<compile_context>
chip_gen: v6e
topology: v6e:2x2x1
jax: 0.10.0
libtpu: 0.0.40
codegen_flags: <defaults>
</compile_context>

<pallas_src>
import jax
import jax.numpy as jnp
from jax import lax
from jax.experimental import pallas as pl
from jax.experimental.pallas import tpu as pltpu

EPS = 1e-5
K = 4        # kernel size of every ConvTranspose2d in the module
S = 2        # stride of the three upsampling stages


def _full_spec(shape):
    return pl.BlockSpec(shape, lambda i: (0,) * len(shape))


# ---------------------------------------------------------------------------
# Pallas kernels
# ---------------------------------------------------------------------------
def _dual_1x1_bn_relu_kernel(x_ref, w_ref, g_ref, beta_ref, o_ref):
    """Both 1x1-spatial-input ConvTranspose stages + BatchNorm + ReLU + concat.

    A ConvTranspose2d on a 1x1 input (k=4, s=1, p=0) is exactly
        out[n, c, ky, kx] = sum_ci x[n, ci] * W[ci, c, ky, kx]
    i.e. one matmul.  Both branches share it via a block-structured weight so
    their outputs land pre-concatenated along the channel axis.

    x_ref   : (N, Ci+Cc)        bf16   [latent | conditional]
    w_ref   : (Ci+Cc, 16*Ccat)  bf16   column = s*Ccat + c, s = ky*4 + kx
    g_ref   : (1, Ccat)         f32    concatenated BN gammas
    beta_ref: (1, Ccat)         f32    concatenated BN betas
    o_ref   : (N, 16*Ccat)      bf16   same column layout as the matmul

    Conv bias omitted: BatchNorm's mean subtraction cancels it exactly.
    """
    n = x_ref.shape[0]
    ccat = g_ref.shape[1]
    y = jnp.dot(x_ref[...], w_ref[...], preferred_element_type=jnp.float32)

    acc = jnp.zeros((1, ccat), jnp.float32)
    acc2 = jnp.zeros((1, ccat), jnp.float32)
    for s in range(K * K):                       # one-pass BN stats per channel
        blk = y[:, s * ccat:(s + 1) * ccat]      # (N, Ccat)
        acc = acc + jnp.sum(blk, axis=0, keepdims=True)
        acc2 = acc2 + jnp.sum(blk * blk, axis=0, keepdims=True)
    inv_cnt = 1.0 / (K * K * n)
    mean = acc * inv_cnt
    var = jnp.maximum(acc2 * inv_cnt - mean * mean, 0.0)   # biased var (train mode)
    scale = g_ref[...] * lax.rsqrt(var + EPS)
    shift = beta_ref[...] - mean * scale

    scale_full = jnp.concatenate([scale] * (K * K), axis=1)   # (1, 16*Ccat)
    shift_full = jnp.concatenate([shift] * (K * K), axis=1)
    o_ref[...] = jnp.maximum(y * scale_full + shift_full, 0.0).astype(o_ref.dtype)


def _upconv_bn_relu_kernel(p_ref, w_ref, g_ref, beta_ref, o_ref, y_scr):
    """Stride-2 ConvTranspose (sub-pixel decomposition) + BatchNorm + ReLU.

    p_ref : (4, R, 4*Cin)  bf16  per-phase patch matrices (no inserted zeros)
    w_ref : (4, 4*Cin, C)  bf16  per-phase weights
    g_ref : (1, C)         f32
    beta  : (1, C)         f32
    o_ref : (4, R, C)      bf16  per-phase outputs (caller pixel-shuffles them)
    y_scr : (4, R, C)      f32   VMEM scratch: raw matmul results

    Pass 1 streams each phase's raw f32 result into VMEM scratch while
    accumulating sum / sum-of-squares (only one phase live in vregs at a time);
    pass 2 reloads, applies scale/shift + ReLU and stores bf16.  BN statistics
    are taken jointly over all 4 phases (= every output pixel), matching
    training-mode BatchNorm2d.  Conv bias omitted (cancelled by BN).
    """
    r = p_ref.shape[1]
    cout = g_ref.shape[1]
    acc = jnp.zeros((1, cout), jnp.float32)
    acc2 = jnp.zeros((1, cout), jnp.float32)
    for ph in range(4):
        y = jnp.dot(p_ref[ph], w_ref[ph], preferred_element_type=jnp.float32)
        y_scr[ph] = y
        acc = acc + jnp.sum(y, axis=0, keepdims=True)
        acc2 = acc2 + jnp.sum(y * y, axis=0, keepdims=True)
    inv_cnt = 1.0 / (4 * r)
    mean = acc * inv_cnt
    var = jnp.maximum(acc2 * inv_cnt - mean * mean, 0.0)
    scale = g_ref[...] * lax.rsqrt(var + EPS)
    shift = beta_ref[...] - mean * scale
    for ph in range(4):
        o_ref[ph] = jnp.maximum(y_scr[ph] * scale + shift, 0.0).astype(o_ref.dtype)


def _upconv_bias_tanh_kernel(p_ref, w_ref, b_ref, o_ref):
    """Final stride-2 ConvTranspose + bias + Tanh, all 4 phases in one program.

    (Single-TC v5e/v6e: grid=(1,) avoids 4x per-grid-step overhead.  On v7x a
    grid=(2,) 'parallel' split of the phases would use both TensorCores.)
    """
    for ph in range(4):
        y = jnp.dot(p_ref[ph], w_ref[ph], preferred_element_type=jnp.float32)
        o_ref[ph] = jnp.tanh(y + b_ref[...])


# ---------------------------------------------------------------------------
# pallas_call wrappers (everything fits in VMEM -> single program per call)
# ---------------------------------------------------------------------------
def dual_1x1_bn_relu(x2, wbig, g, beta):
    n, kin = x2.shape
    ccat = g.shape[1]
    return pl.pallas_call(
        _dual_1x1_bn_relu_kernel,
        out_shape=jax.ShapeDtypeStruct((n, K * K * ccat), jnp.bfloat16),
        grid=(1,),
        in_specs=[_full_spec((n, kin)), _full_spec((kin, K * K * ccat)),
                  _full_spec((1, ccat)), _full_spec((1, ccat))],
        out_specs=_full_spec((n, K * K * ccat)),
    )(x2, wbig, g, beta)


def upconv_bn_relu(p4, w4, g, beta):
    _, r, kc = p4.shape
    cout = g.shape[1]
    return pl.pallas_call(
        _upconv_bn_relu_kernel,
        out_shape=jax.ShapeDtypeStruct((4, r, cout), jnp.bfloat16),
        grid=(1,),
        in_specs=[_full_spec((4, r, kc)), _full_spec((4, kc, cout)),
                  _full_spec((1, cout)), _full_spec((1, cout))],
        out_specs=_full_spec((4, r, cout)),
        scratch_shapes=[pltpu.VMEM((4, r, cout), jnp.float32)],
    )(p4, w4, g, beta)


def upconv_bias_tanh(p4, w4, bias):
    _, r, kc = p4.shape
    cout = bias.shape[1]
    return pl.pallas_call(
        _upconv_bias_tanh_kernel,
        out_shape=jax.ShapeDtypeStruct((4, r, cout), jnp.float32),
        grid=(1,),
        in_specs=[_full_spec((4, r, kc)), _full_spec((4, kc, cout)),
                  _full_spec((1, cout))],
        out_specs=_full_spec((4, r, cout)),
    )(p4, w4, bias)


# ---------------------------------------------------------------------------
# Sub-pixel decomposition of ConvTranspose2d (k=4, s=2), HWNC layout
# ---------------------------------------------------------------------------
def _phase_taps(phase, padding):
    """Kernel taps hitting output parity `phase` for k=4, stride=2.

    Returns [(k, d)] where the input index used is output_half_index + d.
    """
    taps = []
    for k in range(K):
        if (k - phase - padding) % S == 0:
            taps.append((k, (phase + padding - k) // S))
    return taps


def build_phase_patches(a, padding):
    """Per-phase patch matrices for a stride-2 ConvTranspose2d (activations only).

    a : (H, W, N, Cin) channels-last activation (bf16).
    Returns p4 (4, ohh*oww*N, 4*Cin) and (ohh, oww).
    """
    h_in, w_in, n, cin = a.shape
    ohh = ((h_in - 1) * S - 2 * padding + K) // S
    oww = ((w_in - 1) * S - 2 * padding + K) // S
    taps_y = [_phase_taps(p, padding) for p in range(S)]
    taps_x = [_phase_taps(p, padding) for p in range(S)]
    dys = [d for taps in taps_y for _, d in taps]
    dxs = [d for taps in taps_x for _, d in taps]
    pad_y = (max(0, -min(dys)), max(0, ohh - 1 + max(dys) - (h_in - 1)))
    pad_x = (max(0, -min(dxs)), max(0, oww - 1 + max(dxs) - (w_in - 1)))
    ap = jnp.pad(a, (pad_y, pad_x, (0, 0), (0, 0)))

    p_list = []
    for py in range(S):
        for px in range(S):
            wins = []
            for _, dy in taps_y[py]:
                for _, dx in taps_x[px]:
                    y0, x0 = dy + pad_y[0], dx + pad_x[0]
                    wins.append(ap[y0:y0 + ohh, x0:x0 + oww])   # (ohh, oww, N, Cin)
            p_list.append(jnp.concatenate(wins, axis=-1).reshape(ohh * oww * n, 4 * cin))
    return jnp.stack(p_list, axis=0), (ohh, oww)


def pixel_shuffle(y4, ohh, oww, n, cout):
    """(4, ohh*oww*N, C) per-phase outputs -> (2*ohh, 2*oww, N, C) HWNC."""
    y = y4.reshape(S, S, ohh, oww, n, cout)
    y = y.transpose(2, 0, 3, 1, 4, 5)
    return y.reshape(ohh * S, oww * S, n, cout)


# ---------------------------------------------------------------------------
# One-time weight preparation (hoisted out of the per-step forward)
# ---------------------------------------------------------------------------
def _upconv_weights(w, padding):
    """(Cin, Cout, 4, 4) torch-layout ConvTranspose2d weight -> (4, 4*Cin, Cout) bf16."""
    taps_y = [_phase_taps(p, padding) for p in range(S)]
    taps_x = [_phase_taps(p, padding) for p in range(S)]
    w_list = []
    for py in range(S):
        for px in range(S):
            blocks = [w[:, :, kh, kw] for kh, _ in taps_y[py] for kw, _ in taps_x[px]]
            w_list.append(jnp.concatenate(blocks, axis=0))      # (4*Cin, Cout)
    return jnp.stack(w_list, axis=0).astype(jnp.bfloat16)


def prepare_params(params):
    """Pack / cast all weight-side tensors once (not in the per-call path)."""
    wi, wc = params["Wi"], params["Wc"]
    ci, cout0 = wi.shape[0], wi.shape[1]
    cc = wc.shape[0]
    ccat = 2 * cout0
    # 1x1 input, stride 1, pad 0: output pixel (ky, kx) uses W[..., ky, kx].
    wi_r = wi.transpose(0, 2, 3, 1).reshape(ci, K * K, cout0)
    wc_r = wc.transpose(0, 2, 3, 1).reshape(cc, K * K, cout0)
    wbig = jnp.zeros((ci + cc, K * K, ccat), jnp.float32)
    wbig = wbig.at[:ci, :, :cout0].set(wi_r)      # lanes [0, 2h)  = input branch
    wbig = wbig.at[ci:, :, cout0:].set(wc_r)      # lanes [2h, 4h) = cond branch
    return {
        "wbig": wbig.reshape(ci + cc, K * K * ccat).astype(jnp.bfloat16),
        "g0": jnp.concatenate([params["gi"], params["gc"]]).reshape(1, ccat),
        "beta0": jnp.concatenate([params["betai"], params["betac"]]).reshape(1, ccat),
        "w1": _upconv_weights(params["W1"], 1),
        "g1": params["g1"].reshape(1, -1), "beta1": params["beta1"].reshape(1, -1),
        "w2": _upconv_weights(params["W2"], 1),
        "g2": params["g2"].reshape(1, -1), "beta2": params["beta2"].reshape(1, -1),
        "w3": _upconv_weights(params["W3"], 3),
        "b3": params["b3"].reshape(1, -1),
    }


# ---------------------------------------------------------------------------
# Model: parameters + forward
# ---------------------------------------------------------------------------
def init_params(key, input_size, conditional_size, hidden_size, output_size):
    h = hidden_size
    ks = jax.random.split(key, 5)

    def wconv(k, cin, cout):
        return 0.02 * jax.random.normal(k, (cin, cout, 4, 4), jnp.float32)

    def bn(c):
        return jnp.ones((c,), jnp.float32), jnp.zeros((c,), jnp.float32)

    p = {}
    p["Wc"] = wconv(ks[0], conditional_size, 2 * h)
    p["gc"], p["betac"] = bn(2 * h)
    p["Wi"] = wconv(ks[1], input_size, 2 * h)
    p["gi"], p["betai"] = bn(2 * h)
    p["W1"] = wconv(ks[2], 4 * h, 2 * h)
    p["g1"], p["beta1"] = bn(2 * h)
    p["W2"] = wconv(ks[3], 2 * h, h)
    p["g2"], p["beta2"] = bn(h)
    p["W3"] = wconv(ks[4], h, output_size)
    p["b3"] = jnp.zeros((output_size,), jnp.float32)
    # Conv biases of the BN stages are omitted: zero at init (as in the torch
    # module) and cancelled exactly by BatchNorm's mean subtraction anyway.
    return p


@jax.jit
def cond_conv_generator_forward(prep, x, conditional):
    n, ci = x.shape[0], x.shape[1]
    cc = conditional.shape[1]
    ccat = prep["g0"].shape[1]          # 4 * hidden_size
    c1 = prep["g1"].shape[1]            # 2 * hidden_size
    c2 = prep["g2"].shape[1]            # hidden_size
    c3 = prep["b3"].shape[1]            # output channels

    # Stage 0: input_layers + cond_layers (1x1-input ConvT + BN + ReLU) + concat.
    x2 = jnp.concatenate([x.reshape(n, ci), conditional.reshape(n, cc)],
                         axis=1).astype(jnp.bfloat16)
    y0 = dual_1x1_bn_relu(x2, prep["wbig"], prep["g0"], prep["beta0"])
    a0 = y0.reshape(n, K, K, ccat).transpose(1, 2, 0, 3)        # (4, 4, N, 4h) HWNC

    # Stage 1: ConvT(4h -> 2h, k4, s2, p1) + BN + ReLU : 4x4 -> 8x8.
    p4, (ohh, oww) = build_phase_patches(a0, 1)
    y4 = upconv_bn_relu(p4, prep["w1"], prep["g1"], prep["beta1"])
    a1 = pixel_shuffle(y4, ohh, oww, n, c1)                     # (8, 8, N, 2h)

    # Stage 2: ConvT(2h -> h, k4, s2, p1) + BN + ReLU : 8x8 -> 16x16.
    p4, (ohh, oww) = build_phase_patches(a1, 1)
    y4 = upconv_bn_relu(p4, prep["w2"], prep["g2"], prep["beta2"])
    a2 = pixel_shuffle(y4, ohh, oww, n, c2)                     # (16, 16, N, h)

    # Stage 3: ConvT(h -> out, k4, s2, p3) + bias + Tanh : 16x16 -> 28x28.
    p4, (ohh, oww) = build_phase_patches(a2, 3)
    y4 = upconv_bias_tanh(p4, prep["w3"], prep["b3"])
    img = pixel_shuffle(y4, ohh, oww, n, c3)                    # (28, 28, N, out)

    return img.transpose(2, 3, 0, 1)                            # NCHW, matches torch


# ---------------------------------------------------------------------------
# Pure-JAX reference (f32, training-mode BatchNorm) for a parity check
# ---------------------------------------------------------------------------
def _conv_transpose_ref(x, w, b, stride, padding):
    """x: (N, Cin, H, W); w: (Cin, Cout, K, K) torch ConvTranspose2d layout."""
    rhs = jnp.flip(w, (2, 3)).transpose(1, 0, 2, 3)     # (Cout, Cin, K, K)
    pad = K - 1 - padding
    y = lax.conv_general_dilated(
        x, rhs, window_strides=(1, 1), padding=[(pad, pad), (pad, pad)],
        lhs_dilation=(stride, stride),
        dimension_numbers=("NCHW", "OIHW", "NCHW"))
    return y + b.reshape(1, -1, 1, 1)


def _bn_relu_ref(x, gamma, beta):
    mean = x.mean(axis=(0, 2, 3), keepdims=True)
    var = ((x - mean) ** 2).mean(axis=(0, 2, 3), keepdims=True)   # biased (train)
    xh = (x - mean) * lax.rsqrt(var + EPS)
    return jnp.maximum(xh * gamma.reshape(1, -1, 1, 1) + beta.reshape(1, -1, 1, 1), 0.0)


def reference_forward(params, x, conditional):
    z = lambda c: jnp.zeros((c,), jnp.float32)
    h2 = params["Wi"].shape[1]
    yi = _bn_relu_ref(_conv_transpose_ref(x, params["Wi"], z(h2), 1, 0),
                      params["gi"], params["betai"])
    yc = _bn_relu_ref(_conv_transpose_ref(conditional, params["Wc"], z(h2), 1, 0),
                      params["gc"], params["betac"])
    a = jnp.concatenate([yi, yc], axis=1)
    a = _bn_relu_ref(_conv_transpose_ref(a, params["W1"], z(params["W1"].shape[1]), 2, 1),
                     params["g1"], params["beta1"])
    a = _bn_relu_ref(_conv_transpose_ref(a, params["W2"], z(params["W2"].shape[1]), 2, 1),
                     params["g2"], params["beta2"])
    a = _conv_transpose_ref(a, params["W3"], params["b3"], 2, 3)
    return jnp.tanh(a)


# ---------------------------------------------------------------------------
if __name__ == "__main__":
    batch = 2
    input_size = 8          # latent dim
    conditional_size = 4    # conditioning dim
    hidden_size = 16
    output_size = 3

    key = jax.random.PRNGKey(0)
    kp, kx, kc = jax.random.split(key, 3)
    params = init_params(kp, input_size, conditional_size, hidden_size, output_size)
    prep = prepare_params(params)        # one-time weight prep, outside the forward

    # ConvTranspose2d expects NCHW with 1x1 spatial latent/conditional input.
    x = jax.random.normal(kx, (batch, input_size, 1, 1), jnp.float32)
    conditional = jax.random.normal(kc, (batch, conditional_size, 1, 1), jnp.float32)

    out = cond_conv_generator_forward(prep, x, conditional)
    out = jax.block_until_ready(out)

    assert out.shape == (batch, output_size, 28, 28), out.shape
    assert bool(jnp.all(jnp.isfinite(out)))
    assert bool(jnp.all(jnp.abs(out) <= 1.0 + 1e-6))       # tanh range

    ref = reference_forward(params, x, conditional)
    max_err = float(jnp.max(jnp.abs(out - ref)))
    assert max_err < 6e-2, max_err                          # bf16-operand tolerance

    print("KERNEL_OK")
</pallas_src>

<mosaic_0001>
module attributes {stable_mosaic.version = 11 : i64} {
  func.func @_dual_1x1_bn_relu_kernel(%arg0: i32, %arg1: memref<2x12xbf16, #tpu.memory_space<vmem>>, %arg2: memref<12x1024xbf16, #tpu.memory_space<vmem>>, %arg3: memref<1x64xf32, #tpu.memory_space<vmem>>, %arg4: memref<1x64xf32, #tpu.memory_space<vmem>>, %arg5: memref<2x1024xbf16, #tpu.memory_space<vmem>>) attributes {dimension_semantics = [#tpu.dimension_semantics<arbitrary>], iteration_bounds = array<i64: 1>, scalar_prefetch = 0 : i64, scratch_operands = 0 : i64, tpu.core_type = #tpu.core_type<tc>, window_params = [{pipeline_mode = #tpu.pipeline_mode<synchronous>, transform_indices = @transform_0, window_bounds = array<i64: 2, 12>}, {pipeline_mode = #tpu.pipeline_mode<synchronous>, transform_indices = @transform_1, window_bounds = array<i64: 12, 1024>}, {pipeline_mode = #tpu.pipeline_mode<synchronous>, transform_indices = @transform_2, window_bounds = array<i64: 1, 64>}, {pipeline_mode = #tpu.pipeline_mode<synchronous>, transform_indices = @transform_3, window_bounds = array<i64: 1, 64>}, {pipeline_mode = #tpu.pipeline_mode<synchronous>, transform_indices = @transform_4, window_bounds = array<i64: 2, 1024>}]} {
    %c0 = arith.constant 0 : index
    %c0_0 = arith.constant 0 : index
    %0 = vector.load %arg1[%c0, %c0_0] : memref<2x12xbf16, #tpu.memory_space<vmem>>, vector<2x12xbf16>
    %c0_1 = arith.constant 0 : index
    %c0_2 = arith.constant 0 : index
    %1 = vector.load %arg2[%c0_1, %c0_2] : memref<12x1024xbf16, #tpu.memory_space<vmem>>, vector<12x1024xbf16>
    %cst = arith.constant dense<0.000000e+00> : vector<2x1024xf32>
    %2 = tpu.matmul %0, %1, %cst {dimension_numbers = #tpu.dot_dimension_numbers<[1], [0], [0], [1], [0, 0, 1, 1], [], []>} : vector<2x12xbf16>, vector<12x1024xbf16>, vector<2x1024xf32> -> vector<2x1024xf32>
    %cst_3 = arith.constant 0.000000e+00 : f32
    %3 = vector.broadcast %cst_3 : f32 to vector<1x64xf32>
    %cst_4 = arith.constant 0.000000e+00 : f32
    %4 = vector.broadcast %cst_4 : f32 to vector<1x64xf32>
    %5 = vector.extract_strided_slice %2 {offsets = [0, 0], sizes = [2, 64], strides = [1, 1]} : vector<2x1024xf32> to vector<2x64xf32>
    %cst_5 = arith.constant dense<0.000000e+00> : vector<64xf32>
    %6 = vector.multi_reduction <add>, %5, %cst_5 [0] : vector<2x64xf32> to vector<64xf32>
    %7 = vector.shape_cast %6 : vector<64xf32> to vector<1x64xf32>
    %8 = arith.addf %3, %7 : vector<1x64xf32>
    %9 = arith.mulf %5, %5 : vector<2x64xf32>
    %cst_6 = arith.constant dense<0.000000e+00> : vector<64xf32>
    %10 = vector.multi_reduction <add>, %9, %cst_6 [0] : vector<2x64xf32> to vector<64xf32>
    %11 = vector.shape_cast %10 : vector<64xf32> to vector<1x64xf32>
    %12 = arith.addf %4, %11 : vector<1x64xf32>
    %13 = vector.extract_strided_slice %2 {offsets = [0, 64], sizes = [2, 64], strides = [1, 1]} : vector<2x1024xf32> to vector<2x64xf32>
    %cst_7 = arith.constant dense<0.000000e+00> : vector<64xf32>
    %14 = vector.multi_reduction <add>, %13, %cst_7 [0] : vector<2x64xf32> to vector<64xf32>
    %15 = vector.shape_cast %14 : vector<64xf32> to vector<1x64xf32>
    %16 = arith.addf %8, %15 : vector<1x64xf32>
    %17 = arith.mulf %13, %13 : vector<2x64xf32>
    %cst_8 = arith.constant dense<0.000000e+00> : vector<64xf32>
    %18 = vector.multi_reduction <add>, %17, %cst_8 [0] : vector<2x64xf32> to vector<64xf32>
    %19 = vector.shape_cast %18 : vector<64xf32> to vector<1x64xf32>
    %20 = arith.addf %12, %19 : vector<1x64xf32>
    %21 = vector.extract_strided_slice %2 {offsets = [0, 128], sizes = [2, 64], strides = [1, 1]} : vector<2x1024xf32> to vector<2x64xf32>
    %cst_9 = arith.constant dense<0.000000e+00> : vector<64xf32>
    %22 = vector.multi_reduction <add>, %21, %cst_9 [0] : vector<2x64xf32> to vector<64xf32>
    %23 = vector.shape_cast %22 : vector<64xf32> to vector<1x64xf32>
    %24 = arith.addf %16, %23 : vector<1x64xf32>
    %25 = arith.mulf %21, %21 : vector<2x64xf32>
    %cst_10 = arith.constant dense<0.000000e+00> : vector<64xf32>
    %26 = vector.multi_reduction <add>, %25, %cst_10 [0] : vector<2x64xf32> to vector<64xf32>
    %27 = vector.shape_cast %26 : vector<64xf32> to vector<1x64xf32>
    %28 = arith.addf %20, %27 : vector<1x64xf32>
    %29 = vector.extract_strided_slice %2 {offsets = [0, 192], sizes = [2, 64], strides = [1, 1]} : vector<2x1024xf32> to vector<2x64xf32>
    %cst_11 = arith.constant dense<0.000000e+00> : vector<64xf32>
    %30 = vector.multi_reduction <add>, %29, %cst_11 [0] : vector<2x64xf32> to vector<64xf32>
    %31 = vector.shape_cast %30 : vector<64xf32> to vector<1x64xf32>
    %32 = arith.addf %24, %31 : vector<1x64xf32>
    %33 = arith.mulf %29, %29 : vector<2x64xf32>
    %cst_12 = arith.constant dense<0.000000e+00> : vector<64xf32>
    %34 = vector.multi_reduction <add>, %33, %cst_12 [0] : vector<2x64xf32> to vector<64xf32>
    %35 = vector.shape_cast %34 : vector<64xf32> to vector<1x64xf32>
    %36 = arith.addf %28, %35 : vector<1x64xf32>
    %37 = vector.extract_strided_slice %2 {offsets = [0, 256], sizes = [2, 64], strides = [1, 1]} : vector<2x1024xf32> to vector<2x64xf32>
    %cst_13 = arith.constant dense<0.000000e+00> : vector<64xf32>
    %38 = vector.multi_reduction <add>, %37, %cst_13 [0] : vector<2x64xf32> to vector<64xf32>
    %39 = vector.shape_cast %38 : vector<64xf32> to vector<1x64xf32>
    %40 = arith.addf %32, %39 : vector<1x64xf32>
    %41 = arith.mulf %37, %37 : vector<2x64xf32>
    %cst_14 = arith.constant dense<0.000000e+00> : vector<64xf32>
    %42 = vector.multi_reduction <add>, %41, %cst_14 [0] : vector<2x64xf32> to vector<64xf32>
    %43 = vector.shape_cast %42 : vector<64xf32> to vector<1x64xf32>
    %44 = arith.addf %36, %43 : vector<1x64xf32>
    %45 = vector.extract_strided_slice %2 {offsets = [0, 320], sizes = [2, 64], strides = [1, 1]} : vector<2x1024xf32> to vector<2x64xf32>
    %cst_15 = arith.constant dense<0.000000e+00> : vector<64xf32>
    %46 = vector.multi_reduction <add>, %45, %cst_15 [0] : vector<2x64xf32> to vector<64xf32>
    %47 = vector.shape_cast %46 : vector<64xf32> to vector<1x64xf32>
    %48 = arith.addf %40, %47 : vector<1x64xf32>
    %49 = arith.mulf %45, %45 : vector<2x64xf32>
    %cst_16 = arith.constant dense<0.000000e+00> : vector<64xf32>
    %50 = vector.multi_reduction <add>, %49, %cst_16 [0] : vector<2x64xf32> to vector<64xf32>
    %51 = vector.shape_cast %50 : vector<64xf32> to vector<1x64xf32>
    %52 = arith.addf %44, %51 : vector<1x64xf32>
    %53 = vector.extract_strided_slice %2 {offsets = [0, 384], sizes = [2, 64], strides = [1, 1]} : vector<2x1024xf32> to vector<2x64xf32>
    %cst_17 = arith.constant dense<0.000000e+00> : vector<64xf32>
    %54 = vector.multi_reduction <add>, %53, %cst_17 [0] : vector<2x64xf32> to vector<64xf32>
    %55 = vector.shape_cast %54 : vector<64xf32> to vector<1x64xf32>
    %56 = arith.addf %48, %55 : vector<1x64xf32>
    %57 = arith.mulf %53, %53 : vector<2x64xf32>
    %cst_18 = arith.constant dense<0.000000e+00> : vector<64xf32>
    %58 = vector.multi_reduction <add>, %57, %cst_18 [0] : vector<2x64xf32> to vector<64xf32>
    %59 = vector.shape_cast %58 : vector<64xf32> to vector<1x64xf32>
    %60 = arith.addf %52, %59 : vector<1x64xf32>
    %61 = vector.extract_strided_slice %2 {offsets = [0, 448], sizes = [2, 64], strides = [1, 1]} : vector<2x1024xf32> to vector<2x64xf32>
    %cst_19 = arith.constant dense<0.000000e+00> : vector<64xf32>
    %62 = vector.multi_reduction <add>, %61, %cst_19 [0] : vector<2x64xf32> to vector<64xf32>
    %63 = vector.shape_cast %62 : vector<64xf32> to vector<1x64xf32>
    %64 = arith.addf %56, %63 : vector<1x64xf32>
    %65 = arith.mulf %61, %61 : vector<2x64xf32>
    %cst_20 = arith.constant dense<0.000000e+00> : vector<64xf32>
    %66 = vector.multi_reduction <add>, %65, %cst_20 [0] : vector<2x64xf32> to vector<64xf32>
    %67 = vector.shape_cast %66 : vector<64xf32> to vector<1x64xf32>
    %68 = arith.addf %60, %67 : vector<1x64xf32>
    %69 = vector.extract_strided_slice %2 {offsets = [0, 512], sizes = [2, 64], strides = [1, 1]} : vector<2x1024xf32> to vector<2x64xf32>
    %cst_21 = arith.constant dense<0.000000e+00> : vector<64xf32>
    %70 = vector.multi_reduction <add>, %69, %cst_21 [0] : vector<2x64xf32> to vector<64xf32>
    %71 = vector.shape_cast %70 : vector<64xf32> to vector<1x64xf32>
    %72 = arith.addf %64, %71 : vector<1x64xf32>
    %73 = arith.mulf %69, %69 : vector<2x64xf32>
    %cst_22 = arith.constant dense<0.000000e+00> : vector<64xf32>
    %74 = vector.multi_reduction <add>, %73, %cst_22 [0] : vector<2x64xf32> to vector<64xf32>
    %75 = vector.shape_cast %74 : vector<64xf32> to vector<1x64xf32>
    %76 = arith.addf %68, %75 : vector<1x64xf32>
    %77 = vector.extract_strided_slice %2 {offsets = [0, 576], sizes = [2, 64], strides = [1, 1]} : vector<2x1024xf32> to vector<2x64xf32>
    %cst_23 = arith.constant dense<0.000000e+00> : vector<64xf32>
    %78 = vector.multi_reduction <add>, %77, %cst_23 [0] : vector<2x64xf32> to vector<64xf32>
    %79 = vector.shape_cast %78 : vector<64xf32> to vector<1x64xf32>
    %80 = arith.addf %72, %79 : vector<1x64xf32>
    %81 = arith.mulf %77, %77 : vector<2x64xf32>
    %cst_24 = arith.constant dense<0.000000e+00> : vector<64xf32>
    %82 = vector.multi_reduction <add>, %81, %cst_24 [0] : vector<2x64xf32> to vector<64xf32>
    %83 = vector.shape_cast %82 : vector<64xf32> to vector<1x64xf32>
    %84 = arith.addf %76, %83 : vector<1x64xf32>
    %85 = vector.extract_strided_slice %2 {offsets = [0, 640], sizes = [2, 64], strides = [1, 1]} : vector<2x1024xf32> to vector<2x64xf32>
    %cst_25 = arith.constant dense<0.000000e+00> : vector<64xf32>
    %86 = vector.multi_reduction <add>, %85, %cst_25 [0] : vector<2x64xf32> to vector<64xf32>
    %87 = vector.shape_cast %86 : vector<64xf32> to vector<1x64xf32>
    %88 = arith.addf %80, %87 : vector<1x64xf32>
    %89 = arith.mulf %85, %85 : vector<2x64xf32>
    %cst_26 = arith.constant dense<0.000000e+00> : vector<64xf32>
    %90 = vector.multi_reduction <add>, %89, %cst_26 [0] : vector<2x64xf32> to vector<64xf32>
    %91 = vector.shape_cast %90 : vector<64xf32> to vector<1x64xf32>
    %92 = arith.addf %84, %91 : vector<1x64xf32>
    %93 = vector.extract_strided_slice %2 {offsets = [0, 704], sizes = [2, 64], strides = [1, 1]} : vector<2x1024xf32> to vector<2x64xf32>
    %cst_27 = arith.constant dense<0.000000e+00> : vector<64xf32>
    %94 = vector.multi_reduction <add>, %93, %cst_27 [0] : vector<2x64xf32> to vector<64xf32>
    %95 = vector.shape_cast %94 : vector<64xf32> to vector<1x64xf32>
    %96 = arith.addf %88, %95 : vector<1x64xf32>
    %97 = arith.mulf %93, %93 : vector<2x64xf32>
    %cst_28 = arith.constant dense<0.000000e+00> : vector<64xf32>
    %98 = vector.multi_reduction <add>, %97, %cst_28 [0] : vector<2x64xf32> to vector<64xf32>
    %99 = vector.shape_cast %98 : vector<64xf32> to vector<1x64xf32>
    %100 = arith.addf %92, %99 : vector<1x64xf32>
    %101 = vector.extract_strided_slice %2 {offsets = [0, 768], sizes = [2, 64], strides = [1, 1]} : vector<2x1024xf32> to vector<2x64xf32>
    %cst_29 = arith.constant dense<0.000000e+00> : vector<64xf32>
    %102 = vector.multi_reduction <add>, %101, %cst_29 [0] : vector<2x64xf32> to vector<64xf32>
    %103 = vector.shape_cast %102 : vector<64xf32> to vector<1x64xf32>
    %104 = arith.addf %96, %103 : vector<1x64xf32>
    %105 = arith.mulf %101, %101 : vector<2x64xf32>
    %cst_30 = arith.constant dense<0.000000e+00> : vector<64xf32>
    %106 = vector.multi_reduction <add>, %105, %cst_30 [0] : vector<2x64xf32> to vector<64xf32>
    %107 = vector.shape_cast %106 : vector<64xf32> to vector<1x64xf32>
    %108 = arith.addf %100, %107 : vector<1x64xf32>
    %109 = vector.extract_strided_slice %2 {offsets = [0, 832], sizes = [2, 64], strides = [1, 1]} : vector<2x1024xf32> to vector<2x64xf32>
    %cst_31 = arith.constant dense<0.000000e+00> : vector<64xf32>
    %110 = vector.multi_reduction <add>, %109, %cst_31 [0] : vector<2x64xf32> to vector<64xf32>
    %111 = vector.shape_cast %110 : vector<64xf32> to vector<1x64xf32>
    %112 = arith.addf %104, %111 : vector<1x64xf32>
    %113 = arith.mulf %109, %109 : vector<2x64xf32>
    %cst_32 = arith.constant dense<0.000000e+00> : vector<64xf32>
    %114 = vector.multi_reduction <add>, %113, %cst_32 [0] : vector<2x64xf32> to vector<64xf32>
    %115 = vector.shape_cast %114 : vector<64xf32> to vector<1x64xf32>
    %116 = arith.addf %108, %115 : vector<1x64xf32>
    %117 = vector.extract_strided_slice %2 {offsets = [0, 896], sizes = [2, 64], strides = [1, 1]} : vector<2x1024xf32> to vector<2x64xf32>
    %cst_33 = arith.constant dense<0.000000e+00> : vector<64xf32>
    %118 = vector.multi_reduction <add>, %117, %cst_33 [0] : vector<2x64xf32> to vector<64xf32>
    %119 = vector.shape_cast %118 : vector<64xf32> to vector<1x64xf32>
    %120 = arith.addf %112, %119 : vector<1x64xf32>
    %121 = arith.mulf %117, %117 : vector<2x64xf32>
    %cst_34 = arith.constant dense<0.000000e+00> : vector<64xf32>
    %122 = vector.multi_reduction <add>, %121, %cst_34 [0] : vector<2x64xf32> to vector<64xf32>
    %123 = vector.shape_cast %122 : vector<64xf32> to vector<1x64xf32>
    %124 = arith.addf %116, %123 : vector<1x64xf32>
    %125 = vector.extract_strided_slice %2 {offsets = [0, 960], sizes = [2, 64], strides = [1, 1]} : vector<2x1024xf32> to vector<2x64xf32>
    %cst_35 = arith.constant dense<0.000000e+00> : vector<64xf32>
    %126 = vector.multi_reduction <add>, %125, %cst_35 [0] : vector<2x64xf32> to vector<64xf32>
    %127 = vector.shape_cast %126 : vector<64xf32> to vector<1x64xf32>
    %128 = arith.addf %120, %127 : vector<1x64xf32>
    %129 = arith.mulf %125, %125 : vector<2x64xf32>
    %cst_36 = arith.constant dense<0.000000e+00> : vector<64xf32>
    %130 = vector.multi_reduction <add>, %129, %cst_36 [0] : vector<2x64xf32> to vector<64xf32>
    %131 = vector.shape_cast %130 : vector<64xf32> to vector<1x64xf32>
    %132 = arith.addf %124, %131 : vector<1x64xf32>
    %cst_37 = arith.constant 3.125000e-02 : f32
    %133 = vector.broadcast %cst_37 : f32 to vector<1x64xf32>
    %134 = arith.mulf %128, %133 : vector<1x64xf32>
    %cst_38 = arith.constant 3.125000e-02 : f32
    %135 = vector.broadcast %cst_38 : f32 to vector<1x64xf32>
    %136 = arith.mulf %132, %135 : vector<1x64xf32>
    %137 = arith.mulf %134, %134 : vector<1x64xf32>
    %138 = arith.subf %136, %137 : vector<1x64xf32>
    %cst_39 = arith.constant 0.000000e+00 : f32
    %139 = vector.broadcast %cst_39 : f32 to vector<1x64xf32>
    %140 = arith.maximumf %138, %139 : vector<1x64xf32>
    %c0_40 = arith.constant 0 : index
    %c0_41 = arith.constant 0 : index
    %141 = vector.load %arg3[%c0_40, %c0_41] : memref<1x64xf32, #tpu.memory_space<vmem>>, vector<1x64xf32>
    %cst_42 = arith.constant 9.99999974E-6 : f32
    %142 = vector.broadcast %cst_42 : f32 to vector<1x64xf32>
    %143 = arith.addf %140, %142 : vector<1x64xf32>
    %144 = math.rsqrt %143 : vector<1x64xf32>
    %145 = arith.mulf %141, %144 : vector<1x64xf32>
    %c0_43 = arith.constant 0 : index
    %c0_44 = arith.constant 0 : index
    %146 = vector.load %arg4[%c0_43, %c0_44] : memref<1x64xf32, #tpu.memory_space<vmem>>, vector<1x64xf32>
    %147 = arith.mulf %134, %145 : vector<1x64xf32>
    %148 = arith.subf %146, %147 : vector<1x64xf32>
    %149 = tpu.concatenate %145, %145, %145, %145, %145, %145, %145, %145, %145, %145, %145, %145, %145, %145, %145, %145 in 1 : vector<1x64xf32>, vector<1x64xf32>, vector<1x64xf32>, vector<1x64xf32>, vector<1x64xf32>, vector<1x64xf32>, vector<1x64xf32>, vector<1x64xf32>, vector<1x64xf32>, vector<1x64xf32>, vector<1x64xf32>, vector<1x64xf32>, vector<1x64xf32>, vector<1x64xf32>, vector<1x64xf32>, vector<1x64xf32> -> vector<1x1024xf32>
    %150 = tpu.concatenate %148, %148, %148, %148, %148, %148, %148, %148, %148, %148, %148, %148, %148, %148, %148, %148 in 1 : vector<1x64xf32>, vector<1x64xf32>, vector<1x64xf32>, vector<1x64xf32>, vector<1x64xf32>, vector<1x64xf32>, vector<1x64xf32>, vector<1x64xf32>, vector<1x64xf32>, vector<1x64xf32>, vector<1x64xf32>, vector<1x64xf32>, vector<1x64xf32>, vector<1x64xf32>, vector<1x64xf32>, vector<1x64xf32> -> vector<1x1024xf32>
    %151 = vector.broadcast %149 : vector<1x1024xf32> to vector<2x1024xf32>
    %152 = arith.mulf %2, %151 : vector<2x1024xf32>
    %153 = vector.broadcast %150 : vector<1x1024xf32> to vector<2x1024xf32>
    %154 = arith.addf %152, %153 : vector<2x1024xf32>
    %cst_45 = arith.constant 0.000000e+00 : f32
    %155 = vector.broadcast %cst_45 : f32 to vector<2x1024xf32>
    %156 = arith.maximumf %154, %155 : vector<2x1024xf32>
    %157 = arith.truncf %156 : vector<2x1024xf32> to vector<2x1024xbf16>
    %c0_46 = arith.constant 0 : index
    %c0_47 = arith.constant 0 : index
    %158 = vector.load %arg5[%c0_46, %c0_47] : memref<2x1024xbf16, #tpu.memory_space<vmem>>, vector<2x1024xbf16>
    tpu.vector_store %arg5[%c0_46, %c0_47], %157 {strides = array<i32>} : memref<2x1024xbf16, #tpu.memory_space<vmem>>, vector<2x1024xbf16>,
    return
  }
  func.func @transform_0(%arg0: i32) -> (i32, i32) {
    %c0_i32 = arith.constant 0 : i32
    %c0_i32_0 = arith.constant 0 : i32
    %c0_i32_1 = arith.constant 0 : i32
    return %c0_i32, %c0_i32_0 : i32, i32
  }
  func.func @transform_1(%arg0: i32) -> (i32, i32) {
    %c0_i32 = arith.constant 0 : i32
    %c0_i32_0 = arith.constant 0 : i32
    %c0_i32_1 = arith.constant 0 : i32
    return %c0_i32, %c0_i32_0 : i32, i32
  }
  func.func @transform_2(%arg0: i32) -> (i32, i32) {
    %c0_i32 = arith.constant 0 : i32
    %c0_i32_0 = arith.constant 0 : i32
    %c0_i32_1 = arith.constant 0 : i32
    return %c0_i32, %c0_i32_0 : i32, i32
  }
  func.func @transform_3(%arg0: i32) -> (i32, i32) {
    %c0_i32 = arith.constant 0 : i32
    %c0_i32_0 = arith.constant 0 : i32
    %c0_i32_1 = arith.constant 0 : i32
    return %c0_i32, %c0_i32_0 : i32, i32
  }
  func.func @transform_4(%arg0: i32) -> (i32, i32) {
    %c0_i32 = arith.constant 0 : i32
    %c0_i32_0 = arith.constant 0 : i32
    %c0_i32_1 = arith.constant 0 : i32
    return %c0_i32, %c0_i32_0 : i32, i32
  }
}

module attributes {stable_mosaic.version = 11 : i64} {
  func.func @_upconv_bn_relu_kernel(%arg0: i32, %arg1: memref<4x32x256xbf16, #tpu.memory_space<vmem>>, %arg2: memref<4x256x32xbf16, #tpu.memory_space<vmem>>, %arg3: memref<1x32xf32, #tpu.memory_space<vmem>>, %arg4: memref<1x32xf32, #tpu.memory_space<vmem>>, %arg5: memref<4x32x32xbf16, #tpu.memory_space<vmem>>, %arg6: memref<4x32x32xf32, #tpu.memory_space<vmem>>) attributes {dimension_semantics = [#tpu.dimension_semantics<arbitrary>], iteration_bounds = array<i64: 1>, scalar_prefetch = 0 : i64, scratch_operands = 1 : i64, tpu.core_type = #tpu.core_type<tc>, window_params = [{pipeline_mode = #tpu.pipeline_mode<synchronous>, transform_indices = @transform_0, window_bounds = array<i64: 4, 32, 256>}, {pipeline_mode = #tpu.pipeline_mode<synchronous>, transform_indices = @transform_1, window_bounds = array<i64: 4, 256, 32>}, {pipeline_mode = #tpu.pipeline_mode<synchronous>, transform_indices = @transform_2, window_bounds = array<i64: 1, 32>}, {pipeline_mode = #tpu.pipeline_mode<synchronous>, transform_indices = @transform_3, window_bounds = array<i64: 1, 32>}, {pipeline_mode = #tpu.pipeline_mode<synchronous>, transform_indices = @transform_4, window_bounds = array<i64: 4, 32, 32>}]} {
    %cst = arith.constant 0.000000e+00 : f32
    %0 = vector.broadcast %cst : f32 to vector<1x32xf32>
    %cst_0 = arith.constant 0.000000e+00 : f32
    %1 = vector.broadcast %cst_0 : f32 to vector<1x32xf32>
    %c0 = arith.constant 0 : index
    %c0_1 = arith.constant 0 : index
    %c0_2 = arith.constant 0 : index
    %2 = vector.load %arg1[%c0, %c0_1, %c0_2] : memref<4x32x256xbf16, #tpu.memory_space<vmem>>, vector<1x32x256xbf16>
    %3 = vector.shape_cast %2 : vector<1x32x256xbf16> to vector<32x256xbf16>
    %c0_3 = arith.constant 0 : index
    %c0_4 = arith.constant 0 : index
    %c0_5 = arith.constant 0 : index
    %4 = vector.load %arg2[%c0_3, %c0_4, %c0_5] : memref<4x256x32xbf16, #tpu.memory_space<vmem>>, vector<1x256x32xbf16>
    %5 = vector.shape_cast %4 : vector<1x256x32xbf16> to vector<256x32xbf16>
    %cst_6 = arith.constant dense<0.000000e+00> : vector<32x32xf32>
    %6 = tpu.matmul %3, %5, %cst_6 {dimension_numbers = #tpu.dot_dimension_numbers<[1], [0], [0], [1], [0, 0, 1, 1], [], []>} : vector<32x256xbf16>, vector<256x32xbf16>, vector<32x32xf32> -> vector<32x32xf32>
    %c0_7 = arith.constant 0 : index
    %c0_8 = arith.constant 0 : index
    %c0_9 = arith.constant 0 : index
    %7 = vector.load %arg6[%c0_7, %c0_8, %c0_9] : memref<4x32x32xf32, #tpu.memory_space<vmem>>, vector<1x32x32xf32>
    %8 = vector.shape_cast %7 : vector<1x32x32xf32> to vector<32x32xf32>
    %9 = vector.shape_cast %6 : vector<32x32xf32> to vector<1x32x32xf32>
    tpu.vector_store %arg6[%c0_7, %c0_8, %c0_9], %9 {strides = array<i32>} : memref<4x32x32xf32, #tpu.memory_space<vmem>>, vector<1x32x32xf32>,
    %cst_10 = arith.constant dense<0.000000e+00> : vector<32xf32>
    %10 = vector.multi_reduction <add>, %6, %cst_10 [0] : vector<32x32xf32> to vector<32xf32>
    %11 = vector.shape_cast %10 : vector<32xf32> to vector<1x32xf32>
    %12 = arith.addf %0, %11 : vector<1x32xf32>
    %13 = arith.mulf %6, %6 : vector<32x32xf32>
    %cst_11 = arith.constant dense<0.000000e+00> : vector<32xf32>
    %14 = vector.multi_reduction <add>, %13, %cst_11 [0] : vector<32x32xf32> to vector<32xf32>
    %15 = vector.shape_cast %14 : vector<32xf32> to vector<1x32xf32>
    %16 = arith.addf %1, %15 : vector<1x32xf32>
    %c1 = arith.constant 1 : index
    %c0_12 = arith.constant 0 : index
    %c0_13 = arith.constant 0 : index
    %17 = vector.load %arg1[%c1, %c0_12, %c0_13] : memref<4x32x256xbf16, #tpu.memory_space<vmem>>, vector<1x32x256xbf16>
    %18 = vector.shape_cast %17 : vector<1x32x256xbf16> to vector<32x256xbf16>
    %c1_14 = arith.constant 1 : index
    %c0_15 = arith.constant 0 : index
    %c0_16 = arith.constant 0 : index
    %19 = vector.load %arg2[%c1_14, %c0_15, %c0_16] : memref<4x256x32xbf16, #tpu.memory_space<vmem>>, vector<1x256x32xbf16>
    %20 = vector.shape_cast %19 : vector<1x256x32xbf16> to vector<256x32xbf16>
    %cst_17 = arith.constant dense<0.000000e+00> : vector<32x32xf32>
    %21 = tpu.matmul %18, %20, %cst_17 {dimension_numbers = #tpu.dot_dimension_numbers<[1], [0], [0], [1], [0, 0, 1, 1], [], []>} : vector<32x256xbf16>, vector<256x32xbf16>, vector<32x32xf32> -> vector<32x32xf32>
    %c1_18 = arith.constant 1 : index
    %c0_19 = arith.constant 0 : index
    %c0_20 = arith.constant 0 : index
    %22 = vector.load %arg6[%c1_18, %c0_19, %c0_20] : memref<4x32x32xf32, #tpu.memory_space<vmem>>, vector<1x32x32xf32>
    %23 = vector.shape_cast %22 : vector<1x32x32xf32> to vector<32x32xf32>
    %24 = vector.shape_cast %21 : vector<32x32xf32> to vector<1x32x32xf32>
    tpu.vector_store %arg6[%c1_18, %c0_19, %c0_20], %24 {strides = array<i32>} : memref<4x32x32xf32, #tpu.memory_space<vmem>>, vector<1x32x32xf32>,
    %cst_21 = arith.constant dense<0.000000e+00> : vector<32xf32>
    %25 = vector.multi_reduction <add>, %21, %cst_21 [0] : vector<32x32xf32> to vector<32xf32>
    %26 = vector.shape_cast %25 : vector<32xf32> to vector<1x32xf32>
    %27 = arith.addf %12, %26 : vector<1x32xf32>
    %28 = arith.mulf %21, %21 : vector<32x32xf32>
    %cst_22 = arith.constant dense<0.000000e+00> : vector<32xf32>
    %29 = vector.multi_reduction <add>, %28, %cst_22 [0] : vector<32x32xf32> to vector<32xf32>
    %30 = vector.shape_cast %29 : vector<32xf32> to vector<1x32xf32>
    %31 = arith.addf %16, %30 : vector<1x32xf32>
    %c2 = arith.constant 2 : index
    %c0_23 = arith.constant 0 : index
    %c0_24 = arith.constant 0 : index
    %32 = vector.load %arg1[%c2, %c0_23, %c0_24] : memref<4x32x256xbf16, #tpu.memory_space<vmem>>, vector<1x32x256xbf16>
    %33 = vector.shape_cast %32 : vector<1x32x256xbf16> to vector<32x256xbf16>
    %c2_25 = arith.constant 2 : index
    %c0_26 = arith.constant 0 : index
    %c0_27 = arith.constant 0 : index
    %34 = vector.load %arg2[%c2_25, %c0_26, %c0_27] : memref<4x256x32xbf16, #tpu.memory_space<vmem>>, vector<1x256x32xbf16>
    %35 = vector.shape_cast %34 : vector<1x256x32xbf16> to vector<256x32xbf16>
    %cst_28 = arith.constant dense<0.000000e+00> : vector<32x32xf32>
    %36 = tpu.matmul %33, %35, %cst_28 {dimension_numbers = #tpu.dot_dimension_numbers<[1], [0], [0], [1], [0, 0, 1, 1], [], []>} : vector<32x256xbf16>, vector<256x32xbf16>, vector<32x32xf32> -> vector<32x32xf32>
    %c2_29 = arith.constant 2 : index
    %c0_30 = arith.constant 0 : index
    %c0_31 = arith.constant 0 : index
    %37 = vector.load %arg6[%c2_29, %c0_30, %c0_31] : memref<4x32x32xf32, #tpu.memory_space<vmem>>, vector<1x32x32xf32>
    %38 = vector.shape_cast %37 : vector<1x32x32xf32> to vector<32x32xf32>
    %39 = vector.shape_cast %36 : vector<32x32xf32> to vector<1x32x32xf32>
    tpu.vector_store %arg6[%c2_29, %c0_30, %c0_31], %39 {strides = array<i32>} : memref<4x32x32xf32, #tpu.memory_space<vmem>>, vector<1x32x32xf32>,
    %cst_32 = arith.constant dense<0.000000e+00> : vector<32xf32>
    %40 = vector.multi_reduction <add>, %36, %cst_32 [0] : vector<32x32xf32> to vector<32xf32>
    %41 = vector.shape_cast %40 : vector<32xf32> to vector<1x32xf32>
    %42 = arith.addf %27, %41 : vector<1x32xf32>
    %43 = arith.mulf %36, %36 : vector<32x32xf32>
    %cst_33 = arith.constant dense<0.000000e+00> : vector<32xf32>
    %44 = vector.multi_reduction <add>, %43, %cst_33 [0] : vector<32x32xf32> to vector<32xf32>
    %45 = vector.shape_cast %44 : vector<32xf32> to vector<1x32xf32>
    %46 = arith.addf %31, %45 : vector<1x32xf32>
    %c3 = arith.constant 3 : index
    %c0_34 = arith.constant 0 : index
    %c0_35 = arith.constant 0 : index
    %47 = vector.load %arg1[%c3, %c0_34, %c0_35] : memref<4x32x256xbf16, #tpu.memory_space<vmem>>, vector<1x32x256xbf16>
    %48 = vector.shape_cast %47 : vector<1x32x256xbf16> to vector<32x256xbf16>
    %c3_36 = arith.constant 3 : index
    %c0_37 = arith.constant 0 : index
    %c0_38 = arith.constant 0 : index
    %49 = vector.load %arg2[%c3_36, %c0_37, %c0_38] : memref<4x256x32xbf16, #tpu.memory_space<vmem>>, vector<1x256x32xbf16>
    %50 = vector.shape_cast %49 : vector<1x256x32xbf16> to vector<256x32xbf16>
    %cst_39 = arith.constant dense<0.000000e+00> : vector<32x32xf32>
    %51 = tpu.matmul %48, %50, %cst_39 {dimension_numbers = #tpu.dot_dimension_numbers<[1], [0], [0], [1], [0, 0, 1, 1], [], []>} : vector<32x256xbf16>, vector<256x32xbf16>, vector<32x32xf32> -> vector<32x32xf32>
    %c3_40 = arith.constant 3 : index
    %c0_41 = arith.constant 0 : index
    %c0_42 = arith.constant 0 : index
    %52 = vector.load %arg6[%c3_40, %c0_41, %c0_42] : memref<4x32x32xf32, #tpu.memory_space<vmem>>, vector<1x32x32xf32>
    %53 = vector.shape_cast %52 : vector<1x32x32xf32> to vector<32x32xf32>
    %54 = vector.shape_cast %51 : vector<32x32xf32> to vector<1x32x32xf32>
    tpu.vector_store %arg6[%c3_40, %c0_41, %c0_42], %54 {strides = array<i32>} : memref<4x32x32xf32, #tpu.memory_space<vmem>>, vector<1x32x32xf32>,
    %cst_43 = arith.constant dense<0.000000e+00> : vector<32xf32>
    %55 = vector.multi_reduction <add>, %51, %cst_43 [0] : vector<32x32xf32> to vector<32xf32>
    %56 = vector.shape_cast %55 : vector<32xf32> to vector<1x32xf32>
    %57 = arith.addf %42, %56 : vector<1x32xf32>
    %58 = arith.mulf %51, %51 : vector<32x32xf32>
    %cst_44 = arith.constant dense<0.000000e+00> : vector<32xf32>
    %59 = vector.multi_reduction <add>, %58, %cst_44 [0] : vector<32x32xf32> to vector<32xf32>
    %60 = vector.shape_cast %59 : vector<32xf32> to vector<1x32xf32>
    %61 = arith.addf %46, %60 : vector<1x32xf32>
    %cst_45 = arith.constant 7.812500e-03 : f32
    %62 = vector.broadcast %cst_45 : f32 to vector<1x32xf32>
    %63 = arith.mulf %57, %62 : vector<1x32xf32>
    %cst_46 = arith.constant 7.812500e-03 : f32
    %64 = vector.broadcast %cst_46 : f32 to vector<1x32xf32>
    %65 = arith.mulf %61, %64 : vector<1x32xf32>
    %66 = arith.mulf %63, %63 : vector<1x32xf32>
    %67 = arith.subf %65, %66 : vector<1x32xf32>
    %cst_47 = arith.constant 0.000000e+00 : f32
    %68 = vector.broadcast %cst_47 : f32 to vector<1x32xf32>
    %69 = arith.maximumf %67, %68 : vector<1x32xf32>
    %c0_48 = arith.constant 0 : index
    %c0_49 = arith.constant 0 : index
    %70 = vector.load %arg3[%c0_48, %c0_49] : memref<1x32xf32, #tpu.memory_space<vmem>>, vector<1x32xf32>
    %cst_50 = arith.constant 9.99999974E-6 : f32
    %71 = vector.broadcast %cst_50 : f32 to vector<1x32xf32>
    %72 = arith.addf %69, %71 : vector<1x32xf32>
    %73 = math.rsqrt %72 : vector<1x32xf32>
    %74 = arith.mulf %70, %73 : vector<1x32xf32>
    %c0_51 = arith.constant 0 : index
    %c0_52 = arith.constant 0 : index
    %75 = vector.load %arg4[%c0_51, %c0_52] : memref<1x32xf32, #tpu.memory_space<vmem>>, vector<1x32xf32>
    %76 = arith.mulf %63, %74 : vector<1x32xf32>
    %77 = arith.subf %75, %76 : vector<1x32xf32>
    %c0_53 = arith.constant 0 : index
    %c0_54 = arith.constant 0 : index
    %c0_55 = arith.constant 0 : index
    %78 = vector.load %arg6[%c0_53, %c0_54, %c0_55] : memref<4x32x32xf32, #tpu.memory_space<vmem>>, vector<1x32x32xf32>
    %79 = vector.shape_cast %78 : vector<1x32x32xf32> to vector<32x32xf32>
    %80 = vector.broadcast %74 : vector<1x32xf32> to vector<32x32xf32>
    %81 = arith.mulf %79, %80 : vector<32x32xf32>
    %82 = vector.broadcast %77 : vector<1x32xf32> to vector<32x32xf32>
    %83 = arith.addf %81, %82 : vector<32x32xf32>
    %cst_56 = arith.constant 0.000000e+00 : f32
    %84 = vector.broadcast %cst_56 : f32 to vector<32x32xf32>
    %85 = arith.maximumf %83, %84 : vector<32x32xf32>
    %86 = arith.truncf %85 : vector<32x32xf32> to vector<32x32xbf16>
    %c0_57 = arith.constant 0 : index
    %c0_58 = arith.constant 0 : index
    %c0_59 = arith.constant 0 : index
    %87 = vector.load %arg5[%c0_57, %c0_58, %c0_59] : memref<4x32x32xbf16, #tpu.memory_space<vmem>>, vector<1x32x32xbf16>
    %88 = vector.shape_cast %87 : vector<1x32x32xbf16> to vector<32x32xbf16>
    %89 = vector.shape_cast %86 : vector<32x32xbf16> to vector<1x32x32xbf16>
    tpu.vector_store %arg5[%c0_57, %c0_58, %c0_59], %89 {strides = array<i32>} : memref<4x32x32xbf16, #tpu.memory_space<vmem>>, vector<1x32x32xbf16>,
    %c1_60 = arith.constant 1 : index
    %c0_61 = arith.constant 0 : index
    %c0_62 = arith.constant 0 : index
    %90 = vector.load %arg6[%c1_60, %c0_61, %c0_62] : memref<4x32x32xf32, #tpu.memory_space<vmem>>, vector<1x32x32xf32>
    %91 = vector.shape_cast %90 : vector<1x32x32xf32> to vector<32x32xf32>
    %92 = vector.broadcast %74 : vector<1x32xf32> to vector<32x32xf32>
    %93 = arith.mulf %91, %92 : vector<32x32xf32>
    %94 = vector.broadcast %77 : vector<1x32xf32> to vector<32x32xf32>
    %95 = arith.addf %93, %94 : vector<32x32xf32>
    %cst_63 = arith.constant 0.000000e+00 : f32
    %96 = vector.broadcast %cst_63 : f32 to vector<32x32xf32>
    %97 = arith.maximumf %95, %96 : vector<32x32xf32>
    %98 = arith.truncf %97 : vector<32x32xf32> to vector<32x32xbf16>
    %c1_64 = arith.constant 1 : index
    %c0_65 = arith.constant 0 : index
    %c0_66 = arith.constant 0 : index
    %99 = vector.load %arg5[%c1_64, %c0_65, %c0_66] : memref<4x32x32xbf16, #tpu.memory_space<vmem>>, vector<1x32x32xbf16>
    %100 = vector.shape_cast %99 : vector<1x32x32xbf16> to vector<32x32xbf16>
    %101 = vector.shape_cast %98 : vector<32x32xbf16> to vector<1x32x32xbf16>
    tpu.vector_store %arg5[%c1_64, %c0_65, %c0_66], %101 {strides = array<i32>} : memref<4x32x32xbf16, #tpu.memory_space<vmem>>, vector<1x32x32xbf16>,
    %c2_67 = arith.constant 2 : index
    %c0_68 = arith.constant 0 : index
    %c0_69 = arith.constant 0 : index
    %102 = vector.load %arg6[%c2_67, %c0_68, %c0_69] : memref<4x32x32xf32, #tpu.memory_space<vmem>>, vector<1x32x32xf32>
    %103 = vector.shape_cast %102 : vector<1x32x32xf32> to vector<32x32xf32>
    %104 = vector.broadcast %74 : vector<1x32xf32> to vector<32x32xf32>
    %105 = arith.mulf %103, %104 : vector<32x32xf32>
    %106 = vector.broadcast %77 : vector<1x32xf32> to vector<32x32xf32>
    %107 = arith.addf %105, %106 : vector<32x32xf32>
    %cst_70 = arith.constant 0.000000e+00 : f32
    %108 = vector.broadcast %cst_70 : f32 to vector<32x32xf32>
    %109 = arith.maximumf %107, %108 : vector<32x32xf32>
    %110 = arith.truncf %109 : vector<32x32xf32> to vector<32x32xbf16>
    %c2_71 = arith.constant 2 : index
    %c0_72 = arith.constant 0 : index
    %c0_73 = arith.constant 0 : index
    %111 = vector.load %arg5[%c2_71, %c0_72, %c0_73] : memref<4x32x32xbf16, #tpu.memory_space<vmem>>, vector<1x32x32xbf16>
    %112 = vector.shape_cast %111 : vector<1x32x32xbf16> to vector<32x32xbf16>
    %113 = vector.shape_cast %110 : vector<32x32xbf16> to vector<1x32x32xbf16>
    tpu.vector_store %arg5[%c2_71, %c0_72, %c0_73], %113 {strides = array<i32>} : memref<4x32x32xbf16, #tpu.memory_space<vmem>>, vector<1x32x32xbf16>,
    %c3_74 = arith.constant 3 : index
    %c0_75 = arith.constant 0 : index
    %c0_76 = arith.constant 0 : index
    %114 = vector.load %arg6[%c3_74, %c0_75, %c0_76] : memref<4x32x32xf32, #tpu.memory_space<vmem>>, vector<1x32x32xf32>
    %115 = vector.shape_cast %114 : vector<1x32x32xf32> to vector<32x32xf32>
    %116 = vector.broadcast %74 : vector<1x32xf32> to vector<32x32xf32>
    %117 = arith.mulf %115, %116 : vector<32x32xf32>
    %118 = vector.broadcast %77 : vector<1x32xf32> to vector<32x32xf32>
    %119 = arith.addf %117, %118 : vector<32x32xf32>
    %cst_77 = arith.constant 0.000000e+00 : f32
    %120 = vector.broadcast %cst_77 : f32 to vector<32x32xf32>
    %121 = arith.maximumf %119, %120 : vector<32x32xf32>
    %122 = arith.truncf %121 : vector<32x32xf32> to vector<32x32xbf16>
    %c3_78 = arith.constant 3 : index
    %c0_79 = arith.constant 0 : index
    %c0_80 = arith.constant 0 : index
    %123 = vector.load %arg5[%c3_78, %c0_79, %c0_80] : memref<4x32x32xbf16, #tpu.memory_space<vmem>>, vector<1x32x32xbf16>
    %124 = vector.shape_cast %123 : vector<1x32x32xbf16> to vector<32x32xbf16>
    %125 = vector.shape_cast %122 : vector<32x32xbf16> to vector<1x32x32xbf16>
    tpu.vector_store %arg5[%c3_78, %c0_79, %c0_80], %125 {strides = array<i32>} : memref<4x32x32xbf16, #tpu.memory_space<vmem>>, vector<1x32x32xbf16>,
    return
  }
  func.func @transform_0(%arg0: i32) -> (i32, i32, i32) {
    %c0_i32 = arith.constant 0 : i32
    %c0_i32_0 = arith.constant 0 : i32
    %c0_i32_1 = arith.constant 0 : i32
    %c0_i32_2 = arith.constant 0 : i32
    return %c0_i32, %c0_i32_0, %c0_i32_1 : i32, i32, i32
  }
  func.func @transform_1(%arg0: i32) -> (i32, i32, i32) {
    %c0_i32 = arith.constant 0 : i32
    %c0_i32_0 = arith.constant 0 : i32
    %c0_i32_1 = arith.constant 0 : i32
    %c0_i32_2 = arith.constant 0 : i32
    return %c0_i32, %c0_i32_0, %c0_i32_1 : i32, i32, i32
  }
  func.func @transform_2(%arg0: i32) -> (i32, i32) {
    %c0_i32 = arith.constant 0 : i32
    %c0_i32_0 = arith.constant 0 : i32
    %c0_i32_1 = arith.constant 0 : i32
    return %c0_i32, %c0_i32_0 : i32, i32
  }
  func.func @transform_3(%arg0: i32) -> (i32, i32) {
    %c0_i32 = arith.constant 0 : i32
    %c0_i32_0 = arith.constant 0 : i32
    %c0_i32_1 = arith.constant 0 : i32
    return %c0_i32, %c0_i32_0 : i32, i32
  }
  func.func @transform_4(%arg0: i32) -> (i32, i32, i32) {
    %c0_i32 = arith.constant 0 : i32
    %c0_i32_0 = arith.constant 0 : i32
    %c0_i32_1 = arith.constant 0 : i32
    %c0_i32_2 = arith.constant 0 : i32
    return %c0_i32, %c0_i32_0, %c0_i32_1 : i32, i32, i32
  }
}

module attributes {stable_mosaic.version = 11 : i64} {
  func.func @_upconv_bn_relu_kernel(%arg0: i32, %arg1: memref<4x128x128xbf16, #tpu.memory_space<vmem>>, %arg2: memref<4x128x16xbf16, #tpu.memory_space<vmem>>, %arg3: memref<1x16xf32, #tpu.memory_space<vmem>>, %arg4: memref<1x16xf32, #tpu.memory_space<vmem>>, %arg5: memref<4x128x16xbf16, #tpu.memory_space<vmem>>, %arg6: memref<4x128x16xf32, #tpu.memory_space<vmem>>) attributes {dimension_semantics = [#tpu.dimension_semantics<arbitrary>], iteration_bounds = array<i64: 1>, scalar_prefetch = 0 : i64, scratch_operands = 1 : i64, tpu.core_type = #tpu.core_type<tc>, window_params = [{pipeline_mode = #tpu.pipeline_mode<synchronous>, transform_indices = @transform_0, window_bounds = array<i64: 4, 128, 128>}, {pipeline_mode = #tpu.pipeline_mode<synchronous>, transform_indices = @transform_1, window_bounds = array<i64: 4, 128, 16>}, {pipeline_mode = #tpu.pipeline_mode<synchronous>, transform_indices = @transform_2, window_bounds = array<i64: 1, 16>}, {pipeline_mode = #tpu.pipeline_mode<synchronous>, transform_indices = @transform_3, window_bounds = array<i64: 1, 16>}, {pipeline_mode = #tpu.pipeline_mode<synchronous>, transform_indices = @transform_4, window_bounds = array<i64: 4, 128, 16>}]} {
    %cst = arith.constant 0.000000e+00 : f32
    %0 = vector.broadcast %cst : f32 to vector<1x16xf32>
    %cst_0 = arith.constant 0.000000e+00 : f32
    %1 = vector.broadcast %cst_0 : f32 to vector<1x16xf32>
    %c0 = arith.constant 0 : index
    %c0_1 = arith.constant 0 : index
    %c0_2 = arith.constant 0 : index
    %2 = vector.load %arg1[%c0, %c0_1, %c0_2] : memref<4x128x128xbf16, #tpu.memory_space<vmem>>, vector<1x128x128xbf16>
    %3 = vector.shape_cast %2 : vector<1x128x128xbf16> to vector<128x128xbf16>
    %c0_3 = arith.constant 0 : index
    %c0_4 = arith.constant 0 : index
    %c0_5 = arith.constant 0 : index
    %4 = vector.load %arg2[%c0_3, %c0_4, %c0_5] : memref<4x128x16xbf16, #tpu.memory_space<vmem>>, vector<1x128x16xbf16>
    %5 = vector.shape_cast %4 : vector<1x128x16xbf16> to vector<128x16xbf16>
    %cst_6 = arith.constant dense<0.000000e+00> : vector<128x16xf32>
    %6 = tpu.matmul %3, %5, %cst_6 {dimension_numbers = #tpu.dot_dimension_numbers<[1], [0], [0], [1], [0, 0, 1, 1], [], []>} : vector<128x128xbf16>, vector<128x16xbf16>, vector<128x16xf32> -> vector<128x16xf32>
    %c0_7 = arith.constant 0 : index
    %c0_8 = arith.constant 0 : index
    %c0_9 = arith.constant 0 : index
    %7 = vector.load %arg6[%c0_7, %c0_8, %c0_9] : memref<4x128x16xf32, #tpu.memory_space<vmem>>, vector<1x128x16xf32>
    %8 = vector.shape_cast %7 : vector<1x128x16xf32> to vector<128x16xf32>
    %9 = vector.shape_cast %6 : vector<128x16xf32> to vector<1x128x16xf32>
    tpu.vector_store %arg6[%c0_7, %c0_8, %c0_9], %9 {strides = array<i32>} : memref<4x128x16xf32, #tpu.memory_space<vmem>>, vector<1x128x16xf32>,
    %cst_10 = arith.constant dense<0.000000e+00> : vector<16xf32>
    %10 = vector.multi_reduction <add>, %6, %cst_10 [0] : vector<128x16xf32> to vector<16xf32>
    %11 = vector.shape_cast %10 : vector<16xf32> to vector<1x16xf32>
    %12 = arith.addf %0, %11 : vector<1x16xf32>
    %13 = arith.mulf %6, %6 : vector<128x16xf32>
    %cst_11 = arith.constant dense<0.000000e+00> : vector<16xf32>
    %14 = vector.multi_reduction <add>, %13, %cst_11 [0] : vector<128x16xf32> to vector<16xf32>
    %15 = vector.shape_cast %14 : vector<16xf32> to vector<1x16xf32>
    %16 = arith.addf %1, %15 : vector<1x16xf32>
    %c1 = arith.constant 1 : index
    %c0_12 = arith.constant 0 : index
    %c0_13 = arith.constant 0 : index
    %17 = vector.load %arg1[%c1, %c0_12, %c0_13] : memref<4x128x128xbf16, #tpu.memory_space<vmem>>, vector<1x128x128xbf16>
    %18 = vector.shape_cast %17 : vector<1x128x128xbf16> to vector<128x128xbf16>
    %c1_14 = arith.constant 1 : index
    %c0_15 = arith.constant 0 : index
    %c0_16 = arith.constant 0 : index
    %19 = vector.load %arg2[%c1_14, %c0_15, %c0_16] : memref<4x128x16xbf16, #tpu.memory_space<vmem>>, vector<1x128x16xbf16>
    %20 = vector.shape_cast %19 : vector<1x128x16xbf16> to vector<128x16xbf16>
    %cst_17 = arith.constant dense<0.000000e+00> : vector<128x16xf32>
    %21 = tpu.matmul %18, %20, %cst_17 {dimension_numbers = #tpu.dot_dimension_numbers<[1], [0], [0], [1], [0, 0, 1, 1], [], []>} : vector<128x128xbf16>, vector<128x16xbf16>, vector<128x16xf32> -> vector<128x16xf32>
    %c1_18 = arith.constant 1 : index
    %c0_19 = arith.constant 0 : index
    %c0_20 = arith.constant 0 : index
    %22 = vector.load %arg6[%c1_18, %c0_19, %c0_20] : memref<4x128x16xf32, #tpu.memory_space<vmem>>, vector<1x128x16xf32>
    %23 = vector.shape_cast %22 : vector<1x128x16xf32> to vector<128x16xf32>
    %24 = vector.shape_cast %21 : vector<128x16xf32> to vector<1x128x16xf32>
    tpu.vector_store %arg6[%c1_18, %c0_19, %c0_20], %24 {strides = array<i32>} : memref<4x128x16xf32, #tpu.memory_space<vmem>>, vector<1x128x16xf32>,
    %cst_21 = arith.constant dense<0.000000e+00> : vector<16xf32>
    %25 = vector.multi_reduction <add>, %21, %cst_21 [0] : vector<128x16xf32> to vector<16xf32>
    %26 = vector.shape_cast %25 : vector<16xf32> to vector<1x16xf32>
    %27 = arith.addf %12, %26 : vector<1x16xf32>
    %28 = arith.mulf %21, %21 : vector<128x16xf32>
    %cst_22 = arith.constant dense<0.000000e+00> : vector<16xf32>
    %29 = vector.multi_reduction <add>, %28, %cst_22 [0] : vector<128x16xf32> to vector<16xf32>
    %30 = vector.shape_cast %29 : vector<16xf32> to vector<1x16xf32>
    %31 = arith.addf %16, %30 : vector<1x16xf32>
    %c2 = arith.constant 2 : index
    %c0_23 = arith.constant 0 : index
    %c0_24 = arith.constant 0 : index
    %32 = vector.load %arg1[%c2, %c0_23, %c0_24] : memref<4x128x128xbf16, #tpu.memory_space<vmem>>, vector<1x128x128xbf16>
    %33 = vector.shape_cast %32 : vector<1x128x128xbf16> to vector<128x128xbf16>
    %c2_25 = arith.constant 2 : index
    %c0_26 = arith.constant 0 : index
    %c0_27 = arith.constant 0 : index
    %34 = vector.load %arg2[%c2_25, %c0_26, %c0_27] : memref<4x128x16xbf16, #tpu.memory_space<vmem>>, vector<1x128x16xbf16>
    %35 = vector.shape_cast %34 : vector<1x128x16xbf16> to vector<128x16xbf16>
    %cst_28 = arith.constant dense<0.000000e+00> : vector<128x16xf32>
    %36 = tpu.matmul %33, %35, %cst_28 {dimension_numbers = #tpu.dot_dimension_numbers<[1], [0], [0], [1], [0, 0, 1, 1], [], []>} : vector<128x128xbf16>, vector<128x16xbf16>, vector<128x16xf32> -> vector<128x16xf32>
    %c2_29 = arith.constant 2 : index
    %c0_30 = arith.constant 0 : index
    %c0_31 = arith.constant 0 : index
    %37 = vector.load %arg6[%c2_29, %c0_30, %c0_31] : memref<4x128x16xf32, #tpu.memory_space<vmem>>, vector<1x128x16xf32>
    %38 = vector.shape_cast %37 : vector<1x128x16xf32> to vector<128x16xf32>
    %39 = vector.shape_cast %36 : vector<128x16xf32> to vector<1x128x16xf32>
    tpu.vector_store %arg6[%c2_29, %c0_30, %c0_31], %39 {strides = array<i32>} : memref<4x128x16xf32, #tpu.memory_space<vmem>>, vector<1x128x16xf32>,
    %cst_32 = arith.constant dense<0.000000e+00> : vector<16xf32>
    %40 = vector.multi_reduction <add>, %36, %cst_32 [0] : vector<128x16xf32> to vector<16xf32>
    %41 = vector.shape_cast %40 : vector<16xf32> to vector<1x16xf32>
    %42 = arith.addf %27, %41 : vector<1x16xf32>
    %43 = arith.mulf %36, %36 : vector<128x16xf32>
    %cst_33 = arith.constant dense<0.000000e+00> : vector<16xf32>
    %44 = vector.multi_reduction <add>, %43, %cst_33 [0] : vector<128x16xf32> to vector<16xf32>
    %45 = vector.shape_cast %44 : vector<16xf32> to vector<1x16xf32>
    %46 = arith.addf %31, %45 : vector<1x16xf32>
    %c3 = arith.constant 3 : index
    %c0_34 = arith.constant 0 : index
    %c0_35 = arith.constant 0 : index
    %47 = vector.load %arg1[%c3, %c0_34, %c0_35] : memref<4x128x128xbf16, #tpu.memory_space<vmem>>, vector<1x128x128xbf16>
    %48 = vector.shape_cast %47 : vector<1x128x128xbf16> to vector<128x128xbf16>
    %c3_36 = arith.constant 3 : index
    %c0_37 = arith.constant 0 : index
    %c0_38 = arith.constant 0 : index
    %49 = vector.load %arg2[%c3_36, %c0_37, %c0_38] : memref<4x128x16xbf16, #tpu.memory_space<vmem>>, vector<1x128x16xbf16>
    %50 = vector.shape_cast %49 : vector<1x128x16xbf16> to vector<128x16xbf16>
    %cst_39 = arith.constant dense<0.000000e+00> : vector<128x16xf32>
    %51 = tpu.matmul %48, %50, %cst_39 {dimension_numbers = #tpu.dot_dimension_numbers<[1], [0], [0], [1], [0, 0, 1, 1], [], []>} : vector<128x128xbf16>, vector<128x16xbf16>, vector<128x16xf32> -> vector<128x16xf32>
    %c3_40 = arith.constant 3 : index
    %c0_41 = arith.constant 0 : index
    %c0_42 = arith.constant 0 : index
    %52 = vector.load %arg6[%c3_40, %c0_41, %c0_42] : memref<4x128x16xf32, #tpu.memory_space<vmem>>, vector<1x128x16xf32>
    %53 = vector.shape_cast %52 : vector<1x128x16xf32> to vector<128x16xf32>
    %54 = vector.shape_cast %51 : vector<128x16xf32> to vector<1x128x16xf32>
    tpu.vector_store %arg6[%c3_40, %c0_41, %c0_42], %54 {strides = array<i32>} : memref<4x128x16xf32, #tpu.memory_space<vmem>>, vector<1x128x16xf32>,
    %cst_43 = arith.constant dense<0.000000e+00> : vector<16xf32>
    %55 = vector.multi_reduction <add>, %51, %cst_43 [0] : vector<128x16xf32> to vector<16xf32>
    %56 = vector.shape_cast %55 : vector<16xf32> to vector<1x16xf32>
    %57 = arith.addf %42, %56 : vector<1x16xf32>
    %58 = arith.mulf %51, %51 : vector<128x16xf32>
    %cst_44 = arith.constant dense<0.000000e+00> : vector<16xf32>
    %59 = vector.multi_reduction <add>, %58, %cst_44 [0] : vector<128x16xf32> to vector<16xf32>
    %60 = vector.shape_cast %59 : vector<16xf32> to vector<1x16xf32>
    %61 = arith.addf %46, %60 : vector<1x16xf32>
    %cst_45 = arith.constant 0.001953125 : f32
    %62 = vector.broadcast %cst_45 : f32 to vector<1x16xf32>
    %63 = arith.mulf %57, %62 : vector<1x16xf32>
    %cst_46 = arith.constant 0.001953125 : f32
    %64 = vector.broadcast %cst_46 : f32 to vector<1x16xf32>
    %65 = arith.mulf %61, %64 : vector<1x16xf32>
    %66 = arith.mulf %63, %63 : vector<1x16xf32>
    %67 = arith.subf %65, %66 : vector<1x16xf32>
    %cst_47 = arith.constant 0.000000e+00 : f32
    %68 = vector.broadcast %cst_47 : f32 to vector<1x16xf32>
    %69 = arith.maximumf %67, %68 : vector<1x16xf32>
    %c0_48 = arith.constant 0 : index
    %c0_49 = arith.constant 0 : index
    %70 = vector.load %arg3[%c0_48, %c0_49] : memref<1x16xf32, #tpu.memory_space<vmem>>, vector<1x16xf32>
    %cst_50 = arith.constant 9.99999974E-6 : f32
    %71 = vector.broadcast %cst_50 : f32 to vector<1x16xf32>
    %72 = arith.addf %69, %71 : vector<1x16xf32>
    %73 = math.rsqrt %72 : vector<1x16xf32>
    %74 = arith.mulf %70, %73 : vector<1x16xf32>
    %c0_51 = arith.constant 0 : index
    %c0_52 = arith.constant 0 : index
    %75 = vector.load %arg4[%c0_51, %c0_52] : memref<1x16xf32, #tpu.memory_space<vmem>>, vector<1x16xf32>
    %76 = arith.mulf %63, %74 : vector<1x16xf32>
    %77 = arith.subf %75, %76 : vector<1x16xf32>
    %c0_53 = arith.constant 0 : index
    %c0_54 = arith.constant 0 : index
    %c0_55 = arith.constant 0 : index
    %78 = vector.load %arg6[%c0_53, %c0_54, %c0_55] : memref<4x128x16xf32, #tpu.memory_space<vmem>>, vector<1x128x16xf32>
    %79 = vector.shape_cast %78 : vector<1x128x16xf32> to vector<128x16xf32>
    %80 = vector.broadcast %74 : vector<1x16xf32> to vector<128x16xf32>
    %81 = arith.mulf %79, %80 : vector<128x16xf32>
    %82 = vector.broadcast %77 : vector<1x16xf32> to vector<128x16xf32>
    %83 = arith.addf %81, %82 : vector<128x16xf32>
    %cst_56 = arith.constant 0.000000e+00 : f32
    %84 = vector.broadcast %cst_56 : f32 to vector<128x16xf32>
    %85 = arith.maximumf %83, %84 : vector<128x16xf32>
    %86 = arith.truncf %85 : vector<128x16xf32> to vector<128x16xbf16>
    %c0_57 = arith.constant 0 : index
    %c0_58 = arith.constant 0 : index
    %c0_59 = arith.constant 0 : index
    %87 = vector.load %arg5[%c0_57, %c0_58, %c0_59] : memref<4x128x16xbf16, #tpu.memory_space<vmem>>, vector<1x128x16xbf16>
    %88 = vector.shape_cast %87 : vector<1x128x16xbf16> to vector<128x16xbf16>
    %89 = vector.shape_cast %86 : vector<128x16xbf16> to vector<1x128x16xbf16>
    tpu.vector_store %arg5[%c0_57, %c0_58, %c0_59], %89 {strides = array<i32>} : memref<4x128x16xbf16, #tpu.memory_space<vmem>>, vector<1x128x16xbf16>,
    %c1_60 = arith.constant 1 : index
    %c0_61 = arith.constant 0 : index
    %c0_62 = arith.constant 0 : index
    %90 = vector.load %arg6[%c1_60, %c0_61, %c0_62] : memref<4x128x16xf32, #tpu.memory_space<vmem>>, vector<1x128x16xf32>
    %91 = vector.shape_cast %90 : vector<1x128x16xf32> to vector<128x16xf32>
    %92 = vector.broadcast %74 : vector<1x16xf32> to vector<128x16xf32>
    %93 = arith.mulf %91, %92 : vector<128x16xf32>
    %94 = vector.broadcast %77 : vector<1x16xf32> to vector<128x16xf32>
    %95 = arith.addf %93, %94 : vector<128x16xf32>
    %cst_63 = arith.constant 0.000000e+00 : f32
    %96 = vector.broadcast %cst_63 : f32 to vector<128x16xf32>
    %97 = arith.maximumf %95, %96 : vector<128x16xf32>
    %98 = arith.truncf %97 : vector<128x16xf32> to vector<128x16xbf16>
    %c1_64 = arith.constant 1 : index
    %c0_65 = arith.constant 0 : index
    %c0_66 = arith.constant 0 : index
    %99 = vector.load %arg5[%c1_64, %c0_65, %c0_66] : memref<4x128x16xbf16, #tpu.memory_space<vmem>>, vector<1x128x16xbf16>
    %100 = vector.shape_cast %99 : vector<1x128x16xbf16> to vector<128x16xbf16>
    %101 = vector.shape_cast %98 : vector<128x16xbf16> to vector<1x128x16xbf16>
    tpu.vector_store %arg5[%c1_64, %c0_65, %c0_66], %101 {strides = array<i32>} : memref<4x128x16xbf16, #tpu.memory_space<vmem>>, vector<1x128x16xbf16>,
    %c2_67 = arith.constant 2 : index
    %c0_68 = arith.constant 0 : index
    %c0_69 = arith.constant 0 : index
    %102 = vector.load %arg6[%c2_67, %c0_68, %c0_69] : memref<4x128x16xf32, #tpu.memory_space<vmem>>, vector<1x128x16xf32>
    %103 = vector.shape_cast %102 : vector<1x128x16xf32> to vector<128x16xf32>
    %104 = vector.broadcast %74 : vector<1x16xf32> to vector<128x16xf32>
    %105 = arith.mulf %103, %104 : vector<128x16xf32>
    %106 = vector.broadcast %77 : vector<1x16xf32> to vector<128x16xf32>
    %107 = arith.addf %105, %106 : vector<128x16xf32>
    %cst_70 = arith.constant 0.000000e+00 : f32
    %108 = vector.broadcast %cst_70 : f32 to vector<128x16xf32>
    %109 = arith.maximumf %107, %108 : vector<128x16xf32>
    %110 = arith.truncf %109 : vector<128x16xf32> to vector<128x16xbf16>
    %c2_71 = arith.constant 2 : index
    %c0_72 = arith.constant 0 : index
    %c0_73 = arith.constant 0 : index
    %111 = vector.load %arg5[%c2_71, %c0_72, %c0_73] : memref<4x128x16xbf16, #tpu.memory_space<vmem>>, vector<1x128x16xbf16>
    %112 = vector.shape_cast %111 : vector<1x128x16xbf16> to vector<128x16xbf16>
    %113 = vector.shape_cast %110 : vector<128x16xbf16> to vector<1x128x16xbf16>
    tpu.vector_store %arg5[%c2_71, %c0_72, %c0_73], %113 {strides = array<i32>} : memref<4x128x16xbf16, #tpu.memory_space<vmem>>, vector<1x128x16xbf16>,
    %c3_74 = arith.constant 3 : index
    %c0_75 = arith.constant 0 : index
    %c0_76 = arith.constant 0 : index
    %114 = vector.load %arg6[%c3_74, %c0_75, %c0_76] : memref<4x128x16xf32, #tpu.memory_space<vmem>>, vector<1x128x16xf32>
    %115 = vector.shape_cast %114 : vector<1x128x16xf32> to vector<128x16xf32>
    %116 = vector.broadcast %74 : vector<1x16xf32> to vector<128x16xf32>
    %117 = arith.mulf %115, %116 : vector<128x16xf32>
    %118 = vector.broadcast %77 : vector<1x16xf32> to vector<128x16xf32>
    %119 = arith.addf %117, %118 : vector<128x16xf32>
    %cst_77 = arith.constant 0.000000e+00 : f32
    %120 = vector.broadcast %cst_77 : f32 to vector<128x16xf32>
    %121 = arith.maximumf %119, %120 : vector<128x16xf32>
    %122 = arith.truncf %121 : vector<128x16xf32> to vector<128x16xbf16>
    %c3_78 = arith.constant 3 : index
    %c0_79 = arith.constant 0 : index
    %c0_80 = arith.constant 0 : index
    %123 = vector.load %arg5[%c3_78, %c0_79, %c0_80] : memref<4x128x16xbf16, #tpu.memory_space<vmem>>, vector<1x128x16xbf16>
    %124 = vector.shape_cast %123 : vector<1x128x16xbf16> to vector<128x16xbf16>
    %125 = vector.shape_cast %122 : vector<128x16xbf16> to vector<1x128x16xbf16>
    tpu.vector_store %arg5[%c3_78, %c0_79, %c0_80], %125 {strides = array<i32>} : memref<4x128x16xbf16, #tpu.memory_space<vmem>>, vector<1x128x16xbf16>,
    return
  }
  func.func @transform_0(%arg0: i32) -> (i32, i32, i32) {
    %c0_i32 = arith.constant 0 : i32
    %c0_i32_0 = arith.constant 0 : i32
    %c0_i32_1 = arith.constant 0 : i32
    %c0_i32_2 = arith.constant 0 : i32
    return %c0_i32, %c0_i32_0, %c0_i32_1 : i32, i32, i32
  }
  func.func @transform_1(%arg0: i32) -> (i32, i32, i32) {
    %c0_i32 = arith.constant 0 : i32
    %c0_i32_0 = arith.constant 0 : i32
    %c0_i32_1 = arith.constant 0 : i32
    %c0_i32_2 = arith.constant 0 : i32
    return %c0_i32, %c0_i32_0, %c0_i32_1 : i32, i32, i32
  }
  func.func @transform_2(%arg0: i32) -> (i32, i32) {
    %c0_i32 = arith.constant 0 : i32
    %c0_i32_0 = arith.constant 0 : i32
    %c0_i32_1 = arith.constant 0 : i32
    return %c0_i32, %c0_i32_0 : i32, i32
  }
  func.func @transform_3(%arg0: i32) -> (i32, i32) {
    %c0_i32 = arith.constant 0 : i32
    %c0_i32_0 = arith.constant 0 : i32
    %c0_i32_1 = arith.constant 0 : i32
    return %c0_i32, %c0_i32_0 : i32, i32
  }
  func.func @transform_4(%arg0: i32) -> (i32, i32, i32) {
    %c0_i32 = arith.constant 0 : i32
    %c0_i32_0 = arith.constant 0 : i32
    %c0_i32_1 = arith.constant 0 : i32
    %c0_i32_2 = arith.constant 0 : i32
    return %c0_i32, %c0_i32_0, %c0_i32_1 : i32, i32, i32
  }
}

module attributes {stable_mosaic.version = 11 : i64} {
  func.func @_upconv_bias_tanh_kernel(%arg0: i32, %arg1: memref<4x392x64xbf16, #tpu.memory_space<vmem>>, %arg2: memref<4x64x3xbf16, #tpu.memory_space<vmem>>, %arg3: memref<1x3xf32, #tpu.memory_space<vmem>>, %arg4: memref<4x392x3xf32, #tpu.memory_space<vmem>>) attributes {dimension_semantics = [#tpu.dimension_semantics<arbitrary>], iteration_bounds = array<i64: 1>, scalar_prefetch = 0 : i64, scratch_operands = 0 : i64, tpu.core_type = #tpu.core_type<tc>, window_params = [{pipeline_mode = #tpu.pipeline_mode<synchronous>, transform_indices = @transform_0, window_bounds = array<i64: 4, 392, 64>}, {pipeline_mode = #tpu.pipeline_mode<synchronous>, transform_indices = @transform_1, window_bounds = array<i64: 4, 64, 3>}, {pipeline_mode = #tpu.pipeline_mode<synchronous>, transform_indices = @transform_2, window_bounds = array<i64: 1, 3>}, {pipeline_mode = #tpu.pipeline_mode<synchronous>, transform_indices = @transform_3, window_bounds = array<i64: 4, 392, 3>}]} {
    %c0 = arith.constant 0 : index
    %c0_0 = arith.constant 0 : index
    %c0_1 = arith.constant 0 : index
    %0 = vector.load %arg1[%c0, %c0_0, %c0_1] : memref<4x392x64xbf16, #tpu.memory_space<vmem>>, vector<1x392x64xbf16>
    %1 = vector.shape_cast %0 : vector<1x392x64xbf16> to vector<392x64xbf16>
    %c0_2 = arith.constant 0 : index
    %c0_3 = arith.constant 0 : index
    %c0_4 = arith.constant 0 : index
    %2 = vector.load %arg2[%c0_2, %c0_3, %c0_4] : memref<4x64x3xbf16, #tpu.memory_space<vmem>>, vector<1x64x3xbf16>
    %3 = vector.shape_cast %2 : vector<1x64x3xbf16> to vector<64x3xbf16>
    %cst = arith.constant dense<0.000000e+00> : vector<392x3xf32>
    %4 = tpu.matmul %1, %3, %cst {dimension_numbers = #tpu.dot_dimension_numbers<[1], [0], [0], [1], [0, 0, 1, 1], [], []>} : vector<392x64xbf16>, vector<64x3xbf16>, vector<392x3xf32> -> vector<392x3xf32>
    %c0_5 = arith.constant 0 : index
    %c0_6 = arith.constant 0 : index
    %5 = vector.load %arg3[%c0_5, %c0_6] : memref<1x3xf32, #tpu.memory_space<vmem>>, vector<1x3xf32>
    %6 = vector.broadcast %5 : vector<1x3xf32> to vector<392x3xf32>
    %7 = arith.addf %4, %6 : vector<392x3xf32>
    %8 = math.tanh %7 : vector<392x3xf32>
    %c0_7 = arith.constant 0 : index
    %c0_8 = arith.constant 0 : index
    %c0_9 = arith.constant 0 : index
    %9 = vector.load %arg4[%c0_7, %c0_8, %c0_9] : memref<4x392x3xf32, #tpu.memory_space<vmem>>, vector<1x392x3xf32>
    %10 = vector.shape_cast %9 : vector<1x392x3xf32> to vector<392x3xf32>
    %11 = vector.shape_cast %8 : vector<392x3xf32> to vector<1x392x3xf32>
    tpu.vector_store %arg4[%c0_7, %c0_8, %c0_9], %11 {strides = array<i32>} : memref<4x392x3xf32, #tpu.memory_space<vmem>>, vector<1x392x3xf32>,
    %c1 = arith.constant 1 : index
    %c0_10 = arith.constant 0 : index
    %c0_11 = arith.constant 0 : index
    %12 = vector.load %arg1[%c1, %c0_10, %c0_11] : memref<4x392x64xbf16, #tpu.memory_space<vmem>>, vector<1x392x64xbf16>
    %13 = vector.shape_cast %12 : vector<1x392x64xbf16> to vector<392x64xbf16>
    %c1_12 = arith.constant 1 : index
    %c0_13 = arith.constant 0 : index
    %c0_14 = arith.constant 0 : index
    %14 = vector.load %arg2[%c1_12, %c0_13, %c0_14] : memref<4x64x3xbf16, #tpu.memory_space<vmem>>, vector<1x64x3xbf16>
    %15 = vector.shape_cast %14 : vector<1x64x3xbf16> to vector<64x3xbf16>
    %cst_15 = arith.constant dense<0.000000e+00> : vector<392x3xf32>
    %16 = tpu.matmul %13, %15, %cst_15 {dimension_numbers = #tpu.dot_dimension_numbers<[1], [0], [0], [1], [0, 0, 1, 1], [], []>} : vector<392x64xbf16>, vector<64x3xbf16>, vector<392x3xf32> -> vector<392x3xf32>
    %c0_16 = arith.constant 0 : index
    %c0_17 = arith.constant 0 : index
    %17 = vector.load %arg3[%c0_16, %c0_17] : memref<1x3xf32, #tpu.memory_space<vmem>>, vector<1x3xf32>
    %18 = vector.broadcast %17 : vector<1x3xf32> to vector<392x3xf32>
    %19 = arith.addf %16, %18 : vector<392x3xf32>
    %20 = math.tanh %19 : vector<392x3xf32>
    %c1_18 = arith.constant 1 : index
    %c0_19 = arith.constant 0 : index
    %c0_20 = arith.constant 0 : index
    %21 = vector.load %arg4[%c1_18, %c0_19, %c0_20] : memref<4x392x3xf32, #tpu.memory_space<vmem>>, vector<1x392x3xf32>
    %22 = vector.shape_cast %21 : vector<1x392x3xf32> to vector<392x3xf32>
    %23 = vector.shape_cast %20 : vector<392x3xf32> to vector<1x392x3xf32>
    tpu.vector_store %arg4[%c1_18, %c0_19, %c0_20], %23 {strides = array<i32>} : memref<4x392x3xf32, #tpu.memory_space<vmem>>, vector<1x392x3xf32>,
    %c2 = arith.constant 2 : index
    %c0_21 = arith.constant 0 : index
    %c0_22 = arith.constant 0 : index
    %24 = vector.load %arg1[%c2, %c0_21, %c0_22] : memref<4x392x64xbf16, #tpu.memory_space<vmem>>, vector<1x392x64xbf16>
    %25 = vector.shape_cast %24 : vector<1x392x64xbf16> to vector<392x64xbf16>
    %c2_23 = arith.constant 2 : index
    %c0_24 = arith.constant 0 : index
    %c0_25 = arith.constant 0 : index
    %26 = vector.load %arg2[%c2_23, %c0_24, %c0_25] : memref<4x64x3xbf16, #tpu.memory_space<vmem>>, vector<1x64x3xbf16>
    %27 = vector.shape_cast %26 : vector<1x64x3xbf16> to vector<64x3xbf16>
    %cst_26 = arith.constant dense<0.000000e+00> : vector<392x3xf32>
    %28 = tpu.matmul %25, %27, %cst_26 {dimension_numbers = #tpu.dot_dimension_numbers<[1], [0], [0], [1], [0, 0, 1, 1], [], []>} : vector<392x64xbf16>, vector<64x3xbf16>, vector<392x3xf32> -> vector<392x3xf32>
    %c0_27 = arith.constant 0 : index
    %c0_28 = arith.constant 0 : index
    %29 = vector.load %arg3[%c0_27, %c0_28] : memref<1x3xf32, #tpu.memory_space<vmem>>, vector<1x3xf32>
    %30 = vector.broadcast %29 : vector<1x3xf32> to vector<392x3xf32>
    %31 = arith.addf %28, %30 : vector<392x3xf32>
    %32 = math.tanh %31 : vector<392x3xf32>
    %c2_29 = arith.constant 2 : index
    %c0_30 = arith.constant 0 : index
    %c0_31 = arith.constant 0 : index
    %33 = vector.load %arg4[%c2_29, %c0_30, %c0_31] : memref<4x392x3xf32, #tpu.memory_space<vmem>>, vector<1x392x3xf32>
    %34 = vector.shape_cast %33 : vector<1x392x3xf32> to vector<392x3xf32>
    %35 = vector.shape_cast %32 : vector<392x3xf32> to vector<1x392x3xf32>
    tpu.vector_store %arg4[%c2_29, %c0_30, %c0_31], %35 {strides = array<i32>} : memref<4x392x3xf32, #tpu.memory_space<vmem>>, vector<1x392x3xf32>,
    %c3 = arith.constant 3 : index
    %c0_32 = arith.constant 0 : index
    %c0_33 = arith.constant 0 : index
    %36 = vector.load %arg1[%c3, %c0_32, %c0_33] : memref<4x392x64xbf16, #tpu.memory_space<vmem>>, vector<1x392x64xbf16>
    %37 = vector.shape_cast %36 : vector<1x392x64xbf16> to vector<392x64xbf16>
    %c3_34 = arith.constant 3 : index
    %c0_35 = arith.constant 0 : index
    %c0_36 = arith.constant 0 : index
    %38 = vector.load %arg2[%c3_34, %c0_35, %c0_36] : memref<4x64x3xbf16, #tpu.memory_space<vmem>>, vector<1x64x3xbf16>
    %39 = vector.shape_cast %38 : vector<1x64x3xbf16> to vector<64x3xbf16>
    %cst_37 = arith.constant dense<0.000000e+00> : vector<392x3xf32>
    %40 = tpu.matmul %37, %39, %cst_37 {dimension_numbers = #tpu.dot_dimension_numbers<[1], [0], [0], [1], [0, 0, 1, 1], [], []>} : vector<392x64xbf16>, vector<64x3xbf16>, vector<392x3xf32> -> vector<392x3xf32>
    %c0_38 = arith.constant 0 : index
    %c0_39 = arith.constant 0 : index
    %41 = vector.load %arg3[%c0_38, %c0_39] : memref<1x3xf32, #tpu.memory_space<vmem>>, vector<1x3xf32>
    %42 = vector.broadcast %41 : vector<1x3xf32> to vector<392x3xf32>
    %43 = arith.addf %40, %42 : vector<392x3xf32>
    %44 = math.tanh %43 : vector<392x3xf32>
    %c3_40 = arith.constant 3 : index
    %c0_41 = arith.constant 0 : index
    %c0_42 = arith.constant 0 : index
    %45 = vector.load %arg4[%c3_40, %c0_41, %c0_42] : memref<4x392x3xf32, #tpu.memory_space<vmem>>, vector<1x392x3xf32>
    %46 = vector.shape_cast %45 : vector<1x392x3xf32> to vector<392x3xf32>
    %47 = vector.shape_cast %44 : vector<392x3xf32> to vector<1x392x3xf32>
    tpu.vector_store %arg4[%c3_40, %c0_41, %c0_42], %47 {strides = array<i32>} : memref<4x392x3xf32, #tpu.memory_space<vmem>>, vector<1x392x3xf32>,
    return
  }
  func.func @transform_0(%arg0: i32) -> (i32, i32, i32) {
    %c0_i32 = arith.constant 0 : i32
    %c0_i32_0 = arith.constant 0 : i32
    %c0_i32_1 = arith.constant 0 : i32
    %c0_i32_2 = arith.constant 0 : i32
    return %c0_i32, %c0_i32_0, %c0_i32_1 : i32, i32, i32
  }
  func.func @transform_1(%arg0: i32) -> (i32, i32, i32) {
    %c0_i32 = arith.constant 0 : i32
    %c0_i32_0 = arith.constant 0 : i32
    %c0_i32_1 = arith.constant 0 : i32
    %c0_i32_2 = arith.constant 0 : i32
    return %c0_i32, %c0_i32_0, %c0_i32_1 : i32, i32, i32
  }
  func.func @transform_2(%arg0: i32) -> (i32, i32) {
    %c0_i32 = arith.constant 0 : i32
    %c0_i32_0 = arith.constant 0 : i32
    %c0_i32_1 = arith.constant 0 : i32
    return %c0_i32, %c0_i32_0 : i32, i32
  }
  func.func @transform_3(%arg0: i32) -> (i32, i32, i32) {
    %c0_i32 = arith.constant 0 : i32
    %c0_i32_0 = arith.constant 0 : i32
    %c0_i32_1 = arith.constant 0 : i32
    %c0_i32_2 = arith.constant 0 : i32
    return %c0_i32, %c0_i32_0, %c0_i32_1 : i32, i32, i32
  }
}

</mosaic_0001>

<llo_original>
// kernel: cond_conv_generator_forward.4
$region0: #{cond_conv_generator_forward.4}
  #allocation0 [shape = 'u32[]', space=smem, size = 0x4, offset = 0x4, fixed_abs, tag = 'smem constant byte address 0x4 - core index']
  #allocation1 [shape = 'u32[144,128]{1,0:T(1,128)}', space=vmem, size = 0x12000, scoped, tag = 'internal scratch']
  %s0 = inlined_call_operand.vmem [shape: bf16[2,12], index: 0, kind: input, shape index: {}]
  %s1 = inlined_call_operand.hbm [shape: bf16[12,1024], index: 1, kind: input, shape index: {}]
  %s2 = inlined_call_operand.hbm [shape: f32[1,64], index: 2, kind: input, shape index: {}]
  %s3 = inlined_call_operand.hbm [shape: f32[1,64], index: 3, kind: input, shape index: {}]
  %s4 = inlined_call_operand.vmem [shape: bf16[2,1024], index: 4, kind: output, shape index: {}]
  %s5 = sld [smem:[#allocation0]]
  $region38: #{cond_conv_generator_forward.4} parent=0
    _
  %s7 = ssub.s32 1, %s5
  %s8 = scalar_select 0, %s7, %s5
  $region1: #{cond_conv_generator_forward.4} parent=0
    #allocation2 [shape = 'u8[32768]{0}', space=vmem, size = 0x8000, scoped, tag = 'input window, operand 1, single buffered']
    #allocation3 [shape = 's32[1]{0}', space=sflag, size = 0x4, scoped, tag = 'scoped memory for cond_conv_generator_forward.4']
    #allocation4 [shape = 'u8[512]{0}', space=vmem, size = 0x400, scoped, tag = 'input window, operand 2, single buffered']
    #allocation5 [shape = 's32[1]{0}', space=sflag, size = 0x4, scoped, tag = 'scoped memory for cond_conv_generator_forward.4']
    #allocation6 [shape = 'u8[512]{0}', space=vmem, size = 0x400, scoped, tag = 'input window, operand 3, single buffered']
    %9 = vsyncpa [#allocation3], 0
    %10 = vsyncpa [#allocation5], 0
    // Predicated region
    $region2: #{cond_conv_generator_forward.4} parent=1 // pred_check
      _
    $region3: #{cond_conv_generator_forward.4} parent=1 // pred_check_branch
      %12 = sbr.rel (0) target = $region5
    $region4: #{cond_conv_generator_forward.4} parent=1 // pred_region
      _
    $region5: #{cond_conv_generator_forward.4} parent=1 // pred_fallthru
      _
    // Predicated region
    $region6: #{cond_conv_generator_forward.4} parent=1 // pred_check
      _
    $region7: #{cond_conv_generator_forward.4} parent=1 // pred_check_branch
      %14 = sbr.rel (0) target = $region9
    $region8: #{cond_conv_generator_forward.4} parent=1 // pred_region
      %s16 = ssub.s32 1024, 1024
      %17 = vsyncadd [#allocation3], %s16
      %s18 = sshll.u32 [#allocation2], 4
      %s19 = int_to_ptr.vmem [resolvable:$true] %s18
      %24 = dma.hbm_to_vmem [thread:$0]  %s1, 1024, %s19, [#allocation3], 512, 512, 32
    $region9: #{cond_conv_generator_forward.4} parent=1 // pred_fallthru
      _
    // Predicated region
    $region10: #{cond_conv_generator_forward.4} parent=1 // pred_check
      _
    $region11: #{cond_conv_generator_forward.4} parent=1 // pred_check_branch
      %26 = sbr.rel (0) target = $region13
    $region12: #{cond_conv_generator_forward.4} parent=1 // pred_region
      %s28 = ssub.s32 16, 16
      %29 = vsyncadd [#allocation5], %s28
      %s31 = sshll.u32 [#allocation4], 4
      %s32 = int_to_ptr.vmem [resolvable:$true] %s31
      %34 = dma.hbm_to_vmem [thread:$0]  %s2, 16, %s32, [#allocation5]
    $region13: #{cond_conv_generator_forward.4} parent=1 // pred_fallthru
      _
    // Predicated region
    $region14: #{cond_conv_generator_forward.4} parent=1 // pred_check
      _
    $region15: #{cond_conv_generator_forward.4} parent=1 // pred_check_branch
      %36 = sbr.rel (0) target = $region17
    $region16: #{cond_conv_generator_forward.4} parent=1 // pred_region
      %s38 = ssub.s32 16, 16
      %39 = vsyncadd [#allocation5], %s38
      %s41 = sshll.u32 [#allocation6], 4
      %s42 = int_to_ptr.vmem [resolvable:$true] %s41
      %44 = dma.hbm_to_vmem [thread:$0]  %s3, 16, %s42, [#allocation5]
    $region17: #{cond_conv_generator_forward.4} parent=1 // pred_fallthru
      _
    // Predicated region
    $region18: #{cond_conv_generator_forward.4} parent=1 // pred_check
      _
    $region19: #{cond_conv_generator_forward.4} parent=1 // pred_check_branch
      %46 = sbr.rel (0) target = $region21
    $region20: #{cond_conv_generator_forward.4} parent=1 // pred_region
      %47 = dma.done [#allocation3], 1024
    $region21: #{cond_conv_generator_forward.4} parent=1 // pred_fallthru
      _
    // Predicated region
    $region22: #{cond_conv_generator_forward.4} parent=1 // pred_check
      _
    $region23: #{cond_conv_generator_forward.4} parent=1 // pred_check_branch
      %49 = sbr.rel (0) target = $region25
    $region24: #{cond_conv_generator_forward.4} parent=1 // pred_region
      %50 = dma.done [#allocation5], 16
    $region25: #{cond_conv_generator_forward.4} parent=1 // pred_fallthru
      _
    // Predicated region
    $region26: #{cond_conv_generator_forward.4} parent=1 // pred_check
      _
    $region27: #{cond_conv_generator_forward.4} parent=1 // pred_check_branch
      %52 = sbr.rel (0) target = $region29
    $region28: #{cond_conv_generator_forward.4} parent=1 // pred_region
      %53 = dma.done [#allocation5], 16
    $region29: #{cond_conv_generator_forward.4} parent=1 // pred_fallthru
      _
    %v55 = vld [vmem:[%s0] sm:$0x1]
    %v56 = vld [vmem:[#allocation2] sm:$0xff]
    %v57 = vld [vmem:[#allocation2 + $0x8] sm:$0xff]
    %v58 = vld [vmem:[#allocation2 + $0x10] sm:$0xff]
    %v59 = vld [vmem:[#allocation2 + $0x18] sm:$0xff]
    %v60 = vld [vmem:[#allocation2 + $0x20] sm:$0x33]
    %v61 = vld [vmem:[#allocation2 + $0x28] sm:$0x33]
    %v62 = vld [vmem:[#allocation2 + $0x30] sm:$0x33]
    %v63 = vld [vmem:[#allocation2 + $0x38] sm:$0x33]
    %v72 = vunpack.c.l.b16 %v56
    %v73 = vunpack.c.h.b16 %v56
    %v74 = vunpack.c.l.b16 %v57
    %v75 = vunpack.c.h.b16 %v57
    %v76 = vunpack.c.l.b16 %v58
    %v77 = vunpack.c.h.b16 %v58
    %v78 = vunpack.c.l.b16 %v59
    %v79 = vunpack.c.h.b16 %v59
    %v80 = vunpack.c.l.b16 %v60
    %v81 = vunpack.c.h.b16 %v60
    %v82 = vunpack.c.l.b16 %v61
    %v83 = vunpack.c.h.b16 %v61
    %v84 = vunpack.c.l.b16 %v62
    %v85 = vunpack.c.h.b16 %v62
    %v86 = vunpack.c.l.b16 %v63
    %v87 = vunpack.c.h.b16 %v63
    %v88 = vpack.c.b16 %v80, %v72
    %v89 = vpack.c.b16 %v81, %v73
    %v90 = vpack.c.b16 %v82, %v74
    %v91 = vpack.c.b16 %v83, %v75
    %v92 = vpack.c.b16 %v84, %v76
    %v93 = vpack.c.b16 %v85, %v77
    %v94 = vpack.c.b16 %v86, %v78
    %v95 = vpack.c.b16 %v87, %v79
    %vm96 = vcmask 97280
    %v98 = vsel %vm96, %v55, 0
    %vm100 = vcmask 1045504
    %v102 = vsel %vm100, %v88, 0
    %v105 = vsel %vm100, %v89, 0
    %v108 = vsel %vm100, %v90, 0
    %v111 = vsel %vm100, %v91, 0
    %v114 = vsel %vm100, %v92, 0
    %v117 = vsel %vm100, %v93, 0
    %v120 = vsel %vm100, %v94, 0
    %v123 = vsel %vm100, %v95, 0
    %125 = vmatprep.subr.bf16.mxu0 0
    %126 = vmatpush1.bf16.msra.mxu0 0
    %127 = vmatprep.subr.bf16.mxu0 0
    %128 = vmatpush1.bf16.msra.mxu0 0
    %129 = vmatprep.subr.bf16.mxu0 0
    %130 = vmatpush1.bf16.msra.mxu0 0
    %131 = vmatprep.subr.bf16.mxu0 0
    %132 = vmatpush1.bf16.msra.mxu0 0
    %133 = vmatprep.subr.bf16.mxu0 0
    %134 = vmatpush1.bf16.msra.mxu0 0
    %135 = vmatprep.subr.bf16.mxu0 0
    %136 = vmatpush1.bf16.msra.mxu0 0
    %137 = vmatprep.subr.bf16.mxu0 0
    %138 = vmatpush1.bf16.msra.mxu0 0
    %139 = vmatprep.subr.bf16.mxu0 %v105
    %140 = vmatpush1.bf16.msra.mxu0 %v102
    %141 = vmatprep.subr.bf16.mxu0 0
    %142 = vmatpush2.bf16.msra.mxu0 0
    %143 = vmatprep.subr.bf16.mxu0 0
    %144 = vmatpush2.bf16.msra.mxu0 0
    %145 = vmatprep.subr.bf16.mxu0 0
    %146 = vmatpush2.bf16.msra.mxu0 0
    %147 = vmatprep.subr.bf16.mxu0 0
    %148 = vmatpush2.bf16.msra.mxu0 0
    %149 = vmatprep.subr.bf16.mxu0 0
    %150 = vmatpush2.bf16.msra.mxu0 0
    %151 = vmatprep.subr.bf16.mxu0 0
    %152 = vmatpush2.bf16.msra.mxu0 0
    %153 = vmatprep.subr.bf16.mxu0 0
    %154 = vmatpush2.bf16.msra.mxu0 0
    %155 = vmatprep.subr.bf16.mxu0 0
    %156 = vmatpush2.bf16.msra.mxu0 0
    %157 = vmatprep.mubr.bf16.mxu0 0
    %158 = vmatmul.mubr.bf16.gmra.mxu0 %v98
    %v159 = vpop.f32.mrf.mxu0
    %v160 = vadd.f32 0.0, %v159
    %v161 = vpop.f32.mrf.mxu0
    %v162 = vadd.f32 0.0, %v161
    %v163 = vpop.f32.mrf.mxu0
    %v164 = vpop.f32.mrf.mxu0
    %165 = vdwg.mxu0
    %166 = vmatprep.subr.bf16.mxu0 0
    %167 = vmatpush1.bf16.msra.mxu0 0
    %168 = vmatprep.subr.bf16.mxu0 0
    %169 = vmatpush1.bf16.msra.mxu0 0
    %170 = vmatprep.subr.bf16.mxu0 0
    %171 = vmatpush1.bf16.msra.mxu0 0
    %172 = vmatprep.subr.bf16.mxu0 0
    %173 = vmatpush1.bf16.msra.mxu0 0
    %174 = vmatprep.subr.bf16.mxu0 0
    %175 = vmatpush1.bf16.msra.mxu0 0
    %176 = vmatprep.subr.bf16.mxu0 0
    %177 = vmatpush1.bf16.msra.mxu0 0
    %178 = vmatprep.subr.bf16.mxu0 0
    %179 = vmatpush1.bf16.msra.mxu0 0
    %180 = vmatprep.subr.bf16.mxu0 %v111
    %181 = vmatpush1.bf16.msra.mxu0 %v108
    %182 = vmatprep.subr.bf16.mxu0 0
    %183 = vmatpush2.bf16.msra.mxu0 0
    %184 = vmatprep.subr.bf16.mxu0 0
    %185 = vmatpush2.bf16.msra.mxu0 0
    %186 = vmatprep.subr.bf16.mxu0 0
    %187 = vmatpush2.bf16.msra.mxu0 0
    %188 = vmatprep.subr.bf16.mxu0 0
    %189 = vmatpush2.bf16.msra.mxu0 0
    %190 = vmatprep.subr.bf16.mxu0 0
    %191 = vmatpush2.bf16.msra.mxu0 0
    %192 = vmatprep.subr.bf16.mxu0 0
    %193 = vmatpush2.bf16.msra.mxu0 0
    %194 = vmatprep.subr.bf16.mxu0 0
    %195 = vmatpush2.bf16.msra.mxu0 0
    %196 = vmatprep.subr.bf16.mxu0 0
    %197 = vmatpush2.bf16.msra.mxu0 0
    %198 = vmatprep.mubr.bf16.mxu0 0
    %199 = vmatmul.mubr.bf16.gmra.mxu0 %v98
    %v200 = vpop.f32.mrf.mxu0
    %v201 = vadd.f32 0.0, %v200
    %v202 = vpop.f32.mrf.mxu0
    %v203 = vadd.f32 0.0, %v202
    %v204 = vpop.f32.mrf.mxu0
    %v205 = vpop.f32.mrf.mxu0
    %206 = vdwg.mxu0
    %207 = vmatprep.subr.bf16.mxu0 0
    %208 = vmatpush1.bf16.msra.mxu0 0
    %209 = vmatprep.subr.bf16.mxu0 0
    %210 = vmatpush1.bf16.msra.mxu0 0
    %211 = vmatprep.subr.bf16.mxu0 0
    %212 = vmatpush1.bf16.msra.mxu0 0
    %213 = vmatprep.subr.bf16.mxu0 0
    %214 = vmatpush1.bf16.msra.mxu0 0
    %215 = vmatprep.subr.bf16.mxu0 0
    %216 = vmatpush1.bf16.msra.mxu0 0
    %217 = vmatprep.subr.bf16.mxu0 0
    %218 = vmatpush1.bf16.msra.mxu0 0
    %219 = vmatprep.subr.bf16.mxu0 0
    %220 = vmatpush1.bf16.msra.mxu0 0
    %221 = vmatprep.subr.bf16.mxu0 %v117
    %222 = vmatpush1.bf16.msra.mxu0 %v114
    %223 = vmatprep.subr.bf16.mxu0 0
    %224 = vmatpush2.bf16.msra.mxu0 0
    %225 = vmatprep.subr.bf16.mxu0 0
    %226 = vmatpush2.bf16.msra.mxu0 0
    %227 = vmatprep.subr.bf16.mxu0 0
    %228 = vmatpush2.bf16.msra.mxu0 0
    %229 = vmatprep.subr.bf16.mxu0 0
    %230 = vmatpush2.bf16.msra.mxu0 0
    %231 = vmatprep.subr.bf16.mxu0 0
    %232 = vmatpush2.bf16.msra.mxu0 0
    %233 = vmatprep.subr.bf16.mxu0 0
    %234 = vmatpush2.bf16.msra.mxu0 0
    %235 = vmatprep.subr.bf16.mxu0 0
    %236 = vmatpush2.bf16.msra.mxu0 0
    %237 = vmatprep.subr.bf16.mxu0 0
    %238 = vmatpush2.bf16.msra.mxu0 0
    %239 = vmatprep.mubr.bf16.mxu0 0
    %240 = vmatmul.mubr.bf16.gmra.mxu0 %v98
    %v241 = vpop.f32.mrf.mxu0
    %v242 = vadd.f32 0.0, %v241
    %v243 = vpop.f32.mrf.mxu0
    %v244 = vadd.f32 0.0, %v243
    %v245 = vpop.f32.mrf.mxu0
    %v246 = vpop.f32.mrf.mxu0
    %247 = vdwg.mxu0
    %248 = vmatprep.subr.bf16.mxu0 0
    %249 = vmatpush1.bf16.msra.mxu0 0
    %250 = vmatprep.subr.bf16.mxu0 0
    %251 = vmatpush1.bf16.msra.mxu0 0
    %252 = vmatprep.subr.bf16.mxu0 0
    %253 = vmatpush1.bf16.msra.mxu0 0
    %254 = vmatprep.subr.bf16.mxu0 0
    %255 = vmatpush1.bf16.msra.mxu0 0
    %256 = vmatprep.subr.bf16.mxu0 0
    %257 = vmatpush1.bf16.msra.mxu0 0
    %258 = vmatprep.subr.bf16.mxu0 0
    %259 = vmatpush1.bf16.msra.mxu0 0
    %260 = vmatprep.subr.bf16.mxu0 0
    %261 = vmatpush1.bf16.msra.mxu0 0
    %262 = vmatprep.subr.bf16.mxu0 %v123
    %263 = vmatpush1.bf16.msra.mxu0 %v120
    %264 = vmatprep.subr.bf16.mxu0 0
    %265 = vmatpush2.bf16.msra.mxu0 0
    %266 = vmatprep.subr.bf16.mxu0 0
    %267 = vmatpush2.bf16.msra.mxu0 0
    %268 = vmatprep.subr.bf16.mxu0 0
    %269 = vmatpush2.bf16.msra.mxu0 0
    %270 = vmatprep.subr.bf16.mxu0 0
    %271 = vmatpush2.bf16.msra.mxu0 0
    %272 = vmatprep.subr.bf16.mxu0 0
    %273 = vmatpush2.bf16.msra.mxu0 0
    %274 = vmatprep.subr.bf16.mxu0 0
    %275 = vmatpush2.bf16.msra.mxu0 0
    %276 = vmatprep.subr.bf16.mxu0 0
    %277 = vmatpush2.bf16.msra.mxu0 0
    %278 = vmatprep.subr.bf16.mxu0 0
    %279 = vmatpush2.bf16.msra.mxu0 0
    %280 = vmatprep.mubr.bf16.mxu0 0
    %281 = vmatmul.mubr.bf16.gmra.mxu0 %v98
    %v282 = vpop.f32.mrf.mxu0
    %v283 = vadd.f32 0.0, %v282
    %v284 = vpop.f32.mrf.mxu0
    %v285 = vadd.f32 0.0, %v284
    %v286 = vpop.f32.mrf.mxu0
    %v287 = vpop.f32.mrf.mxu0
    %288 = vdwg.mxu0
    %vm289 = vcmask 517120
    %v290 = vsel %vm289, %v160, 0.0
    %v291 = vrot.slane %v290, 4
    %v292 = vadd.f32 %v290, %v291
    %v293 = vrot.slane %v292, 2
    %v294 = vadd.f32 %v292, %v293
    %v295 = vrot.slane %v294, 1
    %v296 = vadd.f32 %v294, %v295
    %v297 = vadd.f32 %v296, 0.0
    %v298 = vmul.f32 %v160, %v160
    %v299 = vsel %vm289, %v298, 0.0
    %v300 = vrot.slane %v299, 4
    %v301 = vadd.f32 %v299, %v300
    %v302 = vrot.slane %v301, 2
    %v303 = vadd.f32 %v301, %v302
    %v304 = vrot.slane %v303, 1
    %v305 = vadd.f32 %v303, %v304
    %v306 = vadd.f32 %v305, 0.0
    %vm307 = vcmask 1041920
    %v308 = vsel %vm307, %v160, 0.0
    %v309 = vrot.slane %v308, 4
    %v310 = vadd.f32 %v308, %v309
    %v311 = vrot.slane %v310, 2
    %v312 = vadd.f32 %v310, %v311
    %v313 = vrot.slane %v312, 1
    %v314 = vadd.f32 %v312, %v313
    %316 = vrot.lane.b32.xlu0 %v314, 64
    %v317 = vpop.permute.xlu0 %316
    %v319 = vadd.f32 %v297, %v317
    %v320 = vsel %vm307, %v298, 0.0
    %v321 = vrot.slane %v320, 4
    %v322 = vadd.f32 %v320, %v321
    %v323 = vrot.slane %v322, 2
    %v324 = vadd.f32 %v322, %v323
    %v325 = vrot.slane %v324, 1
    %v326 = vadd.f32 %v324, %v325
    %328 = vrot.lane.b32.xlu0 %v326, 64
    %v329 = vpop.permute.xlu0 %328
    %v331 = vadd.f32 %v306, %v329
    %v332 = vsel %vm289, %v162, 0.0
    %v333 = vrot.slane %v332, 4
    %v334 = vadd.f32 %v332, %v333
    %v335 = vrot.slane %v334, 2
    %v336 = vadd.f32 %v334, %v335
    %v337 = vrot.slane %v336, 1
    %v338 = vadd.f32 %v336, %v337
    %v339 = vadd.f32 %v319, %v338
    %v340 = vmul.f32 %v162, %v162
    %v341 = vsel %vm289, %v340, 0.0
    %v342 = vrot.slane %v341, 4
    %v343 = vadd.f32 %v341, %v342
    %v344 = vrot.slane %v343, 2
    %v345 = vadd.f32 %v343, %v344
    %v346 = vrot.slane %v345, 1
    %v347 = vadd.f32 %v345, %v346
    %v348 = vadd.f32 %v331, %v347
    %v349 = vsel %vm307, %v162, 0.0
    %v350 = vrot.slane %v349, 4
    %v351 = vadd.f32 %v349, %v350
    %v352 = vrot.slane %v351, 2
    %v353 = vadd.f32 %v351, %v352
    %v354 = vrot.slane %v353, 1
    %v355 = vadd.f32 %v353, %v354
    %357 = vrot.lane.b32.xlu0 %v355, 64
    %v358 = vpop.permute.xlu0 %357
    %v360 = vadd.f32 %v339, %v358
    %v361 = vsel %vm307, %v340, 0.0
    %v362 = vrot.slane %v361, 4
    %v363 = vadd.f32 %v361, %v362
    %v364 = vrot.slane %v363, 2
    %v365 = vadd.f32 %v363, %v364
    %v366 = vrot.slane %v365, 1
    %v367 = vadd.f32 %v365, %v366
    %369 = vrot.lane.b32.xlu0 %v367, 64
    %v370 = vpop.permute.xlu0 %369
    %v372 = vadd.f32 %v348, %v370
    %v373 = vsel %vm289, %v201, 0.0
    %v374 = vrot.slane %v373, 4
    %v375 = vadd.f32 %v373, %v374
    %v376 = vrot.slane %v375, 2
    %v377 = vadd.f32 %v375, %v376
    %v378 = vrot.slane %v377, 1
    %v379 = vadd.f32 %v377, %v378
    %v380 = vadd.f32 %v360, %v379
    %v381 = vmul.f32 %v201, %v201
    %v382 = vsel %vm289, %v381, 0.0
    %v383 = vrot.slane %v382, 4
    %v384 = vadd.f32 %v382, %v383
    %v385 = vrot.slane %v384, 2
    %v386 = vadd.f32 %v384, %v385
    %v387 = vrot.slane %v386, 1
    %v388 = vadd.f32 %v386, %v387
    %v389 = vadd.f32 %v372, %v388
    %v390 = vsel %vm307, %v201, 0.0
    %v391 = vrot.slane %v390, 4
    %v392 = vadd.f32 %v390, %v391
    %v393 = vrot.slane %v392, 2
    %v394 = vadd.f32 %v392, %v393
    %v395 = vrot.slane %v394, 1
    %v396 = vadd.f32 %v394, %v395
    %398 = vrot.lane.b32.xlu0 %v396, 64
    %v399 = vpop.permute.xlu0 %398
    %v401 = vadd.f32 %v380, %v399
    %v402 = vsel %vm307, %v381, 0.0
    %v403 = vrot.slane %v402, 4
    %v404 = vadd.f32 %v402, %v403
    %v405 = vrot.slane %v404, 2
    %v406 = vadd.f32 %v404, %v405
    %v407 = vrot.slane %v406, 1
    %v408 = vadd.f32 %v406, %v407
    %410 = vrot.lane.b32.xlu0 %v408, 64
    %v411 = vpop.permute.xlu0 %410
    %v413 = vadd.f32 %v389, %v411
    %v414 = vsel %vm289, %v203, 0.0
    %v415 = vrot.slane %v414, 4
    %v416 = vadd.f32 %v414, %v415
    %v417 = vrot.slane %v416, 2
    %v418 = vadd.f32 %v416, %v417
    %v419 = vrot.slane %v418, 1
    %v420 = vadd.f32 %v418, %v419
    %v421 = vadd.f32 %v401, %v420
    %v422 = vmul.f32 %v203, %v203
    %v423 = vsel %vm289, %v422, 0.0
    %v424 = vrot.slane %v423, 4
    %v425 = vadd.f32 %v423, %v424
    %v426 = vrot.slane %v425, 2
    %v427 = vadd.f32 %v425, %v426
    %v428 = vrot.slane %v427, 1
    %v429 = vadd.f32 %v427, %v428
    %v430 = vadd.f32 %v413, %v429
    %v431 = vsel %vm307, %v203, 0.0
    %v432 = vrot.slane %v431, 4
    %v433 = vadd.f32 %v431, %v432
    %v434 = vrot.slane %v433, 2
    %v435 = vadd.f32 %v433, %v434
    %v436 = vrot.slane %v435, 1
    %v437 = vadd.f32 %v435, %v436
    %439 = vrot.lane.b32.xlu0 %v437, 64
    %v440 = vpop.permute.xlu0 %439
    %v442 = vadd.f32 %v421, %v440
    %v443 = vsel %vm307, %v422, 0.0
    %v444 = vrot.slane %v443, 4
    %v445 = vadd.f32 %v443, %v444
    %v446 = vrot.slane %v445, 2
    %v447 = vadd.f32 %v445, %v446
    %v448 = vrot.slane %v447, 1
    %v449 = vadd.f32 %v447, %v448
    %451 = vrot.lane.b32.xlu0 %v449, 64
    %v452 = vpop.permute.xlu0 %451
    %v454 = vadd.f32 %v430, %v452
    %v455 = vsel %vm289, %v242, 0.0
    %v456 = vrot.slane %v455, 4
    %v457 = vadd.f32 %v455, %v456
    %v458 = vrot.slane %v457, 2
    %v459 = vadd.f32 %v457, %v458
    %v460 = vrot.slane %v459, 1
    %v461 = vadd.f32 %v459, %v460
    %v462 = vadd.f32 %v442, %v461
    %v463 = vmul.f32 %v242, %v242
    %v464 = vsel %vm289, %v463, 0.0
    %v465 = vrot.slane %v464, 4
    %v466 = vadd.f32 %v464, %v465
    %v467 = vrot.slane %v466, 2
    %v468 = vadd.f32 %v466, %v467
    %v469 = vrot.slane %v468, 1
    %v470 = vadd.f32 %v468, %v469
    %v471 = vadd.f32 %v454, %v470
    %v472 = vsel %vm307, %v242, 0.0
    %v473 = vrot.slane %v472, 4
    %v474 = vadd.f32 %v472, %v473
    %v475 = vrot.slane %v474, 2
    %v476 = vadd.f32 %v474, %v475
    %v477 = vrot.slane %v476, 1
    %v478 = vadd.f32 %v476, %v477
    %480 = vrot.lane.b32.xlu0 %v478, 64
    %v481 = vpop.permute.xlu0 %480
    %v483 = vadd.f32 %v462, %v481
    %v484 = vsel %vm307, %v463, 0.0
    %v485 = vrot.slane %v484, 4
    %v486 = vadd.f32 %v484, %v485
    %v487 = vrot.slane %v486, 2
    %v488 = vadd.f32 %v486, %v487
    %v489 = vrot.slane %v488, 1
    %v490 = vadd.f32 %v488, %v489
    %492 = vrot.lane.b32.xlu0 %v490, 64
    %v493 = vpop.permute.xlu0 %492
    %v495 = vadd.f32 %v471, %v493
    %v496 = vsel %vm289, %v244, 0.0
    %v497 = vrot.slane %v496, 4
    %v498 = vadd.f32 %v496, %v497
    %v499 = vrot.slane %v498, 2
    %v500 = vadd.f32 %v498, %v499
    %v501 = vrot.slane %v500, 1
    %v502 = vadd.f32 %v500, %v501
    %v503 = vadd.f32 %v483, %v502
    %v504 = vmul.f32 %v244, %v244
    %v505 = vsel %vm289, %v504, 0.0
    %v506 = vrot.slane %v505, 4
    %v507 = vadd.f32 %v505, %v506
    %v508 = vrot.slane %v507, 2
    %v509 = vadd.f32 %v507, %v508
    %v510 = vrot.slane %v509, 1
    %v511 = vadd.f32 %v509, %v510
    %v512 = vadd.f32 %v495, %v511
    %v513 = vsel %vm307, %v244, 0.0
    %v514 = vrot.slane %v513, 4
    %v515 = vadd.f32 %v513, %v514
    %v516 = vrot.slane %v515, 2
    %v517 = vadd.f32 %v515, %v516
    %v518 = vrot.slane %v517, 1
    %v519 = vadd.f32 %v517, %v518
    %521 = vrot.lane.b32.xlu0 %v519, 64
    %v522 = vpop.permute.xlu0 %521
    %v524 = vadd.f32 %v503, %v522
    %v525 = vsel %vm307, %v504, 0.0
    %v526 = vrot.slane %v525, 4
    %v527 = vadd.f32 %v525, %v526
    %v528 = vrot.slane %v527, 2
    %v529 = vadd.f32 %v527, %v528
    %v530 = vrot.slane %v529, 1
    %v531 = vadd.f32 %v529, %v530
    %533 = vrot.lane.b32.xlu0 %v531, 64
    %v534 = vpop.permute.xlu0 %533
    %v536 = vadd.f32 %v512, %v534
    %v537 = vsel %vm289, %v283, 0.0
    %v538 = vrot.slane %v537, 4
    %v539 = vadd.f32 %v537, %v538
    %v540 = vrot.slane %v539, 2
    %v541 = vadd.f32 %v539, %v540
    %v542 = vrot.slane %v541, 1
    %v543 = vadd.f32 %v541, %v542
    %v544 = vadd.f32 %v524, %v543
    %v545 = vmul.f32 %v283, %v283
    %v546 = vsel %vm289, %v545, 0.0
    %v547 = vrot.slane %v546, 4
    %v548 = vadd.f32 %v546, %v547
    %v549 = vrot.slane %v548, 2
    %v550 = vadd.f32 %v548, %v549
    %v551 = vrot.slane %v550, 1
    %v552 = vadd.f32 %v550, %v551
    %v553 = vadd.f32 %v536, %v552
    %v554 = vsel %vm307, %v283, 0.0
    %v555 = vrot.slane %v554, 4
    %v556 = vadd.f32 %v554, %v555
    %v557 = vrot.slane %v556, 2
    %v558 = vadd.f32 %v556, %v557
    %v559 = vrot.slane %v558, 1
    %v560 = vadd.f32 %v558, %v559
    %562 = vrot.lane.b32.xlu0 %v560, 64
    %v563 = vpop.permute.xlu0 %562
    %v565 = vadd.f32 %v544, %v563
    %v566 = vsel %vm307, %v545, 0.0
    %v567 = vrot.slane %v566, 4
    %v568 = vadd.f32 %v566, %v567
    %v569 = vrot.slane %v568, 2
    %v570 = vadd.f32 %v568, %v569
    %v571 = vrot.slane %v570, 1
    %v572 = vadd.f32 %v570, %v571
    %574 = vrot.lane.b32.xlu0 %v572, 64
    %v575 = vpop.permute.xlu0 %574
    %v577 = vadd.f32 %v553, %v575
    %v578 = vsel %vm289, %v285, 0.0
    %v579 = vrot.slane %v578, 4
    %v580 = vadd.f32 %v578, %v579
    %v581 = vrot.slane %v580, 2
    %v582 = vadd.f32 %v580, %v581
    %v583 = vrot.slane %v582, 1
    %v584 = vadd.f32 %v582, %v583
    %v585 = vadd.f32 %v565, %v584
    %v586 = vmul.f32 %v285, %v285
    %v587 = vsel %vm289, %v586, 0.0
    %v588 = vrot.slane %v587, 4
    %v589 = vadd.f32 %v587, %v588
    %v590 = vrot.slane %v589, 2
    %v591 = vadd.f32 %v589, %v590
    %v592 = vrot.slane %v591, 1
    %v593 = vadd.f32 %v591, %v592
    %v594 = vadd.f32 %v577, %v593
    %v595 = vsel %vm307, %v285, 0.0
    %v596 = vrot.slane %v595, 4
    %v597 = vadd.f32 %v595, %v596
    %v598 = vrot.slane %v597, 2
    %v599 = vadd.f32 %v597, %v598
    %v600 = vrot.slane %v599, 1
    %v601 = vadd.f32 %v599, %v600
    %603 = vrot.lane.b32.xlu0 %v601, 64
    %v604 = vpop.permute.xlu0 %603
    %v606 = vadd.f32 %v585, %v604
    %v607 = vsel %vm307, %v586, 0.0
    %v608 = vrot.slane %v607, 4
    %v609 = vadd.f32 %v607, %v608
    %v610 = vrot.slane %v609, 2
    %v611 = vadd.f32 %v609, %v610
    %v612 = vrot.slane %v611, 1
    %v613 = vadd.f32 %v611, %v612
    %615 = vrot.lane.b32.xlu0 %v613, 64
    %v616 = vpop.permute.xlu0 %615
    %v618 = vadd.f32 %v594, %v616
    %v619 = vmul.f32 %v606, 0.03125
    %v620 = vmul.f32 %v618, 0.03125
    %v621 = vmul.f32 %v619, %v619
    %v622 = vsub.f32 %v620, %v621
    %v623 = vmax.f32 %v622, 0.0
    %v624 = vld [vmem:[#allocation4] sm:$0x1]
    %v625 = vadd.f32 %v623, 1e-05
    %v626 = vrsqrt.pop %v625
    %v627 = vmul.f32 %v624, %v626
    %v628 = vld [vmem:[#allocation6] sm:$0x1]
    %v629 = vmul.f32 %v619, %v627
    %v630 = vsub.f32 %v628, %v629
    %v632 = vlaneseq
    %v633 = vshrl.u32 %v632, 7
    %v634 = vsub.s32 0, %v633
    %v635 = vrot.slane %v627, %v634
    %636 = vrot.lane.b32.xlu0 %v635, 64
    %v637 = vpop.permute.xlu0 %636
    %vm639 = vcmask 523264
    %v640 = vsel %vm639, %v627, %v637
    %v642 = vlaneseq
    %v643 = vshrl.u32 %v642, 7
    %v644 = vsub.s32 0, %v643
    %v645 = vrot.slane %v630, %v644
    %646 = vrot.lane.b32.xlu0 %v645, 64
    %v647 = vpop.permute.xlu0 %646
    %v649 = vsel %vm639, %v630, %v647
    %v650 = vlaneseq
    %v651 = vshrl.u32 %v650, 7
    %v652 = vsub.s32 0, %v651
    %v653 = vrot.slane %v640, %v652
    %v654 = vmul.f32 %v160, %v653
    %v655 = vmul.f32 %v162, %v653
    %v656 = vmul.f32 %v201, %v653
    %v657 = vmul.f32 %v203, %v653
    %v658 = vmul.f32 %v242, %v653
    %v659 = vmul.f32 %v244, %v653
    %v660 = vmul.f32 %v283, %v653
    %v661 = vmul.f32 %v285, %v653
    %v662 = vlaneseq
    %v663 = vshrl.u32 %v662, 7
    %v664 = vsub.s32 0, %v663
    %v665 = vrot.slane %v649, %v664
    %v666 = vadd.f32 %v654, %v665
    %v667 = vadd.f32 %v655, %v665
    %v668 = vadd.f32 %v656, %v665
    %v669 = vadd.f32 %v657, %v665
    %v670 = vadd.f32 %v658, %v665
    %v671 = vadd.f32 %v659, %v665
    %v672 = vadd.f32 %v660, %v665
    %v673 = vadd.f32 %v661, %v665
    %v674 = vmax.f32 %v666, 0.0
    %v675 = vmax.f32 %v667, 0.0
    %v676 = vmax.f32 %v668, 0.0
    %v677 = vmax.f32 %v669, 0.0
    %v678 = vmax.f32 %v670, 0.0
    %v679 = vmax.f32 %v671, 0.0
    %v680 = vmax.f32 %v672, 0.0
    %v681 = vmax.f32 %v673, 0.0
    %v682 = vpack.c.bf16 %v674, %v674
    %v683 = vpack.c.bf16 %v675, %v675
    %v684 = vpack.c.bf16 %v676, %v676
    %v685 = vpack.c.bf16 %v677, %v677
    %v686 = vpack.c.bf16 %v678, %v678
    %v687 = vpack.c.bf16 %v679, %v679
    %v688 = vpack.c.bf16 %v680, %v680
    %v689 = vpack.c.bf16 %v681, %v681
    %v698 = vcombine.low %v682, %v683
    %v699 = vcombine.low %v684, %v685
    %v700 = vcombine.low %v686, %v687
    %v701 = vcombine.low %v688, %v689
    %v703 = vunpack.c.l.s4 1966171168
    %v704 = vunpack.c.0.s8 %v703
    %v705 = vlaneseq
    %v706 = vshrl.u32 %v705, 7
    %v707 = vsub.s32 %v704, %v706
    %v708 = vrot.slane %v698, %v707
    %v710 = vunpack.c.l.s4 1966171168
    %v711 = vunpack.c.0.s8 %v710
    %v712 = vlaneseq
    %v713 = vshrl.u32 %v712, 7
    %v714 = vsub.s32 %v711, %v713
    %v715 = vrot.slane %v699, %v714
    %v717 = vunpack.c.l.s4 1966171168
    %v718 = vunpack.c.0.s8 %v717
    %v719 = vlaneseq
    %v720 = vshrl.u32 %v719, 7
    %v721 = vsub.s32 %v718, %v720
    %v722 = vrot.slane %v700, %v721
    %v724 = vunpack.c.l.s4 1966171168
    %v725 = vunpack.c.0.s8 %v724
    %v726 = vlaneseq
    %v727 = vshrl.u32 %v726, 7
    %v728 = vsub.s32 %v725, %v727
    %v729 = vrot.slane %v701, %v728
    %v730 = vcombine.low %v708, %v715
    %v731 = vcombine.low %v722, %v729
    %v733 = vunpack.c.l.s4 1966171168
    %v734 = vunpack.c.0.s8 %v733
    %v735 = vlaneseq
    %v736 = vshrl.u32 %v735, 7
    %v737 = vsub.s32 %v734, %v736
    %v738 = vrot.slane %v730, %v737
    %v740 = vunpack.c.l.s4 1966171168
    %v741 = vunpack.c.0.s8 %v740
    %v742 = vlaneseq
    %v743 = vshrl.u32 %v742, 7
    %v744 = vsub.s32 %v741, %v743
    %v745 = vrot.slane %v731, %v744
    %v746 = vcombine.low %v738, %v745
    %748 = vst [vmem:[%s4] sm:$0xff] %v746
    // Predicated region
    $region30: #{cond_conv_generator_forward.4} parent=1 // pred_check
      _
    $region31: #{cond_conv_generator_forward.4} parent=1 // pred_check_branch
      %750 = sbr.rel (0) target = $region33
    $region32: #{cond_conv_generator_forward.4} parent=1 // pred_region
      _
    $region33: #{cond_conv_generator_forward.4} parent=1 // pred_fallthru
      _
    // Predicated region
    $region34: #{cond_conv_generator_forward.4} parent=1 // pred_check
      _
    $region35: #{cond_conv_generator_forward.4} parent=1 // pred_check_branch
      %752 = sbr.rel (0) target = $region37
    $region36: #{cond_conv_generator_forward.4} parent=1 // pred_region
      _
    $region37: #{cond_conv_generator_forward.4} parent=1 // pred_fallthru
      _
    %753 = vsyncpa [#allocation3], 1
    %754 = vsyncpa [#allocation5], 1

// kernel: cond_conv_generator_forward.5
$region0: #{cond_conv_generator_forward.5}
  #allocation0 [shape = 'u32[]', space=smem, size = 0x4, offset = 0x4, fixed_abs, tag = 'smem constant byte address 0x4 - core index']
  #allocation1 [shape = 'u32[144,128]{1,0:T(1,128)}', space=vmem, size = 0x12000, scoped, tag = 'internal scratch']
  #allocation2 [shape = 'f32[4,32,32]{2,1,0:T(8,128)}', space=vmem, size = 0x10000, scoped, tag = 'scratch operand']
  %s0 = inlined_call_operand.vmem [shape: bf16[4,32,256], index: 0, kind: input, shape index: {}]
  %s1 = inlined_call_operand.vmem [shape: bf16[4,256,32], index: 1, kind: input, shape index: {}]
  %s2 = inlined_call_operand.hbm [shape: f32[1,32], index: 2, kind: input, shape index: {}]
  %s3 = inlined_call_operand.hbm [shape: f32[1,32], index: 3, kind: input, shape index: {}]
  %s4 = inlined_call_operand.vmem [shape: bf16[4,32,32], index: 4, kind: output, shape index: {}]
  %s5 = sld [smem:[#allocation0]]
  $region34: #{cond_conv_generator_forward.5} parent=0
    _
  %s7 = ssub.s32 1, %s5
  %s8 = scalar_select 0, %s7, %s5
  $region1: #{cond_conv_generator_forward.5} parent=0
    #allocation3 [shape = 'u8[512]{0}', space=vmem, size = 0x400, scoped, tag = 'input window, operand 2, single buffered']
    #allocation4 [shape = 's32[1]{0}', space=sflag, size = 0x4, scoped, tag = 'scoped memory for cond_conv_generator_forward.5']
    #allocation5 [shape = 'u8[512]{0}', space=vmem, size = 0x400, scoped, tag = 'input window, operand 3, single buffered']
    #allocation6 [shape = 's32[1]{0}', space=sflag, size = 0x4, scoped, tag = 'scoped memory for cond_conv_generator_forward.5']
    %9 = vsyncpa [#allocation4], 0
    %10 = vsyncpa [#allocation6], 0
    // Predicated region
    $region2: #{cond_conv_generator_forward.5} parent=1 // pred_check
      _
    $region3: #{cond_conv_generator_forward.5} parent=1 // pred_check_branch
      %12 = sbr.rel (0) target = $region5
    $region4: #{cond_conv_generator_forward.5} parent=1 // pred_region
      _
    $region5: #{cond_conv_generator_forward.5} parent=1 // pred_fallthru
      _
    // Predicated region
    $region6: #{cond_conv_generator_forward.5} parent=1 // pred_check
      _
    $region7: #{cond_conv_generator_forward.5} parent=1 // pred_check_branch
      %14 = sbr.rel (0) target = $region9
    $region8: #{cond_conv_generator_forward.5} parent=1 // pred_region
      _
    $region9: #{cond_conv_generator_forward.5} parent=1 // pred_fallthru
      _
    // Predicated region
    $region10: #{cond_conv_generator_forward.5} parent=1 // pred_check
      _
    $region11: #{cond_conv_generator_forward.5} parent=1 // pred_check_branch
      %16 = sbr.rel (0) target = $region13
    $region12: #{cond_conv_generator_forward.5} parent=1 // pred_region
      %s18 = ssub.s32 16, 16
      %19 = vsyncadd [#allocation4], %s18
      %s21 = sshll.u32 [#allocation3], 4
      %s22 = int_to_ptr.vmem [resolvable:$true] %s21
      %24 = dma.hbm_to_vmem [thread:$0]  %s2, 16, %s22, [#allocation4]
    $region13: #{cond_conv_generator_forward.5} parent=1 // pred_fallthru
      _
    // Predicated region
    $region14: #{cond_conv_generator_forward.5} parent=1 // pred_check
      _
    $region15: #{cond_conv_generator_forward.5} parent=1 // pred_check_branch
      %26 = sbr.rel (0) target = $region17
    $region16: #{cond_conv_generator_forward.5} parent=1 // pred_region
      %s28 = ssub.s32 16, 16
      %29 = vsyncadd [#allocation6], %s28
      %s31 = sshll.u32 [#allocation5], 4
      %s32 = int_to_ptr.vmem [resolvable:$true] %s31
      %34 = dma.hbm_to_vmem [thread:$0]  %s3, 16, %s32, [#allocation6]
    $region17: #{cond_conv_generator_forward.5} parent=1 // pred_fallthru
      _
    // Predicated region
    $region18: #{cond_conv_generator_forward.5} parent=1 // pred_check
      _
    $region19: #{cond_conv_generator_forward.5} parent=1 // pred_check_branch
      %36 = sbr.rel (0) target = $region21
    $region20: #{cond_conv_generator_forward.5} parent=1 // pred_region
      %37 = dma.done [#allocation4], 16
    $region21: #{cond_conv_generator_forward.5} parent=1 // pred_fallthru
      _
    // Predicated region
    $region22: #{cond_conv_generator_forward.5} parent=1 // pred_check
      _
    $region23: #{cond_conv_generator_forward.5} parent=1 // pred_check_branch
      %39 = sbr.rel (0) target = $region25
    $region24: #{cond_conv_generator_forward.5} parent=1 // pred_region
      %40 = dma.done [#allocation6], 16
    $region25: #{cond_conv_generator_forward.5} parent=1 // pred_fallthru
      _
    %v42 = vld [vmem:[%s0] sm:$0xff]
    %v43 = vld [vmem:[%s0 + $0x8] sm:$0xff]
    %v44 = vld [vmem:[%s0 + $0x10] sm:$0xff]
    %v45 = vld [vmem:[%s0 + $0x18] sm:$0xff]
    %v46 = vld [vmem:[%s1] sm:$0xf]
    %v47 = vld [vmem:[%s1 + $0x4] sm:$0xf]
    %v48 = vld [vmem:[%s1 + $0x8] sm:$0xf]
    %v49 = vld [vmem:[%s1 + $0xc] sm:$0xf]
    %v50 = vld [vmem:[%s1 + $0x10] sm:$0xf]
    %v51 = vld [vmem:[%s1 + $0x14] sm:$0xf]
    %v52 = vld [vmem:[%s1 + $0x18] sm:$0xf]
    %v53 = vld [vmem:[%s1 + $0x1c] sm:$0xf]
    %v54 = vld [vmem:[%s1 + $0x20] sm:$0xf]
    %v55 = vld [vmem:[%s1 + $0x24] sm:$0xf]
    %v56 = vld [vmem:[%s1 + $0x28] sm:$0xf]
    %v57 = vld [vmem:[%s1 + $0x2c] sm:$0xf]
    %v58 = vld [vmem:[%s1 + $0x30] sm:$0xf]
    %v59 = vld [vmem:[%s1 + $0x34] sm:$0xf]
    %v60 = vld [vmem:[%s1 + $0x38] sm:$0xf]
    %v61 = vld [vmem:[%s1 + $0x3c] sm:$0xf]
    %v62 = vld [vmem:[%s1 + $0x40] sm:$0xf]
    %v63 = vld [vmem:[%s1 + $0x44] sm:$0xf]
    %v64 = vld [vmem:[%s1 + $0x48] sm:$0xf]
    %v65 = vld [vmem:[%s1 + $0x4c] sm:$0xf]
    %v66 = vld [vmem:[%s1 + $0x50] sm:$0xf]
    %v67 = vld [vmem:[%s1 + $0x54] sm:$0xf]
    %v68 = vld [vmem:[%s1 + $0x58] sm:$0xf]
    %v69 = vld [vmem:[%s1 + $0x5c] sm:$0xf]
    %v70 = vld [vmem:[%s1 + $0x60] sm:$0xf]
    %v71 = vld [vmem:[%s1 + $0x64] sm:$0xf]
    %v72 = vld [vmem:[%s1 + $0x68] sm:$0xf]
    %v73 = vld [vmem:[%s1 + $0x6c] sm:$0xf]
    %v74 = vld [vmem:[%s1 + $0x70] sm:$0xf]
    %v75 = vld [vmem:[%s1 + $0x74] sm:$0xf]
    %v76 = vld [vmem:[%s1 + $0x78] sm:$0xf]
    %v77 = vld [vmem:[%s1 + $0x7c] sm:$0xf]
    %v82 = vunpack.c.l.b16 %v42
    %v83 = vunpack.c.h.b16 %v42
    %v84 = vunpack.c.l.b16 %v43
    %v85 = vunpack.c.h.b16 %v43
    %v86 = vunpack.c.l.b16 %v44
    %v87 = vunpack.c.h.b16 %v44
    %v88 = vunpack.c.l.b16 %v45
    %v89 = vunpack.c.h.b16 %v45
    %v90 = vpack.c.b16 %v84, %v82
    %v91 = vpack.c.b16 %v85, %v83
    %v92 = vpack.c.b16 %v88, %v86
    %v93 = vpack.c.b16 %v89, %v87
    %v130 = vunpack.c.l.b16 %v46
    %v131 = vunpack.c.l.b16 %v47
    %v132 = vunpack.c.l.b16 %v48
    %v133 = vunpack.c.l.b16 %v49
    %v134 = vunpack.c.l.b16 %v50
    %v135 = vunpack.c.l.b16 %v51
    %v136 = vunpack.c.l.b16 %v52
    %v137 = vunpack.c.l.b16 %v53
    %v138 = vunpack.c.l.b16 %v54
    %v139 = vunpack.c.l.b16 %v55
    %v140 = vunpack.c.l.b16 %v56
    %v141 = vunpack.c.l.b16 %v57
    %v142 = vunpack.c.l.b16 %v58
    %v143 = vunpack.c.l.b16 %v59
    %v144 = vunpack.c.l.b16 %v60
    %v145 = vunpack.c.l.b16 %v61
    %v146 = vunpack.c.l.b16 %v62
    %v147 = vunpack.c.l.b16 %v63
    %v148 = vunpack.c.l.b16 %v64
    %v149 = vunpack.c.l.b16 %v65
    %v150 = vunpack.c.l.b16 %v66
    %v151 = vunpack.c.l.b16 %v67
    %v152 = vunpack.c.l.b16 %v68
    %v153 = vunpack.c.l.b16 %v69
    %v154 = vunpack.c.l.b16 %v70
    %v155 = vunpack.c.l.b16 %v71
    %v156 = vunpack.c.l.b16 %v72
    %v157 = vunpack.c.l.b16 %v73
    %v158 = vunpack.c.l.b16 %v74
    %v159 = vunpack.c.l.b16 %v75
    %v160 = vunpack.c.l.b16 %v76
    %v161 = vunpack.c.l.b16 %v77
    %v162 = vpack.c.b16 %v131, %v130
    %v163 = vpack.c.b16 %v133, %v132
    %v164 = vpack.c.b16 %v135, %v134
    %v165 = vpack.c.b16 %v137, %v136
    %v166 = vpack.c.b16 %v139, %v138
    %v167 = vpack.c.b16 %v141, %v140
    %v168 = vpack.c.b16 %v143, %v142
    %v169 = vpack.c.b16 %v145, %v144
    %v170 = vpack.c.b16 %v147, %v146
    %v171 = vpack.c.b16 %v149, %v148
    %v172 = vpack.c.b16 %v151, %v150
    %v173 = vpack.c.b16 %v153, %v152
    %v174 = vpack.c.b16 %v155, %v154
    %v175 = vpack.c.b16 %v157, %v156
    %v176 = vpack.c.b16 %v159, %v158
    %v177 = vpack.c.b16 %v161, %v160
    %194 = vmatprep.subr.bf16.mxu0 0
    %195 = vmatpush1.bf16.msra.mxu0 %v169
    %196 = vmatprep.subr.bf16.mxu0 0
    %197 = vmatpush1.bf16.msra.mxu0 %v168
    %198 = vmatprep.subr.bf16.mxu0 0
    %199 = vmatpush1.bf16.msra.mxu0 %v167
    %200 = vmatprep.subr.bf16.mxu0 0
    %201 = vmatpush1.bf16.msra.mxu0 %v166
    %202 = vmatprep.subr.bf16.mxu0 0
    %203 = vmatpush1.bf16.msra.mxu0 %v165
    %204 = vmatprep.subr.bf16.mxu0 0
    %205 = vmatpush1.bf16.msra.mxu0 %v164
    %206 = vmatprep.subr.bf16.mxu0 0
    %207 = vmatpush1.bf16.msra.mxu0 %v163
    %208 = vmatprep.subr.bf16.mxu0 0
    %209 = vmatpush1.bf16.msra.mxu0 %v162
    %210 = vmatprep.subr.bf16.mxu0 0
    %211 = vmatpush2.bf16.msra.mxu0 %v177
    %212 = vmatprep.subr.bf16.mxu0 0
    %213 = vmatpush2.bf16.msra.mxu0 %v176
    %214 = vmatprep.subr.bf16.mxu0 0
    %215 = vmatpush2.bf16.msra.mxu0 %v175
    %216 = vmatprep.subr.bf16.mxu0 0
    %217 = vmatpush2.bf16.msra.mxu0 %v174
    %218 = vmatprep.subr.bf16.mxu0 0
    %219 = vmatpush2.bf16.msra.mxu0 %v173
    %220 = vmatprep.subr.bf16.mxu0 0
    %221 = vmatpush2.bf16.msra.mxu0 %v172
    %222 = vmatprep.subr.bf16.mxu0 0
    %223 = vmatpush2.bf16.msra.mxu0 %v171
    %224 = vmatprep.subr.bf16.mxu0 0
    %225 = vmatpush2.bf16.msra.mxu0 %v170
    %226 = vmatprep.mubr.bf16.mxu0 %v91
    %227 = vmatmul.mubr.bf16.gmra.mxu0 %v90
    %v228 = vpop.f32.mrf.mxu0
    %v229 = vadd.f32 0.0, %v228
    %v230 = vpop.f32.mrf.mxu0
    %v231 = vpop.f32.mrf.mxu0
    %v232 = vadd.f32 0.0, %v231
    %v233 = vpop.f32.mrf.mxu0
    %234 = vmatprep.mubr.bf16.mxu0 %v93
    %235 = vmatmul.mubr.bf16.gmra.mxu0 %v92
    %v236 = vpop.f32.mrf.mxu0
    %v237 = vadd.f32 0.0, %v236
    %v238 = vpop.f32.mrf.mxu0
    %v239 = vpop.f32.mrf.mxu0
    %v240 = vadd.f32 0.0, %v239
    %v241 = vpop.f32.mrf.mxu0
    %242 = vdwg.mxu0
    %vm243 = vcmask 261120
    %244 = vst.msk [vmem:[#allocation2] sm:$0xff] %vm243, %v229
    %245 = vst.msk [vmem:[#allocation2 + $0x8] sm:$0xff] %vm243, %v232
    %246 = vst.msk [vmem:[#allocation2 + $0x10] sm:$0xff] %vm243, %v237
    %247 = vst.msk [vmem:[#allocation2 + $0x18] sm:$0xff] %vm243, %v240
    %v248 = vsel %vm243, %v229, 0.0
    %v249 = vsel %vm243, %v232, 0.0
    %v250 = vadd.f32 %v248, %v249
    %v251 = vsel %vm243, %v237, 0.0
    %v252 = vadd.f32 %v250, %v251
    %v253 = vsel %vm243, %v240, 0.0
    %v254 = vadd.f32 %v252, %v253
    %v255 = vrot.slane %v254, 4
    %v256 = vadd.f32 %v254, %v255
    %v257 = vrot.slane %v256, 2
    %v258 = vadd.f32 %v256, %v257
    %v259 = vrot.slane %v258, 1
    %v260 = vadd.f32 %v258, %v259
    %v261 = vadd.f32 %v260, 0.0
    %v262 = vmul.f32 %v229, %v229
    %v263 = vmul.f32 %v232, %v232
    %v264 = vmul.f32 %v237, %v237
    %v265 = vmul.f32 %v240, %v240
    %v266 = vsel %vm243, %v262, 0.0
    %v267 = vsel %vm243, %v263, 0.0
    %v268 = vadd.f32 %v266, %v267
    %v269 = vsel %vm243, %v264, 0.0
    %v270 = vadd.f32 %v268, %v269
    %v271 = vsel %vm243, %v265, 0.0
    %v272 = vadd.f32 %v270, %v271
    %v273 = vrot.slane %v272, 4
    %v274 = vadd.f32 %v272, %v273
    %v275 = vrot.slane %v274, 2
    %v276 = vadd.f32 %v274, %v275
    %v277 = vrot.slane %v276, 1
    %v278 = vadd.f32 %v276, %v277
    %v279 = vadd.f32 %v278, 0.0
    %s280 = scalar_lea.vmem %s0, 32
    %v281 = vld [vmem:[%s280] sm:$0xff]
    %v282 = vld [vmem:[%s280 + $0x8] sm:$0xff]
    %v283 = vld [vmem:[%s280 + $0x10] sm:$0xff]
    %v284 = vld [vmem:[%s280 + $0x18] sm:$0xff]
    %s285 = scalar_lea.vmem %s1, 128
    %v286 = vld [vmem:[%s285] sm:$0xf]
    %v287 = vld [vmem:[%s285 + $0x4] sm:$0xf]
    %v288 = vld [vmem:[%s285 + $0x8] sm:$0xf]
    %v289 = vld [vmem:[%s285 + $0xc] sm:$0xf]
    %v290 = vld [vmem:[%s285 + $0x10] sm:$0xf]
    %v291 = vld [vmem:[%s285 + $0x14] sm:$0xf]
    %v292 = vld [vmem:[%s285 + $0x18] sm:$0xf]
    %v293 = vld [vmem:[%s285 + $0x1c] sm:$0xf]
    %v294 = vld [vmem:[%s285 + $0x20] sm:$0xf]
    %v295 = vld [vmem:[%s285 + $0x24] sm:$0xf]
    %v296 = vld [vmem:[%s285 + $0x28] sm:$0xf]
    %v297 = vld [vmem:[%s285 + $0x2c] sm:$0xf]
    %v298 = vld [vmem:[%s285 + $0x30] sm:$0xf]
    %v299 = vld [vmem:[%s285 + $0x34] sm:$0xf]
    %v300 = vld [vmem:[%s285 + $0x38] sm:$0xf]
    %v301 = vld [vmem:[%s285 + $0x3c] sm:$0xf]
    %v302 = vld [vmem:[%s285 + $0x40] sm:$0xf]
    %v303 = vld [vmem:[%s285 + $0x44] sm:$0xf]
    %v304 = vld [vmem:[%s285 + $0x48] sm:$0xf]
    %v305 = vld [vmem:[%s285 + $0x4c] sm:$0xf]
    %v306 = vld [vmem:[%s285 + $0x50] sm:$0xf]
    %v307 = vld [vmem:[%s285 + $0x54] sm:$0xf]
    %v308 = vld [vmem:[%s285 + $0x58] sm:$0xf]
    %v309 = vld [vmem:[%s285 + $0x5c] sm:$0xf]
    %v310 = vld [vmem:[%s285 + $0x60] sm:$0xf]
    %v311 = vld [vmem:[%s285 + $0x64] sm:$0xf]
    %v312 = vld [vmem:[%s285 + $0x68] sm:$0xf]
    %v313 = vld [vmem:[%s285 + $0x6c] sm:$0xf]
    %v314 = vld [vmem:[%s285 + $0x70] sm:$0xf]
    %v315 = vld [vmem:[%s285 + $0x74] sm:$0xf]
    %v316 = vld [vmem:[%s285 + $0x78] sm:$0xf]
    %v317 = vld [vmem:[%s285 + $0x7c] sm:$0xf]
    %v322 = vunpack.c.l.b16 %v281
    %v323 = vunpack.c.h.b16 %v281
    %v324 = vunpack.c.l.b16 %v282
    %v325 = vunpack.c.h.b16 %v282
    %v326 = vunpack.c.l.b16 %v283
    %v327 = vunpack.c.h.b16 %v283
    %v328 = vunpack.c.l.b16 %v284
    %v329 = vunpack.c.h.b16 %v284
    %v330 = vpack.c.b16 %v324, %v322
    %v331 = vpack.c.b16 %v325, %v323
    %v332 = vpack.c.b16 %v328, %v326
    %v333 = vpack.c.b16 %v329, %v327
    %v370 = vunpack.c.l.b16 %v286
    %v371 = vunpack.c.l.b16 %v287
    %v372 = vunpack.c.l.b16 %v288
    %v373 = vunpack.c.l.b16 %v289
    %v374 = vunpack.c.l.b16 %v290
    %v375 = vunpack.c.l.b16 %v291
    %v376 = vunpack.c.l.b16 %v292
    %v377 = vunpack.c.l.b16 %v293
    %v378 = vunpack.c.l.b16 %v294
    %v379 = vunpack.c.l.b16 %v295
    %v380 = vunpack.c.l.b16 %v296
    %v381 = vunpack.c.l.b16 %v297
    %v382 = vunpack.c.l.b16 %v298
    %v383 = vunpack.c.l.b16 %v299
    %v384 = vunpack.c.l.b16 %v300
    %v385 = vunpack.c.l.b16 %v301
    %v386 = vunpack.c.l.b16 %v302
    %v387 = vunpack.c.l.b16 %v303
    %v388 = vunpack.c.l.b16 %v304
    %v389 = vunpack.c.l.b16 %v305
    %v390 = vunpack.c.l.b16 %v306
    %v391 = vunpack.c.l.b16 %v307
    %v392 = vunpack.c.l.b16 %v308
    %v393 = vunpack.c.l.b16 %v309
    %v394 = vunpack.c.l.b16 %v310
    %v395 = vunpack.c.l.b16 %v311
    %v396 = vunpack.c.l.b16 %v312
    %v397 = vunpack.c.l.b16 %v313
    %v398 = vunpack.c.l.b16 %v314
    %v399 = vunpack.c.l.b16 %v315
    %v400 = vunpack.c.l.b16 %v316
    %v401 = vunpack.c.l.b16 %v317
    %v402 = vpack.c.b16 %v371, %v370
    %v403 = vpack.c.b16 %v373, %v372
    %v404 = vpack.c.b16 %v375, %v374
    %v405 = vpack.c.b16 %v377, %v376
    %v406 = vpack.c.b16 %v379, %v378
    %v407 = vpack.c.b16 %v381, %v380
    %v408 = vpack.c.b16 %v383, %v382
    %v409 = vpack.c.b16 %v385, %v384
    %v410 = vpack.c.b16 %v387, %v386
    %v411 = vpack.c.b16 %v389, %v388
    %v412 = vpack.c.b16 %v391, %v390
    %v413 = vpack.c.b16 %v393, %v392
    %v414 = vpack.c.b16 %v395, %v394
    %v415 = vpack.c.b16 %v397, %v396
    %v416 = vpack.c.b16 %v399, %v398
    %v417 = vpack.c.b16 %v401, %v400
    %434 = vmatprep.subr.bf16.mxu0 0
    %435 = vmatpush1.bf16.msra.mxu0 %v409
    %436 = vmatprep.subr.bf16.mxu0 0
    %437 = vmatpush1.bf16.msra.mxu0 %v408
    %438 = vmatprep.subr.bf16.mxu0 0
    %439 = vmatpush1.bf16.msra.mxu0 %v407
    %440 = vmatprep.subr.bf16.mxu0 0
    %441 = vmatpush1.bf16.msra.mxu0 %v406
    %442 = vmatprep.subr.bf16.mxu0 0
    %443 = vmatpush1.bf16.msra.mxu0 %v405
    %444 = vmatprep.subr.bf16.mxu0 0
    %445 = vmatpush1.bf16.msra.mxu0 %v404
    %446 = vmatprep.subr.bf16.mxu0 0
    %447 = vmatpush1.bf16.msra.mxu0 %v403
    %448 = vmatprep.subr.bf16.mxu0 0
    %449 = vmatpush1.bf16.msra.mxu0 %v402
    %450 = vmatprep.subr.bf16.mxu0 0
    %451 = vmatpush2.bf16.msra.mxu0 %v417
    %452 = vmatprep.subr.bf16.mxu0 0
    %453 = vmatpush2.bf16.msra.mxu0 %v416
    %454 = vmatprep.subr.bf16.mxu0 0
    %455 = vmatpush2.bf16.msra.mxu0 %v415
    %456 = vmatprep.subr.bf16.mxu0 0
    %457 = vmatpush2.bf16.msra.mxu0 %v414
    %458 = vmatprep.subr.bf16.mxu0 0
    %459 = vmatpush2.bf16.msra.mxu0 %v413
    %460 = vmatprep.subr.bf16.mxu0 0
    %461 = vmatpush2.bf16.msra.mxu0 %v412
    %462 = vmatprep.subr.bf16.mxu0 0
    %463 = vmatpush2.bf16.msra.mxu0 %v411
    %464 = vmatprep.subr.bf16.mxu0 0
    %465 = vmatpush2.bf16.msra.mxu0 %v410
    %466 = vmatprep.mubr.bf16.mxu0 %v331
    %467 = vmatmul.mubr.bf16.gmra.mxu0 %v330
    %v468 = vpop.f32.mrf.mxu0
    %v469 = vadd.f32 0.0, %v468
    %v470 = vpop.f32.mrf.mxu0
    %v471 = vpop.f32.mrf.mxu0
    %v472 = vadd.f32 0.0, %v471
    %v473 = vpop.f32.mrf.mxu0
    %474 = vmatprep.mubr.bf16.mxu0 %v333
    %475 = vmatmul.mubr.bf16.gmra.mxu0 %v332
    %v476 = vpop.f32.mrf.mxu0
    %v477 = vadd.f32 0.0, %v476
    %v478 = vpop.f32.mrf.mxu0
    %v479 = vpop.f32.mrf.mxu0
    %v480 = vadd.f32 0.0, %v479
    %v481 = vpop.f32.mrf.mxu0
    %482 = vdwg.mxu0
    %s483 = scalar_lea.vmem [#allocation2], 32
    %484 = vst.msk [vmem:[%s483] sm:$0xff] %vm243, %v469
    %485 = vst.msk [vmem:[%s483 + $0x8] sm:$0xff] %vm243, %v472
    %486 = vst.msk [vmem:[%s483 + $0x10] sm:$0xff] %vm243, %v477
    %487 = vst.msk [vmem:[%s483 + $0x18] sm:$0xff] %vm243, %v480
    %v488 = vsel %vm243, %v469, 0.0
    %v489 = vsel %vm243, %v472, 0.0
    %v490 = vadd.f32 %v488, %v489
    %v491 = vsel %vm243, %v477, 0.0
    %v492 = vadd.f32 %v490, %v491
    %v493 = vsel %vm243, %v480, 0.0
    %v494 = vadd.f32 %v492, %v493
    %v495 = vrot.slane %v494, 4
    %v496 = vadd.f32 %v494, %v495
    %v497 = vrot.slane %v496, 2
    %v498 = vadd.f32 %v496, %v497
    %v499 = vrot.slane %v498, 1
    %v500 = vadd.f32 %v498, %v499
    %v501 = vadd.f32 %v261, %v500
    %v502 = vmul.f32 %v469, %v469
    %v503 = vmul.f32 %v472, %v472
    %v504 = vmul.f32 %v477, %v477
    %v505 = vmul.f32 %v480, %v480
    %v506 = vsel %vm243, %v502, 0.0
    %v507 = vsel %vm243, %v503, 0.0
    %v508 = vadd.f32 %v506, %v507
    %v509 = vsel %vm243, %v504, 0.0
    %v510 = vadd.f32 %v508, %v509
    %v511 = vsel %vm243, %v505, 0.0
    %v512 = vadd.f32 %v510, %v511
    %v513 = vrot.slane %v512, 4
    %v514 = vadd.f32 %v512, %v513
    %v515 = vrot.slane %v514, 2
    %v516 = vadd.f32 %v514, %v515
    %v517 = vrot.slane %v516, 1
    %v518 = vadd.f32 %v516, %v517
    %v519 = vadd.f32 %v279, %v518
    %s520 = scalar_lea.vmem %s0, 64
    %v521 = vld [vmem:[%s520] sm:$0xff]
    %v522 = vld [vmem:[%s520 + $0x8] sm:$0xff]
    %v523 = vld [vmem:[%s520 + $0x10] sm:$0xff]
    %v524 = vld [vmem:[%s520 + $0x18] sm:$0xff]
    %s525 = scalar_lea.vmem %s1, 256
    %v526 = vld [vmem:[%s525] sm:$0xf]
    %v527 = vld [vmem:[%s525 + $0x4] sm:$0xf]
    %v528 = vld [vmem:[%s525 + $0x8] sm:$0xf]
    %v529 = vld [vmem:[%s525 + $0xc] sm:$0xf]
    %v530 = vld [vmem:[%s525 + $0x10] sm:$0xf]
    %v531 = vld [vmem:[%s525 + $0x14] sm:$0xf]
    %v532 = vld [vmem:[%s525 + $0x18] sm:$0xf]
    %v533 = vld [vmem:[%s525 + $0x1c] sm:$0xf]
    %v534 = vld [vmem:[%s525 + $0x20] sm:$0xf]
    %v535 = vld [vmem:[%s525 + $0x24] sm:$0xf]
    %v536 = vld [vmem:[%s525 + $0x28] sm:$0xf]
    %v537 = vld [vmem:[%s525 + $0x2c] sm:$0xf]
    %v538 = vld [vmem:[%s525 + $0x30] sm:$0xf]
    %v539 = vld [vmem:[%s525 + $0x34] sm:$0xf]
    %v540 = vld [vmem:[%s525 + $0x38] sm:$0xf]
    %v541 = vld [vmem:[%s525 + $0x3c] sm:$0xf]
    %v542 = vld [vmem:[%s525 + $0x40] sm:$0xf]
    %v543 = vld [vmem:[%s525 + $0x44] sm:$0xf]
    %v544 = vld [vmem:[%s525 + $0x48] sm:$0xf]
    %v545 = vld [vmem:[%s525 + $0x4c] sm:$0xf]
    %v546 = vld [vmem:[%s525 + $0x50] sm:$0xf]
    %v547 = vld [vmem:[%s525 + $0x54] sm:$0xf]
    %v548 = vld [vmem:[%s525 + $0x58] sm:$0xf]
    %v549 = vld [vmem:[%s525 + $0x5c] sm:$0xf]
    %v550 = vld [vmem:[%s525 + $0x60] sm:$0xf]
    %v551 = vld [vmem:[%s525 + $0x64] sm:$0xf]
    %v552 = vld [vmem:[%s525 + $0x68] sm:$0xf]
    %v553 = vld [vmem:[%s525 + $0x6c] sm:$0xf]
    %v554 = vld [vmem:[%s525 + $0x70] sm:$0xf]
    %v555 = vld [vmem:[%s525 + $0x74] sm:$0xf]
    %v556 = vld [vmem:[%s525 + $0x78] sm:$0xf]
    %v557 = vld [vmem:[%s525 + $0x7c] sm:$0xf]
    %v562 = vunpack.c.l.b16 %v521
    %v563 = vunpack.c.h.b16 %v521
    %v564 = vunpack.c.l.b16 %v522
    %v565 = vunpack.c.h.b16 %v522
    %v566 = vunpack.c.l.b16 %v523
    %v567 = vunpack.c.h.b16 %v523
    %v568 = vunpack.c.l.b16 %v524
    %v569 = vunpack.c.h.b16 %v524
    %v570 = vpack.c.b16 %v564, %v562
    %v571 = vpack.c.b16 %v565, %v563
    %v572 = vpack.c.b16 %v568, %v566
    %v573 = vpack.c.b16 %v569, %v567
    %v610 = vunpack.c.l.b16 %v526
    %v611 = vunpack.c.l.b16 %v527
    %v612 = vunpack.c.l.b16 %v528
    %v613 = vunpack.c.l.b16 %v529
    %v614 = vunpack.c.l.b16 %v530
    %v615 = vunpack.c.l.b16 %v531
    %v616 = vunpack.c.l.b16 %v532
    %v617 = vunpack.c.l.b16 %v533
    %v618 = vunpack.c.l.b16 %v534
    %v619 = vunpack.c.l.b16 %v535
    %v620 = vunpack.c.l.b16 %v536
    %v621 = vunpack.c.l.b16 %v537
    %v622 = vunpack.c.l.b16 %v538
    %v623 = vunpack.c.l.b16 %v539
    %v624 = vunpack.c.l.b16 %v540
    %v625 = vunpack.c.l.b16 %v541
    %v626 = vunpack.c.l.b16 %v542
    %v627 = vunpack.c.l.b16 %v543
    %v628 = vunpack.c.l.b16 %v544
    %v629 = vunpack.c.l.b16 %v545
    %v630 = vunpack.c.l.b16 %v546
    %v631 = vunpack.c.l.b16 %v547
    %v632 = vunpack.c.l.b16 %v548
    %v633 = vunpack.c.l.b16 %v549
    %v634 = vunpack.c.l.b16 %v550
    %v635 = vunpack.c.l.b16 %v551
    %v636 = vunpack.c.l.b16 %v552
    %v637 = vunpack.c.l.b16 %v553
    %v638 = vunpack.c.l.b16 %v554
    %v639 = vunpack.c.l.b16 %v555
    %v640 = vunpack.c.l.b16 %v556
    %v641 = vunpack.c.l.b16 %v557
    %v642 = vpack.c.b16 %v611, %v610
    %v643 = vpack.c.b16 %v613, %v612
    %v644 = vpack.c.b16 %v615, %v614
    %v645 = vpack.c.b16 %v617, %v616
    %v646 = vpack.c.b16 %v619, %v618
    %v647 = vpack.c.b16 %v621, %v620
    %v648 = vpack.c.b16 %v623, %v622
    %v649 = vpack.c.b16 %v625, %v624
    %v650 = vpack.c.b16 %v627, %v626
    %v651 = vpack.c.b16 %v629, %v628
    %v652 = vpack.c.b16 %v631, %v630
    %v653 = vpack.c.b16 %v633, %v632
    %v654 = vpack.c.b16 %v635, %v634
    %v655 = vpack.c.b16 %v637, %v636
    %v656 = vpack.c.b16 %v639, %v638
    %v657 = vpack.c.b16 %v641, %v640
    %674 = vmatprep.subr.bf16.mxu0 0
    %675 = vmatpush1.bf16.msra.mxu0 %v649
    %676 = vmatprep.subr.bf16.mxu0 0
    %677 = vmatpush1.bf16.msra.mxu0 %v648
    %678 = vmatprep.subr.bf16.mxu0 0
    %679 = vmatpush1.bf16.msra.mxu0 %v647
    %680 = vmatprep.subr.bf16.mxu0 0
    %681 = vmatpush1.bf16.msra.mxu0 %v646
    %682 = vmatprep.subr.bf16.mxu0 0
    %683 = vmatpush1.bf16.msra.mxu0 %v645
    %684 = vmatprep.subr.bf16.mxu0 0
    %685 = vmatpush1.bf16.msra.mxu0 %v644
    %686 = vmatprep.subr.bf16.mxu0 0
    %687 = vmatpush1.bf16.msra.mxu0 %v643
    %688 = vmatprep.subr.bf16.mxu0 0
    %689 = vmatpush1.bf16.msra.mxu0 %v642
    %690 = vmatprep.subr.bf16.mxu0 0
    %691 = vmatpush2.bf16.msra.mxu0 %v657
    %692 = vmatprep.subr.bf16.mxu0 0
    %693 = vmatpush2.bf16.msra.mxu0 %v656
    %694 = vmatprep.subr.bf16.mxu0 0
    %695 = vmatpush2.bf16.msra.mxu0 %v655
    %696 = vmatprep.subr.bf16.mxu0 0
    %697 = vmatpush2.bf16.msra.mxu0 %v654
    %698 = vmatprep.subr.bf16.mxu0 0
    %699 = vmatpush2.bf16.msra.mxu0 %v653
    %700 = vmatprep.subr.bf16.mxu0 0
    %701 = vmatpush2.bf16.msra.mxu0 %v652
    %702 = vmatprep.subr.bf16.mxu0 0
    %703 = vmatpush2.bf16.msra.mxu0 %v651
    %704 = vmatprep.subr.bf16.mxu0 0
    %705 = vmatpush2.bf16.msra.mxu0 %v650
    %706 = vmatprep.mubr.bf16.mxu0 %v571
    %707 = vmatmul.mubr.bf16.gmra.mxu0 %v570
    %v708 = vpop.f32.mrf.mxu0
    %v709 = vadd.f32 0.0, %v708
    %v710 = vpop.f32.mrf.mxu0
    %v711 = vpop.f32.mrf.mxu0
    %v712 = vadd.f32 0.0, %v711
    %v713 = vpop.f32.mrf.mxu0
    %714 = vmatprep.mubr.bf16.mxu0 %v573
    %715 = vmatmul.mubr.bf16.gmra.mxu0 %v572
    %v716 = vpop.f32.mrf.mxu0
    %v717 = vadd.f32 0.0, %v716
    %v718 = vpop.f32.mrf.mxu0
    %v719 = vpop.f32.mrf.mxu0
    %v720 = vadd.f32 0.0, %v719
    %v721 = vpop.f32.mrf.mxu0
    %722 = vdwg.mxu0
    %s723 = scalar_lea.vmem [#allocation2], 64
    %724 = vst.msk [vmem:[%s723] sm:$0xff] %vm243, %v709
    %725 = vst.msk [vmem:[%s723 + $0x8] sm:$0xff] %vm243, %v712
    %726 = vst.msk [vmem:[%s723 + $0x10] sm:$0xff] %vm243, %v717
    %727 = vst.msk [vmem:[%s723 + $0x18] sm:$0xff] %vm243, %v720
    %v728 = vsel %vm243, %v709, 0.0
    %v729 = vsel %vm243, %v712, 0.0
    %v730 = vadd.f32 %v728, %v729
    %v731 = vsel %vm243, %v717, 0.0
    %v732 = vadd.f32 %v730, %v731
    %v733 = vsel %vm243, %v720, 0.0
    %v734 = vadd.f32 %v732, %v733
    %v735 = vrot.slane %v734, 4
    %v736 = vadd.f32 %v734, %v735
    %v737 = vrot.slane %v736, 2
    %v738 = vadd.f32 %v736, %v737
    %v739 = vrot.slane %v738, 1
    %v740 = vadd.f32 %v738, %v739
    %v741 = vadd.f32 %v501, %v740
    %v742 = vmul.f32 %v709, %v709
    %v743 = vmul.f32 %v712, %v712
    %v744 = vmul.f32 %v717, %v717
    %v745 = vmul.f32 %v720, %v720
    %v746 = vsel %vm243, %v742, 0.0
    %v747 = vsel %vm243, %v743, 0.0
    %v748 = vadd.f32 %v746, %v747
    %v749 = vsel %vm243, %v744, 0.0
    %v750 = vadd.f32 %v748, %v749
    %v751 = vsel %vm243, %v745, 0.0
    %v752 = vadd.f32 %v750, %v751
    %v753 = vrot.slane %v752, 4
    %v754 = vadd.f32 %v752, %v753
    %v755 = vrot.slane %v754, 2
    %v756 = vadd.f32 %v754, %v755
    %v757 = vrot.slane %v756, 1
    %v758 = vadd.f32 %v756, %v757
    %v759 = vadd.f32 %v519, %v758
    %s760 = scalar_lea.vmem %s0, 96
    %v761 = vld [vmem:[%s760] sm:$0xff]
    %v762 = vld [vmem:[%s760 + $0x8] sm:$0xff]
    %v763 = vld [vmem:[%s760 + $0x10] sm:$0xff]
    %v764 = vld [vmem:[%s760 + $0x18] sm:$0xff]
    %s765 = scalar_lea.vmem %s1, 384
    %v766 = vld [vmem:[%s765] sm:$0xf]
    %v767 = vld [vmem:[%s765 + $0x4] sm:$0xf]
    %v768 = vld [vmem:[%s765 + $0x8] sm:$0xf]
    %v769 = vld [vmem:[%s765 + $0xc] sm:$0xf]
    %v770 = vld [vmem:[%s765 + $0x10] sm:$0xf]
    %v771 = vld [vmem:[%s765 + $0x14] sm:$0xf]
    %v772 = vld [vmem:[%s765 + $0x18] sm:$0xf]
    %v773 = vld [vmem:[%s765 + $0x1c] sm:$0xf]
    %v774 = vld [vmem:[%s765 + $0x20] sm:$0xf]
    %v775 = vld [vmem:[%s765 + $0x24] sm:$0xf]
    %v776 = vld [vmem:[%s765 + $0x28] sm:$0xf]
    %v777 = vld [vmem:[%s765 + $0x2c] sm:$0xf]
    %v778 = vld [vmem:[%s765 + $0x30] sm:$0xf]
    %v779 = vld [vmem:[%s765 + $0x34] sm:$0xf]
    %v780 = vld [vmem:[%s765 + $0x38] sm:$0xf]
    %v781 = vld [vmem:[%s765 + $0x3c] sm:$0xf]
    %v782 = vld [vmem:[%s765 + $0x40] sm:$0xf]
    %v783 = vld [vmem:[%s765 + $0x44] sm:$0xf]
    %v784 = vld [vmem:[%s765 + $0x48] sm:$0xf]
    %v785 = vld [vmem:[%s765 + $0x4c] sm:$0xf]
    %v786 = vld [vmem:[%s765 + $0x50] sm:$0xf]
    %v787 = vld [vmem:[%s765 + $0x54] sm:$0xf]
    %v788 = vld [vmem:[%s765 + $0x58] sm:$0xf]
    %v789 = vld [vmem:[%s765 + $0x5c] sm:$0xf]
    %v790 = vld [vmem:[%s765 + $0x60] sm:$0xf]
    %v791 = vld [vmem:[%s765 + $0x64] sm:$0xf]
    %v792 = vld [vmem:[%s765 + $0x68] sm:$0xf]
    %v793 = vld [vmem:[%s765 + $0x6c] sm:$0xf]
    %v794 = vld [vmem:[%s765 + $0x70] sm:$0xf]
    %v795 = vld [vmem:[%s765 + $0x74] sm:$0xf]
    %v796 = vld [vmem:[%s765 + $0x78] sm:$0xf]
    %v797 = vld [vmem:[%s765 + $0x7c] sm:$0xf]
    %v802 = vunpack.c.l.b16 %v761
    %v803 = vunpack.c.h.b16 %v761
    %v804 = vunpack.c.l.b16 %v762
    %v805 = vunpack.c.h.b16 %v762
    %v806 = vunpack.c.l.b16 %v763
    %v807 = vunpack.c.h.b16 %v763
    %v808 = vunpack.c.l.b16 %v764
    %v809 = vunpack.c.h.b16 %v764
    %v810 = vpack.c.b16 %v804, %v802
    %v811 = vpack.c.b16 %v805, %v803
    %v812 = vpack.c.b16 %v808, %v806
    %v813 = vpack.c.b16 %v809, %v807
    %v850 = vunpack.c.l.b16 %v766
    %v851 = vunpack.c.l.b16 %v767
    %v852 = vunpack.c.l.b16 %v768
    %v853 = vunpack.c.l.b16 %v769
    %v854 = vunpack.c.l.b16 %v770
    %v855 = vunpack.c.l.b16 %v771
    %v856 = vunpack.c.l.b16 %v772
    %v857 = vunpack.c.l.b16 %v773
    %v858 = vunpack.c.l.b16 %v774
    %v859 = vunpack.c.l.b16 %v775
    %v860 = vunpack.c.l.b16 %v776
    %v861 = vunpack.c.l.b16 %v777
    %v862 = vunpack.c.l.b16 %v778
    %v863 = vunpack.c.l.b16 %v779
    %v864 = vunpack.c.l.b16 %v780
    %v865 = vunpack.c.l.b16 %v781
    %v866 = vunpack.c.l.b16 %v782
    %v867 = vunpack.c.l.b16 %v783
    %v868 = vunpack.c.l.b16 %v784
    %v869 = vunpack.c.l.b16 %v785
    %v870 = vunpack.c.l.b16 %v786
    %v871 = vunpack.c.l.b16 %v787
    %v872 = vunpack.c.l.b16 %v788
    %v873 = vunpack.c.l.b16 %v789
    %v874 = vunpack.c.l.b16 %v790
    %v875 = vunpack.c.l.b16 %v791
    %v876 = vunpack.c.l.b16 %v792
    %v877 = vunpack.c.l.b16 %v793
    %v878 = vunpack.c.l.b16 %v794
    %v879 = vunpack.c.l.b16 %v795
    %v880 = vunpack.c.l.b16 %v796
    %v881 = vunpack.c.l.b16 %v797
    %v882 = vpack.c.b16 %v851, %v850
    %v883 = vpack.c.b16 %v853, %v852
    %v884 = vpack.c.b16 %v855, %v854
    %v885 = vpack.c.b16 %v857, %v856
    %v886 = vpack.c.b16 %v859, %v858
    %v887 = vpack.c.b16 %v861, %v860
    %v888 = vpack.c.b16 %v863, %v862
    %v889 = vpack.c.b16 %v865, %v864
    %v890 = vpack.c.b16 %v867, %v866
    %v891 = vpack.c.b16 %v869, %v868
    %v892 = vpack.c.b16 %v871, %v870
    %v893 = vpack.c.b16 %v873, %v872
    %v894 = vpack.c.b16 %v875, %v874
    %v895 = vpack.c.b16 %v877, %v876
    %v896 = vpack.c.b16 %v879, %v878
    %v897 = vpack.c.b16 %v881, %v880
    %914 = vmatprep.subr.bf16.mxu0 0
    %915 = vmatpush1.bf16.msra.mxu0 %v889
    %916 = vmatprep.subr.bf16.mxu0 0
    %917 = vmatpush1.bf16.msra.mxu0 %v888
    %918 = vmatprep.subr.bf16.mxu0 0
    %919 = vmatpush1.bf16.msra.mxu0 %v887
    %920 = vmatprep.subr.bf16.mxu0 0
    %921 = vmatpush1.bf16.msra.mxu0 %v886
    %922 = vmatprep.subr.bf16.mxu0 0
    %923 = vmatpush1.bf16.msra.mxu0 %v885
    %924 = vmatprep.subr.bf16.mxu0 0
    %925 = vmatpush1.bf16.msra.mxu0 %v884
    %926 = vmatprep.subr.bf16.mxu0 0
    %927 = vmatpush1.bf16.msra.mxu0 %v883
    %928 = vmatprep.subr.bf16.mxu0 0
    %929 = vmatpush1.bf16.msra.mxu0 %v882
    %930 = vmatprep.subr.bf16.mxu0 0
    %931 = vmatpush2.bf16.msra.mxu0 %v897
    %932 = vmatprep.subr.bf16.mxu0 0
    %933 = vmatpush2.bf16.msra.mxu0 %v896
    %934 = vmatprep.subr.bf16.mxu0 0
    %935 = vmatpush2.bf16.msra.mxu0 %v895
    %936 = vmatprep.subr.bf16.mxu0 0
    %937 = vmatpush2.bf16.msra.mxu0 %v894
    %938 = vmatprep.subr.bf16.mxu0 0
    %939 = vmatpush2.bf16.msra.mxu0 %v893
    %940 = vmatprep.subr.bf16.mxu0 0
    %941 = vmatpush2.bf16.msra.mxu0 %v892
    %942 = vmatprep.subr.bf16.mxu0 0
    %943 = vmatpush2.bf16.msra.mxu0 %v891
    %944 = vmatprep.subr.bf16.mxu0 0
    %945 = vmatpush2.bf16.msra.mxu0 %v890
    %946 = vmatprep.mubr.bf16.mxu0 %v811
    %947 = vmatmul.mubr.bf16.gmra.mxu0 %v810
    %v948 = vpop.f32.mrf.mxu0
    %v949 = vadd.f32 0.0, %v948
    %v950 = vpop.f32.mrf.mxu0
    %v951 = vpop.f32.mrf.mxu0
    %v952 = vadd.f32 0.0, %v951
    %v953 = vpop.f32.mrf.mxu0
    %954 = vmatprep.mubr.bf16.mxu0 %v813
    %955 = vmatmul.mubr.bf16.gmra.mxu0 %v812
    %v956 = vpop.f32.mrf.mxu0
    %v957 = vadd.f32 0.0, %v956
    %v958 = vpop.f32.mrf.mxu0
    %v959 = vpop.f32.mrf.mxu0
    %v960 = vadd.f32 0.0, %v959
    %v961 = vpop.f32.mrf.mxu0
    %962 = vdwg.mxu0
    %s963 = scalar_lea.vmem [#allocation2], 96
    %964 = vst.msk [vmem:[%s963] sm:$0xff] %vm243, %v949
    %965 = vst.msk [vmem:[%s963 + $0x8] sm:$0xff] %vm243, %v952
    %966 = vst.msk [vmem:[%s963 + $0x10] sm:$0xff] %vm243, %v957
    %967 = vst.msk [vmem:[%s963 + $0x18] sm:$0xff] %vm243, %v960
    %v968 = vsel %vm243, %v949, 0.0
    %v969 = vsel %vm243, %v952, 0.0
    %v970 = vadd.f32 %v968, %v969
    %v971 = vsel %vm243, %v957, 0.0
    %v972 = vadd.f32 %v970, %v971
    %v973 = vsel %vm243, %v960, 0.0
    %v974 = vadd.f32 %v972, %v973
    %v975 = vrot.slane %v974, 4
    %v976 = vadd.f32 %v974, %v975
    %v977 = vrot.slane %v976, 2
    %v978 = vadd.f32 %v976, %v977
    %v979 = vrot.slane %v978, 1
    %v980 = vadd.f32 %v978, %v979
    %v981 = vadd.f32 %v741, %v980
    %v982 = vmul.f32 %v949, %v949
    %v983 = vmul.f32 %v952, %v952
    %v984 = vmul.f32 %v957, %v957
    %v985 = vmul.f32 %v960, %v960
    %v986 = vsel %vm243, %v982, 0.0
    %v987 = vsel %vm243, %v983, 0.0
    %v988 = vadd.f32 %v986, %v987
    %v989 = vsel %vm243, %v984, 0.0
    %v990 = vadd.f32 %v988, %v989
    %v991 = vsel %vm243, %v985, 0.0
    %v992 = vadd.f32 %v990, %v991
    %v993 = vrot.slane %v992, 4
    %v994 = vadd.f32 %v992, %v993
    %v995 = vrot.slane %v994, 2
    %v996 = vadd.f32 %v994, %v995
    %v997 = vrot.slane %v996, 1
    %v998 = vadd.f32 %v996, %v997
    %v999 = vadd.f32 %v759, %v998
    %v1000 = vmul.f32 %v981, 0.0078125
    %v1001 = vmul.f32 %v999, 0.0078125
    %v1002 = vmul.f32 %v1000, %v1000
    %v1003 = vsub.f32 %v1001, %v1002
    %v1004 = vmax.f32 %v1003, 0.0
    %v1005 = vld [vmem:[#allocation3] sm:$0x1]
    %v1006 = vadd.f32 %v1004, 1e-05
    %v1007 = vrsqrt.pop %v1006
    %v1008 = vmul.f32 %v1005, %v1007
    %v1009 = vld [vmem:[#allocation5] sm:$0x1]
    %v1010 = vmul.f32 %v1000, %v1008
    %v1011 = vsub.f32 %v1009, %v1010
    %v1012 = vld [vmem:[#allocation2] sm:$0xff]
    %v1013 = vld [vmem:[#allocation2 + $0x8] sm:$0xff]
    %v1014 = vld [vmem:[#allocation2 + $0x10] sm:$0xff]
    %v1015 = vld [vmem:[#allocation2 + $0x18] sm:$0xff]
    %v1017 = vlaneseq
    %v1018 = vshrl.u32 %v1017, 7
    %v1019 = vsub.s32 0, %v1018
    %v1020 = vrot.slane %v1008, %v1019
    %v1022 = vmul.f32 %v1012, %v1020
    %v1023 = vmul.f32 %v1013, %v1020
    %v1024 = vmul.f32 %v1014, %v1020
    %v1025 = vmul.f32 %v1015, %v1020
    %v1027 = vlaneseq
    %v1028 = vshrl.u32 %v1027, 7
    %v1029 = vsub.s32 0, %v1028
    %v1030 = vrot.slane %v1011, %v1029
    %v1032 = vadd.f32 %v1022, %v1030
    %v1033 = vadd.f32 %v1023, %v1030
    %v1034 = vadd.f32 %v1024, %v1030
    %v1035 = vadd.f32 %v1025, %v1030
    %v1036 = vmax.f32 %v1032, 0.0
    %v1037 = vmax.f32 %v1033, 0.0
    %v1038 = vmax.f32 %v1034, 0.0
    %v1039 = vmax.f32 %v1035, 0.0
    %v1040 = vpack.c.bf16 %v1037, %v1036
    %v1041 = vpack.c.bf16 %v1039, %v1038
    %v1044 = vunpack.c.l.b16 %v1040
    %v1045 = vunpack.c.h.b16 %v1040
    %v1046 = vunpack.c.l.b16 %v1041
    %v1047 = vunpack.c.h.b16 %v1041
    %v1048 = vpack.c.b16 %v1044, %v1044
    %v1049 = vpack.c.b16 %v1045, %v1045
    %v1050 = vpack.c.b16 %v1046, %v1046
    %v1051 = vpack.c.b16 %v1047, %v1047
    %vm1056 = vcmask 257024
    %1057 = vst.msk [vmem:[%s4] sm:$0xf] %vm1056, %v1048
    %1058 = vst.msk [vmem:[%s4 + $0x4] sm:$0xf] %vm1056, %v1049
    %1059 = vst.msk [vmem:[%s4 + $0x8] sm:$0xf] %vm1056, %v1050
    %1060 = vst.msk [vmem:[%s4 + $0xc] sm:$0xf] %vm1056, %v1051
    %v1061 = vld [vmem:[%s483] sm:$0xff]
    %v1062 = vld [vmem:[%s483 + $0x8] sm:$0xff]
    %v1063 = vld [vmem:[%s483 + $0x10] sm:$0xff]
    %v1064 = vld [vmem:[%s483 + $0x18] sm:$0xff]
    %v1065 = vmul.f32 %v1061, %v1020
    %v1066 = vmul.f32 %v1062, %v1020
    %v1067 = vmul.f32 %v1063, %v1020
    %v1068 = vmul.f32 %v1064, %v1020
    %v1069 = vadd.f32 %v1065, %v1030
    %v1070 = vadd.f32 %v1066, %v1030
    %v1071 = vadd.f32 %v1067, %v1030
    %v1072 = vadd.f32 %v1068, %v1030
    %v1073 = vmax.f32 %v1069, 0.0
    %v1074 = vmax.f32 %v1070, 0.0
    %v1075 = vmax.f32 %v1071, 0.0
    %v1076 = vmax.f32 %v1072, 0.0
    %v1077 = vpack.c.bf16 %v1074, %v1073
    %v1078 = vpack.c.bf16 %v1076, %v1075
    %v1081 = vunpack.c.l.b16 %v1077
    %v1082 = vunpack.c.h.b16 %v1077
    %v1083 = vunpack.c.l.b16 %v1078
    %v1084 = vunpack.c.h.b16 %v1078
    %v1085 = vpack.c.b16 %v1081, %v1081
    %v1086 = vpack.c.b16 %v1082, %v1082
    %v1087 = vpack.c.b16 %v1083, %v1083
    %v1088 = vpack.c.b16 %v1084, %v1084
    %s1093 = scalar_lea.vmem %s4, 16
    %1094 = vst.msk [vmem:[%s1093] sm:$0xf] %vm1056, %v1085
    %1095 = vst.msk [vmem:[%s1093 + $0x4] sm:$0xf] %vm1056, %v1086
    %1096 = vst.msk [vmem:[%s1093 + $0x8] sm:$0xf] %vm1056, %v1087
    %1097 = vst.msk [vmem:[%s1093 + $0xc] sm:$0xf] %vm1056, %v1088
    %v1098 = vld [vmem:[%s723] sm:$0xff]
    %v1099 = vld [vmem:[%s723 + $0x8] sm:$0xff]
    %v1100 = vld [vmem:[%s723 + $0x10] sm:$0xff]
    %v1101 = vld [vmem:[%s723 + $0x18] sm:$0xff]
    %v1102 = vmul.f32 %v1098, %v1020
    %v1103 = vmul.f32 %v1099, %v1020
    %v1104 = vmul.f32 %v1100, %v1020
    %v1105 = vmul.f32 %v1101, %v1020
    %v1106 = vadd.f32 %v1102, %v1030
    %v1107 = vadd.f32 %v1103, %v1030
    %v1108 = vadd.f32 %v1104, %v1030
    %v1109 = vadd.f32 %v1105, %v1030
    %v1110 = vmax.f32 %v1106, 0.0
    %v1111 = vmax.f32 %v1107, 0.0
    %v1112 = vmax.f32 %v1108, 0.0
    %v1113 = vmax.f32 %v1109, 0.0
    %v1114 = vpack.c.bf16 %v1111, %v1110
    %v1115 = vpack.c.bf16 %v1113, %v1112
    %v1118 = vunpack.c.l.b16 %v1114
    %v1119 = vunpack.c.h.b16 %v1114
    %v1120 = vunpack.c.l.b16 %v1115
    %v1121 = vunpack.c.h.b16 %v1115
    %v1122 = vpack.c.b16 %v1118, %v1118
    %v1123 = vpack.c.b16 %v1119, %v1119
    %v1124 = vpack.c.b16 %v1120, %v1120
    %v1125 = vpack.c.b16 %v1121, %v1121
    %s1130 = scalar_lea.vmem %s4, 32
    %1131 = vst.msk [vmem:[%s1130] sm:$0xf] %vm1056, %v1122
    %1132 = vst.msk [vmem:[%s1130 + $0x4] sm:$0xf] %vm1056, %v1123
    %1133 = vst.msk [vmem:[%s1130 + $0x8] sm:$0xf] %vm1056, %v1124
    %1134 = vst.msk [vmem:[%s1130 + $0xc] sm:$0xf] %vm1056, %v1125
    %v1135 = vld [vmem:[%s963] sm:$0xff]
    %v1136 = vld [vmem:[%s963 + $0x8] sm:$0xff]
    %v1137 = vld [vmem:[%s963 + $0x10] sm:$0xff]
    %v1138 = vld [vmem:[%s963 + $0x18] sm:$0xff]
    %v1139 = vmul.f32 %v1135, %v1020
    %v1140 = vmul.f32 %v1136, %v1020
    %v1141 = vmul.f32 %v1137, %v1020
    %v1142 = vmul.f32 %v1138, %v1020
    %v1143 = vadd.f32 %v1139, %v1030
    %v1144 = vadd.f32 %v1140, %v1030
    %v1145 = vadd.f32 %v1141, %v1030
    %v1146 = vadd.f32 %v1142, %v1030
    %v1147 = vmax.f32 %v1143, 0.0
    %v1148 = vmax.f32 %v1144, 0.0
    %v1149 = vmax.f32 %v1145, 0.0
    %v1150 = vmax.f32 %v1146, 0.0
    %v1151 = vpack.c.bf16 %v1148, %v1147
    %v1152 = vpack.c.bf16 %v1150, %v1149
    %v1155 = vunpack.c.l.b16 %v1151
    %v1156 = vunpack.c.h.b16 %v1151
    %v1157 = vunpack.c.l.b16 %v1152
    %v1158 = vunpack.c.h.b16 %v1152
    %v1159 = vpack.c.b16 %v1155, %v1155
    %v1160 = vpack.c.b16 %v1156, %v1156
    %v1161 = vpack.c.b16 %v1157, %v1157
    %v1162 = vpack.c.b16 %v1158, %v1158
    %s1167 = scalar_lea.vmem %s4, 48
    %1168 = vst.msk [vmem:[%s1167] sm:$0xf] %vm1056, %v1159
    %1169 = vst.msk [vmem:[%s1167 + $0x4] sm:$0xf] %vm1056, %v1160
    %1170 = vst.msk [vmem:[%s1167 + $0x8] sm:$0xf] %vm1056, %v1161
    %1171 = vst.msk [vmem:[%s1167 + $0xc] sm:$0xf] %vm1056, %v1162
    // Predicated region
    $region26: #{cond_conv_generator_forward.5} parent=1 // pred_check
      _
    $region27: #{cond_conv_generator_forward.5} parent=1 // pred_check_branch
      %1173 = sbr.rel (0) target = $region29
    $region28: #{cond_conv_generator_forward.5} parent=1 // pred_region
      _
    $region29: #{cond_conv_generator_forward.5} parent=1 // pred_fallthru
      _
    // Predicated region
    $region30: #{cond_conv_generator_forward.5} parent=1 // pred_check
      _
    $region31: #{cond_conv_generator_forward.5} parent=1 // pred_check_branch
      %1175 = sbr.rel (0) target = $region33
    $region32: #{cond_conv_generator_forward.5} parent=1 // pred_region
      _
    $region33: #{cond_conv_generator_forward.5} parent=1 // pred_fallthru
      _
    %1176 = vsyncpa [#allocation4], 1
    %1177 = vsyncpa [#allocation6], 1

// kernel: cond_conv_generator_forward.6
$region0: #{cond_conv_generator_forward.6}
  #allocation0 [shape = 'u32[]', space=smem, size = 0x4, offset = 0x4, fixed_abs, tag = 'smem constant byte address 0x4 - core index']
  #allocation1 [shape = 'u32[144,128]{1,0:T(1,128)}', space=vmem, size = 0x12000, scoped, tag = 'internal scratch']
  #allocation2 [shape = 'f32[4,128,16]{2,1,0:T(8,128)}', space=vmem, size = 0x40000, scoped, tag = 'scratch operand']
  %s0 = inlined_call_operand.vmem [shape: bf16[4,128,128], index: 0, kind: input, shape index: {}]
  %s1 = inlined_call_operand.vmem [shape: bf16[4,128,16], index: 1, kind: input, shape index: {}]
  %s2 = inlined_call_operand.vmem [shape: f32[1,16], index: 2, kind: input, shape index: {}]
  %s3 = inlined_call_operand.vmem [shape: f32[1,16], index: 3, kind: input, shape index: {}]
  %s4 = inlined_call_operand.vmem [shape: bf16[4,128,16], index: 4, kind: output, shape index: {}]
  %s5 = sld [smem:[#allocation0]]
  $region26: #{cond_conv_generator_forward.6} parent=0
    _
  %s7 = ssub.s32 1, %s5
  %s8 = scalar_select 0, %s7, %s5
  // Predicated region
  $region2: #{cond_conv_generator_forward.6} parent=0 // pred_check
    _
  $region3: #{cond_conv_generator_forward.6} parent=0 // pred_check_branch
    %10 = sbr.rel (0) target = $region5
  $region4: #{cond_conv_generator_forward.6} parent=0 // pred_region
    _
  $region5: #{cond_conv_generator_forward.6} parent=0 // pred_fallthru
    _
  // Predicated region
  $region6: #{cond_conv_generator_forward.6} parent=0 // pred_check
    _
  $region7: #{cond_conv_generator_forward.6} parent=0 // pred_check_branch
    %12 = sbr.rel (0) target = $region9
  $region8: #{cond_conv_generator_forward.6} parent=0 // pred_region
    _
  $region9: #{cond_conv_generator_forward.6} parent=0 // pred_fallthru
    _
  // Predicated region
  $region10: #{cond_conv_generator_forward.6} parent=0 // pred_check
    _
  $region11: #{cond_conv_generator_forward.6} parent=0 // pred_check_branch
    %14 = sbr.rel (0) target = $region13
  $region12: #{cond_conv_generator_forward.6} parent=0 // pred_region
    _
  $region13: #{cond_conv_generator_forward.6} parent=0 // pred_fallthru
    _
  // Predicated region
  $region14: #{cond_conv_generator_forward.6} parent=0 // pred_check
    _
  $region15: #{cond_conv_generator_forward.6} parent=0 // pred_check_branch
    %16 = sbr.rel (0) target = $region17
  $region16: #{cond_conv_generator_forward.6} parent=0 // pred_region
    _
  $region17: #{cond_conv_generator_forward.6} parent=0 // pred_fallthru
    _
  %v18 = vld [vmem:[%s0] sm:$0xf]
  %v19 = vld [vmem:[%s0 + $0x4] sm:$0xf]
  %v20 = vld [vmem:[%s0 + $0x8] sm:$0xf]
  %v21 = vld [vmem:[%s0 + $0xc] sm:$0xf]
  %v22 = vld [vmem:[%s0 + $0x10] sm:$0xf]
  %v23 = vld [vmem:[%s0 + $0x14] sm:$0xf]
  %v24 = vld [vmem:[%s0 + $0x18] sm:$0xf]
  %v25 = vld [vmem:[%s0 + $0x1c] sm:$0xf]
  %v26 = vld [vmem:[%s0 + $0x20] sm:$0xf]
  %v27 = vld [vmem:[%s0 + $0x24] sm:$0xf]
  %v28 = vld [vmem:[%s0 + $0x28] sm:$0xf]
  %v29 = vld [vmem:[%s0 + $0x2c] sm:$0xf]
  %v30 = vld [vmem:[%s0 + $0x30] sm:$0xf]
  %v31 = vld [vmem:[%s0 + $0x34] sm:$0xf]
  %v32 = vld [vmem:[%s0 + $0x38] sm:$0xf]
  %v33 = vld [vmem:[%s0 + $0x3c] sm:$0xf]
  %v34 = vld [vmem:[%s1] sm:$0xf]
  %v35 = vld [vmem:[%s1 + $0x4] sm:$0xf]
  %v36 = vld [vmem:[%s1 + $0x8] sm:$0xf]
  %v37 = vld [vmem:[%s1 + $0xc] sm:$0xf]
  %v38 = vld [vmem:[%s1 + $0x10] sm:$0xf]
  %v39 = vld [vmem:[%s1 + $0x14] sm:$0xf]
  %v40 = vld [vmem:[%s1 + $0x18] sm:$0xf]
  %v41 = vld [vmem:[%s1 + $0x1c] sm:$0xf]
  %v42 = vld [vmem:[%s1 + $0x20] sm:$0xf]
  %v43 = vld [vmem:[%s1 + $0x24] sm:$0xf]
  %v44 = vld [vmem:[%s1 + $0x28] sm:$0xf]
  %v45 = vld [vmem:[%s1 + $0x2c] sm:$0xf]
  %v46 = vld [vmem:[%s1 + $0x30] sm:$0xf]
  %v47 = vld [vmem:[%s1 + $0x34] sm:$0xf]
  %v48 = vld [vmem:[%s1 + $0x38] sm:$0xf]
  %v49 = vld [vmem:[%s1 + $0x3c] sm:$0xf]
  %v66 = vunpack.c.l.b16 %v18
  %v67 = vunpack.c.l.b16 %v19
  %v68 = vunpack.c.l.b16 %v20
  %v69 = vunpack.c.l.b16 %v21
  %v70 = vunpack.c.l.b16 %v22
  %v71 = vunpack.c.l.b16 %v23
  %v72 = vunpack.c.l.b16 %v24
  %v73 = vunpack.c.l.b16 %v25
  %v74 = vunpack.c.l.b16 %v26
  %v75 = vunpack.c.l.b16 %v27
  %v76 = vunpack.c.l.b16 %v28
  %v77 = vunpack.c.l.b16 %v29
  %v78 = vunpack.c.l.b16 %v30
  %v79 = vunpack.c.l.b16 %v31
  %v80 = vunpack.c.l.b16 %v32
  %v81 = vunpack.c.l.b16 %v33
  %v82 = vpack.c.b16 %v67, %v66
  %v83 = vpack.c.b16 %v69, %v68
  %v84 = vpack.c.b16 %v71, %v70
  %v85 = vpack.c.b16 %v73, %v72
  %v86 = vpack.c.b16 %v75, %v74
  %v87 = vpack.c.b16 %v77, %v76
  %v88 = vpack.c.b16 %v79, %v78
  %v89 = vpack.c.b16 %v81, %v80
  %v114 = vunpack.c.l.b16 %v34
  %v115 = vunpack.c.l.b16 %v35
  %v116 = vunpack.c.l.b16 %v36
  %v117 = vunpack.c.l.b16 %v37
  %v118 = vunpack.c.l.b16 %v38
  %v119 = vunpack.c.l.b16 %v39
  %v120 = vunpack.c.l.b16 %v40
  %v121 = vunpack.c.l.b16 %v41
  %v122 = vunpack.c.l.b16 %v42
  %v123 = vunpack.c.l.b16 %v43
  %v124 = vunpack.c.l.b16 %v44
  %v125 = vunpack.c.l.b16 %v45
  %v126 = vunpack.c.l.b16 %v46
  %v127 = vunpack.c.l.b16 %v47
  %v128 = vunpack.c.l.b16 %v48
  %v129 = vunpack.c.l.b16 %v49
  %v130 = vpack.c.b16 %v115, %v114
  %v131 = vpack.c.b16 %v117, %v116
  %v132 = vpack.c.b16 %v119, %v118
  %v133 = vpack.c.b16 %v121, %v120
  %v134 = vpack.c.b16 %v123, %v122
  %v135 = vpack.c.b16 %v125, %v124
  %v136 = vpack.c.b16 %v127, %v126
  %v137 = vpack.c.b16 %v129, %v128
  %146 = vmatprep.subr.bf16.mxu0 0
  %147 = vmatpush1.bf16.msra.mxu0 %v137
  %148 = vmatprep.subr.bf16.mxu0 0
  %149 = vmatpush1.bf16.msra.mxu0 %v136
  %150 = vmatprep.subr.bf16.mxu0 0
  %151 = vmatpush1.bf16.msra.mxu0 %v135
  %152 = vmatprep.subr.bf16.mxu0 0
  %153 = vmatpush1.bf16.msra.mxu0 %v134
  %154 = vmatprep.subr.bf16.mxu0 0
  %155 = vmatpush1.bf16.msra.mxu0 %v133
  %156 = vmatprep.subr.bf16.mxu0 0
  %157 = vmatpush1.bf16.msra.mxu0 %v132
  %158 = vmatprep.subr.bf16.mxu0 0
  %159 = vmatpush1.bf16.msra.mxu0 %v131
  %160 = vmatprep.subr.bf16.mxu0 0
  %161 = vmatpush1.bf16.msra.mxu0 %v130
  %162 = vmatprep.subr.bf16.mxu0 0
  %163 = vmatpush2.bf16.msra.mxu0 0
  %164 = vmatprep.subr.bf16.mxu0 0
  %165 = vmatpush2.bf16.msra.mxu0 0
  %166 = vmatprep.subr.bf16.mxu0 0
  %167 = vmatpush2.bf16.msra.mxu0 0
  %168 = vmatprep.subr.bf16.mxu0 0
  %169 = vmatpush2.bf16.msra.mxu0 0
  %170 = vmatprep.subr.bf16.mxu0 0
  %171 = vmatpush2.bf16.msra.mxu0 0
  %172 = vmatprep.subr.bf16.mxu0 0
  %173 = vmatpush2.bf16.msra.mxu0 0
  %174 = vmatprep.subr.bf16.mxu0 0
  %175 = vmatpush2.bf16.msra.mxu0 0
  %176 = vmatprep.subr.bf16.mxu0 0
  %177 = vmatpush2.bf16.msra.mxu0 0
  %178 = vmatprep.mubr.bf16.mxu0 0
  %179 = vmatmul.mubr.bf16.gmra.mxu0 %v82
  %v180 = vpop.f32.mrf.mxu0
  %v181 = vadd.f32 0.0, %v180
  %v182 = vpop.f32.mrf.mxu0
  %v183 = vpop.f32.mrf.mxu0
  %v184 = vadd.f32 0.0, %v183
  %v185 = vpop.f32.mrf.mxu0
  %186 = vmatprep.mubr.bf16.mxu0 0
  %187 = vmatmul.mubr.bf16.gmra.mxu0 %v83
  %v188 = vpop.f32.mrf.mxu0
  %v189 = vadd.f32 0.0, %v188
  %v190 = vpop.f32.mrf.mxu0
  %v191 = vpop.f32.mrf.mxu0
  %v192 = vadd.f32 0.0, %v191
  %v193 = vpop.f32.mrf.mxu0
  %194 = vmatprep.mubr.bf16.mxu0 0
  %195 = vmatmul.mubr.bf16.gmra.mxu0 %v84
  %v196 = vpop.f32.mrf.mxu0
  %v197 = vadd.f32 0.0, %v196
  %v198 = vpop.f32.mrf.mxu0
  %v199 = vpop.f32.mrf.mxu0
  %v200 = vadd.f32 0.0, %v199
  %v201 = vpop.f32.mrf.mxu0
  %202 = vmatprep.mubr.bf16.mxu0 0
  %203 = vmatmul.mubr.bf16.gmra.mxu0 %v85
  %v204 = vpop.f32.mrf.mxu0
  %v205 = vadd.f32 0.0, %v204
  %v206 = vpop.f32.mrf.mxu0
  %v207 = vpop.f32.mrf.mxu0
  %v208 = vadd.f32 0.0, %v207
  %v209 = vpop.f32.mrf.mxu0
  %210 = vmatprep.mubr.bf16.mxu0 0
  %211 = vmatmul.mubr.bf16.gmra.mxu0 %v86
  %v212 = vpop.f32.mrf.mxu0
  %v213 = vadd.f32 0.0, %v212
  %v214 = vpop.f32.mrf.mxu0
  %v215 = vpop.f32.mrf.mxu0
  %v216 = vadd.f32 0.0, %v215
  %v217 = vpop.f32.mrf.mxu0
  %218 = vmatprep.mubr.bf16.mxu0 0
  %219 = vmatmul.mubr.bf16.gmra.mxu0 %v87
  %v220 = vpop.f32.mrf.mxu0
  %v221 = vadd.f32 0.0, %v220
  %v222 = vpop.f32.mrf.mxu0
  %v223 = vpop.f32.mrf.mxu0
  %v224 = vadd.f32 0.0, %v223
  %v225 = vpop.f32.mrf.mxu0
  %226 = vmatprep.mubr.bf16.mxu0 0
  %227 = vmatmul.mubr.bf16.gmra.mxu0 %v88
  %v228 = vpop.f32.mrf.mxu0
  %v229 = vadd.f32 0.0, %v228
  %v230 = vpop.f32.mrf.mxu0
  %v231 = vpop.f32.mrf.mxu0
  %v232 = vadd.f32 0.0, %v231
  %v233 = vpop.f32.mrf.mxu0
  %234 = vmatprep.mubr.bf16.mxu0 0
  %235 = vmatmul.mubr.bf16.gmra.mxu0 %v89
  %v236 = vpop.f32.mrf.mxu0
  %v237 = vadd.f32 0.0, %v236
  %v238 = vpop.f32.mrf.mxu0
  %v239 = vpop.f32.mrf.mxu0
  %v240 = vadd.f32 0.0, %v239
  %v241 = vpop.f32.mrf.mxu0
  %242 = vdwg.mxu0
  %vm243 = vcmask 130048
  %244 = vst.msk [vmem:[#allocation2] sm:$0xff] %vm243, %v181
  %245 = vst.msk [vmem:[#allocation2 + $0x8] sm:$0xff] %vm243, %v184
  %246 = vst.msk [vmem:[#allocation2 + $0x10] sm:$0xff] %vm243, %v189
  %247 = vst.msk [vmem:[#allocation2 + $0x18] sm:$0xff] %vm243, %v192
  %248 = vst.msk [vmem:[#allocation2 + $0x20] sm:$0xff] %vm243, %v197
  %249 = vst.msk [vmem:[#allocation2 + $0x28] sm:$0xff] %vm243, %v200
  %250 = vst.msk [vmem:[#allocation2 + $0x30] sm:$0xff] %vm243, %v205
  %251 = vst.msk [vmem:[#allocation2 + $0x38] sm:$0xff] %vm243, %v208
  %252 = vst.msk [vmem:[#allocation2 + $0x40] sm:$0xff] %vm243, %v213
  %253 = vst.msk [vmem:[#allocation2 + $0x48] sm:$0xff] %vm243, %v216
  %254 = vst.msk [vmem:[#allocation2 + $0x50] sm:$0xff] %vm243, %v221
  %255 = vst.msk [vmem:[#allocation2 + $0x58] sm:$0xff] %vm243, %v224
  %256 = vst.msk [vmem:[#allocation2 + $0x60] sm:$0xff] %vm243, %v229
  %257 = vst.msk [vmem:[#allocation2 + $0x68] sm:$0xff] %vm243, %v232
  %258 = vst.msk [vmem:[#allocation2 + $0x70] sm:$0xff] %vm243, %v237
  %259 = vst.msk [vmem:[#allocation2 + $0x78] sm:$0xff] %vm243, %v240
  %v260 = vsel %vm243, %v181, 0.0
  %v261 = vsel %vm243, %v184, 0.0
  %v262 = vadd.f32 %v260, %v261
  %v263 = vsel %vm243, %v189, 0.0
  %v264 = vadd.f32 %v262, %v263
  %v265 = vsel %vm243, %v192, 0.0
  %v266 = vadd.f32 %v264, %v265
  %v267 = vsel %vm243, %v197, 0.0
  %v268 = vadd.f32 %v266, %v267
  %v269 = vsel %vm243, %v200, 0.0
  %v270 = vadd.f32 %v268, %v269
  %v271 = vsel %vm243, %v205, 0.0
  %v272 = vadd.f32 %v270, %v271
  %v273 = vsel %vm243, %v208, 0.0
  %v274 = vadd.f32 %v272, %v273
  %v275 = vsel %vm243, %v213, 0.0
  %v276 = vadd.f32 %v274, %v275
  %v277 = vsel %vm243, %v216, 0.0
  %v278 = vadd.f32 %v276, %v277
  %v279 = vsel %vm243, %v221, 0.0
  %v280 = vadd.f32 %v278, %v279
  %v281 = vsel %vm243, %v224, 0.0
  %v282 = vadd.f32 %v280, %v281
  %v283 = vsel %vm243, %v229, 0.0
  %v284 = vadd.f32 %v282, %v283
  %v285 = vsel %vm243, %v232, 0.0
  %v286 = vadd.f32 %v284, %v285
  %v287 = vsel %vm243, %v237, 0.0
  %v288 = vadd.f32 %v286, %v287
  %v289 = vsel %vm243, %v240, 0.0
  %v290 = vadd.f32 %v288, %v289
  %v291 = vrot.slane %v290, 4
  %v292 = vadd.f32 %v290, %v291
  %v293 = vrot.slane %v292, 2
  %v294 = vadd.f32 %v292, %v293
  %v295 = vrot.slane %v294, 1
  %v296 = vadd.f32 %v294, %v295
  %v297 = vadd.f32 %v296, 0.0
  %v298 = vmul.f32 %v181, %v181
  %v299 = vmul.f32 %v184, %v184
  %v300 = vmul.f32 %v189, %v189
  %v301 = vmul.f32 %v192, %v192
  %v302 = vmul.f32 %v197, %v197
  %v303 = vmul.f32 %v200, %v200
  %v304 = vmul.f32 %v205, %v205
  %v305 = vmul.f32 %v208, %v208
  %v306 = vmul.f32 %v213, %v213
  %v307 = vmul.f32 %v216, %v216
  %v308 = vmul.f32 %v221, %v221
  %v309 = vmul.f32 %v224, %v224
  %v310 = vmul.f32 %v229, %v229
  %v311 = vmul.f32 %v232, %v232
  %v312 = vmul.f32 %v237, %v237
  %v313 = vmul.f32 %v240, %v240
  %v314 = vsel %vm243, %v298, 0.0
  %v315 = vsel %vm243, %v299, 0.0
  %v316 = vadd.f32 %v314, %v315
  %v317 = vsel %vm243, %v300, 0.0
  %v318 = vadd.f32 %v316, %v317
  %v319 = vsel %vm243, %v301, 0.0
  %v320 = vadd.f32 %v318, %v319
  %v321 = vsel %vm243, %v302, 0.0
  %v322 = vadd.f32 %v320, %v321
  %v323 = vsel %vm243, %v303, 0.0
  %v324 = vadd.f32 %v322, %v323
  %v325 = vsel %vm243, %v304, 0.0
  %v326 = vadd.f32 %v324, %v325
  %v327 = vsel %vm243, %v305, 0.0
  %v328 = vadd.f32 %v326, %v327
  %v329 = vsel %vm243, %v306, 0.0
  %v330 = vadd.f32 %v328, %v329
  %v331 = vsel %vm243, %v307, 0.0
  %v332 = vadd.f32 %v330, %v331
  %v333 = vsel %vm243, %v308, 0.0
  %v334 = vadd.f32 %v332, %v333
  %v335 = vsel %vm243, %v309, 0.0
  %v336 = vadd.f32 %v334, %v335
  %v337 = vsel %vm243, %v310, 0.0
  %v338 = vadd.f32 %v336, %v337
  %v339 = vsel %vm243, %v311, 0.0
  %v340 = vadd.f32 %v338, %v339
  %v341 = vsel %vm243, %v312, 0.0
  %v342 = vadd.f32 %v340, %v341
  %v343 = vsel %vm243, %v313, 0.0
  %v344 = vadd.f32 %v342, %v343
  %v345 = vrot.slane %v344, 4
  %v346 = vadd.f32 %v344, %v345
  %v347 = vrot.slane %v346, 2
  %v348 = vadd.f32 %v346, %v347
  %v349 = vrot.slane %v348, 1
  %v350 = vadd.f32 %v348, %v349
  %v351 = vadd.f32 %v350, 0.0
  %s352 = scalar_lea.vmem %s0, 64
  %v353 = vld [vmem:[%s352] sm:$0xf]
  %v354 = vld [vmem:[%s352 + $0x4] sm:$0xf]
  %v355 = vld [vmem:[%s352 + $0x8] sm:$0xf]
  %v356 = vld [vmem:[%s352 + $0xc] sm:$0xf]
  %v357 = vld [vmem:[%s352 + $0x10] sm:$0xf]
  %v358 = vld [vmem:[%s352 + $0x14] sm:$0xf]
  %v359 = vld [vmem:[%s352 + $0x18] sm:$0xf]
  %v360 = vld [vmem:[%s352 + $0x1c] sm:$0xf]
  %v361 = vld [vmem:[%s352 + $0x20] sm:$0xf]
  %v362 = vld [vmem:[%s352 + $0x24] sm:$0xf]
  %v363 = vld [vmem:[%s352 + $0x28] sm:$0xf]
  %v364 = vld [vmem:[%s352 + $0x2c] sm:$0xf]
  %v365 = vld [vmem:[%s352 + $0x30] sm:$0xf]
  %v366 = vld [vmem:[%s352 + $0x34] sm:$0xf]
  %v367 = vld [vmem:[%s352 + $0x38] sm:$0xf]
  %v368 = vld [vmem:[%s352 + $0x3c] sm:$0xf]
  %s369 = scalar_lea.vmem %s1, 64
  %v370 = vld [vmem:[%s369] sm:$0xf]
  %v371 = vld [vmem:[%s369 + $0x4] sm:$0xf]
  %v372 = vld [vmem:[%s369 + $0x8] sm:$0xf]
  %v373 = vld [vmem:[%s369 + $0xc] sm:$0xf]
  %v374 = vld [vmem:[%s369 + $0x10] sm:$0xf]
  %v375 = vld [vmem:[%s369 + $0x14] sm:$0xf]
  %v376 = vld [vmem:[%s369 + $0x18] sm:$0xf]
  %v377 = vld [vmem:[%s369 + $0x1c] sm:$0xf]
  %v378 = vld [vmem:[%s369 + $0x20] sm:$0xf]
  %v379 = vld [vmem:[%s369 + $0x24] sm:$0xf]
  %v380 = vld [vmem:[%s369 + $0x28] sm:$0xf]
  %v381 = vld [vmem:[%s369 + $0x2c] sm:$0xf]
  %v382 = vld [vmem:[%s369 + $0x30] sm:$0xf]
  %v383 = vld [vmem:[%s369 + $0x34] sm:$0xf]
  %v384 = vld [vmem:[%s369 + $0x38] sm:$0xf]
  %v385 = vld [vmem:[%s369 + $0x3c] sm:$0xf]
  %v402 = vunpack.c.l.b16 %v353
  %v403 = vunpack.c.l.b16 %v354
  %v404 = vunpack.c.l.b16 %v355
  %v405 = vunpack.c.l.b16 %v356
  %v406 = vunpack.c.l.b16 %v357
  %v407 = vunpack.c.l.b16 %v358
  %v408 = vunpack.c.l.b16 %v359
  %v409 = vunpack.c.l.b16 %v360
  %v410 = vunpack.c.l.b16 %v361
  %v411 = vunpack.c.l.b16 %v362
  %v412 = vunpack.c.l.b16 %v363
  %v413 = vunpack.c.l.b16 %v364
  %v414 = vunpack.c.l.b16 %v365
  %v415 = vunpack.c.l.b16 %v366
  %v416 = vunpack.c.l.b16 %v367
  %v417 = vunpack.c.l.b16 %v368
  %v418 = vpack.c.b16 %v403, %v402
  %v419 = vpack.c.b16 %v405, %v404
  %v420 = vpack.c.b16 %v407, %v406
  %v421 = vpack.c.b16 %v409, %v408
  %v422 = vpack.c.b16 %v411, %v410
  %v423 = vpack.c.b16 %v413, %v412
  %v424 = vpack.c.b16 %v415, %v414
  %v425 = vpack.c.b16 %v417, %v416
  %v450 = vunpack.c.l.b16 %v370
  %v451 = vunpack.c.l.b16 %v371
  %v452 = vunpack.c.l.b16 %v372
  %v453 = vunpack.c.l.b16 %v373
  %v454 = vunpack.c.l.b16 %v374
  %v455 = vunpack.c.l.b16 %v375
  %v456 = vunpack.c.l.b16 %v376
  %v457 = vunpack.c.l.b16 %v377
  %v458 = vunpack.c.l.b16 %v378
  %v459 = vunpack.c.l.b16 %v379
  %v460 = vunpack.c.l.b16 %v380
  %v461 = vunpack.c.l.b16 %v381
  %v462 = vunpack.c.l.b16 %v382
  %v463 = vunpack.c.l.b16 %v383
  %v464 = vunpack.c.l.b16 %v384
  %v465 = vunpack.c.l.b16 %v385
  %v466 = vpack.c.b16 %v451, %v450
  %v467 = vpack.c.b16 %v453, %v452
  %v468 = vpack.c.b16 %v455, %v454
  %v469 = vpack.c.b16 %v457, %v456
  %v470 = vpack.c.b16 %v459, %v458
  %v471 = vpack.c.b16 %v461, %v460
  %v472 = vpack.c.b16 %v463, %v462
  %v473 = vpack.c.b16 %v465, %v464
  %482 = vmatprep.subr.bf16.mxu0 0
  %483 = vmatpush1.bf16.msra.mxu0 %v473
  %484 = vmatprep.subr.bf16.mxu0 0
  %485 = vmatpush1.bf16.msra.mxu0 %v472
  %486 = vmatprep.subr.bf16.mxu0 0
  %487 = vmatpush1.bf16.msra.mxu0 %v471
  %488 = vmatprep.subr.bf16.mxu0 0
  %489 = vmatpush1.bf16.msra.mxu0 %v470
  %490 = vmatprep.subr.bf16.mxu0 0
  %491 = vmatpush1.bf16.msra.mxu0 %v469
  %492 = vmatprep.subr.bf16.mxu0 0
  %493 = vmatpush1.bf16.msra.mxu0 %v468
  %494 = vmatprep.subr.bf16.mxu0 0
  %495 = vmatpush1.bf16.msra.mxu0 %v467
  %496 = vmatprep.subr.bf16.mxu0 0
  %497 = vmatpush1.bf16.msra.mxu0 %v466
  %498 = vmatprep.subr.bf16.mxu0 0
  %499 = vmatpush2.bf16.msra.mxu0 0
  %500 = vmatprep.subr.bf16.mxu0 0
  %501 = vmatpush2.bf16.msra.mxu0 0
  %502 = vmatprep.subr.bf16.mxu0 0
  %503 = vmatpush2.bf16.msra.mxu0 0
  %504 = vmatprep.subr.bf16.mxu0 0
  %505 = vmatpush2.bf16.msra.mxu0 0
  %506 = vmatprep.subr.bf16.mxu0 0
  %507 = vmatpush2.bf16.msra.mxu0 0
  %508 = vmatprep.subr.bf16.mxu0 0
  %509 = vmatpush2.bf16.msra.mxu0 0
  %510 = vmatprep.subr.bf16.mxu0 0
  %511 = vmatpush2.bf16.msra.mxu0 0
  %512 = vmatprep.subr.bf16.mxu0 0
  %513 = vmatpush2.bf16.msra.mxu0 0
  %514 = vmatprep.mubr.bf16.mxu0 0
  %515 = vmatmul.mubr.bf16.gmra.mxu0 %v418
  %v516 = vpop.f32.mrf.mxu0
  %v517 = vadd.f32 0.0, %v516
  %v518 = vpop.f32.mrf.mxu0
  %v519 = vpop.f32.mrf.mxu0
  %v520 = vadd.f32 0.0, %v519
  %v521 = vpop.f32.mrf.mxu0
  %522 = vmatprep.mubr.bf16.mxu0 0
  %523 = vmatmul.mubr.bf16.gmra.mxu0 %v419
  %v524 = vpop.f32.mrf.mxu0
  %v525 = vadd.f32 0.0, %v524
  %v526 = vpop.f32.mrf.mxu0
  %v527 = vpop.f32.mrf.mxu0
  %v528 = vadd.f32 0.0, %v527
  %v529 = vpop.f32.mrf.mxu0
  %530 = vmatprep.mubr.bf16.mxu0 0
  %531 = vmatmul.mubr.bf16.gmra.mxu0 %v420
  %v532 = vpop.f32.mrf.mxu0
  %v533 = vadd.f32 0.0, %v532
  %v534 = vpop.f32.mrf.mxu0
  %v535 = vpop.f32.mrf.mxu0
  %v536 = vadd.f32 0.0, %v535
  %v537 = vpop.f32.mrf.mxu0
  %538 = vmatprep.mubr.bf16.mxu0 0
  %539 = vmatmul.mubr.bf16.gmra.mxu0 %v421
  %v540 = vpop.f32.mrf.mxu0
  %v541 = vadd.f32 0.0, %v540
  %v542 = vpop.f32.mrf.mxu0
  %v543 = vpop.f32.mrf.mxu0
  %v544 = vadd.f32 0.0, %v543
  %v545 = vpop.f32.mrf.mxu0
  %546 = vmatprep.mubr.bf16.mxu0 0
  %547 = vmatmul.mubr.bf16.gmra.mxu0 %v422
  %v548 = vpop.f32.mrf.mxu0
  %v549 = vadd.f32 0.0, %v548
  %v550 = vpop.f32.mrf.mxu0
  %v551 = vpop.f32.mrf.mxu0
  %v552 = vadd.f32 0.0, %v551
  %v553 = vpop.f32.mrf.mxu0
  %554 = vmatprep.mubr.bf16.mxu0 0
  %555 = vmatmul.mubr.bf16.gmra.mxu0 %v423
  %v556 = vpop.f32.mrf.mxu0
  %v557 = vadd.f32 0.0, %v556
  %v558 = vpop.f32.mrf.mxu0
  %v559 = vpop.f32.mrf.mxu0
  %v560 = vadd.f32 0.0, %v559
  %v561 = vpop.f32.mrf.mxu0
  %562 = vmatprep.mubr.bf16.mxu0 0
  %563 = vmatmul.mubr.bf16.gmra.mxu0 %v424
  %v564 = vpop.f32.mrf.mxu0
  %v565 = vadd.f32 0.0, %v564
  %v566 = vpop.f32.mrf.mxu0
  %v567 = vpop.f32.mrf.mxu0
  %v568 = vadd.f32 0.0, %v567
  %v569 = vpop.f32.mrf.mxu0
  %570 = vmatprep.mubr.bf16.mxu0 0
  %571 = vmatmul.mubr.bf16.gmra.mxu0 %v425
  %v572 = vpop.f32.mrf.mxu0
  %v573 = vadd.f32 0.0, %v572
  %v574 = vpop.f32.mrf.mxu0
  %v575 = vpop.f32.mrf.mxu0
  %v576 = vadd.f32 0.0, %v575
  %v577 = vpop.f32.mrf.mxu0
  %578 = vdwg.mxu0
  %s579 = scalar_lea.vmem [#allocation2], 128
  %580 = vst.msk [vmem:[%s579] sm:$0xff] %vm243, %v517
  %581 = vst.msk [vmem:[%s579 + $0x8] sm:$0xff] %vm243, %v520
  %582 = vst.msk [vmem:[%s579 + $0x10] sm:$0xff] %vm243, %v525
  %583 = vst.msk [vmem:[%s579 + $0x18] sm:$0xff] %vm243, %v528
  %584 = vst.msk [vmem:[%s579 + $0x20] sm:$0xff] %vm243, %v533
  %585 = vst.msk [vmem:[%s579 + $0x28] sm:$0xff] %vm243, %v536
  %586 = vst.msk [vmem:[%s579 + $0x30] sm:$0xff] %vm243, %v541
  %587 = vst.msk [vmem:[%s579 + $0x38] sm:$0xff] %vm243, %v544
  %588 = vst.msk [vmem:[%s579 + $0x40] sm:$0xff] %vm243, %v549
  %589 = vst.msk [vmem:[%s579 + $0x48] sm:$0xff] %vm243, %v552
  %590 = vst.msk [vmem:[%s579 + $0x50] sm:$0xff] %vm243, %v557
  %591 = vst.msk [vmem:[%s579 + $0x58] sm:$0xff] %vm243, %v560
  %592 = vst.msk [vmem:[%s579 + $0x60] sm:$0xff] %vm243, %v565
  %593 = vst.msk [vmem:[%s579 + $0x68] sm:$0xff] %vm243, %v568
  %594 = vst.msk [vmem:[%s579 + $0x70] sm:$0xff] %vm243, %v573
  %595 = vst.msk [vmem:[%s579 + $0x78] sm:$0xff] %vm243, %v576
  %v596 = vsel %vm243, %v517, 0.0
  %v597 = vsel %vm243, %v520, 0.0
  %v598 = vadd.f32 %v596, %v597
  %v599 = vsel %vm243, %v525, 0.0
  %v600 = vadd.f32 %v598, %v599
  %v601 = vsel %vm243, %v528, 0.0
  %v602 = vadd.f32 %v600, %v601
  %v603 = vsel %vm243, %v533, 0.0
  %v604 = vadd.f32 %v602, %v603
  %v605 = vsel %vm243, %v536, 0.0
  %v606 = vadd.f32 %v604, %v605
  %v607 = vsel %vm243, %v541, 0.0
  %v608 = vadd.f32 %v606, %v607
  %v609 = vsel %vm243, %v544, 0.0
  %v610 = vadd.f32 %v608, %v609
  %v611 = vsel %vm243, %v549, 0.0
  %v612 = vadd.f32 %v610, %v611
  %v613 = vsel %vm243, %v552, 0.0
  %v614 = vadd.f32 %v612, %v613
  %v615 = vsel %vm243, %v557, 0.0
  %v616 = vadd.f32 %v614, %v615
  %v617 = vsel %vm243, %v560, 0.0
  %v618 = vadd.f32 %v616, %v617
  %v619 = vsel %vm243, %v565, 0.0
  %v620 = vadd.f32 %v618, %v619
  %v621 = vsel %vm243, %v568, 0.0
  %v622 = vadd.f32 %v620, %v621
  %v623 = vsel %vm243, %v573, 0.0
  %v624 = vadd.f32 %v622, %v623
  %v625 = vsel %vm243, %v576, 0.0
  %v626 = vadd.f32 %v624, %v625
  %v627 = vrot.slane %v626, 4
  %v628 = vadd.f32 %v626, %v627
  %v629 = vrot.slane %v628, 2
  %v630 = vadd.f32 %v628, %v629
  %v631 = vrot.slane %v630, 1
  %v632 = vadd.f32 %v630, %v631
  %v633 = vadd.f32 %v297, %v632
  %v634 = vmul.f32 %v517, %v517
  %v635 = vmul.f32 %v520, %v520
  %v636 = vmul.f32 %v525, %v525
  %v637 = vmul.f32 %v528, %v528
  %v638 = vmul.f32 %v533, %v533
  %v639 = vmul.f32 %v536, %v536
  %v640 = vmul.f32 %v541, %v541
  %v641 = vmul.f32 %v544, %v544
  %v642 = vmul.f32 %v549, %v549
  %v643 = vmul.f32 %v552, %v552
  %v644 = vmul.f32 %v557, %v557
  %v645 = vmul.f32 %v560, %v560
  %v646 = vmul.f32 %v565, %v565
  %v647 = vmul.f32 %v568, %v568
  %v648 = vmul.f32 %v573, %v573
  %v649 = vmul.f32 %v576, %v576
  %v650 = vsel %vm243, %v634, 0.0
  %v651 = vsel %vm243, %v635, 0.0
  %v652 = vadd.f32 %v650, %v651
  %v653 = vsel %vm243, %v636, 0.0
  %v654 = vadd.f32 %v652, %v653
  %v655 = vsel %vm243, %v637, 0.0
  %v656 = vadd.f32 %v654, %v655
  %v657 = vsel %vm243, %v638, 0.0
  %v658 = vadd.f32 %v656, %v657
  %v659 = vsel %vm243, %v639, 0.0
  %v660 = vadd.f32 %v658, %v659
  %v661 = vsel %vm243, %v640, 0.0
  %v662 = vadd.f32 %v660, %v661
  %v663 = vsel %vm243, %v641, 0.0
  %v664 = vadd.f32 %v662, %v663
  %v665 = vsel %vm243, %v642, 0.0
  %v666 = vadd.f32 %v664, %v665
  %v667 = vsel %vm243, %v643, 0.0
  %v668 = vadd.f32 %v666, %v667
  %v669 = vsel %vm243, %v644, 0.0
  %v670 = vadd.f32 %v668, %v669
  %v671 = vsel %vm243, %v645, 0.0
  %v672 = vadd.f32 %v670, %v671
  %v673 = vsel %vm243, %v646, 0.0
  %v674 = vadd.f32 %v672, %v673
  %v675 = vsel %vm243, %v647, 0.0
  %v676 = vadd.f32 %v674, %v675
  %v677 = vsel %vm243, %v648, 0.0
  %v678 = vadd.f32 %v676, %v677
  %v679 = vsel %vm243, %v649, 0.0
  %v680 = vadd.f32 %v678, %v679
  %v681 = vrot.slane %v680, 4
  %v682 = vadd.f32 %v680, %v681
  %v683 = vrot.slane %v682, 2
  %v684 = vadd.f32 %v682, %v683
  %v685 = vrot.slane %v684, 1
  %v686 = vadd.f32 %v684, %v685
  %v687 = vadd.f32 %v351, %v686
  %s688 = scalar_lea.vmem %s0, 128
  %v689 = vld [vmem:[%s688] sm:$0xf]
  %v690 = vld [vmem:[%s688 + $0x4] sm:$0xf]
  %v691 = vld [vmem:[%s688 + $0x8] sm:$0xf]
  %v692 = vld [vmem:[%s688 + $0xc] sm:$0xf]
  %v693 = vld [vmem:[%s688 + $0x10] sm:$0xf]
  %v694 = vld [vmem:[%s688 + $0x14] sm:$0xf]
  %v695 = vld [vmem:[%s688 + $0x18] sm:$0xf]
  %v696 = vld [vmem:[%s688 + $0x1c] sm:$0xf]
  %v697 = vld [vmem:[%s688 + $0x20] sm:$0xf]
  %v698 = vld [vmem:[%s688 + $0x24] sm:$0xf]
  %v699 = vld [vmem:[%s688 + $0x28] sm:$0xf]
  %v700 = vld [vmem:[%s688 + $0x2c] sm:$0xf]
  %v701 = vld [vmem:[%s688 + $0x30] sm:$0xf]
  %v702 = vld [vmem:[%s688 + $0x34] sm:$0xf]
  %v703 = vld [vmem:[%s688 + $0x38] sm:$0xf]
  %v704 = vld [vmem:[%s688 + $0x3c] sm:$0xf]
  %s705 = scalar_lea.vmem %s1, 128
  %v706 = vld [vmem:[%s705] sm:$0xf]
  %v707 = vld [vmem:[%s705 + $0x4] sm:$0xf]
  %v708 = vld [vmem:[%s705 + $0x8] sm:$0xf]
  %v709 = vld [vmem:[%s705 + $0xc] sm:$0xf]
  %v710 = vld [vmem:[%s705 + $0x10] sm:$0xf]
  %v711 = vld [vmem:[%s705 + $0x14] sm:$0xf]
  %v712 = vld [vmem:[%s705 + $0x18] sm:$0xf]
  %v713 = vld [vmem:[%s705 + $0x1c] sm:$0xf]
  %v714 = vld [vmem:[%s705 + $0x20] sm:$0xf]
  %v715 = vld [vmem:[%s705 + $0x24] sm:$0xf]
  %v716 = vld [vmem:[%s705 + $0x28] sm:$0xf]
  %v717 = vld [vmem:[%s705 + $0x2c] sm:$0xf]
  %v718 = vld [vmem:[%s705 + $0x30] sm:$0xf]
  %v719 = vld [vmem:[%s705 + $0x34] sm:$0xf]
  %v720 = vld [vmem:[%s705 + $0x38] sm:$0xf]
  %v721 = vld [vmem:[%s705 + $0x3c] sm:$0xf]
  %v738 = vunpack.c.l.b16 %v689
  %v739 = vunpack.c.l.b16 %v690
  %v740 = vunpack.c.l.b16 %v691
  %v741 = vunpack.c.l.b16 %v692
  %v742 = vunpack.c.l.b16 %v693
  %v743 = vunpack.c.l.b16 %v694
  %v744 = vunpack.c.l.b16 %v695
  %v745 = vunpack.c.l.b16 %v696
  %v746 = vunpack.c.l.b16 %v697
  %v747 = vunpack.c.l.b16 %v698
  %v748 = vunpack.c.l.b16 %v699
  %v749 = vunpack.c.l.b16 %v700
  %v750 = vunpack.c.l.b16 %v701
  %v751 = vunpack.c.l.b16 %v702
  %v752 = vunpack.c.l.b16 %v703
  %v753 = vunpack.c.l.b16 %v704
  %v754 = vpack.c.b16 %v739, %v738
  %v755 = vpack.c.b16 %v741, %v740
  %v756 = vpack.c.b16 %v743, %v742
  %v757 = vpack.c.b16 %v745, %v744
  %v758 = vpack.c.b16 %v747, %v746
  %v759 = vpack.c.b16 %v749, %v748
  %v760 = vpack.c.b16 %v751, %v750
  %v761 = vpack.c.b16 %v753, %v752
  %v786 = vunpack.c.l.b16 %v706
  %v787 = vunpack.c.l.b16 %v707
  %v788 = vunpack.c.l.b16 %v708
  %v789 = vunpack.c.l.b16 %v709
  %v790 = vunpack.c.l.b16 %v710
  %v791 = vunpack.c.l.b16 %v711
  %v792 = vunpack.c.l.b16 %v712
  %v793 = vunpack.c.l.b16 %v713
  %v794 = vunpack.c.l.b16 %v714
  %v795 = vunpack.c.l.b16 %v715
  %v796 = vunpack.c.l.b16 %v716
  %v797 = vunpack.c.l.b16 %v717
  %v798 = vunpack.c.l.b16 %v718
  %v799 = vunpack.c.l.b16 %v719
  %v800 = vunpack.c.l.b16 %v720
  %v801 = vunpack.c.l.b16 %v721
  %v802 = vpack.c.b16 %v787, %v786
  %v803 = vpack.c.b16 %v789, %v788
  %v804 = vpack.c.b16 %v791, %v790
  %v805 = vpack.c.b16 %v793, %v792
  %v806 = vpack.c.b16 %v795, %v794
  %v807 = vpack.c.b16 %v797, %v796
  %v808 = vpack.c.b16 %v799, %v798
  %v809 = vpack.c.b16 %v801, %v800
  %818 = vmatprep.subr.bf16.mxu0 0
  %819 = vmatpush1.bf16.msra.mxu0 %v809
  %820 = vmatprep.subr.bf16.mxu0 0
  %821 = vmatpush1.bf16.msra.mxu0 %v808
  %822 = vmatprep.subr.bf16.mxu0 0
  %823 = vmatpush1.bf16.msra.mxu0 %v807
  %824 = vmatprep.subr.bf16.mxu0 0
  %825 = vmatpush1.bf16.msra.mxu0 %v806
  %826 = vmatprep.subr.bf16.mxu0 0
  %827 = vmatpush1.bf16.msra.mxu0 %v805
  %828 = vmatprep.subr.bf16.mxu0 0
  %829 = vmatpush1.bf16.msra.mxu0 %v804
  %830 = vmatprep.subr.bf16.mxu0 0
  %831 = vmatpush1.bf16.msra.mxu0 %v803
  %832 = vmatprep.subr.bf16.mxu0 0
  %833 = vmatpush1.bf16.msra.mxu0 %v802
  %834 = vmatprep.subr.bf16.mxu0 0
  %835 = vmatpush2.bf16.msra.mxu0 0
  %836 = vmatprep.subr.bf16.mxu0 0
  %837 = vmatpush2.bf16.msra.mxu0 0
  %838 = vmatprep.subr.bf16.mxu0 0
  %839 = vmatpush2.bf16.msra.mxu0 0
  %840 = vmatprep.subr.bf16.mxu0 0
  %841 = vmatpush2.bf16.msra.mxu0 0
  %842 = vmatprep.subr.bf16.mxu0 0
  %843 = vmatpush2.bf16.msra.mxu0 0
  %844 = vmatprep.subr.bf16.mxu0 0
  %845 = vmatpush2.bf16.msra.mxu0 0
  %846 = vmatprep.subr.bf16.mxu0 0
  %847 = vmatpush2.bf16.msra.mxu0 0
  %848 = vmatprep.subr.bf16.mxu0 0
  %849 = vmatpush2.bf16.msra.mxu0 0
  %850 = vmatprep.mubr.bf16.mxu0 0
  %851 = vmatmul.mubr.bf16.gmra.mxu0 %v754
  %v852 = vpop.f32.mrf.mxu0
  %v853 = vadd.f32 0.0, %v852
  %v854 = vpop.f32.mrf.mxu0
  %v855 = vpop.f32.mrf.mxu0
  %v856 = vadd.f32 0.0, %v855
  %v857 = vpop.f32.mrf.mxu0
  %858 = vmatprep.mubr.bf16.mxu0 0
  %859 = vmatmul.mubr.bf16.gmra.mxu0 %v755
  %v860 = vpop.f32.mrf.mxu0
  %v861 = vadd.f32 0.0, %v860
  %v862 = vpop.f32.mrf.mxu0
  %v863 = vpop.f32.mrf.mxu0
  %v864 = vadd.f32 0.0, %v863
  %v865 = vpop.f32.mrf.mxu0
  %866 = vmatprep.mubr.bf16.mxu0 0
  %867 = vmatmul.mubr.bf16.gmra.mxu0 %v756
  %v868 = vpop.f32.mrf.mxu0
  %v869 = vadd.f32 0.0, %v868
  %v870 = vpop.f32.mrf.mxu0
  %v871 = vpop.f32.mrf.mxu0
  %v872 = vadd.f32 0.0, %v871
  %v873 = vpop.f32.mrf.mxu0
  %874 = vmatprep.mubr.bf16.mxu0 0
  %875 = vmatmul.mubr.bf16.gmra.mxu0 %v757
  %v876 = vpop.f32.mrf.mxu0
  %v877 = vadd.f32 0.0, %v876
  %v878 = vpop.f32.mrf.mxu0
  %v879 = vpop.f32.mrf.mxu0
  %v880 = vadd.f32 0.0, %v879
  %v881 = vpop.f32.mrf.mxu0
  %882 = vmatprep.mubr.bf16.mxu0 0
  %883 = vmatmul.mubr.bf16.gmra.mxu0 %v758
  %v884 = vpop.f32.mrf.mxu0
  %v885 = vadd.f32 0.0, %v884
  %v886 = vpop.f32.mrf.mxu0
  %v887 = vpop.f32.mrf.mxu0
  %v888 = vadd.f32 0.0, %v887
  %v889 = vpop.f32.mrf.mxu0
  %890 = vmatprep.mubr.bf16.mxu0 0
  %891 = vmatmul.mubr.bf16.gmra.mxu0 %v759
  %v892 = vpop.f32.mrf.mxu0
  %v893 = vadd.f32 0.0, %v892
  %v894 = vpop.f32.mrf.mxu0
  %v895 = vpop.f32.mrf.mxu0
  %v896 = vadd.f32 0.0, %v895
  %v897 = vpop.f32.mrf.mxu0
  %898 = vmatprep.mubr.bf16.mxu0 0
  %899 = vmatmul.mubr.bf16.gmra.mxu0 %v760
  %v900 = vpop.f32.mrf.mxu0
  %v901 = vadd.f32 0.0, %v900
  %v902 = vpop.f32.mrf.mxu0
  %v903 = vpop.f32.mrf.mxu0
  %v904 = vadd.f32 0.0, %v903
  %v905 = vpop.f32.mrf.mxu0
  %906 = vmatprep.mubr.bf16.mxu0 0
  %907 = vmatmul.mubr.bf16.gmra.mxu0 %v761
  %v908 = vpop.f32.mrf.mxu0
  %v909 = vadd.f32 0.0, %v908
  %v910 = vpop.f32.mrf.mxu0
  %v911 = vpop.f32.mrf.mxu0
  %v912 = vadd.f32 0.0, %v911
  %v913 = vpop.f32.mrf.mxu0
  %914 = vdwg.mxu0
  %s915 = scalar_lea.vmem [#allocation2], 256
  %916 = vst.msk [vmem:[%s915] sm:$0xff] %vm243, %v853
  %917 = vst.msk [vmem:[%s915 + $0x8] sm:$0xff] %vm243, %v856
  %918 = vst.msk [vmem:[%s915 + $0x10] sm:$0xff] %vm243, %v861
  %919 = vst.msk [vmem:[%s915 + $0x18] sm:$0xff] %vm243, %v864
  %920 = vst.msk [vmem:[%s915 + $0x20] sm:$0xff] %vm243, %v869
  %921 = vst.msk [vmem:[%s915 + $0x28] sm:$0xff] %vm243, %v872
  %922 = vst.msk [vmem:[%s915 + $0x30] sm:$0xff] %vm243, %v877
  %923 = vst.msk [vmem:[%s915 + $0x38] sm:$0xff] %vm243, %v880
  %924 = vst.msk [vmem:[%s915 + $0x40] sm:$0xff] %vm243, %v885
  %925 = vst.msk [vmem:[%s915 + $0x48] sm:$0xff] %vm243, %v888
  %926 = vst.msk [vmem:[%s915 + $0x50] sm:$0xff] %vm243, %v893
  %927 = vst.msk [vmem:[%s915 + $0x58] sm:$0xff] %vm243, %v896
  %928 = vst.msk [vmem:[%s915 + $0x60] sm:$0xff] %vm243, %v901
  %929 = vst.msk [vmem:[%s915 + $0x68] sm:$0xff] %vm243, %v904
  %930 = vst.msk [vmem:[%s915 + $0x70] sm:$0xff] %vm243, %v909
  %931 = vst.msk [vmem:[%s915 + $0x78] sm:$0xff] %vm243, %v912
  %v932 = vsel %vm243, %v853, 0.0
  %v933 = vsel %vm243, %v856, 0.0
  %v934 = vadd.f32 %v932, %v933
  %v935 = vsel %vm243, %v861, 0.0
  %v936 = vadd.f32 %v934, %v935
  %v937 = vsel %vm243, %v864, 0.0
  %v938 = vadd.f32 %v936, %v937
  %v939 = vsel %vm243, %v869, 0.0
  %v940 = vadd.f32 %v938, %v939
  %v941 = vsel %vm243, %v872, 0.0
  %v942 = vadd.f32 %v940, %v941
  %v943 = vsel %vm243, %v877, 0.0
  %v944 = vadd.f32 %v942, %v943
  %v945 = vsel %vm243, %v880, 0.0
  %v946 = vadd.f32 %v944, %v945
  %v947 = vsel %vm243, %v885, 0.0
  %v948 = vadd.f32 %v946, %v947
  %v949 = vsel %vm243, %v888, 0.0
  %v950 = vadd.f32 %v948, %v949
  %v951 = vsel %vm243, %v893, 0.0
  %v952 = vadd.f32 %v950, %v951
  %v953 = vsel %vm243, %v896, 0.0
  %v954 = vadd.f32 %v952, %v953
  %v955 = vsel %vm243, %v901, 0.0
  %v956 = vadd.f32 %v954, %v955
  %v957 = vsel %vm243, %v904, 0.0
  %v958 = vadd.f32 %v956, %v957
  %v959 = vsel %vm243, %v909, 0.0
  %v960 = vadd.f32 %v958, %v959
  %v961 = vsel %vm243, %v912, 0.0
  %v962 = vadd.f32 %v960, %v961
  %v963 = vrot.slane %v962, 4
  %v964 = vadd.f32 %v962, %v963
  %v965 = vrot.slane %v964, 2
  %v966 = vadd.f32 %v964, %v965
  %v967 = vrot.slane %v966, 1
  %v968 = vadd.f32 %v966, %v967
  %v969 = vadd.f32 %v633, %v968
  %v970 = vmul.f32 %v853, %v853
  %v971 = vmul.f32 %v856, %v856
  %v972 = vmul.f32 %v861, %v861
  %v973 = vmul.f32 %v864, %v864
  %v974 = vmul.f32 %v869, %v869
  %v975 = vmul.f32 %v872, %v872
  %v976 = vmul.f32 %v877, %v877
  %v977 = vmul.f32 %v880, %v880
  %v978 = vmul.f32 %v885, %v885
  %v979 = vmul.f32 %v888, %v888
  %v980 = vmul.f32 %v893, %v893
  %v981 = vmul.f32 %v896, %v896
  %v982 = vmul.f32 %v901, %v901
  %v983 = vmul.f32 %v904, %v904
  %v984 = vmul.f32 %v909, %v909
  %v985 = vmul.f32 %v912, %v912
  %v986 = vsel %vm243, %v970, 0.0
  %v987 = vsel %vm243, %v971, 0.0
  %v988 = vadd.f32 %v986, %v987
  %v989 = vsel %vm243, %v972, 0.0
  %v990 = vadd.f32 %v988, %v989
  %v991 = vsel %vm243, %v973, 0.0
  %v992 = vadd.f32 %v990, %v991
  %v993 = vsel %vm243, %v974, 0.0
  %v994 = vadd.f32 %v992, %v993
  %v995 = vsel %vm243, %v975, 0.0
  %v996 = vadd.f32 %v994, %v995
  %v997 = vsel %vm243, %v976, 0.0
  %v998 = vadd.f32 %v996, %v997
  %v999 = vsel %vm243, %v977, 0.0
  %v1000 = vadd.f32 %v998, %v999
  %v1001 = vsel %vm243, %v978, 0.0
  %v1002 = vadd.f32 %v1000, %v1001
  %v1003 = vsel %vm243, %v979, 0.0
  %v1004 = vadd.f32 %v1002, %v1003
  %v1005 = vsel %vm243, %v980, 0.0
  %v1006 = vadd.f32 %v1004, %v1005
  %v1007 = vsel %vm243, %v981, 0.0
  %v1008 = vadd.f32 %v1006, %v1007
  %v1009 = vsel %vm243, %v982, 0.0
  %v1010 = vadd.f32 %v1008, %v1009
  %v1011 = vsel %vm243, %v983, 0.0
  %v1012 = vadd.f32 %v1010, %v1011
  %v1013 = vsel %vm243, %v984, 0.0
  %v1014 = vadd.f32 %v1012, %v1013
  %v1015 = vsel %vm243, %v985, 0.0
  %v1016 = vadd.f32 %v1014, %v1015
  %v1017 = vrot.slane %v1016, 4
  %v1018 = vadd.f32 %v1016, %v1017
  %v1019 = vrot.slane %v1018, 2
  %v1020 = vadd.f32 %v1018, %v1019
  %v1021 = vrot.slane %v1020, 1
  %v1022 = vadd.f32 %v1020, %v1021
  %v1023 = vadd.f32 %v687, %v1022
  %s1024 = scalar_lea.vmem %s0, 192
  %v1025 = vld [vmem:[%s1024] sm:$0xf]
  %v1026 = vld [vmem:[%s1024 + $0x4] sm:$0xf]
  %v1027 = vld [vmem:[%s1024 + $0x8] sm:$0xf]
  %v1028 = vld [vmem:[%s1024 + $0xc] sm:$0xf]
  %v1029 = vld [vmem:[%s1024 + $0x10] sm:$0xf]
  %v1030 = vld [vmem:[%s1024 + $0x14] sm:$0xf]
  %v1031 = vld [vmem:[%s1024 + $0x18] sm:$0xf]
  %v1032 = vld [vmem:[%s1024 + $0x1c] sm:$0xf]
  %v1033 = vld [vmem:[%s1024 + $0x20] sm:$0xf]
  %v1034 = vld [vmem:[%s1024 + $0x24] sm:$0xf]
  %v1035 = vld [vmem:[%s1024 + $0x28] sm:$0xf]
  %v1036 = vld [vmem:[%s1024 + $0x2c] sm:$0xf]
  %v1037 = vld [vmem:[%s1024 + $0x30] sm:$0xf]
  %v1038 = vld [vmem:[%s1024 + $0x34] sm:$0xf]
  %v1039 = vld [vmem:[%s1024 + $0x38] sm:$0xf]
  %v1040 = vld [vmem:[%s1024 + $0x3c] sm:$0xf]
  %s1041 = scalar_lea.vmem %s1, 192
  %v1042 = vld [vmem:[%s1041] sm:$0xf]
  %v1043 = vld [vmem:[%s1041 + $0x4] sm:$0xf]
  %v1044 = vld [vmem:[%s1041 + $0x8] sm:$0xf]
  %v1045 = vld [vmem:[%s1041 + $0xc] sm:$0xf]
  %v1046 = vld [vmem:[%s1041 + $0x10] sm:$0xf]
  %v1047 = vld [vmem:[%s1041 + $0x14] sm:$0xf]
  %v1048 = vld [vmem:[%s1041 + $0x18] sm:$0xf]
  %v1049 = vld [vmem:[%s1041 + $0x1c] sm:$0xf]
  %v1050 = vld [vmem:[%s1041 + $0x20] sm:$0xf]
  %v1051 = vld [vmem:[%s1041 + $0x24] sm:$0xf]
  %v1052 = vld [vmem:[%s1041 + $0x28] sm:$0xf]
  %v1053 = vld [vmem:[%s1041 + $0x2c] sm:$0xf]
  %v1054 = vld [vmem:[%s1041 + $0x30] sm:$0xf]
  %v1055 = vld [vmem:[%s1041 + $0x34] sm:$0xf]
  %v1056 = vld [vmem:[%s1041 + $0x38] sm:$0xf]
  %v1057 = vld [vmem:[%s1041 + $0x3c] sm:$0xf]
  %v1074 = vunpack.c.l.b16 %v1025
  %v1075 = vunpack.c.l.b16 %v1026
  %v1076 = vunpack.c.l.b16 %v1027
  %v1077 = vunpack.c.l.b16 %v1028
  %v1078 = vunpack.c.l.b16 %v1029
  %v1079 = vunpack.c.l.b16 %v1030
  %v1080 = vunpack.c.l.b16 %v1031
  %v1081 = vunpack.c.l.b16 %v1032
  %v1082 = vunpack.c.l.b16 %v1033
  %v1083 = vunpack.c.l.b16 %v1034
  %v1084 = vunpack.c.l.b16 %v1035
  %v1085 = vunpack.c.l.b16 %v1036
  %v1086 = vunpack.c.l.b16 %v1037
  %v1087 = vunpack.c.l.b16 %v1038
  %v1088 = vunpack.c.l.b16 %v1039
  %v1089 = vunpack.c.l.b16 %v1040
  %v1090 = vpack.c.b16 %v1075, %v1074
  %v1091 = vpack.c.b16 %v1077, %v1076
  %v1092 = vpack.c.b16 %v1079, %v1078
  %v1093 = vpack.c.b16 %v1081, %v1080
  %v1094 = vpack.c.b16 %v1083, %v1082
  %v1095 = vpack.c.b16 %v1085, %v1084
  %v1096 = vpack.c.b16 %v1087, %v1086
  %v1097 = vpack.c.b16 %v1089, %v1088
  %v1122 = vunpack.c.l.b16 %v1042
  %v1123 = vunpack.c.l.b16 %v1043
  %v1124 = vunpack.c.l.b16 %v1044
  %v1125 = vunpack.c.l.b16 %v1045
  %v1126 = vunpack.c.l.b16 %v1046
  %v1127 = vunpack.c.l.b16 %v1047
  %v1128 = vunpack.c.l.b16 %v1048
  %v1129 = vunpack.c.l.b16 %v1049
  %v1130 = vunpack.c.l.b16 %v1050
  %v1131 = vunpack.c.l.b16 %v1051
  %v1132 = vunpack.c.l.b16 %v1052
  %v1133 = vunpack.c.l.b16 %v1053
  %v1134 = vunpack.c.l.b16 %v1054
  %v1135 = vunpack.c.l.b16 %v1055
  %v1136 = vunpack.c.l.b16 %v1056
  %v1137 = vunpack.c.l.b16 %v1057
  %v1138 = vpack.c.b16 %v1123, %v1122
  %v1139 = vpack.c.b16 %v1125, %v1124
  %v1140 = vpack.c.b16 %v1127, %v1126
  %v1141 = vpack.c.b16 %v1129, %v1128
  %v1142 = vpack.c.b16 %v1131, %v1130
  %v1143 = vpack.c.b16 %v1133, %v1132
  %v1144 = vpack.c.b16 %v1135, %v1134
  %v1145 = vpack.c.b16 %v1137, %v1136
  %1154 = vmatprep.subr.bf16.mxu0 0
  %1155 = vmatpush1.bf16.msra.mxu0 %v1145
  %1156 = vmatprep.subr.bf16.mxu0 0
  %1157 = vmatpush1.bf16.msra.mxu0 %v1144
  %1158 = vmatprep.subr.bf16.mxu0 0
  %1159 = vmatpush1.bf16.msra.mxu0 %v1143
  %1160 = vmatprep.subr.bf16.mxu0 0
  %1161 = vmatpush1.bf16.msra.mxu0 %v1142
  %1162 = vmatprep.subr.bf16.mxu0 0
  %1163 = vmatpush1.bf16.msra.mxu0 %v1141
  %1164 = vmatprep.subr.bf16.mxu0 0
  %1165 = vmatpush1.bf16.msra.mxu0 %v1140
  %1166 = vmatprep.subr.bf16.mxu0 0
  %1167 = vmatpush1.bf16.msra.mxu0 %v1139
  %1168 = vmatprep.subr.bf16.mxu0 0
  %1169 = vmatpush1.bf16.msra.mxu0 %v1138
  %1170 = vmatprep.subr.bf16.mxu0 0
  %1171 = vmatpush2.bf16.msra.mxu0 0
  %1172 = vmatprep.subr.bf16.mxu0 0
  %1173 = vmatpush2.bf16.msra.mxu0 0
  %1174 = vmatprep.subr.bf16.mxu0 0
  %1175 = vmatpush2.bf16.msra.mxu0 0
  %1176 = vmatprep.subr.bf16.mxu0 0
  %1177 = vmatpush2.bf16.msra.mxu0 0
  %1178 = vmatprep.subr.bf16.mxu0 0
  %1179 = vmatpush2.bf16.msra.mxu0 0
  %1180 = vmatprep.subr.bf16.mxu0 0
  %1181 = vmatpush2.bf16.msra.mxu0 0
  %1182 = vmatprep.subr.bf16.mxu0 0
  %1183 = vmatpush2.bf16.msra.mxu0 0
  %1184 = vmatprep.subr.bf16.mxu0 0
  %1185 = vmatpush2.bf16.msra.mxu0 0
  %1186 = vmatprep.mubr.bf16.mxu0 0
  %1187 = vmatmul.mubr.bf16.gmra.mxu0 %v1090
  %v1188 = vpop.f32.mrf.mxu0
  %v1189 = vadd.f32 0.0, %v1188
  %v1190 = vpop.f32.mrf.mxu0
  %v1191 = vpop.f32.mrf.mxu0
  %v1192 = vadd.f32 0.0, %v1191
  %v1193 = vpop.f32.mrf.mxu0
  %1194 = vmatprep.mubr.bf16.mxu0 0
  %1195 = vmatmul.mubr.bf16.gmra.mxu0 %v1091
  %v1196 = vpop.f32.mrf.mxu0
  %v1197 = vadd.f32 0.0, %v1196
  %v1198 = vpop.f32.mrf.mxu0
  %v1199 = vpop.f32.mrf.mxu0
  %v1200 = vadd.f32 0.0, %v1199
  %v1201 = vpop.f32.mrf.mxu0
  %1202 = vmatprep.mubr.bf16.mxu0 0
  %1203 = vmatmul.mubr.bf16.gmra.mxu0 %v1092
  %v1204 = vpop.f32.mrf.mxu0
  %v1205 = vadd.f32 0.0, %v1204
  %v1206 = vpop.f32.mrf.mxu0
  %v1207 = vpop.f32.mrf.mxu0
  %v1208 = vadd.f32 0.0, %v1207
  %v1209 = vpop.f32.mrf.mxu0
  %1210 = vmatprep.mubr.bf16.mxu0 0
  %1211 = vmatmul.mubr.bf16.gmra.mxu0 %v1093
  %v1212 = vpop.f32.mrf.mxu0
  %v1213 = vadd.f32 0.0, %v1212
  %v1214 = vpop.f32.mrf.mxu0
  %v1215 = vpop.f32.mrf.mxu0
  %v1216 = vadd.f32 0.0, %v1215
  %v1217 = vpop.f32.mrf.mxu0
  %1218 = vmatprep.mubr.bf16.mxu0 0
  %1219 = vmatmul.mubr.bf16.gmra.mxu0 %v1094
  %v1220 = vpop.f32.mrf.mxu0
  %v1221 = vadd.f32 0.0, %v1220
  %v1222 = vpop.f32.mrf.mxu0
  %v1223 = vpop.f32.mrf.mxu0
  %v1224 = vadd.f32 0.0, %v1223
  %v1225 = vpop.f32.mrf.mxu0
  %1226 = vmatprep.mubr.bf16.mxu0 0
  %1227 = vmatmul.mubr.bf16.gmra.mxu0 %v1095
  %v1228 = vpop.f32.mrf.mxu0
  %v1229 = vadd.f32 0.0, %v1228
  %v1230 = vpop.f32.mrf.mxu0
  %v1231 = vpop.f32.mrf.mxu0
  %v1232 = vadd.f32 0.0, %v1231
  %v1233 = vpop.f32.mrf.mxu0
  %1234 = vmatprep.mubr.bf16.mxu0 0
  %1235 = vmatmul.mubr.bf16.gmra.mxu0 %v1096
  %v1236 = vpop.f32.mrf.mxu0
  %v1237 = vadd.f32 0.0, %v1236
  %v1238 = vpop.f32.mrf.mxu0
  %v1239 = vpop.f32.mrf.mxu0
  %v1240 = vadd.f32 0.0, %v1239
  %v1241 = vpop.f32.mrf.mxu0
  %1242 = vmatprep.mubr.bf16.mxu0 0
  %1243 = vmatmul.mubr.bf16.gmra.mxu0 %v1097
  %v1244 = vpop.f32.mrf.mxu0
  %v1245 = vadd.f32 0.0, %v1244
  %v1246 = vpop.f32.mrf.mxu0
  %v1247 = vpop.f32.mrf.mxu0
  %v1248 = vadd.f32 0.0, %v1247
  %v1249 = vpop.f32.mrf.mxu0
  %1250 = vdwg.mxu0
  %s1251 = scalar_lea.vmem [#allocation2], 384
  %1252 = vst.msk [vmem:[%s1251] sm:$0xff] %vm243, %v1189
  %1253 = vst.msk [vmem:[%s1251 + $0x8] sm:$0xff] %vm243, %v1192
  %1254 = vst.msk [vmem:[%s1251 + $0x10] sm:$0xff] %vm243, %v1197
  %1255 = vst.msk [vmem:[%s1251 + $0x18] sm:$0xff] %vm243, %v1200
  %1256 = vst.msk [vmem:[%s1251 + $0x20] sm:$0xff] %vm243, %v1205
  %1257 = vst.msk [vmem:[%s1251 + $0x28] sm:$0xff] %vm243, %v1208
  %1258 = vst.msk [vmem:[%s1251 + $0x30] sm:$0xff] %vm243, %v1213
  %1259 = vst.msk [vmem:[%s1251 + $0x38] sm:$0xff] %vm243, %v1216
  %1260 = vst.msk [vmem:[%s1251 + $0x40] sm:$0xff] %vm243, %v1221
  %1261 = vst.msk [vmem:[%s1251 + $0x48] sm:$0xff] %vm243, %v1224
  %1262 = vst.msk [vmem:[%s1251 + $0x50] sm:$0xff] %vm243, %v1229
  %1263 = vst.msk [vmem:[%s1251 + $0x58] sm:$0xff] %vm243, %v1232
  %1264 = vst.msk [vmem:[%s1251 + $0x60] sm:$0xff] %vm243, %v1237
  %1265 = vst.msk [vmem:[%s1251 + $0x68] sm:$0xff] %vm243, %v1240
  %1266 = vst.msk [vmem:[%s1251 + $0x70] sm:$0xff] %vm243, %v1245
  %1267 = vst.msk [vmem:[%s1251 + $0x78] sm:$0xff] %vm243, %v1248
  %v1268 = vsel %vm243, %v1189, 0.0
  %v1269 = vsel %vm243, %v1192, 0.0
  %v1270 = vadd.f32 %v1268, %v1269
  %v1271 = vsel %vm243, %v1197, 0.0
  %v1272 = vadd.f32 %v1270, %v1271
  %v1273 = vsel %vm243, %v1200, 0.0
  %v1274 = vadd.f32 %v1272, %v1273
  %v1275 = vsel %vm243, %v1205, 0.0
  %v1276 = vadd.f32 %v1274, %v1275
  %v1277 = vsel %vm243, %v1208, 0.0
  %v1278 = vadd.f32 %v1276, %v1277
  %v1279 = vsel %vm243, %v1213, 0.0
  %v1280 = vadd.f32 %v1278, %v1279
  %v1281 = vsel %vm243, %v1216, 0.0
  %v1282 = vadd.f32 %v1280, %v1281
  %v1283 = vsel %vm243, %v1221, 0.0
  %v1284 = vadd.f32 %v1282, %v1283
  %v1285 = vsel %vm243, %v1224, 0.0
  %v1286 = vadd.f32 %v1284, %v1285
  %v1287 = vsel %vm243, %v1229, 0.0
  %v1288 = vadd.f32 %v1286, %v1287
  %v1289 = vsel %vm243, %v1232, 0.0
  %v1290 = vadd.f32 %v1288, %v1289
  %v1291 = vsel %vm243, %v1237, 0.0
  %v1292 = vadd.f32 %v1290, %v1291
  %v1293 = vsel %vm243, %v1240, 0.0
  %v1294 = vadd.f32 %v1292, %v1293
  %v1295 = vsel %vm243, %v1245, 0.0
  %v1296 = vadd.f32 %v1294, %v1295
  %v1297 = vsel %vm243, %v1248, 0.0
  %v1298 = vadd.f32 %v1296, %v1297
  %v1299 = vrot.slane %v1298, 4
  %v1300 = vadd.f32 %v1298, %v1299
  %v1301 = vrot.slane %v1300, 2
  %v1302 = vadd.f32 %v1300, %v1301
  %v1303 = vrot.slane %v1302, 1
  %v1304 = vadd.f32 %v1302, %v1303
  %v1305 = vadd.f32 %v969, %v1304
  %v1306 = vmul.f32 %v1189, %v1189
  %v1307 = vmul.f32 %v1192, %v1192
  %v1308 = vmul.f32 %v1197, %v1197
  %v1309 = vmul.f32 %v1200, %v1200
  %v1310 = vmul.f32 %v1205, %v1205
  %v1311 = vmul.f32 %v1208, %v1208
  %v1312 = vmul.f32 %v1213, %v1213
  %v1313 = vmul.f32 %v1216, %v1216
  %v1314 = vmul.f32 %v1221, %v1221
  %v1315 = vmul.f32 %v1224, %v1224
  %v1316 = vmul.f32 %v1229, %v1229
  %v1317 = vmul.f32 %v1232, %v1232
  %v1318 = vmul.f32 %v1237, %v1237
  %v1319 = vmul.f32 %v1240, %v1240
  %v1320 = vmul.f32 %v1245, %v1245
  %v1321 = vmul.f32 %v1248, %v1248
  %v1322 = vsel %vm243, %v1306, 0.0
  %v1323 = vsel %vm243, %v1307, 0.0
  %v1324 = vadd.f32 %v1322, %v1323
  %v1325 = vsel %vm243, %v1308, 0.0
  %v1326 = vadd.f32 %v1324, %v1325
  %v1327 = vsel %vm243, %v1309, 0.0
  %v1328 = vadd.f32 %v1326, %v1327
  %v1329 = vsel %vm243, %v1310, 0.0
  %v1330 = vadd.f32 %v1328, %v1329
  %v1331 = vsel %vm243, %v1311, 0.0
  %v1332 = vadd.f32 %v1330, %v1331
  %v1333 = vsel %vm243, %v1312, 0.0
  %v1334 = vadd.f32 %v1332, %v1333
  %v1335 = vsel %vm243, %v1313, 0.0
  %v1336 = vadd.f32 %v1334, %v1335
  %v1337 = vsel %vm243, %v1314, 0.0
  %v1338 = vadd.f32 %v1336, %v1337
  %v1339 = vsel %vm243, %v1315, 0.0
  %v1340 = vadd.f32 %v1338, %v1339
  %v1341 = vsel %vm243, %v1316, 0.0
  %v1342 = vadd.f32 %v1340, %v1341
  %v1343 = vsel %vm243, %v1317, 0.0
  %v1344 = vadd.f32 %v1342, %v1343
  %v1345 = vsel %vm243, %v1318, 0.0
  %v1346 = vadd.f32 %v1344, %v1345
  %v1347 = vsel %vm243, %v1319, 0.0
  %v1348 = vadd.f32 %v1346, %v1347
  %v1349 = vsel %vm243, %v1320, 0.0
  %v1350 = vadd.f32 %v1348, %v1349
  %v1351 = vsel %vm243, %v1321, 0.0
  %v1352 = vadd.f32 %v1350, %v1351
  %v1353 = vrot.slane %v1352, 4
  %v1354 = vadd.f32 %v1352, %v1353
  %v1355 = vrot.slane %v1354, 2
  %v1356 = vadd.f32 %v1354, %v1355
  %v1357 = vrot.slane %v1356, 1
  %v1358 = vadd.f32 %v1356, %v1357
  %v1359 = vadd.f32 %v1023, %v1358
  %v1360 = vmul.f32 %v1305, 0.001953125
  %v1361 = vmul.f32 %v1359, 0.001953125
  %v1362 = vmul.f32 %v1360, %v1360
  %v1363 = vsub.f32 %v1361, %v1362
  %v1364 = vmax.f32 %v1363, 0.0
  %v1365 = vld [vmem:[%s2] sm:$0x1]
  %v1366 = vadd.f32 %v1364, 1e-05
  %v1367 = vrsqrt.pop %v1366
  %v1368 = vmul.f32 %v1365, %v1367
  %v1369 = vld [vmem:[%s3] sm:$0x1]
  %v1370 = vmul.f32 %v1360, %v1368
  %v1371 = vsub.f32 %v1369, %v1370
  %v1372 = vld [vmem:[#allocation2] sm:$0xff]
  %v1373 = vld [vmem:[#allocation2 + $0x8] sm:$0xff]
  %v1374 = vld [vmem:[#allocation2 + $0x10] sm:$0xff]
  %v1375 = vld [vmem:[#allocation2 + $0x18] sm:$0xff]
  %v1376 = vld [vmem:[#allocation2 + $0x20] sm:$0xff]
  %v1377 = vld [vmem:[#allocation2 + $0x28] sm:$0xff]
  %v1378 = vld [vmem:[#allocation2 + $0x30] sm:$0xff]
  %v1379 = vld [vmem:[#allocation2 + $0x38] sm:$0xff]
  %v1380 = vld [vmem:[#allocation2 + $0x40] sm:$0xff]
  %v1381 = vld [vmem:[#allocation2 + $0x48] sm:$0xff]
  %v1382 = vld [vmem:[#allocation2 + $0x50] sm:$0xff]
  %v1383 = vld [vmem:[#allocation2 + $0x58] sm:$0xff]
  %v1384 = vld [vmem:[#allocation2 + $0x60] sm:$0xff]
  %v1385 = vld [vmem:[#allocation2 + $0x68] sm:$0xff]
  %v1386 = vld [vmem:[#allocation2 + $0x70] sm:$0xff]
  %v1387 = vld [vmem:[#allocation2 + $0x78] sm:$0xff]
  %v1389 = vlaneseq
  %v1390 = vshrl.u32 %v1389, 7
  %v1391 = vsub.s32 0, %v1390
  %v1392 = vrot.slane %v1368, %v1391
  %v1394 = vmul.f32 %v1372, %v1392
  %v1395 = vmul.f32 %v1373, %v1392
  %v1396 = vmul.f32 %v1374, %v1392
  %v1397 = vmul.f32 %v1375, %v1392
  %v1398 = vmul.f32 %v1376, %v1392
  %v1399 = vmul.f32 %v1377, %v1392
  %v1400 = vmul.f32 %v1378, %v1392
  %v1401 = vmul.f32 %v1379, %v1392
  %v1402 = vmul.f32 %v1380, %v1392
  %v1403 = vmul.f32 %v1381, %v1392
  %v1404 = vmul.f32 %v1382, %v1392
  %v1405 = vmul.f32 %v1383, %v1392
  %v1406 = vmul.f32 %v1384, %v1392
  %v1407 = vmul.f32 %v1385, %v1392
  %v1408 = vmul.f32 %v1386, %v1392
  %v1409 = vmul.f32 %v1387, %v1392
  %v1411 = vlaneseq
  %v1412 = vshrl.u32 %v1411, 7
  %v1413 = vsub.s32 0, %v1412
  %v1414 = vrot.slane %v1371, %v1413
  %v1416 = vadd.f32 %v1394, %v1414
  %v1417 = vadd.f32 %v1395, %v1414
  %v1418 = vadd.f32 %v1396, %v1414
  %v1419 = vadd.f32 %v1397, %v1414
  %v1420 = vadd.f32 %v1398, %v1414
  %v1421 = vadd.f32 %v1399, %v1414
  %v1422 = vadd.f32 %v1400, %v1414
  %v1423 = vadd.f32 %v1401, %v1414
  %v1424 = vadd.f32 %v1402, %v1414
  %v1425 = vadd.f32 %v1403, %v1414
  %v1426 = vadd.f32 %v1404, %v1414
  %v1427 = vadd.f32 %v1405, %v1414
  %v1428 = vadd.f32 %v1406, %v1414
  %v1429 = vadd.f32 %v1407, %v1414
  %v1430 = vadd.f32 %v1408, %v1414
  %v1431 = vadd.f32 %v1409, %v1414
  %v1432 = vmax.f32 %v1416, 0.0
  %v1433 = vmax.f32 %v1417, 0.0
  %v1434 = vmax.f32 %v1418, 0.0
  %v1435 = vmax.f32 %v1419, 0.0
  %v1436 = vmax.f32 %v1420, 0.0
  %v1437 = vmax.f32 %v1421, 0.0
  %v1438 = vmax.f32 %v1422, 0.0
  %v1439 = vmax.f32 %v1423, 0.0
  %v1440 = vmax.f32 %v1424, 0.0
  %v1441 = vmax.f32 %v1425, 0.0
  %v1442 = vmax.f32 %v1426, 0.0
  %v1443 = vmax.f32 %v1427, 0.0
  %v1444 = vmax.f32 %v1428, 0.0
  %v1445 = vmax.f32 %v1429, 0.0
  %v1446 = vmax.f32 %v1430, 0.0
  %v1447 = vmax.f32 %v1431, 0.0
  %v1448 = vpack.c.bf16 %v1433, %v1432
  %v1449 = vpack.c.bf16 %v1435, %v1434
  %v1450 = vpack.c.bf16 %v1437, %v1436
  %v1451 = vpack.c.bf16 %v1439, %v1438
  %v1452 = vpack.c.bf16 %v1441, %v1440
  %v1453 = vpack.c.bf16 %v1443, %v1442
  %v1454 = vpack.c.bf16 %v1445, %v1444
  %v1455 = vpack.c.bf16 %v1447, %v1446
  %v1464 = vunpack.c.l.b16 %v1448
  %v1465 = vunpack.c.h.b16 %v1448
  %v1466 = vunpack.c.l.b16 %v1449
  %v1467 = vunpack.c.h.b16 %v1449
  %v1468 = vunpack.c.l.b16 %v1450
  %v1469 = vunpack.c.h.b16 %v1450
  %v1470 = vunpack.c.l.b16 %v1451
  %v1471 = vunpack.c.h.b16 %v1451
  %v1472 = vunpack.c.l.b16 %v1452
  %v1473 = vunpack.c.h.b16 %v1452
  %v1474 = vunpack.c.l.b16 %v1453
  %v1475 = vunpack.c.h.b16 %v1453
  %v1476 = vunpack.c.l.b16 %v1454
  %v1477 = vunpack.c.h.b16 %v1454
  %v1478 = vunpack.c.l.b16 %v1455
  %v1479 = vunpack.c.h.b16 %v1455
  %v1480 = vpack.c.b16 %v1464, %v1464
  %v1481 = vpack.c.b16 %v1465, %v1465
  %v1482 = vpack.c.b16 %v1466, %v1466
  %v1483 = vpack.c.b16 %v1467, %v1467
  %v1484 = vpack.c.b16 %v1468, %v1468
  %v1485 = vpack.c.b16 %v1469, %v1469
  %v1486 = vpack.c.b16 %v1470, %v1470
  %v1487 = vpack.c.b16 %v1471, %v1471
  %v1488 = vpack.c.b16 %v1472, %v1472
  %v1489 = vpack.c.b16 %v1473, %v1473
  %v1490 = vpack.c.b16 %v1474, %v1474
  %v1491 = vpack.c.b16 %v1475, %v1475
  %v1492 = vpack.c.b16 %v1476, %v1476
  %v1493 = vpack.c.b16 %v1477, %v1477
  %v1494 = vpack.c.b16 %v1478, %v1478
  %v1495 = vpack.c.b16 %v1479, %v1479
  %vm1512 = vcmask 125952
  %1513 = vst.msk [vmem:[%s4] sm:$0xf] %vm1512, %v1480
  %1514 = vst.msk [vmem:[%s4 + $0x4] sm:$0xf] %vm1512, %v1481
  %1515 = vst.msk [vmem:[%s4 + $0x8] sm:$0xf] %vm1512, %v1482
  %1516 = vst.msk [vmem:[%s4 + $0xc] sm:$0xf] %vm1512, %v1483
  %1517 = vst.msk [vmem:[%s4 + $0x10] sm:$0xf] %vm1512, %v1484
  %1518 = vst.msk [vmem:[%s4 + $0x14] sm:$0xf] %vm1512, %v1485
  %1519 = vst.msk [vmem:[%s4 + $0x18] sm:$0xf] %vm1512, %v1486
  %1520 = vst.msk [vmem:[%s4 + $0x1c] sm:$0xf] %vm1512, %v1487
  %1521 = vst.msk [vmem:[%s4 + $0x20] sm:$0xf] %vm1512, %v1488
  %1522 = vst.msk [vmem:[%s4 + $0x24] sm:$0xf] %vm1512, %v1489
  %1523 = vst.msk [vmem:[%s4 + $0x28] sm:$0xf] %vm1512, %v1490
  %1524 = vst.msk [vmem:[%s4 + $0x2c] sm:$0xf] %vm1512, %v1491
  %1525 = vst.msk [vmem:[%s4 + $0x30] sm:$0xf] %vm1512, %v1492
  %1526 = vst.msk [vmem:[%s4 + $0x34] sm:$0xf] %vm1512, %v1493
  %1527 = vst.msk [vmem:[%s4 + $0x38] sm:$0xf] %vm1512, %v1494
  %1528 = vst.msk [vmem:[%s4 + $0x3c] sm:$0xf] %vm1512, %v1495
  %v1529 = vld [vmem:[%s579] sm:$0xff]
  %v1530 = vld [vmem:[%s579 + $0x8] sm:$0xff]
  %v1531 = vld [vmem:[%s579 + $0x10] sm:$0xff]
  %v1532 = vld [vmem:[%s579 + $0x18] sm:$0xff]
  %v1533 = vld [vmem:[%s579 + $0x20] sm:$0xff]
  %v1534 = vld [vmem:[%s579 + $0x28] sm:$0xff]
  %v1535 = vld [vmem:[%s579 + $0x30] sm:$0xff]
  %v1536 = vld [vmem:[%s579 + $0x38] sm:$0xff]
  %v1537 = vld [vmem:[%s579 + $0x40] sm:$0xff]
  %v1538 = vld [vmem:[%s579 + $0x48] sm:$0xff]
  %v1539 = vld [vmem:[%s579 + $0x50] sm:$0xff]
  %v1540 = vld [vmem:[%s579 + $0x58] sm:$0xff]
  %v1541 = vld [vmem:[%s579 + $0x60] sm:$0xff]
  %v1542 = vld [vmem:[%s579 + $0x68] sm:$0xff]
  %v1543 = vld [vmem:[%s579 + $0x70] sm:$0xff]
  %v1544 = vld [vmem:[%s579 + $0x78] sm:$0xff]
  %v1545 = vmul.f32 %v1529, %v1392
  %v1546 = vmul.f32 %v1530, %v1392
  %v1547 = vmul.f32 %v1531, %v1392
  %v1548 = vmul.f32 %v1532, %v1392
  %v1549 = vmul.f32 %v1533, %v1392
  %v1550 = vmul.f32 %v1534, %v1392
  %v1551 = vmul.f32 %v1535, %v1392
  %v1552 = vmul.f32 %v1536, %v1392
  %v1553 = vmul.f32 %v1537, %v1392
  %v1554 = vmul.f32 %v1538, %v1392
  %v1555 = vmul.f32 %v1539, %v1392
  %v1556 = vmul.f32 %v1540, %v1392
  %v1557 = vmul.f32 %v1541, %v1392
  %v1558 = vmul.f32 %v1542, %v1392
  %v1559 = vmul.f32 %v1543, %v1392
  %v1560 = vmul.f32 %v1544, %v1392
  %v1561 = vadd.f32 %v1545, %v1414
  %v1562 = vadd.f32 %v1546, %v1414
  %v1563 = vadd.f32 %v1547, %v1414
  %v1564 = vadd.f32 %v1548, %v1414
  %v1565 = vadd.f32 %v1549, %v1414
  %v1566 = vadd.f32 %v1550, %v1414
  %v1567 = vadd.f32 %v1551, %v1414
  %v1568 = vadd.f32 %v1552, %v1414
  %v1569 = vadd.f32 %v1553, %v1414
  %v1570 = vadd.f32 %v1554, %v1414
  %v1571 = vadd.f32 %v1555, %v1414
  %v1572 = vadd.f32 %v1556, %v1414
  %v1573 = vadd.f32 %v1557, %v1414
  %v1574 = vadd.f32 %v1558, %v1414
  %v1575 = vadd.f32 %v1559, %v1414
  %v1576 = vadd.f32 %v1560, %v1414
  %v1577 = vmax.f32 %v1561, 0.0
  %v1578 = vmax.f32 %v1562, 0.0
  %v1579 = vmax.f32 %v1563, 0.0
  %v1580 = vmax.f32 %v1564, 0.0
  %v1581 = vmax.f32 %v1565, 0.0
  %v1582 = vmax.f32 %v1566, 0.0
  %v1583 = vmax.f32 %v1567, 0.0
  %v1584 = vmax.f32 %v1568, 0.0
  %v1585 = vmax.f32 %v1569, 0.0
  %v1586 = vmax.f32 %v1570, 0.0
  %v1587 = vmax.f32 %v1571, 0.0
  %v1588 = vmax.f32 %v1572, 0.0
  %v1589 = vmax.f32 %v1573, 0.0
  %v1590 = vmax.f32 %v1574, 0.0
  %v1591 = vmax.f32 %v1575, 0.0
  %v1592 = vmax.f32 %v1576, 0.0
  %v1593 = vpack.c.bf16 %v1578, %v1577
  %v1594 = vpack.c.bf16 %v1580, %v1579
  %v1595 = vpack.c.bf16 %v1582, %v1581
  %v1596 = vpack.c.bf16 %v1584, %v1583
  %v1597 = vpack.c.bf16 %v1586, %v1585
  %v1598 = vpack.c.bf16 %v1588, %v1587
  %v1599 = vpack.c.bf16 %v1590, %v1589
  %v1600 = vpack.c.bf16 %v1592, %v1591
  %v1609 = vunpack.c.l.b16 %v1593
  %v1610 = vunpack.c.h.b16 %v1593
  %v1611 = vunpack.c.l.b16 %v1594
  %v1612 = vunpack.c.h.b16 %v1594
  %v1613 = vunpack.c.l.b16 %v1595
  %v1614 = vunpack.c.h.b16 %v1595
  %v1615 = vunpack.c.l.b16 %v1596
  %v1616 = vunpack.c.h.b16 %v1596
  %v1617 = vunpack.c.l.b16 %v1597
  %v1618 = vunpack.c.h.b16 %v1597
  %v1619 = vunpack.c.l.b16 %v1598
  %v1620 = vunpack.c.h.b16 %v1598
  %v1621 = vunpack.c.l.b16 %v1599
  %v1622 = vunpack.c.h.b16 %v1599
  %v1623 = vunpack.c.l.b16 %v1600
  %v1624 = vunpack.c.h.b16 %v1600
  %v1625 = vpack.c.b16 %v1609, %v1609
  %v1626 = vpack.c.b16 %v1610, %v1610
  %v1627 = vpack.c.b16 %v1611, %v1611
  %v1628 = vpack.c.b16 %v1612, %v1612
  %v1629 = vpack.c.b16 %v1613, %v1613
  %v1630 = vpack.c.b16 %v1614, %v1614
  %v1631 = vpack.c.b16 %v1615, %v1615
  %v1632 = vpack.c.b16 %v1616, %v1616
  %v1633 = vpack.c.b16 %v1617, %v1617
  %v1634 = vpack.c.b16 %v1618, %v1618
  %v1635 = vpack.c.b16 %v1619, %v1619
  %v1636 = vpack.c.b16 %v1620, %v1620
  %v1637 = vpack.c.b16 %v1621, %v1621
  %v1638 = vpack.c.b16 %v1622, %v1622
  %v1639 = vpack.c.b16 %v1623, %v1623
  %v1640 = vpack.c.b16 %v1624, %v1624
  %s1657 = scalar_lea.vmem %s4, 64
  %1658 = vst.msk [vmem:[%s1657] sm:$0xf] %vm1512, %v1625
  %1659 = vst.msk [vmem:[%s1657 + $0x4] sm:$0xf] %vm1512, %v1626
  %1660 = vst.msk [vmem:[%s1657 + $0x8] sm:$0xf] %vm1512, %v1627
  %1661 = vst.msk [vmem:[%s1657 + $0xc] sm:$0xf] %vm1512, %v1628
  %1662 = vst.msk [vmem:[%s1657 + $0x10] sm:$0xf] %vm1512, %v1629
  %1663 = vst.msk [vmem:[%s1657 + $0x14] sm:$0xf] %vm1512, %v1630
  %1664 = vst.msk [vmem:[%s1657 + $0x18] sm:$0xf] %vm1512, %v1631
  %1665 = vst.msk [vmem:[%s1657 + $0x1c] sm:$0xf] %vm1512, %v1632
  %1666 = vst.msk [vmem:[%s1657 + $0x20] sm:$0xf] %vm1512, %v1633
  %1667 = vst.msk [vmem:[%s1657 + $0x24] sm:$0xf] %vm1512, %v1634
  %1668 = vst.msk [vmem:[%s1657 + $0x28] sm:$0xf] %vm1512, %v1635
  %1669 = vst.msk [vmem:[%s1657 + $0x2c] sm:$0xf] %vm1512, %v1636
  %1670 = vst.msk [vmem:[%s1657 + $0x30] sm:$0xf] %vm1512, %v1637
  %1671 = vst.msk [vmem:[%s1657 + $0x34] sm:$0xf] %vm1512, %v1638
  %1672 = vst.msk [vmem:[%s1657 + $0x38] sm:$0xf] %vm1512, %v1639
  %1673 = vst.msk [vmem:[%s1657 + $0x3c] sm:$0xf] %vm1512, %v1640
  %v1674 = vld [vmem:[%s915] sm:$0xff]
  %v1675 = vld [vmem:[%s915 + $0x8] sm:$0xff]
  %v1676 = vld [vmem:[%s915 + $0x10] sm:$0xff]
  %v1677 = vld [vmem:[%s915 + $0x18] sm:$0xff]
  %v1678 = vld [vmem:[%s915 + $0x20] sm:$0xff]
  %v1679 = vld [vmem:[%s915 + $0x28] sm:$0xff]
  %v1680 = vld [vmem:[%s915 + $0x30] sm:$0xff]
  %v1681 = vld [vmem:[%s915 + $0x38] sm:$0xff]
  %v1682 = vld [vmem:[%s915 + $0x40] sm:$0xff]
  %v1683 = vld [vmem:[%s915 + $0x48] sm:$0xff]
  %v1684 = vld [vmem:[%s915 + $0x50] sm:$0xff]
  %v1685 = vld [vmem:[%s915 + $0x58] sm:$0xff]
  %v1686 = vld [vmem:[%s915 + $0x60] sm:$0xff]
  %v1687 = vld [vmem:[%s915 + $0x68] sm:$0xff]
  %v1688 = vld [vmem:[%s915 + $0x70] sm:$0xff]
  %v1689 = vld [vmem:[%s915 + $0x78] sm:$0xff]
  %v1690 = vmul.f32 %v1674, %v1392
  %v1691 = vmul.f32 %v1675, %v1392
  %v1692 = vmul.f32 %v1676, %v1392
  %v1693 = vmul.f32 %v1677, %v1392
  %v1694 = vmul.f32 %v1678, %v1392
  %v1695 = vmul.f32 %v1679, %v1392
  %v1696 = vmul.f32 %v1680, %v1392
  %v1697 = vmul.f32 %v1681, %v1392
  %v1698 = vmul.f32 %v1682, %v1392
  %v1699 = vmul.f32 %v1683, %v1392
  %v1700 = vmul.f32 %v1684, %v1392
  %v1701 = vmul.f32 %v1685, %v1392
  %v1702 = vmul.f32 %v1686, %v1392
  %v1703 = vmul.f32 %v1687, %v1392
  %v1704 = vmul.f32 %v1688, %v1392
  %v1705 = vmul.f32 %v1689, %v1392
  %v1706 = vadd.f32 %v1690, %v1414
  %v1707 = vadd.f32 %v1691, %v1414
  %v1708 = vadd.f32 %v1692, %v1414
  %v1709 = vadd.f32 %v1693, %v1414
  %v1710 = vadd.f32 %v1694, %v1414
  %v1711 = vadd.f32 %v1695, %v1414
  %v1712 = vadd.f32 %v1696, %v1414
  %v1713 = vadd.f32 %v1697, %v1414
  %v1714 = vadd.f32 %v1698, %v1414
  %v1715 = vadd.f32 %v1699, %v1414
  %v1716 = vadd.f32 %v1700, %v1414
  %v1717 = vadd.f32 %v1701, %v1414
  %v1718 = vadd.f32 %v1702, %v1414
  %v1719 = vadd.f32 %v1703, %v1414
  %v1720 = vadd.f32 %v1704, %v1414
  %v1721 = vadd.f32 %v1705, %v1414
  %v1722 = vmax.f32 %v1706, 0.0
  %v1723 = vmax.f32 %v1707, 0.0
  %v1724 = vmax.f32 %v1708, 0.0
  %v1725 = vmax.f32 %v1709, 0.0
  %v1726 = vmax.f32 %v1710, 0.0
  %v1727 = vmax.f32 %v1711, 0.0
  %v1728 = vmax.f32 %v1712, 0.0
  %v1729 = vmax.f32 %v1713, 0.0
  %v1730 = vmax.f32 %v1714, 0.0
  %v1731 = vmax.f32 %v1715, 0.0
  %v1732 = vmax.f32 %v1716, 0.0
  %v1733 = vmax.f32 %v1717, 0.0
  %v1734 = vmax.f32 %v1718, 0.0
  %v1735 = vmax.f32 %v1719, 0.0
  %v1736 = vmax.f32 %v1720, 0.0
  %v1737 = vmax.f32 %v1721, 0.0
  %v1738 = vpack.c.bf16 %v1723, %v1722
  %v1739 = vpack.c.bf16 %v1725, %v1724
  %v1740 = vpack.c.bf16 %v1727, %v1726
  %v1741 = vpack.c.bf16 %v1729, %v1728
  %v1742 = vpack.c.bf16 %v1731, %v1730
  %v1743 = vpack.c.bf16 %v1733, %v1732
  %v1744 = vpack.c.bf16 %v1735, %v1734
  %v1745 = vpack.c.bf16 %v1737, %v1736
  %v1754 = vunpack.c.l.b16 %v1738
  %v1755 = vunpack.c.h.b16 %v1738
  %v1756 = vunpack.c.l.b16 %v1739
  %v1757 = vunpack.c.h.b16 %v1739
  %v1758 = vunpack.c.l.b16 %v1740
  %v1759 = vunpack.c.h.b16 %v1740
  %v1760 = vunpack.c.l.b16 %v1741
  %v1761 = vunpack.c.h.b16 %v1741
  %v1762 = vunpack.c.l.b16 %v1742
  %v1763 = vunpack.c.h.b16 %v1742
  %v1764 = vunpack.c.l.b16 %v1743
  %v1765 = vunpack.c.h.b16 %v1743
  %v1766 = vunpack.c.l.b16 %v1744
  %v1767 = vunpack.c.h.b16 %v1744
  %v1768 = vunpack.c.l.b16 %v1745
  %v1769 = vunpack.c.h.b16 %v1745
  %v1770 = vpack.c.b16 %v1754, %v1754
  %v1771 = vpack.c.b16 %v1755, %v1755
  %v1772 = vpack.c.b16 %v1756, %v1756
  %v1773 = vpack.c.b16 %v1757, %v1757
  %v1774 = vpack.c.b16 %v1758, %v1758
  %v1775 = vpack.c.b16 %v1759, %v1759
  %v1776 = vpack.c.b16 %v1760, %v1760
  %v1777 = vpack.c.b16 %v1761, %v1761
  %v1778 = vpack.c.b16 %v1762, %v1762
  %v1779 = vpack.c.b16 %v1763, %v1763
  %v1780 = vpack.c.b16 %v1764, %v1764
  %v1781 = vpack.c.b16 %v1765, %v1765
  %v1782 = vpack.c.b16 %v1766, %v1766
  %v1783 = vpack.c.b16 %v1767, %v1767
  %v1784 = vpack.c.b16 %v1768, %v1768
  %v1785 = vpack.c.b16 %v1769, %v1769
  %s1802 = scalar_lea.vmem %s4, 128
  %1803 = vst.msk [vmem:[%s1802] sm:$0xf] %vm1512, %v1770
  %1804 = vst.msk [vmem:[%s1802 + $0x4] sm:$0xf] %vm1512, %v1771
  %1805 = vst.msk [vmem:[%s1802 + $0x8] sm:$0xf] %vm1512, %v1772
  %1806 = vst.msk [vmem:[%s1802 + $0xc] sm:$0xf] %vm1512, %v1773
  %1807 = vst.msk [vmem:[%s1802 + $0x10] sm:$0xf] %vm1512, %v1774
  %1808 = vst.msk [vmem:[%s1802 + $0x14] sm:$0xf] %vm1512, %v1775
  %1809 = vst.msk [vmem:[%s1802 + $0x18] sm:$0xf] %vm1512, %v1776
  %1810 = vst.msk [vmem:[%s1802 + $0x1c] sm:$0xf] %vm1512, %v1777
  %1811 = vst.msk [vmem:[%s1802 + $0x20] sm:$0xf] %vm1512, %v1778
  %1812 = vst.msk [vmem:[%s1802 + $0x24] sm:$0xf] %vm1512, %v1779
  %1813 = vst.msk [vmem:[%s1802 + $0x28] sm:$0xf] %vm1512, %v1780
  %1814 = vst.msk [vmem:[%s1802 + $0x2c] sm:$0xf] %vm1512, %v1781
  %1815 = vst.msk [vmem:[%s1802 + $0x30] sm:$0xf] %vm1512, %v1782
  %1816 = vst.msk [vmem:[%s1802 + $0x34] sm:$0xf] %vm1512, %v1783
  %1817 = vst.msk [vmem:[%s1802 + $0x38] sm:$0xf] %vm1512, %v1784
  %1818 = vst.msk [vmem:[%s1802 + $0x3c] sm:$0xf] %vm1512, %v1785
  %v1819 = vld [vmem:[%s1251] sm:$0xff]
  %v1820 = vld [vmem:[%s1251 + $0x8] sm:$0xff]
  %v1821 = vld [vmem:[%s1251 + $0x10] sm:$0xff]
  %v1822 = vld [vmem:[%s1251 + $0x18] sm:$0xff]
  %v1823 = vld [vmem:[%s1251 + $0x20] sm:$0xff]
  %v1824 = vld [vmem:[%s1251 + $0x28] sm:$0xff]
  %v1825 = vld [vmem:[%s1251 + $0x30] sm:$0xff]
  %v1826 = vld [vmem:[%s1251 + $0x38] sm:$0xff]
  %v1827 = vld [vmem:[%s1251 + $0x40] sm:$0xff]
  %v1828 = vld [vmem:[%s1251 + $0x48] sm:$0xff]
  %v1829 = vld [vmem:[%s1251 + $0x50] sm:$0xff]
  %v1830 = vld [vmem:[%s1251 + $0x58] sm:$0xff]
  %v1831 = vld [vmem:[%s1251 + $0x60] sm:$0xff]
  %v1832 = vld [vmem:[%s1251 + $0x68] sm:$0xff]
  %v1833 = vld [vmem:[%s1251 + $0x70] sm:$0xff]
  %v1834 = vld [vmem:[%s1251 + $0x78] sm:$0xff]
  %v1835 = vmul.f32 %v1819, %v1392
  %v1836 = vmul.f32 %v1820, %v1392
  %v1837 = vmul.f32 %v1821, %v1392
  %v1838 = vmul.f32 %v1822, %v1392
  %v1839 = vmul.f32 %v1823, %v1392
  %v1840 = vmul.f32 %v1824, %v1392
  %v1841 = vmul.f32 %v1825, %v1392
  %v1842 = vmul.f32 %v1826, %v1392
  %v1843 = vmul.f32 %v1827, %v1392
  %v1844 = vmul.f32 %v1828, %v1392
  %v1845 = vmul.f32 %v1829, %v1392
  %v1846 = vmul.f32 %v1830, %v1392
  %v1847 = vmul.f32 %v1831, %v1392
  %v1848 = vmul.f32 %v1832, %v1392
  %v1849 = vmul.f32 %v1833, %v1392
  %v1850 = vmul.f32 %v1834, %v1392
  %v1851 = vadd.f32 %v1835, %v1414
  %v1852 = vadd.f32 %v1836, %v1414
  %v1853 = vadd.f32 %v1837, %v1414
  %v1854 = vadd.f32 %v1838, %v1414
  %v1855 = vadd.f32 %v1839, %v1414
  %v1856 = vadd.f32 %v1840, %v1414
  %v1857 = vadd.f32 %v1841, %v1414
  %v1858 = vadd.f32 %v1842, %v1414
  %v1859 = vadd.f32 %v1843, %v1414
  %v1860 = vadd.f32 %v1844, %v1414
  %v1861 = vadd.f32 %v1845, %v1414
  %v1862 = vadd.f32 %v1846, %v1414
  %v1863 = vadd.f32 %v1847, %v1414
  %v1864 = vadd.f32 %v1848, %v1414
  %v1865 = vadd.f32 %v1849, %v1414
  %v1866 = vadd.f32 %v1850, %v1414
  %v1867 = vmax.f32 %v1851, 0.0
  %v1868 = vmax.f32 %v1852, 0.0
  %v1869 = vmax.f32 %v1853, 0.0
  %v1870 = vmax.f32 %v1854, 0.0
  %v1871 = vmax.f32 %v1855, 0.0
  %v1872 = vmax.f32 %v1856, 0.0
  %v1873 = vmax.f32 %v1857, 0.0
  %v1874 = vmax.f32 %v1858, 0.0
  %v1875 = vmax.f32 %v1859, 0.0
  %v1876 = vmax.f32 %v1860, 0.0
  %v1877 = vmax.f32 %v1861, 0.0
  %v1878 = vmax.f32 %v1862, 0.0
  %v1879 = vmax.f32 %v1863, 0.0
  %v1880 = vmax.f32 %v1864, 0.0
  %v1881 = vmax.f32 %v1865, 0.0
  %v1882 = vmax.f32 %v1866, 0.0
  %v1883 = vpack.c.bf16 %v1868, %v1867
  %v1884 = vpack.c.bf16 %v1870, %v1869
  %v1885 = vpack.c.bf16 %v1872, %v1871
  %v1886 = vpack.c.bf16 %v1874, %v1873
  %v1887 = vpack.c.bf16 %v1876, %v1875
  %v1888 = vpack.c.bf16 %v1878, %v1877
  %v1889 = vpack.c.bf16 %v1880, %v1879
  %v1890 = vpack.c.bf16 %v1882, %v1881
  %v1899 = vunpack.c.l.b16 %v1883
  %v1900 = vunpack.c.h.b16 %v1883
  %v1901 = vunpack.c.l.b16 %v1884
  %v1902 = vunpack.c.h.b16 %v1884
  %v1903 = vunpack.c.l.b16 %v1885
  %v1904 = vunpack.c.h.b16 %v1885
  %v1905 = vunpack.c.l.b16 %v1886
  %v1906 = vunpack.c.h.b16 %v1886
  %v1907 = vunpack.c.l.b16 %v1887
  %v1908 = vunpack.c.h.b16 %v1887
  %v1909 = vunpack.c.l.b16 %v1888
  %v1910 = vunpack.c.h.b16 %v1888
  %v1911 = vunpack.c.l.b16 %v1889
  %v1912 = vunpack.c.h.b16 %v1889
  %v1913 = vunpack.c.l.b16 %v1890
  %v1914 = vunpack.c.h.b16 %v1890
  %v1915 = vpack.c.b16 %v1899, %v1899
  %v1916 = vpack.c.b16 %v1900, %v1900
  %v1917 = vpack.c.b16 %v1901, %v1901
  %v1918 = vpack.c.b16 %v1902, %v1902
  %v1919 = vpack.c.b16 %v1903, %v1903
  %v1920 = vpack.c.b16 %v1904, %v1904
  %v1921 = vpack.c.b16 %v1905, %v1905
  %v1922 = vpack.c.b16 %v1906, %v1906
  %v1923 = vpack.c.b16 %v1907, %v1907
  %v1924 = vpack.c.b16 %v1908, %v1908
  %v1925 = vpack.c.b16 %v1909, %v1909
  %v1926 = vpack.c.b16 %v1910, %v1910
  %v1927 = vpack.c.b16 %v1911, %v1911
  %v1928 = vpack.c.b16 %v1912, %v1912
  %v1929 = vpack.c.b16 %v1913, %v1913
  %v1930 = vpack.c.b16 %v1914, %v1914
  %s1947 = scalar_lea.vmem %s4, 192
  %1948 = vst.msk [vmem:[%s1947] sm:$0xf] %vm1512, %v1915
  %1949 = vst.msk [vmem:[%s1947 + $0x4] sm:$0xf] %vm1512, %v1916
  %1950 = vst.msk [vmem:[%s1947 + $0x8] sm:$0xf] %vm1512, %v1917
  %1951 = vst.msk [vmem:[%s1947 + $0xc] sm:$0xf] %vm1512, %v1918
  %1952 = vst.msk [vmem:[%s1947 + $0x10] sm:$0xf] %vm1512, %v1919
  %1953 = vst.msk [vmem:[%s1947 + $0x14] sm:$0xf] %vm1512, %v1920
  %1954 = vst.msk [vmem:[%s1947 + $0x18] sm:$0xf] %vm1512, %v1921
  %1955 = vst.msk [vmem:[%s1947 + $0x1c] sm:$0xf] %vm1512, %v1922
  %1956 = vst.msk [vmem:[%s1947 + $0x20] sm:$0xf] %vm1512, %v1923
  %1957 = vst.msk [vmem:[%s1947 + $0x24] sm:$0xf] %vm1512, %v1924
  %1958 = vst.msk [vmem:[%s1947 + $0x28] sm:$0xf] %vm1512, %v1925
  %1959 = vst.msk [vmem:[%s1947 + $0x2c] sm:$0xf] %vm1512, %v1926
  %1960 = vst.msk [vmem:[%s1947 + $0x30] sm:$0xf] %vm1512, %v1927
  %1961 = vst.msk [vmem:[%s1947 + $0x34] sm:$0xf] %vm1512, %v1928
  %1962 = vst.msk [vmem:[%s1947 + $0x38] sm:$0xf] %vm1512, %v1929
  %1963 = vst.msk [vmem:[%s1947 + $0x3c] sm:$0xf] %vm1512, %v1930
  // Predicated region
  $region18: #{cond_conv_generator_forward.6} parent=0 // pred_check
    _
  $region19: #{cond_conv_generator_forward.6} parent=0 // pred_check_branch
    %1965 = sbr.rel (0) target = $region21
  $region20: #{cond_conv_generator_forward.6} parent=0 // pred_region
    _
  $region21: #{cond_conv_generator_forward.6} parent=0 // pred_fallthru
    _
  // Predicated region
  $region22: #{cond_conv_generator_forward.6} parent=0 // pred_check
    _
  $region23: #{cond_conv_generator_forward.6} parent=0 // pred_check_branch
    %1967 = sbr.rel (0) target = $region25
  $region24: #{cond_conv_generator_forward.6} parent=0 // pred_region
    _
  $region25: #{cond_conv_generator_forward.6} parent=0 // pred_fallthru
    _

// kernel: cond_conv_generator_forward.7
$region0: #{cond_conv_generator_forward.7}
  #allocation0 [shape = 'u32[]', space=smem, size = 0x4, offset = 0x4, fixed_abs, tag = 'smem constant byte address 0x4 - core index']
  #allocation1 [shape = 'u32[144,128]{1,0:T(1,128)}', space=vmem, size = 0x12000, scoped, tag = 'internal scratch']
  %s0 = inlined_call_operand.vmem [shape: bf16[4,392,64], index: 0, kind: input, shape index: {}]
  %s1 = inlined_call_operand.vmem [shape: bf16[4,64,3], index: 1, kind: input, shape index: {}]
  %s2 = inlined_call_operand.vmem [shape: f32[1,3], index: 2, kind: input, shape index: {}]
  %s3 = inlined_call_operand.vmem [shape: f32[4,392,3], index: 3, kind: output, shape index: {}]
  %s4 = sld [smem:[#allocation0]]
  $region22: #{cond_conv_generator_forward.7} parent=0
    _
  %s6 = ssub.s32 1, %s4
  %s7 = scalar_select 0, %s6, %s4
  // Predicated region
  $region2: #{cond_conv_generator_forward.7} parent=0 // pred_check
    _
  $region3: #{cond_conv_generator_forward.7} parent=0 // pred_check_branch
    %9 = sbr.rel (0) target = $region5
  $region4: #{cond_conv_generator_forward.7} parent=0 // pred_region
    _
  $region5: #{cond_conv_generator_forward.7} parent=0 // pred_fallthru
    _
  // Predicated region
  $region6: #{cond_conv_generator_forward.7} parent=0 // pred_check
    _
  $region7: #{cond_conv_generator_forward.7} parent=0 // pred_check_branch
    %11 = sbr.rel (0) target = $region9
  $region8: #{cond_conv_generator_forward.7} parent=0 // pred_region
    _
  $region9: #{cond_conv_generator_forward.7} parent=0 // pred_fallthru
    _
  // Predicated region
  $region10: #{cond_conv_generator_forward.7} parent=0 // pred_check
    _
  $region11: #{cond_conv_generator_forward.7} parent=0 // pred_check_branch
    %13 = sbr.rel (0) target = $region13
  $region12: #{cond_conv_generator_forward.7} parent=0 // pred_region
    _
  $region13: #{cond_conv_generator_forward.7} parent=0 // pred_fallthru
    _
  %v15 = vld [vmem:[%s0] sm:$0xf]
  %v16 = vld [vmem:[%s0 + $0x4] sm:$0xf]
  %v17 = vld [vmem:[%s0 + $0x8] sm:$0xf]
  %v18 = vld [vmem:[%s0 + $0xc] sm:$0xf]
  %v19 = vld [vmem:[%s0 + $0x10] sm:$0xf]
  %v20 = vld [vmem:[%s0 + $0x14] sm:$0xf]
  %v21 = vld [vmem:[%s0 + $0x18] sm:$0xf]
  %v22 = vld [vmem:[%s0 + $0x1c] sm:$0xf]
  %v23 = vld [vmem:[%s0 + $0x20] sm:$0xf]
  %v24 = vld [vmem:[%s0 + $0x24] sm:$0xf]
  %v25 = vld [vmem:[%s0 + $0x28] sm:$0xf]
  %v26 = vld [vmem:[%s0 + $0x2c] sm:$0xf]
  %v27 = vld [vmem:[%s0 + $0x30] sm:$0xf]
  %v28 = vld [vmem:[%s0 + $0x34] sm:$0xf]
  %v29 = vld [vmem:[%s0 + $0x38] sm:$0xf]
  %v30 = vld [vmem:[%s0 + $0x3c] sm:$0xf]
  %v31 = vld [vmem:[%s0 + $0x40] sm:$0xf]
  %v32 = vld [vmem:[%s0 + $0x44] sm:$0xf]
  %v33 = vld [vmem:[%s0 + $0x48] sm:$0xf]
  %v34 = vld [vmem:[%s0 + $0x4c] sm:$0xf]
  %v35 = vld [vmem:[%s0 + $0x50] sm:$0xf]
  %v36 = vld [vmem:[%s0 + $0x54] sm:$0xf]
  %v37 = vld [vmem:[%s0 + $0x58] sm:$0xf]
  %v38 = vld [vmem:[%s0 + $0x5c] sm:$0xf]
  %v39 = vld [vmem:[%s0 + $0x60] sm:$0xf]
  %v40 = vld [vmem:[%s0 + $0x64] sm:$0xf]
  %v41 = vld [vmem:[%s0 + $0x68] sm:$0xf]
  %v42 = vld [vmem:[%s0 + $0x6c] sm:$0xf]
  %v43 = vld [vmem:[%s0 + $0x70] sm:$0xf]
  %v44 = vld [vmem:[%s0 + $0x74] sm:$0xf]
  %v45 = vld [vmem:[%s0 + $0x78] sm:$0xf]
  %v46 = vld [vmem:[%s0 + $0x7c] sm:$0xf]
  %v47 = vld [vmem:[%s0 + $0x80] sm:$0xf]
  %v48 = vld [vmem:[%s0 + $0x84] sm:$0xf]
  %v49 = vld [vmem:[%s0 + $0x88] sm:$0xf]
  %v50 = vld [vmem:[%s0 + $0x8c] sm:$0xf]
  %v51 = vld [vmem:[%s0 + $0x90] sm:$0xf]
  %v52 = vld [vmem:[%s0 + $0x94] sm:$0xf]
  %v53 = vld [vmem:[%s0 + $0x98] sm:$0xf]
  %v54 = vld [vmem:[%s0 + $0x9c] sm:$0xf]
  %v55 = vld [vmem:[%s0 + $0xa0] sm:$0xf]
  %v56 = vld [vmem:[%s0 + $0xa4] sm:$0xf]
  %v57 = vld [vmem:[%s0 + $0xa8] sm:$0xf]
  %v58 = vld [vmem:[%s0 + $0xac] sm:$0xf]
  %v59 = vld [vmem:[%s0 + $0xb0] sm:$0xf]
  %v60 = vld [vmem:[%s0 + $0xb4] sm:$0xf]
  %v61 = vld [vmem:[%s0 + $0xb8] sm:$0xf]
  %v62 = vld [vmem:[%s0 + $0xbc] sm:$0xf]
  %v63 = vld [vmem:[%s0 + $0xc0] sm:$0xf]
  %v64 = vld [vmem:[%s1] sm:$0xf]
  %v65 = vld [vmem:[%s1 + $0x4] sm:$0xf]
  %v66 = vld [vmem:[%s1 + $0x8] sm:$0xf]
  %v67 = vld [vmem:[%s1 + $0xc] sm:$0xf]
  %v68 = vld [vmem:[%s1 + $0x10] sm:$0xf]
  %v69 = vld [vmem:[%s1 + $0x14] sm:$0xf]
  %v70 = vld [vmem:[%s1 + $0x18] sm:$0xf]
  %v71 = vld [vmem:[%s1 + $0x1c] sm:$0xf]
  %v72 = vld [vmem:[%s2] sm:$0x1]
  %v74 = vlaneseq
  %v75 = vshrl.u32 %v74, 7
  %v76 = vsub.s32 0, %v75
  %v77 = vrot.slane %v72, %v76
  %v128 = vunpack.c.l.b16 %v15
  %v129 = vunpack.c.l.b16 %v16
  %v130 = vunpack.c.l.b16 %v17
  %v131 = vunpack.c.l.b16 %v18
  %v132 = vunpack.c.l.b16 %v19
  %v133 = vunpack.c.l.b16 %v20
  %v134 = vunpack.c.l.b16 %v21
  %v135 = vunpack.c.l.b16 %v22
  %v136 = vunpack.c.l.b16 %v23
  %v137 = vunpack.c.l.b16 %v24
  %v138 = vunpack.c.l.b16 %v25
  %v139 = vunpack.c.l.b16 %v26
  %v140 = vunpack.c.l.b16 %v27
  %v141 = vunpack.c.l.b16 %v28
  %v142 = vunpack.c.l.b16 %v29
  %v143 = vunpack.c.l.b16 %v30
  %v144 = vunpack.c.l.b16 %v31
  %v145 = vunpack.c.l.b16 %v32
  %v146 = vunpack.c.l.b16 %v33
  %v147 = vunpack.c.l.b16 %v34
  %v148 = vunpack.c.l.b16 %v35
  %v149 = vunpack.c.l.b16 %v36
  %v150 = vunpack.c.l.b16 %v37
  %v151 = vunpack.c.l.b16 %v38
  %v152 = vunpack.c.l.b16 %v39
  %v153 = vunpack.c.l.b16 %v40
  %v154 = vunpack.c.l.b16 %v41
  %v155 = vunpack.c.l.b16 %v42
  %v156 = vunpack.c.l.b16 %v43
  %v157 = vunpack.c.l.b16 %v44
  %v158 = vunpack.c.l.b16 %v45
  %v159 = vunpack.c.l.b16 %v46
  %v160 = vunpack.c.l.b16 %v47
  %v161 = vunpack.c.l.b16 %v48
  %v162 = vunpack.c.l.b16 %v49
  %v163 = vunpack.c.l.b16 %v50
  %v164 = vunpack.c.l.b16 %v51
  %v165 = vunpack.c.l.b16 %v52
  %v166 = vunpack.c.l.b16 %v53
  %v167 = vunpack.c.l.b16 %v54
  %v168 = vunpack.c.l.b16 %v55
  %v169 = vunpack.c.l.b16 %v56
  %v170 = vunpack.c.l.b16 %v57
  %v171 = vunpack.c.l.b16 %v58
  %v172 = vunpack.c.l.b16 %v59
  %v173 = vunpack.c.l.b16 %v60
  %v174 = vunpack.c.l.b16 %v61
  %v175 = vunpack.c.l.b16 %v62
  %v176 = vunpack.c.l.b16 %v63
  %v177 = vpack.c.b16 %v129, %v128
  %v178 = vpack.c.b16 %v131, %v130
  %v179 = vpack.c.b16 %v133, %v132
  %v180 = vpack.c.b16 %v135, %v134
  %v181 = vpack.c.b16 %v137, %v136
  %v182 = vpack.c.b16 %v139, %v138
  %v183 = vpack.c.b16 %v141, %v140
  %v184 = vpack.c.b16 %v143, %v142
  %v185 = vpack.c.b16 %v145, %v144
  %v186 = vpack.c.b16 %v147, %v146
  %v187 = vpack.c.b16 %v149, %v148
  %v188 = vpack.c.b16 %v151, %v150
  %v189 = vpack.c.b16 %v153, %v152
  %v190 = vpack.c.b16 %v155, %v154
  %v191 = vpack.c.b16 %v157, %v156
  %v192 = vpack.c.b16 %v159, %v158
  %v193 = vpack.c.b16 %v161, %v160
  %v194 = vpack.c.b16 %v163, %v162
  %v195 = vpack.c.b16 %v165, %v164
  %v196 = vpack.c.b16 %v167, %v166
  %v197 = vpack.c.b16 %v169, %v168
  %v198 = vpack.c.b16 %v171, %v170
  %v199 = vpack.c.b16 %v173, %v172
  %v200 = vpack.c.b16 %v175, %v174
  %v201 = vpack.c.b16 %v176, %v176
  %v210 = vunpack.c.l.b16 %v64
  %v211 = vunpack.c.l.b16 %v65
  %v212 = vunpack.c.l.b16 %v66
  %v213 = vunpack.c.l.b16 %v67
  %v214 = vunpack.c.l.b16 %v68
  %v215 = vunpack.c.l.b16 %v69
  %v216 = vunpack.c.l.b16 %v70
  %v217 = vunpack.c.l.b16 %v71
  %v218 = vpack.c.b16 %v211, %v210
  %v219 = vpack.c.b16 %v213, %v212
  %v220 = vpack.c.b16 %v215, %v214
  %v221 = vpack.c.b16 %v217, %v216
  %vm226 = vcmask 523264
  %v228 = vsel %vm226, %v177, 0
  %v231 = vsel %vm226, %v178, 0
  %v234 = vsel %vm226, %v179, 0
  %v237 = vsel %vm226, %v180, 0
  %v240 = vsel %vm226, %v181, 0
  %v243 = vsel %vm226, %v182, 0
  %v246 = vsel %vm226, %v183, 0
  %v249 = vsel %vm226, %v184, 0
  %v252 = vsel %vm226, %v185, 0
  %v255 = vsel %vm226, %v186, 0
  %v258 = vsel %vm226, %v187, 0
  %v261 = vsel %vm226, %v188, 0
  %v264 = vsel %vm226, %v189, 0
  %v267 = vsel %vm226, %v190, 0
  %v270 = vsel %vm226, %v191, 0
  %v273 = vsel %vm226, %v192, 0
  %v276 = vsel %vm226, %v193, 0
  %v279 = vsel %vm226, %v194, 0
  %v282 = vsel %vm226, %v195, 0
  %v285 = vsel %vm226, %v196, 0
  %v288 = vsel %vm226, %v197, 0
  %v291 = vsel %vm226, %v198, 0
  %v294 = vsel %vm226, %v199, 0
  %v297 = vsel %vm226, %v200, 0
  %v300 = vsel %vm226, %v201, 0
  %302 = vmatprep.subr.bf16.mxu0 0
  %303 = vmatpush1.bf16.msra.mxu0 0
  %304 = vmatprep.subr.bf16.mxu0 0
  %305 = vmatpush1.bf16.msra.mxu0 0
  %306 = vmatprep.subr.bf16.mxu0 0
  %307 = vmatpush1.bf16.msra.mxu0 0
  %308 = vmatprep.subr.bf16.mxu0 0
  %309 = vmatpush1.bf16.msra.mxu0 0
  %310 = vmatprep.subr.bf16.mxu0 0
  %311 = vmatpush1.bf16.msra.mxu0 %v221
  %312 = vmatprep.subr.bf16.mxu0 0
  %313 = vmatpush1.bf16.msra.mxu0 %v220
  %314 = vmatprep.subr.bf16.mxu0 0
  %315 = vmatpush1.bf16.msra.mxu0 %v219
  %316 = vmatprep.subr.bf16.mxu0 0
  %317 = vmatpush1.bf16.msra.mxu0 %v218
  %318 = vmatprep.subr.bf16.mxu0 0
  %319 = vmatpush2.bf16.msra.mxu0 0
  %320 = vmatprep.subr.bf16.mxu0 0
  %321 = vmatpush2.bf16.msra.mxu0 0
  %322 = vmatprep.subr.bf16.mxu0 0
  %323 = vmatpush2.bf16.msra.mxu0 0
  %324 = vmatprep.subr.bf16.mxu0 0
  %325 = vmatpush2.bf16.msra.mxu0 0
  %326 = vmatprep.subr.bf16.mxu0 0
  %327 = vmatpush2.bf16.msra.mxu0 0
  %328 = vmatprep.subr.bf16.mxu0 0
  %329 = vmatpush2.bf16.msra.mxu0 0
  %330 = vmatprep.subr.bf16.mxu0 0
  %331 = vmatpush2.bf16.msra.mxu0 0
  %332 = vmatprep.subr.bf16.mxu0 0
  %333 = vmatpush2.bf16.msra.mxu0 0
  %334 = vmatprep.mubr.bf16.mxu0 0
  %335 = vmatmul.mubr.bf16.gmra.mxu0 %v228
  %v336 = vpop.f32.mrf.mxu0
  %v337 = vadd.f32 %v77, %v336
  %v338 = vpop.f32.mrf.mxu0
  %v339 = vpop.f32.mrf.mxu0
  %v340 = vadd.f32 %v77, %v339
  %v341 = vpop.f32.mrf.mxu0
  %342 = vmatprep.mubr.bf16.mxu0 0
  %343 = vmatmul.mubr.bf16.gmra.mxu0 %v231
  %v344 = vpop.f32.mrf.mxu0
  %v345 = vadd.f32 %v77, %v344
  %v346 = vpop.f32.mrf.mxu0
  %v347 = vpop.f32.mrf.mxu0
  %v348 = vadd.f32 %v77, %v347
  %v349 = vpop.f32.mrf.mxu0
  %350 = vmatprep.mubr.bf16.mxu0 0
  %351 = vmatmul.mubr.bf16.gmra.mxu0 %v234
  %v352 = vpop.f32.mrf.mxu0
  %v353 = vadd.f32 %v77, %v352
  %v354 = vpop.f32.mrf.mxu0
  %v355 = vpop.f32.mrf.mxu0
  %v356 = vadd.f32 %v77, %v355
  %v357 = vpop.f32.mrf.mxu0
  %358 = vmatprep.mubr.bf16.mxu0 0
  %359 = vmatmul.mubr.bf16.gmra.mxu0 %v237
  %v360 = vpop.f32.mrf.mxu0
  %v361 = vadd.f32 %v77, %v360
  %v362 = vpop.f32.mrf.mxu0
  %v363 = vpop.f32.mrf.mxu0
  %v364 = vadd.f32 %v77, %v363
  %v365 = vpop.f32.mrf.mxu0
  %366 = vmatprep.mubr.bf16.mxu0 0
  %367 = vmatmul.mubr.bf16.gmra.mxu0 %v240
  %v368 = vpop.f32.mrf.mxu0
  %v369 = vadd.f32 %v77, %v368
  %v370 = vpop.f32.mrf.mxu0
  %v371 = vpop.f32.mrf.mxu0
  %v372 = vadd.f32 %v77, %v371
  %v373 = vpop.f32.mrf.mxu0
  %374 = vmatprep.mubr.bf16.mxu0 0
  %375 = vmatmul.mubr.bf16.gmra.mxu0 %v243
  %v376 = vpop.f32.mrf.mxu0
  %v377 = vadd.f32 %v77, %v376
  %v378 = vpop.f32.mrf.mxu0
  %v379 = vpop.f32.mrf.mxu0
  %v380 = vadd.f32 %v77, %v379
  %v381 = vpop.f32.mrf.mxu0
  %382 = vmatprep.mubr.bf16.mxu0 0
  %383 = vmatmul.mubr.bf16.gmra.mxu0 %v246
  %v384 = vpop.f32.mrf.mxu0
  %v385 = vadd.f32 %v77, %v384
  %v386 = vpop.f32.mrf.mxu0
  %v387 = vpop.f32.mrf.mxu0
  %v388 = vadd.f32 %v77, %v387
  %v389 = vpop.f32.mrf.mxu0
  %390 = vmatprep.mubr.bf16.mxu0 0
  %391 = vmatmul.mubr.bf16.gmra.mxu0 %v249
  %v392 = vpop.f32.mrf.mxu0
  %v393 = vadd.f32 %v77, %v392
  %v394 = vpop.f32.mrf.mxu0
  %v395 = vpop.f32.mrf.mxu0
  %v396 = vadd.f32 %v77, %v395
  %v397 = vpop.f32.mrf.mxu0
  %398 = vmatprep.mubr.bf16.mxu0 0
  %399 = vmatmul.mubr.bf16.gmra.mxu0 %v252
  %v400 = vpop.f32.mrf.mxu0
  %v401 = vadd.f32 %v77, %v400
  %v402 = vpop.f32.mrf.mxu0
  %v403 = vpop.f32.mrf.mxu0
  %v404 = vadd.f32 %v77, %v403
  %v405 = vpop.f32.mrf.mxu0
  %406 = vmatprep.mubr.bf16.mxu0 0
  %407 = vmatmul.mubr.bf16.gmra.mxu0 %v255
  %v408 = vpop.f32.mrf.mxu0
  %v409 = vadd.f32 %v77, %v408
  %v410 = vpop.f32.mrf.mxu0
  %v411 = vpop.f32.mrf.mxu0
  %v412 = vadd.f32 %v77, %v411
  %v413 = vpop.f32.mrf.mxu0
  %414 = vmatprep.mubr.bf16.mxu0 0
  %415 = vmatmul.mubr.bf16.gmra.mxu0 %v258
  %v416 = vpop.f32.mrf.mxu0
  %v417 = vadd.f32 %v77, %v416
  %v418 = vpop.f32.mrf.mxu0
  %v419 = vpop.f32.mrf.mxu0
  %v420 = vadd.f32 %v77, %v419
  %v421 = vpop.f32.mrf.mxu0
  %422 = vmatprep.mubr.bf16.mxu0 0
  %423 = vmatmul.mubr.bf16.gmra.mxu0 %v261
  %v424 = vpop.f32.mrf.mxu0
  %v425 = vadd.f32 %v77, %v424
  %v426 = vpop.f32.mrf.mxu0
  %v427 = vpop.f32.mrf.mxu0
  %v428 = vadd.f32 %v77, %v427
  %v429 = vpop.f32.mrf.mxu0
  %430 = vmatprep.mubr.bf16.mxu0 0
  %431 = vmatmul.mubr.bf16.gmra.mxu0 %v264
  %v432 = vpop.f32.mrf.mxu0
  %v433 = vadd.f32 %v77, %v432
  %v434 = vpop.f32.mrf.mxu0
  %v435 = vpop.f32.mrf.mxu0
  %v436 = vadd.f32 %v77, %v435
  %v437 = vpop.f32.mrf.mxu0
  %438 = vmatprep.mubr.bf16.mxu0 0
  %439 = vmatmul.mubr.bf16.gmra.mxu0 %v267
  %v440 = vpop.f32.mrf.mxu0
  %v441 = vadd.f32 %v77, %v440
  %v442 = vpop.f32.mrf.mxu0
  %v443 = vpop.f32.mrf.mxu0
  %v444 = vadd.f32 %v77, %v443
  %v445 = vpop.f32.mrf.mxu0
  %446 = vmatprep.mubr.bf16.mxu0 0
  %447 = vmatmul.mubr.bf16.gmra.mxu0 %v270
  %v448 = vpop.f32.mrf.mxu0
  %v449 = vadd.f32 %v77, %v448
  %v450 = vpop.f32.mrf.mxu0
  %v451 = vpop.f32.mrf.mxu0
  %v452 = vadd.f32 %v77, %v451
  %v453 = vpop.f32.mrf.mxu0
  %454 = vmatprep.mubr.bf16.mxu0 0
  %455 = vmatmul.mubr.bf16.gmra.mxu0 %v273
  %v456 = vpop.f32.mrf.mxu0
  %v457 = vadd.f32 %v77, %v456
  %v458 = vpop.f32.mrf.mxu0
  %v459 = vpop.f32.mrf.mxu0
  %v460 = vadd.f32 %v77, %v459
  %v461 = vpop.f32.mrf.mxu0
  %462 = vmatprep.mubr.bf16.mxu0 0
  %463 = vmatmul.mubr.bf16.gmra.mxu0 %v276
  %v464 = vpop.f32.mrf.mxu0
  %v465 = vadd.f32 %v77, %v464
  %v466 = vpop.f32.mrf.mxu0
  %v467 = vpop.f32.mrf.mxu0
  %v468 = vadd.f32 %v77, %v467
  %v469 = vpop.f32.mrf.mxu0
  %470 = vmatprep.mubr.bf16.mxu0 0
  %471 = vmatmul.mubr.bf16.gmra.mxu0 %v279
  %v472 = vpop.f32.mrf.mxu0
  %v473 = vadd.f32 %v77, %v472
  %v474 = vpop.f32.mrf.mxu0
  %v475 = vpop.f32.mrf.mxu0
  %v476 = vadd.f32 %v77, %v475
  %v477 = vpop.f32.mrf.mxu0
  %478 = vmatprep.mubr.bf16.mxu0 0
  %479 = vmatmul.mubr.bf16.gmra.mxu0 %v282
  %v480 = vpop.f32.mrf.mxu0
  %v481 = vadd.f32 %v77, %v480
  %v482 = vpop.f32.mrf.mxu0
  %v483 = vpop.f32.mrf.mxu0
  %v484 = vadd.f32 %v77, %v483
  %v485 = vpop.f32.mrf.mxu0
  %486 = vmatprep.mubr.bf16.mxu0 0
  %487 = vmatmul.mubr.bf16.gmra.mxu0 %v285
  %v488 = vpop.f32.mrf.mxu0
  %v489 = vadd.f32 %v77, %v488
  %v490 = vpop.f32.mrf.mxu0
  %v491 = vpop.f32.mrf.mxu0
  %v492 = vadd.f32 %v77, %v491
  %v493 = vpop.f32.mrf.mxu0
  %494 = vmatprep.mubr.bf16.mxu0 0
  %495 = vmatmul.mubr.bf16.gmra.mxu0 %v288
  %v496 = vpop.f32.mrf.mxu0
  %v497 = vadd.f32 %v77, %v496
  %v498 = vpop.f32.mrf.mxu0
  %v499 = vpop.f32.mrf.mxu0
  %v500 = vadd.f32 %v77, %v499
  %v501 = vpop.f32.mrf.mxu0
  %502 = vmatprep.mubr.bf16.mxu0 0
  %503 = vmatmul.mubr.bf16.gmra.mxu0 %v291
  %v504 = vpop.f32.mrf.mxu0
  %v505 = vadd.f32 %v77, %v504
  %v506 = vpop.f32.mrf.mxu0
  %v507 = vpop.f32.mrf.mxu0
  %v508 = vadd.f32 %v77, %v507
  %v509 = vpop.f32.mrf.mxu0
  %510 = vmatprep.mubr.bf16.mxu0 0
  %511 = vmatmul.mubr.bf16.gmra.mxu0 %v294
  %v512 = vpop.f32.mrf.mxu0
  %v513 = vadd.f32 %v77, %v512
  %v514 = vpop.f32.mrf.mxu0
  %v515 = vpop.f32.mrf.mxu0
  %v516 = vadd.f32 %v77, %v515
  %v517 = vpop.f32.mrf.mxu0
  %518 = vmatprep.mubr.bf16.mxu0 0
  %519 = vmatmul.mubr.bf16.gmra.mxu0 %v297
  %v520 = vpop.f32.mrf.mxu0
  %v521 = vadd.f32 %v77, %v520
  %v522 = vpop.f32.mrf.mxu0
  %v523 = vpop.f32.mrf.mxu0
  %v524 = vadd.f32 %v77, %v523
  %v525 = vpop.f32.mrf.mxu0
  %526 = vmatprep.mubr.bf16.mxu0 0
  %527 = vmatmul.mubr.bf16.gmra.mxu0 %v300
  %v528 = vpop.f32.mrf.mxu0
  %v529 = vadd.f32 %v77, %v528
  %v530 = vpop.f32.mrf.mxu0
  %v531 = vpop.f32.mrf.mxu0
  %v532 = vpop.f32.mrf.mxu0
  %533 = vdwg.mxu0
  %v534 = vtanh.pop %v337
  %v535 = vtanh.pop %v340
  %v536 = vtanh.pop %v345
  %v537 = vtanh.pop %v348
  %v538 = vtanh.pop %v353
  %v539 = vtanh.pop %v356
  %v540 = vtanh.pop %v361
  %v541 = vtanh.pop %v364
  %v542 = vtanh.pop %v369
  %v543 = vtanh.pop %v372
  %v544 = vtanh.pop %v377
  %v545 = vtanh.pop %v380
  %v546 = vtanh.pop %v385
  %v547 = vtanh.pop %v388
  %v548 = vtanh.pop %v393
  %v549 = vtanh.pop %v396
  %v550 = vtanh.pop %v401
  %v551 = vtanh.pop %v404
  %v552 = vtanh.pop %v409
  %v553 = vtanh.pop %v412
  %v554 = vtanh.pop %v417
  %v555 = vtanh.pop %v420
  %v556 = vtanh.pop %v425
  %v557 = vtanh.pop %v428
  %v558 = vtanh.pop %v433
  %v559 = vtanh.pop %v436
  %v560 = vtanh.pop %v441
  %v561 = vtanh.pop %v444
  %v562 = vtanh.pop %v449
  %v563 = vtanh.pop %v452
  %v564 = vtanh.pop %v457
  %v565 = vtanh.pop %v460
  %v566 = vtanh.pop %v465
  %v567 = vtanh.pop %v468
  %v568 = vtanh.pop %v473
  %v569 = vtanh.pop %v476
  %v570 = vtanh.pop %v481
  %v571 = vtanh.pop %v484
  %v572 = vtanh.pop %v489
  %v573 = vtanh.pop %v492
  %v574 = vtanh.pop %v497
  %v575 = vtanh.pop %v500
  %v576 = vtanh.pop %v505
  %v577 = vtanh.pop %v508
  %v578 = vtanh.pop %v513
  %v579 = vtanh.pop %v516
  %v580 = vtanh.pop %v521
  %v581 = vtanh.pop %v524
  %v582 = vtanh.pop %v529
  %vm583 = vcmask 23552
  %584 = vst.msk [vmem:[%s3] sm:$0xff] %vm583, %v534
  %585 = vst.msk [vmem:[%s3 + $0x8] sm:$0xff] %vm583, %v535
  %586 = vst.msk [vmem:[%s3 + $0x10] sm:$0xff] %vm583, %v536
  %587 = vst.msk [vmem:[%s3 + $0x18] sm:$0xff] %vm583, %v537
  %588 = vst.msk [vmem:[%s3 + $0x20] sm:$0xff] %vm583, %v538
  %589 = vst.msk [vmem:[%s3 + $0x28] sm:$0xff] %vm583, %v539
  %590 = vst.msk [vmem:[%s3 + $0x30] sm:$0xff] %vm583, %v540
  %591 = vst.msk [vmem:[%s3 + $0x38] sm:$0xff] %vm583, %v541
  %592 = vst.msk [vmem:[%s3 + $0x40] sm:$0xff] %vm583, %v542
  %593 = vst.msk [vmem:[%s3 + $0x48] sm:$0xff] %vm583, %v543
  %594 = vst.msk [vmem:[%s3 + $0x50] sm:$0xff] %vm583, %v544
  %595 = vst.msk [vmem:[%s3 + $0x58] sm:$0xff] %vm583, %v545
  %596 = vst.msk [vmem:[%s3 + $0x60] sm:$0xff] %vm583, %v546
  %597 = vst.msk [vmem:[%s3 + $0x68] sm:$0xff] %vm583, %v547
  %598 = vst.msk [vmem:[%s3 + $0x70] sm:$0xff] %vm583, %v548
  %599 = vst.msk [vmem:[%s3 + $0x78] sm:$0xff] %vm583, %v549
  %600 = vst.msk [vmem:[%s3 + $0x80] sm:$0xff] %vm583, %v550
  %601 = vst.msk [vmem:[%s3 + $0x88] sm:$0xff] %vm583, %v551
  %602 = vst.msk [vmem:[%s3 + $0x90] sm:$0xff] %vm583, %v552
  %603 = vst.msk [vmem:[%s3 + $0x98] sm:$0xff] %vm583, %v553
  %604 = vst.msk [vmem:[%s3 + $0xa0] sm:$0xff] %vm583, %v554
  %605 = vst.msk [vmem:[%s3 + $0xa8] sm:$0xff] %vm583, %v555
  %606 = vst.msk [vmem:[%s3 + $0xb0] sm:$0xff] %vm583, %v556
  %607 = vst.msk [vmem:[%s3 + $0xb8] sm:$0xff] %vm583, %v557
  %608 = vst.msk [vmem:[%s3 + $0xc0] sm:$0xff] %vm583, %v558
  %609 = vst.msk [vmem:[%s3 + $0xc8] sm:$0xff] %vm583, %v559
  %610 = vst.msk [vmem:[%s3 + $0xd0] sm:$0xff] %vm583, %v560
  %611 = vst.msk [vmem:[%s3 + $0xd8] sm:$0xff] %vm583, %v561
  %612 = vst.msk [vmem:[%s3 + $0xe0] sm:$0xff] %vm583, %v562
  %613 = vst.msk [vmem:[%s3 + $0xe8] sm:$0xff] %vm583, %v563
  %614 = vst.msk [vmem:[%s3 + $0xf0] sm:$0xff] %vm583, %v564
  %615 = vst.msk [vmem:[%s3 + $0xf8] sm:$0xff] %vm583, %v565
  %616 = vst.msk [vmem:[%s3 + $0x100] sm:$0xff] %vm583, %v566
  %617 = vst.msk [vmem:[%s3 + $0x108] sm:$0xff] %vm583, %v567
  %618 = vst.msk [vmem:[%s3 + $0x110] sm:$0xff] %vm583, %v568
  %619 = vst.msk [vmem:[%s3 + $0x118] sm:$0xff] %vm583, %v569
  %620 = vst.msk [vmem:[%s3 + $0x120] sm:$0xff] %vm583, %v570
  %621 = vst.msk [vmem:[%s3 + $0x128] sm:$0xff] %vm583, %v571
  %622 = vst.msk [vmem:[%s3 + $0x130] sm:$0xff] %vm583, %v572
  %623 = vst.msk [vmem:[%s3 + $0x138] sm:$0xff] %vm583, %v573
  %624 = vst.msk [vmem:[%s3 + $0x140] sm:$0xff] %vm583, %v574
  %625 = vst.msk [vmem:[%s3 + $0x148] sm:$0xff] %vm583, %v575
  %626 = vst.msk [vmem:[%s3 + $0x150] sm:$0xff] %vm583, %v576
  %627 = vst.msk [vmem:[%s3 + $0x158] sm:$0xff] %vm583, %v577
  %628 = vst.msk [vmem:[%s3 + $0x160] sm:$0xff] %vm583, %v578
  %629 = vst.msk [vmem:[%s3 + $0x168] sm:$0xff] %vm583, %v579
  %630 = vst.msk [vmem:[%s3 + $0x170] sm:$0xff] %vm583, %v580
  %631 = vst.msk [vmem:[%s3 + $0x178] sm:$0xff] %vm583, %v581
  %632 = vst.msk [vmem:[%s3 + $0x180] sm:$0xff] %vm583, %v582
  %s633 = scalar_lea.vmem %s0, 196
  %v634 = vld [vmem:[%s633] sm:$0xf]
  %v635 = vld [vmem:[%s633 + $0x4] sm:$0xf]
  %v636 = vld [vmem:[%s633 + $0x8] sm:$0xf]
  %v637 = vld [vmem:[%s633 + $0xc] sm:$0xf]
  %v638 = vld [vmem:[%s633 + $0x10] sm:$0xf]
  %v639 = vld [vmem:[%s633 + $0x14] sm:$0xf]
  %v640 = vld [vmem:[%s633 + $0x18] sm:$0xf]
  %v641 = vld [vmem:[%s633 + $0x1c] sm:$0xf]
  %v642 = vld [vmem:[%s633 + $0x20] sm:$0xf]
  %v643 = vld [vmem:[%s633 + $0x24] sm:$0xf]
  %v644 = vld [vmem:[%s633 + $0x28] sm:$0xf]
  %v645 = vld [vmem:[%s633 + $0x2c] sm:$0xf]
  %v646 = vld [vmem:[%s633 + $0x30] sm:$0xf]
  %v647 = vld [vmem:[%s633 + $0x34] sm:$0xf]
  %v648 = vld [vmem:[%s633 + $0x38] sm:$0xf]
  %v649 = vld [vmem:[%s633 + $0x3c] sm:$0xf]
  %v650 = vld [vmem:[%s633 + $0x40] sm:$0xf]
  %v651 = vld [vmem:[%s633 + $0x44] sm:$0xf]
  %v652 = vld [vmem:[%s633 + $0x48] sm:$0xf]
  %v653 = vld [vmem:[%s633 + $0x4c] sm:$0xf]
  %v654 = vld [vmem:[%s633 + $0x50] sm:$0xf]
  %v655 = vld [vmem:[%s633 + $0x54] sm:$0xf]
  %v656 = vld [vmem:[%s633 + $0x58] sm:$0xf]
  %v657 = vld [vmem:[%s633 + $0x5c] sm:$0xf]
  %v658 = vld [vmem:[%s633 + $0x60] sm:$0xf]
  %v659 = vld [vmem:[%s633 + $0x64] sm:$0xf]
  %v660 = vld [vmem:[%s633 + $0x68] sm:$0xf]
  %v661 = vld [vmem:[%s633 + $0x6c] sm:$0xf]
  %v662 = vld [vmem:[%s633 + $0x70] sm:$0xf]
  %v663 = vld [vmem:[%s633 + $0x74] sm:$0xf]
  %v664 = vld [vmem:[%s633 + $0x78] sm:$0xf]
  %v665 = vld [vmem:[%s633 + $0x7c] sm:$0xf]
  %v666 = vld [vmem:[%s633 + $0x80] sm:$0xf]
  %v667 = vld [vmem:[%s633 + $0x84] sm:$0xf]
  %v668 = vld [vmem:[%s633 + $0x88] sm:$0xf]
  %v669 = vld [vmem:[%s633 + $0x8c] sm:$0xf]
  %v670 = vld [vmem:[%s633 + $0x90] sm:$0xf]
  %v671 = vld [vmem:[%s633 + $0x94] sm:$0xf]
  %v672 = vld [vmem:[%s633 + $0x98] sm:$0xf]
  %v673 = vld [vmem:[%s633 + $0x9c] sm:$0xf]
  %v674 = vld [vmem:[%s633 + $0xa0] sm:$0xf]
  %v675 = vld [vmem:[%s633 + $0xa4] sm:$0xf]
  %v676 = vld [vmem:[%s633 + $0xa8] sm:$0xf]
  %v677 = vld [vmem:[%s633 + $0xac] sm:$0xf]
  %v678 = vld [vmem:[%s633 + $0xb0] sm:$0xf]
  %v679 = vld [vmem:[%s633 + $0xb4] sm:$0xf]
  %v680 = vld [vmem:[%s633 + $0xb8] sm:$0xf]
  %v681 = vld [vmem:[%s633 + $0xbc] sm:$0xf]
  %v682 = vld [vmem:[%s633 + $0xc0] sm:$0xf]
  %s683 = scalar_lea.vmem %s1, 32
  %v684 = vld [vmem:[%s683] sm:$0xf]
  %v685 = vld [vmem:[%s683 + $0x4] sm:$0xf]
  %v686 = vld [vmem:[%s683 + $0x8] sm:$0xf]
  %v687 = vld [vmem:[%s683 + $0xc] sm:$0xf]
  %v688 = vld [vmem:[%s683 + $0x10] sm:$0xf]
  %v689 = vld [vmem:[%s683 + $0x14] sm:$0xf]
  %v690 = vld [vmem:[%s683 + $0x18] sm:$0xf]
  %v691 = vld [vmem:[%s683 + $0x1c] sm:$0xf]
  %v692 = vld [vmem:[%s2] sm:$0x1]
  %v694 = vlaneseq
  %v695 = vshrl.u32 %v694, 7
  %v696 = vsub.s32 0, %v695
  %v697 = vrot.slane %v692, %v696
  %v748 = vunpack.c.l.b16 %v634
  %v749 = vunpack.c.l.b16 %v635
  %v750 = vunpack.c.l.b16 %v636
  %v751 = vunpack.c.l.b16 %v637
  %v752 = vunpack.c.l.b16 %v638
  %v753 = vunpack.c.l.b16 %v639
  %v754 = vunpack.c.l.b16 %v640
  %v755 = vunpack.c.l.b16 %v641
  %v756 = vunpack.c.l.b16 %v642
  %v757 = vunpack.c.l.b16 %v643
  %v758 = vunpack.c.l.b16 %v644
  %v759 = vunpack.c.l.b16 %v645
  %v760 = vunpack.c.l.b16 %v646
  %v761 = vunpack.c.l.b16 %v647
  %v762 = vunpack.c.l.b16 %v648
  %v763 = vunpack.c.l.b16 %v649
  %v764 = vunpack.c.l.b16 %v650
  %v765 = vunpack.c.l.b16 %v651
  %v766 = vunpack.c.l.b16 %v652
  %v767 = vunpack.c.l.b16 %v653
  %v768 = vunpack.c.l.b16 %v654
  %v769 = vunpack.c.l.b16 %v655
  %v770 = vunpack.c.l.b16 %v656
  %v771 = vunpack.c.l.b16 %v657
  %v772 = vunpack.c.l.b16 %v658
  %v773 = vunpack.c.l.b16 %v659
  %v774 = vunpack.c.l.b16 %v660
  %v775 = vunpack.c.l.b16 %v661
  %v776 = vunpack.c.l.b16 %v662
  %v777 = vunpack.c.l.b16 %v663
  %v778 = vunpack.c.l.b16 %v664
  %v779 = vunpack.c.l.b16 %v665
  %v780 = vunpack.c.l.b16 %v666
  %v781 = vunpack.c.l.b16 %v667
  %v782 = vunpack.c.l.b16 %v668
  %v783 = vunpack.c.l.b16 %v669
  %v784 = vunpack.c.l.b16 %v670
  %v785 = vunpack.c.l.b16 %v671
  %v786 = vunpack.c.l.b16 %v672
  %v787 = vunpack.c.l.b16 %v673
  %v788 = vunpack.c.l.b16 %v674
  %v789 = vunpack.c.l.b16 %v675
  %v790 = vunpack.c.l.b16 %v676
  %v791 = vunpack.c.l.b16 %v677
  %v792 = vunpack.c.l.b16 %v678
  %v793 = vunpack.c.l.b16 %v679
  %v794 = vunpack.c.l.b16 %v680
  %v795 = vunpack.c.l.b16 %v681
  %v796 = vunpack.c.l.b16 %v682
  %v797 = vpack.c.b16 %v749, %v748
  %v798 = vpack.c.b16 %v751, %v750
  %v799 = vpack.c.b16 %v753, %v752
  %v800 = vpack.c.b16 %v755, %v754
  %v801 = vpack.c.b16 %v757, %v756
  %v802 = vpack.c.b16 %v759, %v758
  %v803 = vpack.c.b16 %v761, %v760
  %v804 = vpack.c.b16 %v763, %v762
  %v805 = vpack.c.b16 %v765, %v764
  %v806 = vpack.c.b16 %v767, %v766
  %v807 = vpack.c.b16 %v769, %v768
  %v808 = vpack.c.b16 %v771, %v770
  %v809 = vpack.c.b16 %v773, %v772
  %v810 = vpack.c.b16 %v775, %v774
  %v811 = vpack.c.b16 %v777, %v776
  %v812 = vpack.c.b16 %v779, %v778
  %v813 = vpack.c.b16 %v781, %v780
  %v814 = vpack.c.b16 %v783, %v782
  %v815 = vpack.c.b16 %v785, %v784
  %v816 = vpack.c.b16 %v787, %v786
  %v817 = vpack.c.b16 %v789, %v788
  %v818 = vpack.c.b16 %v791, %v790
  %v819 = vpack.c.b16 %v793, %v792
  %v820 = vpack.c.b16 %v795, %v794
  %v821 = vpack.c.b16 %v796, %v796
  %v830 = vunpack.c.l.b16 %v684
  %v831 = vunpack.c.l.b16 %v685
  %v832 = vunpack.c.l.b16 %v686
  %v833 = vunpack.c.l.b16 %v687
  %v834 = vunpack.c.l.b16 %v688
  %v835 = vunpack.c.l.b16 %v689
  %v836 = vunpack.c.l.b16 %v690
  %v837 = vunpack.c.l.b16 %v691
  %v838 = vpack.c.b16 %v831, %v830
  %v839 = vpack.c.b16 %v833, %v832
  %v840 = vpack.c.b16 %v835, %v834
  %v841 = vpack.c.b16 %v837, %v836
  %v847 = vsel %vm226, %v797, 0
  %v850 = vsel %vm226, %v798, 0
  %v853 = vsel %vm226, %v799, 0
  %v856 = vsel %vm226, %v800, 0
  %v859 = vsel %vm226, %v801, 0
  %v862 = vsel %vm226, %v802, 0
  %v865 = vsel %vm226, %v803, 0
  %v868 = vsel %vm226, %v804, 0
  %v871 = vsel %vm226, %v805, 0
  %v874 = vsel %vm226, %v806, 0
  %v877 = vsel %vm226, %v807, 0
  %v880 = vsel %vm226, %v808, 0
  %v883 = vsel %vm226, %v809, 0
  %v886 = vsel %vm226, %v810, 0
  %v889 = vsel %vm226, %v811, 0
  %v892 = vsel %vm226, %v812, 0
  %v895 = vsel %vm226, %v813, 0
  %v898 = vsel %vm226, %v814, 0
  %v901 = vsel %vm226, %v815, 0
  %v904 = vsel %vm226, %v816, 0
  %v907 = vsel %vm226, %v817, 0
  %v910 = vsel %vm226, %v818, 0
  %v913 = vsel %vm226, %v819, 0
  %v916 = vsel %vm226, %v820, 0
  %v919 = vsel %vm226, %v821, 0
  %921 = vmatprep.subr.bf16.mxu0 0
  %922 = vmatpush1.bf16.msra.mxu0 0
  %923 = vmatprep.subr.bf16.mxu0 0
  %924 = vmatpush1.bf16.msra.mxu0 0
  %925 = vmatprep.subr.bf16.mxu0 0
  %926 = vmatpush1.bf16.msra.mxu0 0
  %927 = vmatprep.subr.bf16.mxu0 0
  %928 = vmatpush1.bf16.msra.mxu0 0
  %929 = vmatprep.subr.bf16.mxu0 0
  %930 = vmatpush1.bf16.msra.mxu0 %v841
  %931 = vmatprep.subr.bf16.mxu0 0
  %932 = vmatpush1.bf16.msra.mxu0 %v840
  %933 = vmatprep.subr.bf16.mxu0 0
  %934 = vmatpush1.bf16.msra.mxu0 %v839
  %935 = vmatprep.subr.bf16.mxu0 0
  %936 = vmatpush1.bf16.msra.mxu0 %v838
  %937 = vmatprep.subr.bf16.mxu0 0
  %938 = vmatpush2.bf16.msra.mxu0 0
  %939 = vmatprep.subr.bf16.mxu0 0
  %940 = vmatpush2.bf16.msra.mxu0 0
  %941 = vmatprep.subr.bf16.mxu0 0
  %942 = vmatpush2.bf16.msra.mxu0 0
  %943 = vmatprep.subr.bf16.mxu0 0
  %944 = vmatpush2.bf16.msra.mxu0 0
  %945 = vmatprep.subr.bf16.mxu0 0
  %946 = vmatpush2.bf16.msra.mxu0 0
  %947 = vmatprep.subr.bf16.mxu0 0
  %948 = vmatpush2.bf16.msra.mxu0 0
  %949 = vmatprep.subr.bf16.mxu0 0
  %950 = vmatpush2.bf16.msra.mxu0 0
  %951 = vmatprep.subr.bf16.mxu0 0
  %952 = vmatpush2.bf16.msra.mxu0 0
  %953 = vmatprep.mubr.bf16.mxu0 0
  %954 = vmatmul.mubr.bf16.gmra.mxu0 %v847
  %v955 = vpop.f32.mrf.mxu0
  %v956 = vadd.f32 %v697, %v955
  %v957 = vpop.f32.mrf.mxu0
  %v958 = vpop.f32.mrf.mxu0
  %v959 = vadd.f32 %v697, %v958
  %v960 = vpop.f32.mrf.mxu0
  %961 = vmatprep.mubr.bf16.mxu0 0
  %962 = vmatmul.mubr.bf16.gmra.mxu0 %v850
  %v963 = vpop.f32.mrf.mxu0
  %v964 = vadd.f32 %v697, %v963
  %v965 = vpop.f32.mrf.mxu0
  %v966 = vpop.f32.mrf.mxu0
  %v967 = vadd.f32 %v697, %v966
  %v968 = vpop.f32.mrf.mxu0
  %969 = vmatprep.mubr.bf16.mxu0 0
  %970 = vmatmul.mubr.bf16.gmra.mxu0 %v853
  %v971 = vpop.f32.mrf.mxu0
  %v972 = vadd.f32 %v697, %v971
  %v973 = vpop.f32.mrf.mxu0
  %v974 = vpop.f32.mrf.mxu0
  %v975 = vadd.f32 %v697, %v974
  %v976 = vpop.f32.mrf.mxu0
  %977 = vmatprep.mubr.bf16.mxu0 0
  %978 = vmatmul.mubr.bf16.gmra.mxu0 %v856
  %v979 = vpop.f32.mrf.mxu0
  %v980 = vadd.f32 %v697, %v979
  %v981 = vpop.f32.mrf.mxu0
  %v982 = vpop.f32.mrf.mxu0
  %v983 = vadd.f32 %v697, %v982
  %v984 = vpop.f32.mrf.mxu0
  %985 = vmatprep.mubr.bf16.mxu0 0
  %986 = vmatmul.mubr.bf16.gmra.mxu0 %v859
  %v987 = vpop.f32.mrf.mxu0
  %v988 = vadd.f32 %v697, %v987
  %v989 = vpop.f32.mrf.mxu0
  %v990 = vpop.f32.mrf.mxu0
  %v991 = vadd.f32 %v697, %v990
  %v992 = vpop.f32.mrf.mxu0
  %993 = vmatprep.mubr.bf16.mxu0 0
  %994 = vmatmul.mubr.bf16.gmra.mxu0 %v862
  %v995 = vpop.f32.mrf.mxu0
  %v996 = vadd.f32 %v697, %v995
  %v997 = vpop.f32.mrf.mxu0
  %v998 = vpop.f32.mrf.mxu0
  %v999 = vadd.f32 %v697, %v998
  %v1000 = vpop.f32.mrf.mxu0
  %1001 = vmatprep.mubr.bf16.mxu0 0
  %1002 = vmatmul.mubr.bf16.gmra.mxu0 %v865
  %v1003 = vpop.f32.mrf.mxu0
  %v1004 = vadd.f32 %v697, %v1003
  %v1005 = vpop.f32.mrf.mxu0
  %v1006 = vpop.f32.mrf.mxu0
  %v1007 = vadd.f32 %v697, %v1006
  %v1008 = vpop.f32.mrf.mxu0
  %1009 = vmatprep.mubr.bf16.mxu0 0
  %1010 = vmatmul.mubr.bf16.gmra.mxu0 %v868
  %v1011 = vpop.f32.mrf.mxu0
  %v1012 = vadd.f32 %v697, %v1011
  %v1013 = vpop.f32.mrf.mxu0
  %v1014 = vpop.f32.mrf.mxu0
  %v1015 = vadd.f32 %v697, %v1014
  %v1016 = vpop.f32.mrf.mxu0
  %1017 = vmatprep.mubr.bf16.mxu0 0
  %1018 = vmatmul.mubr.bf16.gmra.mxu0 %v871
  %v1019 = vpop.f32.mrf.mxu0
  %v1020 = vadd.f32 %v697, %v1019
  %v1021 = vpop.f32.mrf.mxu0
  %v1022 = vpop.f32.mrf.mxu0
  %v1023 = vadd.f32 %v697, %v1022
  %v1024 = vpop.f32.mrf.mxu0
  %1025 = vmatprep.mubr.bf16.mxu0 0
  %1026 = vmatmul.mubr.bf16.gmra.mxu0 %v874
  %v1027 = vpop.f32.mrf.mxu0
  %v1028 = vadd.f32 %v697, %v1027
  %v1029 = vpop.f32.mrf.mxu0
  %v1030 = vpop.f32.mrf.mxu0
  %v1031 = vadd.f32 %v697, %v1030
  %v1032 = vpop.f32.mrf.mxu0
  %1033 = vmatprep.mubr.bf16.mxu0 0
  %1034 = vmatmul.mubr.bf16.gmra.mxu0 %v877
  %v1035 = vpop.f32.mrf.mxu0
  %v1036 = vadd.f32 %v697, %v1035
  %v1037 = vpop.f32.mrf.mxu0
  %v1038 = vpop.f32.mrf.mxu0
  %v1039 = vadd.f32 %v697, %v1038
  %v1040 = vpop.f32.mrf.mxu0
  %1041 = vmatprep.mubr.bf16.mxu0 0
  %1042 = vmatmul.mubr.bf16.gmra.mxu0 %v880
  %v1043 = vpop.f32.mrf.mxu0
  %v1044 = vadd.f32 %v697, %v1043
  %v1045 = vpop.f32.mrf.mxu0
  %v1046 = vpop.f32.mrf.mxu0
  %v1047 = vadd.f32 %v697, %v1046
  %v1048 = vpop.f32.mrf.mxu0
  %1049 = vmatprep.mubr.bf16.mxu0 0
  %1050 = vmatmul.mubr.bf16.gmra.mxu0 %v883
  %v1051 = vpop.f32.mrf.mxu0
  %v1052 = vadd.f32 %v697, %v1051
  %v1053 = vpop.f32.mrf.mxu0
  %v1054 = vpop.f32.mrf.mxu0
  %v1055 = vadd.f32 %v697, %v1054
  %v1056 = vpop.f32.mrf.mxu0
  %1057 = vmatprep.mubr.bf16.mxu0 0
  %1058 = vmatmul.mubr.bf16.gmra.mxu0 %v886
  %v1059 = vpop.f32.mrf.mxu0
  %v1060 = vadd.f32 %v697, %v1059
  %v1061 = vpop.f32.mrf.mxu0
  %v1062 = vpop.f32.mrf.mxu0
  %v1063 = vadd.f32 %v697, %v1062
  %v1064 = vpop.f32.mrf.mxu0
  %1065 = vmatprep.mubr.bf16.mxu0 0
  %1066 = vmatmul.mubr.bf16.gmra.mxu0 %v889
  %v1067 = vpop.f32.mrf.mxu0
  %v1068 = vadd.f32 %v697, %v1067
  %v1069 = vpop.f32.mrf.mxu0
  %v1070 = vpop.f32.mrf.mxu0
  %v1071 = vadd.f32 %v697, %v1070
  %v1072 = vpop.f32.mrf.mxu0
  %1073 = vmatprep.mubr.bf16.mxu0 0
  %1074 = vmatmul.mubr.bf16.gmra.mxu0 %v892
  %v1075 = vpop.f32.mrf.mxu0
  %v1076 = vadd.f32 %v697, %v1075
  %v1077 = vpop.f32.mrf.mxu0
  %v1078 = vpop.f32.mrf.mxu0
  %v1079 = vadd.f32 %v697, %v1078
  %v1080 = vpop.f32.mrf.mxu0
  %1081 = vmatprep.mubr.bf16.mxu0 0
  %1082 = vmatmul.mubr.bf16.gmra.mxu0 %v895
  %v1083 = vpop.f32.mrf.mxu0
  %v1084 = vadd.f32 %v697, %v1083
  %v1085 = vpop.f32.mrf.mxu0
  %v1086 = vpop.f32.mrf.mxu0
  %v1087 = vadd.f32 %v697, %v1086
  %v1088 = vpop.f32.mrf.mxu0
  %1089 = vmatprep.mubr.bf16.mxu0 0
  %1090 = vmatmul.mubr.bf16.gmra.mxu0 %v898
  %v1091 = vpop.f32.mrf.mxu0
  %v1092 = vadd.f32 %v697, %v1091
  %v1093 = vpop.f32.mrf.mxu0
  %v1094 = vpop.f32.mrf.mxu0
  %v1095 = vadd.f32 %v697, %v1094
  %v1096 = vpop.f32.mrf.mxu0
  %1097 = vmatprep.mubr.bf16.mxu0 0
  %1098 = vmatmul.mubr.bf16.gmra.mxu0 %v901
  %v1099 = vpop.f32.mrf.mxu0
  %v1100 = vadd.f32 %v697, %v1099
  %v1101 = vpop.f32.mrf.mxu0
  %v1102 = vpop.f32.mrf.mxu0
  %v1103 = vadd.f32 %v697, %v1102
  %v1104 = vpop.f32.mrf.mxu0
  %1105 = vmatprep.mubr.bf16.mxu0 0
  %1106 = vmatmul.mubr.bf16.gmra.mxu0 %v904
  %v1107 = vpop.f32.mrf.mxu0
  %v1108 = vadd.f32 %v697, %v1107
  %v1109 = vpop.f32.mrf.mxu0
  %v1110 = vpop.f32.mrf.mxu0
  %v1111 = vadd.f32 %v697, %v1110
  %v1112 = vpop.f32.mrf.mxu0
  %1113 = vmatprep.mubr.bf16.mxu0 0
  %1114 = vmatmul.mubr.bf16.gmra.mxu0 %v907
  %v1115 = vpop.f32.mrf.mxu0
  %v1116 = vadd.f32 %v697, %v1115
  %v1117 = vpop.f32.mrf.mxu0
  %v1118 = vpop.f32.mrf.mxu0
  %v1119 = vadd.f32 %v697, %v1118
  %v1120 = vpop.f32.mrf.mxu0
  %1121 = vmatprep.mubr.bf16.mxu0 0
  %1122 = vmatmul.mubr.bf16.gmra.mxu0 %v910
  %v1123 = vpop.f32.mrf.mxu0
  %v1124 = vadd.f32 %v697, %v1123
  %v1125 = vpop.f32.mrf.mxu0
  %v1126 = vpop.f32.mrf.mxu0
  %v1127 = vadd.f32 %v697, %v1126
  %v1128 = vpop.f32.mrf.mxu0
  %1129 = vmatprep.mubr.bf16.mxu0 0
  %1130 = vmatmul.mubr.bf16.gmra.mxu0 %v913
  %v1131 = vpop.f32.mrf.mxu0
  %v1132 = vadd.f32 %v697, %v1131
  %v1133 = vpop.f32.mrf.mxu0
  %v1134 = vpop.f32.mrf.mxu0
  %v1135 = vadd.f32 %v697, %v1134
  %v1136 = vpop.f32.mrf.mxu0
  %1137 = vmatprep.mubr.bf16.mxu0 0
  %1138 = vmatmul.mubr.bf16.gmra.mxu0 %v916
  %v1139 = vpop.f32.mrf.mxu0
  %v1140 = vadd.f32 %v697, %v1139
  %v1141 = vpop.f32.mrf.mxu0
  %v1142 = vpop.f32.mrf.mxu0
  %v1143 = vadd.f32 %v697, %v1142
  %v1144 = vpop.f32.mrf.mxu0
  %1145 = vmatprep.mubr.bf16.mxu0 0
  %1146 = vmatmul.mubr.bf16.gmra.mxu0 %v919
  %v1147 = vpop.f32.mrf.mxu0
  %v1148 = vadd.f32 %v697, %v1147
  %v1149 = vpop.f32.mrf.mxu0
  %v1150 = vpop.f32.mrf.mxu0
  %v1151 = vpop.f32.mrf.mxu0
  %1152 = vdwg.mxu0
  %v1153 = vtanh.pop %v956
  %v1154 = vtanh.pop %v959
  %v1155 = vtanh.pop %v964
  %v1156 = vtanh.pop %v967
  %v1157 = vtanh.pop %v972
  %v1158 = vtanh.pop %v975
  %v1159 = vtanh.pop %v980
  %v1160 = vtanh.pop %v983
  %v1161 = vtanh.pop %v988
  %v1162 = vtanh.pop %v991
  %v1163 = vtanh.pop %v996
  %v1164 = vtanh.pop %v999
  %v1165 = vtanh.pop %v1004
  %v1166 = vtanh.pop %v1007
  %v1167 = vtanh.pop %v1012
  %v1168 = vtanh.pop %v1015
  %v1169 = vtanh.pop %v1020
  %v1170 = vtanh.pop %v1023
  %v1171 = vtanh.pop %v1028
  %v1172 = vtanh.pop %v1031
  %v1173 = vtanh.pop %v1036
  %v1174 = vtanh.pop %v1039
  %v1175 = vtanh.pop %v1044
  %v1176 = vtanh.pop %v1047
  %v1177 = vtanh.pop %v1052
  %v1178 = vtanh.pop %v1055
  %v1179 = vtanh.pop %v1060
  %v1180 = vtanh.pop %v1063
  %v1181 = vtanh.pop %v1068
  %v1182 = vtanh.pop %v1071
  %v1183 = vtanh.pop %v1076
  %v1184 = vtanh.pop %v1079
  %v1185 = vtanh.pop %v1084
  %v1186 = vtanh.pop %v1087
  %v1187 = vtanh.pop %v1092
  %v1188 = vtanh.pop %v1095
  %v1189 = vtanh.pop %v1100
  %v1190 = vtanh.pop %v1103
  %v1191 = vtanh.pop %v1108
  %v1192 = vtanh.pop %v1111
  %v1193 = vtanh.pop %v1116
  %v1194 = vtanh.pop %v1119
  %v1195 = vtanh.pop %v1124
  %v1196 = vtanh.pop %v1127
  %v1197 = vtanh.pop %v1132
  %v1198 = vtanh.pop %v1135
  %v1199 = vtanh.pop %v1140
  %v1200 = vtanh.pop %v1143
  %v1201 = vtanh.pop %v1148
  %s1202 = scalar_lea.vmem %s3, 392
  %1203 = vst.msk [vmem:[%s1202] sm:$0xff] %vm583, %v1153
  %1204 = vst.msk [vmem:[%s1202 + $0x8] sm:$0xff] %vm583, %v1154
  %1205 = vst.msk [vmem:[%s1202 + $0x10] sm:$0xff] %vm583, %v1155
  %1206 = vst.msk [vmem:[%s1202 + $0x18] sm:$0xff] %vm583, %v1156
  %1207 = vst.msk [vmem:[%s1202 + $0x20] sm:$0xff] %vm583, %v1157
  %1208 = vst.msk [vmem:[%s1202 + $0x28] sm:$0xff] %vm583, %v1158
  %1209 = vst.msk [vmem:[%s1202 + $0x30] sm:$0xff] %vm583, %v1159
  %1210 = vst.msk [vmem:[%s1202 + $0x38] sm:$0xff] %vm583, %v1160
  %1211 = vst.msk [vmem:[%s1202 + $0x40] sm:$0xff] %vm583, %v1161
  %1212 = vst.msk [vmem:[%s1202 + $0x48] sm:$0xff] %vm583, %v1162
  %1213 = vst.msk [vmem:[%s1202 + $0x50] sm:$0xff] %vm583, %v1163
  %1214 = vst.msk [vmem:[%s1202 + $0x58] sm:$0xff] %vm583, %v1164
  %1215 = vst.msk [vmem:[%s1202 + $0x60] sm:$0xff] %vm583, %v1165
  %1216 = vst.msk [vmem:[%s1202 + $0x68] sm:$0xff] %vm583, %v1166
  %1217 = vst.msk [vmem:[%s1202 + $0x70] sm:$0xff] %vm583, %v1167
  %1218 = vst.msk [vmem:[%s1202 + $0x78] sm:$0xff] %vm583, %v1168
  %1219 = vst.msk [vmem:[%s1202 + $0x80] sm:$0xff] %vm583, %v1169
  %1220 = vst.msk [vmem:[%s1202 + $0x88] sm:$0xff] %vm583, %v1170
  %1221 = vst.msk [vmem:[%s1202 + $0x90] sm:$0xff] %vm583, %v1171
  %1222 = vst.msk [vmem:[%s1202 + $0x98] sm:$0xff] %vm583, %v1172
  %1223 = vst.msk [vmem:[%s1202 + $0xa0] sm:$0xff] %vm583, %v1173
  %1224 = vst.msk [vmem:[%s1202 + $0xa8] sm:$0xff] %vm583, %v1174
  %1225 = vst.msk [vmem:[%s1202 + $0xb0] sm:$0xff] %vm583, %v1175
  %1226 = vst.msk [vmem:[%s1202 + $0xb8] sm:$0xff] %vm583, %v1176
  %1227 = vst.msk [vmem:[%s1202 + $0xc0] sm:$0xff] %vm583, %v1177
  %1228 = vst.msk [vmem:[%s1202 + $0xc8] sm:$0xff] %vm583, %v1178
  %1229 = vst.msk [vmem:[%s1202 + $0xd0] sm:$0xff] %vm583, %v1179
  %1230 = vst.msk [vmem:[%s1202 + $0xd8] sm:$0xff] %vm583, %v1180
  %1231 = vst.msk [vmem:[%s1202 + $0xe0] sm:$0xff] %vm583, %v1181
  %1232 = vst.msk [vmem:[%s1202 + $0xe8] sm:$0xff] %vm583, %v1182
  %1233 = vst.msk [vmem:[%s1202 + $0xf0] sm:$0xff] %vm583, %v1183
  %1234 = vst.msk [vmem:[%s1202 + $0xf8] sm:$0xff] %vm583, %v1184
  %1235 = vst.msk [vmem:[%s1202 + $0x100] sm:$0xff] %vm583, %v1185
  %1236 = vst.msk [vmem:[%s1202 + $0x108] sm:$0xff] %vm583, %v1186
  %1237 = vst.msk [vmem:[%s1202 + $0x110] sm:$0xff] %vm583, %v1187
  %1238 = vst.msk [vmem:[%s1202 + $0x118] sm:$0xff] %vm583, %v1188
  %1239 = vst.msk [vmem:[%s1202 + $0x120] sm:$0xff] %vm583, %v1189
  %1240 = vst.msk [vmem:[%s1202 + $0x128] sm:$0xff] %vm583, %v1190
  %1241 = vst.msk [vmem:[%s1202 + $0x130] sm:$0xff] %vm583, %v1191
  %1242 = vst.msk [vmem:[%s1202 + $0x138] sm:$0xff] %vm583, %v1192
  %1243 = vst.msk [vmem:[%s1202 + $0x140] sm:$0xff] %vm583, %v1193
  %1244 = vst.msk [vmem:[%s1202 + $0x148] sm:$0xff] %vm583, %v1194
  %1245 = vst.msk [vmem:[%s1202 + $0x150] sm:$0xff] %vm583, %v1195
  %1246 = vst.msk [vmem:[%s1202 + $0x158] sm:$0xff] %vm583, %v1196
  %1247 = vst.msk [vmem:[%s1202 + $0x160] sm:$0xff] %vm583, %v1197
  %1248 = vst.msk [vmem:[%s1202 + $0x168] sm:$0xff] %vm583, %v1198
  %1249 = vst.msk [vmem:[%s1202 + $0x170] sm:$0xff] %vm583, %v1199
  %1250 = vst.msk [vmem:[%s1202 + $0x178] sm:$0xff] %vm583, %v1200
  %1251 = vst.msk [vmem:[%s1202 + $0x180] sm:$0xff] %vm583, %v1201
  %s1252 = scalar_lea.vmem %s0, 392
  %v1253 = vld [vmem:[%s1252] sm:$0xf]
  %v1254 = vld [vmem:[%s1252 + $0x4] sm:$0xf]
  %v1255 = vld [vmem:[%s1252 + $0x8] sm:$0xf]
  %v1256 = vld [vmem:[%s1252 + $0xc] sm:$0xf]
  %v1257 = vld [vmem:[%s1252 + $0x10] sm:$0xf]
  %v1258 = vld [vmem:[%s1252 + $0x14] sm:$0xf]
  %v1259 = vld [vmem:[%s1252 + $0x18] sm:$0xf]
  %v1260 = vld [vmem:[%s1252 + $0x1c] sm:$0xf]
  %v1261 = vld [vmem:[%s1252 + $0x20] sm:$0xf]
  %v1262 = vld [vmem:[%s1252 + $0x24] sm:$0xf]
  %v1263 = vld [vmem:[%s1252 + $0x28] sm:$0xf]
  %v1264 = vld [vmem:[%s1252 + $0x2c] sm:$0xf]
  %v1265 = vld [vmem:[%s1252 + $0x30] sm:$0xf]
  %v1266 = vld [vmem:[%s1252 + $0x34] sm:$0xf]
  %v1267 = vld [vmem:[%s1252 + $0x38] sm:$0xf]
  %v1268 = vld [vmem:[%s1252 + $0x3c] sm:$0xf]
  %v1269 = vld [vmem:[%s1252 + $0x40] sm:$0xf]
  %v1270 = vld [vmem:[%s1252 + $0x44] sm:$0xf]
  %v1271 = vld [vmem:[%s1252 + $0x48] sm:$0xf]
  %v1272 = vld [vmem:[%s1252 + $0x4c] sm:$0xf]
  %v1273 = vld [vmem:[%s1252 + $0x50] sm:$0xf]
  %v1274 = vld [vmem:[%s1252 + $0x54] sm:$0xf]
  %v1275 = vld [vmem:[%s1252 + $0x58] sm:$0xf]
  %v1276 = vld [vmem:[%s1252 + $0x5c] sm:$0xf]
  %v1277 = vld [vmem:[%s1252 + $0x60] sm:$0xf]
  %v1278 = vld [vmem:[%s1252 + $0x64] sm:$0xf]
  %v1279 = vld [vmem:[%s1252 + $0x68] sm:$0xf]
  %v1280 = vld [vmem:[%s1252 + $0x6c] sm:$0xf]
  %v1281 = vld [vmem:[%s1252 + $0x70] sm:$0xf]
  %v1282 = vld [vmem:[%s1252 + $0x74] sm:$0xf]
  %v1283 = vld [vmem:[%s1252 + $0x78] sm:$0xf]
  %v1284 = vld [vmem:[%s1252 + $0x7c] sm:$0xf]
  %v1285 = vld [vmem:[%s1252 + $0x80] sm:$0xf]
  %v1286 = vld [vmem:[%s1252 + $0x84] sm:$0xf]
  %v1287 = vld [vmem:[%s1252 + $0x88] sm:$0xf]
  %v1288 = vld [vmem:[%s1252 + $0x8c] sm:$0xf]
  %v1289 = vld [vmem:[%s1252 + $0x90] sm:$0xf]
  %v1290 = vld [vmem:[%s1252 + $0x94] sm:$0xf]
  %v1291 = vld [vmem:[%s1252 + $0x98] sm:$0xf]
  %v1292 = vld [vmem:[%s1252 + $0x9c] sm:$0xf]
  %v1293 = vld [vmem:[%s1252 + $0xa0] sm:$0xf]
  %v1294 = vld [vmem:[%s1252 + $0xa4] sm:$0xf]
  %v1295 = vld [vmem:[%s1252 + $0xa8] sm:$0xf]
  %v1296 = vld [vmem:[%s1252 + $0xac] sm:$0xf]
  %v1297 = vld [vmem:[%s1252 + $0xb0] sm:$0xf]
  %v1298 = vld [vmem:[%s1252 + $0xb4] sm:$0xf]
  %v1299 = vld [vmem:[%s1252 + $0xb8] sm:$0xf]
  %v1300 = vld [vmem:[%s1252 + $0xbc] sm:$0xf]
  %v1301 = vld [vmem:[%s1252 + $0xc0] sm:$0xf]
  %s1302 = scalar_lea.vmem %s1, 64
  %v1303 = vld [vmem:[%s1302] sm:$0xf]
  %v1304 = vld [vmem:[%s1302 + $0x4] sm:$0xf]
  %v1305 = vld [vmem:[%s1302 + $0x8] sm:$0xf]
  %v1306 = vld [vmem:[%s1302 + $0xc] sm:$0xf]
  %v1307 = vld [vmem:[%s1302 + $0x10] sm:$0xf]
  %v1308 = vld [vmem:[%s1302 + $0x14] sm:$0xf]
  %v1309 = vld [vmem:[%s1302 + $0x18] sm:$0xf]
  %v1310 = vld [vmem:[%s1302 + $0x1c] sm:$0xf]
  %v1311 = vld [vmem:[%s2] sm:$0x1]
  %v1313 = vlaneseq
  %v1314 = vshrl.u32 %v1313, 7
  %v1315 = vsub.s32 0, %v1314
  %v1316 = vrot.slane %v1311, %v1315
  %v1367 = vunpack.c.l.b16 %v1253
  %v1368 = vunpack.c.l.b16 %v1254
  %v1369 = vunpack.c.l.b16 %v1255
  %v1370 = vunpack.c.l.b16 %v1256
  %v1371 = vunpack.c.l.b16 %v1257
  %v1372 = vunpack.c.l.b16 %v1258
  %v1373 = vunpack.c.l.b16 %v1259
  %v1374 = vunpack.c.l.b16 %v1260
  %v1375 = vunpack.c.l.b16 %v1261
  %v1376 = vunpack.c.l.b16 %v1262
  %v1377 = vunpack.c.l.b16 %v1263
  %v1378 = vunpack.c.l.b16 %v1264
  %v1379 = vunpack.c.l.b16 %v1265
  %v1380 = vunpack.c.l.b16 %v1266
  %v1381 = vunpack.c.l.b16 %v1267
  %v1382 = vunpack.c.l.b16 %v1268
  %v1383 = vunpack.c.l.b16 %v1269
  %v1384 = vunpack.c.l.b16 %v1270
  %v1385 = vunpack.c.l.b16 %v1271
  %v1386 = vunpack.c.l.b16 %v1272
  %v1387 = vunpack.c.l.b16 %v1273
  %v1388 = vunpack.c.l.b16 %v1274
  %v1389 = vunpack.c.l.b16 %v1275
  %v1390 = vunpack.c.l.b16 %v1276
  %v1391 = vunpack.c.l.b16 %v1277
  %v1392 = vunpack.c.l.b16 %v1278
  %v1393 = vunpack.c.l.b16 %v1279
  %v1394 = vunpack.c.l.b16 %v1280
  %v1395 = vunpack.c.l.b16 %v1281
  %v1396 = vunpack.c.l.b16 %v1282
  %v1397 = vunpack.c.l.b16 %v1283
  %v1398 = vunpack.c.l.b16 %v1284
  %v1399 = vunpack.c.l.b16 %v1285
  %v1400 = vunpack.c.l.b16 %v1286
  %v1401 = vunpack.c.l.b16 %v1287
  %v1402 = vunpack.c.l.b16 %v1288
  %v1403 = vunpack.c.l.b16 %v1289
  %v1404 = vunpack.c.l.b16 %v1290
  %v1405 = vunpack.c.l.b16 %v1291
  %v1406 = vunpack.c.l.b16 %v1292
  %v1407 = vunpack.c.l.b16 %v1293
  %v1408 = vunpack.c.l.b16 %v1294
  %v1409 = vunpack.c.l.b16 %v1295
  %v1410 = vunpack.c.l.b16 %v1296
  %v1411 = vunpack.c.l.b16 %v1297
  %v1412 = vunpack.c.l.b16 %v1298
  %v1413 = vunpack.c.l.b16 %v1299
  %v1414 = vunpack.c.l.b16 %v1300
  %v1415 = vunpack.c.l.b16 %v1301
  %v1416 = vpack.c.b16 %v1368, %v1367
  %v1417 = vpack.c.b16 %v1370, %v1369
  %v1418 = vpack.c.b16 %v1372, %v1371
  %v1419 = vpack.c.b16 %v1374, %v1373
  %v1420 = vpack.c.b16 %v1376, %v1375
  %v1421 = vpack.c.b16 %v1378, %v1377
  %v1422 = vpack.c.b16 %v1380, %v1379
  %v1423 = vpack.c.b16 %v1382, %v1381
  %v1424 = vpack.c.b16 %v1384, %v1383
  %v1425 = vpack.c.b16 %v1386, %v1385
  %v1426 = vpack.c.b16 %v1388, %v1387
  %v1427 = vpack.c.b16 %v1390, %v1389
  %v1428 = vpack.c.b16 %v1392, %v1391
  %v1429 = vpack.c.b16 %v1394, %v1393
  %v1430 = vpack.c.b16 %v1396, %v1395
  %v1431 = vpack.c.b16 %v1398, %v1397
  %v1432 = vpack.c.b16 %v1400, %v1399
  %v1433 = vpack.c.b16 %v1402, %v1401
  %v1434 = vpack.c.b16 %v1404, %v1403
  %v1435 = vpack.c.b16 %v1406, %v1405
  %v1436 = vpack.c.b16 %v1408, %v1407
  %v1437 = vpack.c.b16 %v1410, %v1409
  %v1438 = vpack.c.b16 %v1412, %v1411
  %v1439 = vpack.c.b16 %v1414, %v1413
  %v1440 = vpack.c.b16 %v1415, %v1415
  %v1449 = vunpack.c.l.b16 %v1303
  %v1450 = vunpack.c.l.b16 %v1304
  %v1451 = vunpack.c.l.b16 %v1305
  %v1452 = vunpack.c.l.b16 %v1306
  %v1453 = vunpack.c.l.b16 %v1307
  %v1454 = vunpack.c.l.b16 %v1308
  %v1455 = vunpack.c.l.b16 %v1309
  %v1456 = vunpack.c.l.b16 %v1310
  %v1457 = vpack.c.b16 %v1450, %v1449
  %v1458 = vpack.c.b16 %v1452, %v1451
  %v1459 = vpack.c.b16 %v1454, %v1453
  %v1460 = vpack.c.b16 %v1456, %v1455
  %v1466 = vsel %vm226, %v1416, 0
  %v1469 = vsel %vm226, %v1417, 0
  %v1472 = vsel %vm226, %v1418, 0
  %v1475 = vsel %vm226, %v1419, 0
  %v1478 = vsel %vm226, %v1420, 0
  %v1481 = vsel %vm226, %v1421, 0
  %v1484 = vsel %vm226, %v1422, 0
  %v1487 = vsel %vm226, %v1423, 0
  %v1490 = vsel %vm226, %v1424, 0
  %v1493 = vsel %vm226, %v1425, 0
  %v1496 = vsel %vm226, %v1426, 0
  %v1499 = vsel %vm226, %v1427, 0
  %v1502 = vsel %vm226, %v1428, 0
  %v1505 = vsel %vm226, %v1429, 0
  %v1508 = vsel %vm226, %v1430, 0
  %v1511 = vsel %vm226, %v1431, 0
  %v1514 = vsel %vm226, %v1432, 0
  %v1517 = vsel %vm226, %v1433, 0
  %v1520 = vsel %vm226, %v1434, 0
  %v1523 = vsel %vm226, %v1435, 0
  %v1526 = vsel %vm226, %v1436, 0
  %v1529 = vsel %vm226, %v1437, 0
  %v1532 = vsel %vm226, %v1438, 0
  %v1535 = vsel %vm226, %v1439, 0
  %v1538 = vsel %vm226, %v1440, 0
  %1540 = vmatprep.subr.bf16.mxu0 0
  %1541 = vmatpush1.bf16.msra.mxu0 0
  %1542 = vmatprep.subr.bf16.mxu0 0
  %1543 = vmatpush1.bf16.msra.mxu0 0
  %1544 = vmatprep.subr.bf16.mxu0 0
  %1545 = vmatpush1.bf16.msra.mxu0 0
  %1546 = vmatprep.subr.bf16.mxu0 0
  %1547 = vmatpush1.bf16.msra.mxu0 0
  %1548 = vmatprep.subr.bf16.mxu0 0
  %1549 = vmatpush1.bf16.msra.mxu0 %v1460
  %1550 = vmatprep.subr.bf16.mxu0 0
  %1551 = vmatpush1.bf16.msra.mxu0 %v1459
  %1552 = vmatprep.subr.bf16.mxu0 0
  %1553 = vmatpush1.bf16.msra.mxu0 %v1458
  %1554 = vmatprep.subr.bf16.mxu0 0
  %1555 = vmatpush1.bf16.msra.mxu0 %v1457
  %1556 = vmatprep.subr.bf16.mxu0 0
  %1557 = vmatpush2.bf16.msra.mxu0 0
  %1558 = vmatprep.subr.bf16.mxu0 0
  %1559 = vmatpush2.bf16.msra.mxu0 0
  %1560 = vmatprep.subr.bf16.mxu0 0
  %1561 = vmatpush2.bf16.msra.mxu0 0
  %1562 = vmatprep.subr.bf16.mxu0 0
  %1563 = vmatpush2.bf16.msra.mxu0 0
  %1564 = vmatprep.subr.bf16.mxu0 0
  %1565 = vmatpush2.bf16.msra.mxu0 0
  %1566 = vmatprep.subr.bf16.mxu0 0
  %1567 = vmatpush2.bf16.msra.mxu0 0
  %1568 = vmatprep.subr.bf16.mxu0 0
  %1569 = vmatpush2.bf16.msra.mxu0 0
  %1570 = vmatprep.subr.bf16.mxu0 0
  %1571 = vmatpush2.bf16.msra.mxu0 0
  %1572 = vmatprep.mubr.bf16.mxu0 0
  %1573 = vmatmul.mubr.bf16.gmra.mxu0 %v1466
  %v1574 = vpop.f32.mrf.mxu0
  %v1575 = vadd.f32 %v1316, %v1574
  %v1576 = vpop.f32.mrf.mxu0
  %v1577 = vpop.f32.mrf.mxu0
  %v1578 = vadd.f32 %v1316, %v1577
  %v1579 = vpop.f32.mrf.mxu0
  %1580 = vmatprep.mubr.bf16.mxu0 0
  %1581 = vmatmul.mubr.bf16.gmra.mxu0 %v1469
  %v1582 = vpop.f32.mrf.mxu0
  %v1583 = vadd.f32 %v1316, %v1582
  %v1584 = vpop.f32.mrf.mxu0
  %v1585 = vpop.f32.mrf.mxu0
  %v1586 = vadd.f32 %v1316, %v1585
  %v1587 = vpop.f32.mrf.mxu0
  %1588 = vmatprep.mubr.bf16.mxu0 0
  %1589 = vmatmul.mubr.bf16.gmra.mxu0 %v1472
  %v1590 = vpop.f32.mrf.mxu0
  %v1591 = vadd.f32 %v1316, %v1590
  %v1592 = vpop.f32.mrf.mxu0
  %v1593 = vpop.f32.mrf.mxu0
  %v1594 = vadd.f32 %v1316, %v1593
  %v1595 = vpop.f32.mrf.mxu0
  %1596 = vmatprep.mubr.bf16.mxu0 0
  %1597 = vmatmul.mubr.bf16.gmra.mxu0 %v1475
  %v1598 = vpop.f32.mrf.mxu0
  %v1599 = vadd.f32 %v1316, %v1598
  %v1600 = vpop.f32.mrf.mxu0
  %v1601 = vpop.f32.mrf.mxu0
  %v1602 = vadd.f32 %v1316, %v1601
  %v1603 = vpop.f32.mrf.mxu0
  %1604 = vmatprep.mubr.bf16.mxu0 0
  %1605 = vmatmul.mubr.bf16.gmra.mxu0 %v1478
  %v1606 = vpop.f32.mrf.mxu0
  %v1607 = vadd.f32 %v1316, %v1606
  %v1608 = vpop.f32.mrf.mxu0
  %v1609 = vpop.f32.mrf.mxu0
  %v1610 = vadd.f32 %v1316, %v1609
  %v1611 = vpop.f32.mrf.mxu0
  %1612 = vmatprep.mubr.bf16.mxu0 0
  %1613 = vmatmul.mubr.bf16.gmra.mxu0 %v1481
  %v1614 = vpop.f32.mrf.mxu0
  %v1615 = vadd.f32 %v1316, %v1614
  %v1616 = vpop.f32.mrf.mxu0
  %v1617 = vpop.f32.mrf.mxu0
  %v1618 = vadd.f32 %v1316, %v1617
  %v1619 = vpop.f32.mrf.mxu0
  %1620 = vmatprep.mubr.bf16.mxu0 0
  %1621 = vmatmul.mubr.bf16.gmra.mxu0 %v1484
  %v1622 = vpop.f32.mrf.mxu0
  %v1623 = vadd.f32 %v1316, %v1622
  %v1624 = vpop.f32.mrf.mxu0
  %v1625 = vpop.f32.mrf.mxu0
  %v1626 = vadd.f32 %v1316, %v1625
  %v1627 = vpop.f32.mrf.mxu0
  %1628 = vmatprep.mubr.bf16.mxu0 0
  %1629 = vmatmul.mubr.bf16.gmra.mxu0 %v1487
  %v1630 = vpop.f32.mrf.mxu0
  %v1631 = vadd.f32 %v1316, %v1630
  %v1632 = vpop.f32.mrf.mxu0
  %v1633 = vpop.f32.mrf.mxu0
  %v1634 = vadd.f32 %v1316, %v1633
  %v1635 = vpop.f32.mrf.mxu0
  %1636 = vmatprep.mubr.bf16.mxu0 0
  %1637 = vmatmul.mubr.bf16.gmra.mxu0 %v1490
  %v1638 = vpop.f32.mrf.mxu0
  %v1639 = vadd.f32 %v1316, %v1638
  %v1640 = vpop.f32.mrf.mxu0
  %v1641 = vpop.f32.mrf.mxu0
  %v1642 = vadd.f32 %v1316, %v1641
  %v1643 = vpop.f32.mrf.mxu0
  %1644 = vmatprep.mubr.bf16.mxu0 0
  %1645 = vmatmul.mubr.bf16.gmra.mxu0 %v1493
  %v1646 = vpop.f32.mrf.mxu0
  %v1647 = vadd.f32 %v1316, %v1646
  %v1648 = vpop.f32.mrf.mxu0
  %v1649 = vpop.f32.mrf.mxu0
  %v1650 = vadd.f32 %v1316, %v1649
  %v1651 = vpop.f32.mrf.mxu0
  %1652 = vmatprep.mubr.bf16.mxu0 0
  %1653 = vmatmul.mubr.bf16.gmra.mxu0 %v1496
  %v1654 = vpop.f32.mrf.mxu0
  %v1655 = vadd.f32 %v1316, %v1654
  %v1656 = vpop.f32.mrf.mxu0
  %v1657 = vpop.f32.mrf.mxu0
  %v1658 = vadd.f32 %v1316, %v1657
  %v1659 = vpop.f32.mrf.mxu0
  %1660 = vmatprep.mubr.bf16.mxu0 0
  %1661 = vmatmul.mubr.bf16.gmra.mxu0 %v1499
  %v1662 = vpop.f32.mrf.mxu0
  %v1663 = vadd.f32 %v1316, %v1662
  %v1664 = vpop.f32.mrf.mxu0
  %v1665 = vpop.f32.mrf.mxu0
  %v1666 = vadd.f32 %v1316, %v1665
  %v1667 = vpop.f32.mrf.mxu0
  %1668 = vmatprep.mubr.bf16.mxu0 0
  %1669 = vmatmul.mubr.bf16.gmra.mxu0 %v1502
  %v1670 = vpop.f32.mrf.mxu0
  %v1671 = vadd.f32 %v1316, %v1670
  %v1672 = vpop.f32.mrf.mxu0
  %v1673 = vpop.f32.mrf.mxu0
  %v1674 = vadd.f32 %v1316, %v1673
  %v1675 = vpop.f32.mrf.mxu0
  %1676 = vmatprep.mubr.bf16.mxu0 0
  %1677 = vmatmul.mubr.bf16.gmra.mxu0 %v1505
  %v1678 = vpop.f32.mrf.mxu0
  %v1679 = vadd.f32 %v1316, %v1678
  %v1680 = vpop.f32.mrf.mxu0
  %v1681 = vpop.f32.mrf.mxu0
  %v1682 = vadd.f32 %v1316, %v1681
  %v1683 = vpop.f32.mrf.mxu0
  %1684 = vmatprep.mubr.bf16.mxu0 0
  %1685 = vmatmul.mubr.bf16.gmra.mxu0 %v1508
  %v1686 = vpop.f32.mrf.mxu0
  %v1687 = vadd.f32 %v1316, %v1686
  %v1688 = vpop.f32.mrf.mxu0
  %v1689 = vpop.f32.mrf.mxu0
  %v1690 = vadd.f32 %v1316, %v1689
  %v1691 = vpop.f32.mrf.mxu0
  %1692 = vmatprep.mubr.bf16.mxu0 0
  %1693 = vmatmul.mubr.bf16.gmra.mxu0 %v1511
  %v1694 = vpop.f32.mrf.mxu0
  %v1695 = vadd.f32 %v1316, %v1694
  %v1696 = vpop.f32.mrf.mxu0
  %v1697 = vpop.f32.mrf.mxu0
  %v1698 = vadd.f32 %v1316, %v1697
  %v1699 = vpop.f32.mrf.mxu0
  %1700 = vmatprep.mubr.bf16.mxu0 0
  %1701 = vmatmul.mubr.bf16.gmra.mxu0 %v1514
  %v1702 = vpop.f32.mrf.mxu0
  %v1703 = vadd.f32 %v1316, %v1702
  %v1704 = vpop.f32.mrf.mxu0
  %v1705 = vpop.f32.mrf.mxu0
  %v1706 = vadd.f32 %v1316, %v1705
  %v1707 = vpop.f32.mrf.mxu0
  %1708 = vmatprep.mubr.bf16.mxu0 0
  %1709 = vmatmul.mubr.bf16.gmra.mxu0 %v1517
  %v1710 = vpop.f32.mrf.mxu0
  %v1711 = vadd.f32 %v1316, %v1710
  %v1712 = vpop.f32.mrf.mxu0
  %v1713 = vpop.f32.mrf.mxu0
  %v1714 = vadd.f32 %v1316, %v1713
  %v1715 = vpop.f32.mrf.mxu0
  %1716 = vmatprep.mubr.bf16.mxu0 0
  %1717 = vmatmul.mubr.bf16.gmra.mxu0 %v1520
  %v1718 = vpop.f32.mrf.mxu0
  %v1719 = vadd.f32 %v1316, %v1718
  %v1720 = vpop.f32.mrf.mxu0
  %v1721 = vpop.f32.mrf.mxu0
  %v1722 = vadd.f32 %v1316, %v1721
  %v1723 = vpop.f32.mrf.mxu0
  %1724 = vmatprep.mubr.bf16.mxu0 0
  %1725 = vmatmul.mubr.bf16.gmra.mxu0 %v1523
  %v1726 = vpop.f32.mrf.mxu0
  %v1727 = vadd.f32 %v1316, %v1726
  %v1728 = vpop.f32.mrf.mxu0
  %v1729 = vpop.f32.mrf.mxu0
  %v1730 = vadd.f32 %v1316, %v1729
  %v1731 = vpop.f32.mrf.mxu0
  %1732 = vmatprep.mubr.bf16.mxu0 0
  %1733 = vmatmul.mubr.bf16.gmra.mxu0 %v1526
  %v1734 = vpop.f32.mrf.mxu0
  %v1735 = vadd.f32 %v1316, %v1734
  %v1736 = vpop.f32.mrf.mxu0
  %v1737 = vpop.f32.mrf.mxu0
  %v1738 = vadd.f32 %v1316, %v1737
  %v1739 = vpop.f32.mrf.mxu0
  %1740 = vmatprep.mubr.bf16.mxu0 0
  %1741 = vmatmul.mubr.bf16.gmra.mxu0 %v1529
  %v1742 = vpop.f32.mrf.mxu0
  %v1743 = vadd.f32 %v1316, %v1742
  %v1744 = vpop.f32.mrf.mxu0
  %v1745 = vpop.f32.mrf.mxu0
  %v1746 = vadd.f32 %v1316, %v1745
  %v1747 = vpop.f32.mrf.mxu0
  %1748 = vmatprep.mubr.bf16.mxu0 0
  %1749 = vmatmul.mubr.bf16.gmra.mxu0 %v1532
  %v1750 = vpop.f32.mrf.mxu0
  %v1751 = vadd.f32 %v1316, %v1750
  %v1752 = vpop.f32.mrf.mxu0
  %v1753 = vpop.f32.mrf.mxu0
  %v1754 = vadd.f32 %v1316, %v1753
  %v1755 = vpop.f32.mrf.mxu0
  %1756 = vmatprep.mubr.bf16.mxu0 0
  %1757 = vmatmul.mubr.bf16.gmra.mxu0 %v1535
  %v1758 = vpop.f32.mrf.mxu0
  %v1759 = vadd.f32 %v1316, %v1758
  %v1760 = vpop.f32.mrf.mxu0
  %v1761 = vpop.f32.mrf.mxu0
  %v1762 = vadd.f32 %v1316, %v1761
  %v1763 = vpop.f32.mrf.mxu0
  %1764 = vmatprep.mubr.bf16.mxu0 0
  %1765 = vmatmul.mubr.bf16.gmra.mxu0 %v1538
  %v1766 = vpop.f32.mrf.mxu0
  %v1767 = vadd.f32 %v1316, %v1766
  %v1768 = vpop.f32.mrf.mxu0
  %v1769 = vpop.f32.mrf.mxu0
  %v1770 = vpop.f32.mrf.mxu0
  %1771 = vdwg.mxu0
  %v1772 = vtanh.pop %v1575
  %v1773 = vtanh.pop %v1578
  %v1774 = vtanh.pop %v1583
  %v1775 = vtanh.pop %v1586
  %v1776 = vtanh.pop %v1591
  %v1777 = vtanh.pop %v1594
  %v1778 = vtanh.pop %v1599
  %v1779 = vtanh.pop %v1602
  %v1780 = vtanh.pop %v1607
  %v1781 = vtanh.pop %v1610
  %v1782 = vtanh.pop %v1615
  %v1783 = vtanh.pop %v1618
  %v1784 = vtanh.pop %v1623
  %v1785 = vtanh.pop %v1626
  %v1786 = vtanh.pop %v1631
  %v1787 = vtanh.pop %v1634
  %v1788 = vtanh.pop %v1639
  %v1789 = vtanh.pop %v1642
  %v1790 = vtanh.pop %v1647
  %v1791 = vtanh.pop %v1650
  %v1792 = vtanh.pop %v1655
  %v1793 = vtanh.pop %v1658
  %v1794 = vtanh.pop %v1663
  %v1795 = vtanh.pop %v1666
  %v1796 = vtanh.pop %v1671
  %v1797 = vtanh.pop %v1674
  %v1798 = vtanh.pop %v1679
  %v1799 = vtanh.pop %v1682
  %v1800 = vtanh.pop %v1687
  %v1801 = vtanh.pop %v1690
  %v1802 = vtanh.pop %v1695
  %v1803 = vtanh.pop %v1698
  %v1804 = vtanh.pop %v1703
  %v1805 = vtanh.pop %v1706
  %v1806 = vtanh.pop %v1711
  %v1807 = vtanh.pop %v1714
  %v1808 = vtanh.pop %v1719
  %v1809 = vtanh.pop %v1722
  %v1810 = vtanh.pop %v1727
  %v1811 = vtanh.pop %v1730
  %v1812 = vtanh.pop %v1735
  %v1813 = vtanh.pop %v1738
  %v1814 = vtanh.pop %v1743
  %v1815 = vtanh.pop %v1746
  %v1816 = vtanh.pop %v1751
  %v1817 = vtanh.pop %v1754
  %v1818 = vtanh.pop %v1759
  %v1819 = vtanh.pop %v1762
  %v1820 = vtanh.pop %v1767
  %s1821 = scalar_lea.vmem %s3, 784
  %1822 = vst.msk [vmem:[%s1821] sm:$0xff] %vm583, %v1772
  %1823 = vst.msk [vmem:[%s1821 + $0x8] sm:$0xff] %vm583, %v1773
  %1824 = vst.msk [vmem:[%s1821 + $0x10] sm:$0xff] %vm583, %v1774
  %1825 = vst.msk [vmem:[%s1821 + $0x18] sm:$0xff] %vm583, %v1775
  %1826 = vst.msk [vmem:[%s1821 + $0x20] sm:$0xff] %vm583, %v1776
  %1827 = vst.msk [vmem:[%s1821 + $0x28] sm:$0xff] %vm583, %v1777
  %1828 = vst.msk [vmem:[%s1821 + $0x30] sm:$0xff] %vm583, %v1778
  %1829 = vst.msk [vmem:[%s1821 + $0x38] sm:$0xff] %vm583, %v1779
  %1830 = vst.msk [vmem:[%s1821 + $0x40] sm:$0xff] %vm583, %v1780
  %1831 = vst.msk [vmem:[%s1821 + $0x48] sm:$0xff] %vm583, %v1781
  %1832 = vst.msk [vmem:[%s1821 + $0x50] sm:$0xff] %vm583, %v1782
  %1833 = vst.msk [vmem:[%s1821 + $0x58] sm:$0xff] %vm583, %v1783
  %1834 = vst.msk [vmem:[%s1821 + $0x60] sm:$0xff] %vm583, %v1784
  %1835 = vst.msk [vmem:[%s1821 + $0x68] sm:$0xff] %vm583, %v1785
  %1836 = vst.msk [vmem:[%s1821 + $0x70] sm:$0xff] %vm583, %v1786
  %1837 = vst.msk [vmem:[%s1821 + $0x78] sm:$0xff] %vm583, %v1787
  %1838 = vst.msk [vmem:[%s1821 + $0x80] sm:$0xff] %vm583, %v1788
  %1839 = vst.msk [vmem:[%s1821 + $0x88] sm:$0xff] %vm583, %v1789
  %1840 = vst.msk [vmem:[%s1821 + $0x90] sm:$0xff] %vm583, %v1790
  %1841 = vst.msk [vmem:[%s1821 + $0x98] sm:$0xff] %vm583, %v1791
  %1842 = vst.msk [vmem:[%s1821 + $0xa0] sm:$0xff] %vm583, %v1792
  %1843 = vst.msk [vmem:[%s1821 + $0xa8] sm:$0xff] %vm583, %v1793
  %1844 = vst.msk [vmem:[%s1821 + $0xb0] sm:$0xff] %vm583, %v1794
  %1845 = vst.msk [vmem:[%s1821 + $0xb8] sm:$0xff] %vm583, %v1795
  %1846 = vst.msk [vmem:[%s1821 + $0xc0] sm:$0xff] %vm583, %v1796
  %1847 = vst.msk [vmem:[%s1821 + $0xc8] sm:$0xff] %vm583, %v1797
  %1848 = vst.msk [vmem:[%s1821 + $0xd0] sm:$0xff] %vm583, %v1798
  %1849 = vst.msk [vmem:[%s1821 + $0xd8] sm:$0xff] %vm583, %v1799
  %1850 = vst.msk [vmem:[%s1821 + $0xe0] sm:$0xff] %vm583, %v1800
  %1851 = vst.msk [vmem:[%s1821 + $0xe8] sm:$0xff] %vm583, %v1801
  %1852 = vst.msk [vmem:[%s1821 + $0xf0] sm:$0xff] %vm583, %v1802
  %1853 = vst.msk [vmem:[%s1821 + $0xf8] sm:$0xff] %vm583, %v1803
  %1854 = vst.msk [vmem:[%s1821 + $0x100] sm:$0xff] %vm583, %v1804
  %1855 = vst.msk [vmem:[%s1821 + $0x108] sm:$0xff] %vm583, %v1805
  %1856 = vst.msk [vmem:[%s1821 + $0x110] sm:$0xff] %vm583, %v1806
  %1857 = vst.msk [vmem:[%s1821 + $0x118] sm:$0xff] %vm583, %v1807
  %1858 = vst.msk [vmem:[%s1821 + $0x120] sm:$0xff] %vm583, %v1808
  %1859 = vst.msk [vmem:[%s1821 + $0x128] sm:$0xff] %vm583, %v1809
  %1860 = vst.msk [vmem:[%s1821 + $0x130] sm:$0xff] %vm583, %v1810
  %1861 = vst.msk [vmem:[%s1821 + $0x138] sm:$0xff] %vm583, %v1811
  %1862 = vst.msk [vmem:[%s1821 + $0x140] sm:$0xff] %vm583, %v1812
  %1863 = vst.msk [vmem:[%s1821 + $0x148] sm:$0xff] %vm583, %v1813
  %1864 = vst.msk [vmem:[%s1821 + $0x150] sm:$0xff] %vm583, %v1814
  %1865 = vst.msk [vmem:[%s1821 + $0x158] sm:$0xff] %vm583, %v1815
  %1866 = vst.msk [vmem:[%s1821 + $0x160] sm:$0xff] %vm583, %v1816
  %1867 = vst.msk [vmem:[%s1821 + $0x168] sm:$0xff] %vm583, %v1817
  %1868 = vst.msk [vmem:[%s1821 + $0x170] sm:$0xff] %vm583, %v1818
  %1869 = vst.msk [vmem:[%s1821 + $0x178] sm:$0xff] %vm583, %v1819
  %1870 = vst.msk [vmem:[%s1821 + $0x180] sm:$0xff] %vm583, %v1820
  %s1871 = scalar_lea.vmem %s0, 588
  %v1872 = vld [vmem:[%s1871] sm:$0xf]
  %v1873 = vld [vmem:[%s1871 + $0x4] sm:$0xf]
  %v1874 = vld [vmem:[%s1871 + $0x8] sm:$0xf]
  %v1875 = vld [vmem:[%s1871 + $0xc] sm:$0xf]
  %v1876 = vld [vmem:[%s1871 + $0x10] sm:$0xf]
  %v1877 = vld [vmem:[%s1871 + $0x14] sm:$0xf]
  %v1878 = vld [vmem:[%s1871 + $0x18] sm:$0xf]
  %v1879 = vld [vmem:[%s1871 + $0x1c] sm:$0xf]
  %v1880 = vld [vmem:[%s1871 + $0x20] sm:$0xf]
  %v1881 = vld [vmem:[%s1871 + $0x24] sm:$0xf]
  %v1882 = vld [vmem:[%s1871 + $0x28] sm:$0xf]
  %v1883 = vld [vmem:[%s1871 + $0x2c] sm:$0xf]
  %v1884 = vld [vmem:[%s1871 + $0x30] sm:$0xf]
  %v1885 = vld [vmem:[%s1871 + $0x34] sm:$0xf]
  %v1886 = vld [vmem:[%s1871 + $0x38] sm:$0xf]
  %v1887 = vld [vmem:[%s1871 + $0x3c] sm:$0xf]
  %v1888 = vld [vmem:[%s1871 + $0x40] sm:$0xf]
  %v1889 = vld [vmem:[%s1871 + $0x44] sm:$0xf]
  %v1890 = vld [vmem:[%s1871 + $0x48] sm:$0xf]
  %v1891 = vld [vmem:[%s1871 + $0x4c] sm:$0xf]
  %v1892 = vld [vmem:[%s1871 + $0x50] sm:$0xf]
  %v1893 = vld [vmem:[%s1871 + $0x54] sm:$0xf]
  %v1894 = vld [vmem:[%s1871 + $0x58] sm:$0xf]
  %v1895 = vld [vmem:[%s1871 + $0x5c] sm:$0xf]
  %v1896 = vld [vmem:[%s1871 + $0x60] sm:$0xf]
  %v1897 = vld [vmem:[%s1871 + $0x64] sm:$0xf]
  %v1898 = vld [vmem:[%s1871 + $0x68] sm:$0xf]
  %v1899 = vld [vmem:[%s1871 + $0x6c] sm:$0xf]
  %v1900 = vld [vmem:[%s1871 + $0x70] sm:$0xf]
  %v1901 = vld [vmem:[%s1871 + $0x74] sm:$0xf]
  %v1902 = vld [vmem:[%s1871 + $0x78] sm:$0xf]
  %v1903 = vld [vmem:[%s1871 + $0x7c] sm:$0xf]
  %v1904 = vld [vmem:[%s1871 + $0x80] sm:$0xf]
  %v1905 = vld [vmem:[%s1871 + $0x84] sm:$0xf]
  %v1906 = vld [vmem:[%s1871 + $0x88] sm:$0xf]
  %v1907 = vld [vmem:[%s1871 + $0x8c] sm:$0xf]
  %v1908 = vld [vmem:[%s1871 + $0x90] sm:$0xf]
  %v1909 = vld [vmem:[%s1871 + $0x94] sm:$0xf]
  %v1910 = vld [vmem:[%s1871 + $0x98] sm:$0xf]
  %v1911 = vld [vmem:[%s1871 + $0x9c] sm:$0xf]
  %v1912 = vld [vmem:[%s1871 + $0xa0] sm:$0xf]
  %v1913 = vld [vmem:[%s1871 + $0xa4] sm:$0xf]
  %v1914 = vld [vmem:[%s1871 + $0xa8] sm:$0xf]
  %v1915 = vld [vmem:[%s1871 + $0xac] sm:$0xf]
  %v1916 = vld [vmem:[%s1871 + $0xb0] sm:$0xf]
  %v1917 = vld [vmem:[%s1871 + $0xb4] sm:$0xf]
  %v1918 = vld [vmem:[%s1871 + $0xb8] sm:$0xf]
  %v1919 = vld [vmem:[%s1871 + $0xbc] sm:$0xf]
  %v1920 = vld [vmem:[%s1871 + $0xc0] sm:$0xf]
  %s1921 = scalar_lea.vmem %s1, 96
  %v1922 = vld [vmem:[%s1921] sm:$0xf]
  %v1923 = vld [vmem:[%s1921 + $0x4] sm:$0xf]
  %v1924 = vld [vmem:[%s1921 + $0x8] sm:$0xf]
  %v1925 = vld [vmem:[%s1921 + $0xc] sm:$0xf]
  %v1926 = vld [vmem:[%s1921 + $0x10] sm:$0xf]
  %v1927 = vld [vmem:[%s1921 + $0x14] sm:$0xf]
  %v1928 = vld [vmem:[%s1921 + $0x18] sm:$0xf]
  %v1929 = vld [vmem:[%s1921 + $0x1c] sm:$0xf]
  %v1930 = vld [vmem:[%s2] sm:$0x1]
  %v1932 = vlaneseq
  %v1933 = vshrl.u32 %v1932, 7
  %v1934 = vsub.s32 0, %v1933
  %v1935 = vrot.slane %v1930, %v1934
  %v1986 = vunpack.c.l.b16 %v1872
  %v1987 = vunpack.c.l.b16 %v1873
  %v1988 = vunpack.c.l.b16 %v1874
  %v1989 = vunpack.c.l.b16 %v1875
  %v1990 = vunpack.c.l.b16 %v1876
  %v1991 = vunpack.c.l.b16 %v1877
  %v1992 = vunpack.c.l.b16 %v1878
  %v1993 = vunpack.c.l.b16 %v1879
  %v1994 = vunpack.c.l.b16 %v1880
  %v1995 = vunpack.c.l.b16 %v1881
  %v1996 = vunpack.c.l.b16 %v1882
  %v1997 = vunpack.c.l.b16 %v1883
  %v1998 = vunpack.c.l.b16 %v1884
  %v1999 = vunpack.c.l.b16 %v1885
  %v2000 = vunpack.c.l.b16 %v1886
  %v2001 = vunpack.c.l.b16 %v1887
  %v2002 = vunpack.c.l.b16 %v1888
  %v2003 = vunpack.c.l.b16 %v1889
  %v2004 = vunpack.c.l.b16 %v1890
  %v2005 = vunpack.c.l.b16 %v1891
  %v2006 = vunpack.c.l.b16 %v1892
  %v2007 = vunpack.c.l.b16 %v1893
  %v2008 = vunpack.c.l.b16 %v1894
  %v2009 = vunpack.c.l.b16 %v1895
  %v2010 = vunpack.c.l.b16 %v1896
  %v2011 = vunpack.c.l.b16 %v1897
  %v2012 = vunpack.c.l.b16 %v1898
  %v2013 = vunpack.c.l.b16 %v1899
  %v2014 = vunpack.c.l.b16 %v1900
  %v2015 = vunpack.c.l.b16 %v1901
  %v2016 = vunpack.c.l.b16 %v1902
  %v2017 = vunpack.c.l.b16 %v1903
  %v2018 = vunpack.c.l.b16 %v1904
  %v2019 = vunpack.c.l.b16 %v1905
  %v2020 = vunpack.c.l.b16 %v1906
  %v2021 = vunpack.c.l.b16 %v1907
  %v2022 = vunpack.c.l.b16 %v1908
  %v2023 = vunpack.c.l.b16 %v1909
  %v2024 = vunpack.c.l.b16 %v1910
  %v2025 = vunpack.c.l.b16 %v1911
  %v2026 = vunpack.c.l.b16 %v1912
  %v2027 = vunpack.c.l.b16 %v1913
  %v2028 = vunpack.c.l.b16 %v1914
  %v2029 = vunpack.c.l.b16 %v1915
  %v2030 = vunpack.c.l.b16 %v1916
  %v2031 = vunpack.c.l.b16 %v1917
  %v2032 = vunpack.c.l.b16 %v1918
  %v2033 = vunpack.c.l.b16 %v1919
  %v2034 = vunpack.c.l.b16 %v1920
  %v2035 = vpack.c.b16 %v1987, %v1986
  %v2036 = vpack.c.b16 %v1989, %v1988
  %v2037 = vpack.c.b16 %v1991, %v1990
  %v2038 = vpack.c.b16 %v1993, %v1992
  %v2039 = vpack.c.b16 %v1995, %v1994
  %v2040 = vpack.c.b16 %v1997, %v1996
  %v2041 = vpack.c.b16 %v1999, %v1998
  %v2042 = vpack.c.b16 %v2001, %v2000
  %v2043 = vpack.c.b16 %v2003, %v2002
  %v2044 = vpack.c.b16 %v2005, %v2004
  %v2045 = vpack.c.b16 %v2007, %v2006
  %v2046 = vpack.c.b16 %v2009, %v2008
  %v2047 = vpack.c.b16 %v2011, %v2010
  %v2048 = vpack.c.b16 %v2013, %v2012
  %v2049 = vpack.c.b16 %v2015, %v2014
  %v2050 = vpack.c.b16 %v2017, %v2016
  %v2051 = vpack.c.b16 %v2019, %v2018
  %v2052 = vpack.c.b16 %v2021, %v2020
  %v2053 = vpack.c.b16 %v2023, %v2022
  %v2054 = vpack.c.b16 %v2025, %v2024
  %v2055 = vpack.c.b16 %v2027, %v2026
  %v2056 = vpack.c.b16 %v2029, %v2028
  %v2057 = vpack.c.b16 %v2031, %v2030
  %v2058 = vpack.c.b16 %v2033, %v2032
  %v2059 = vpack.c.b16 %v2034, %v2034
  %v2068 = vunpack.c.l.b16 %v1922
  %v2069 = vunpack.c.l.b16 %v1923
  %v2070 = vunpack.c.l.b16 %v1924
  %v2071 = vunpack.c.l.b16 %v1925
  %v2072 = vunpack.c.l.b16 %v1926
  %v2073 = vunpack.c.l.b16 %v1927
  %v2074 = vunpack.c.l.b16 %v1928
  %v2075 = vunpack.c.l.b16 %v1929
  %v2076 = vpack.c.b16 %v2069, %v2068
  %v2077 = vpack.c.b16 %v2071, %v2070
  %v2078 = vpack.c.b16 %v2073, %v2072
  %v2079 = vpack.c.b16 %v2075, %v2074
  %v2085 = vsel %vm226, %v2035, 0
  %v2088 = vsel %vm226, %v2036, 0
  %v2091 = vsel %vm226, %v2037, 0
  %v2094 = vsel %vm226, %v2038, 0
  %v2097 = vsel %vm226, %v2039, 0
  %v2100 = vsel %vm226, %v2040, 0
  %v2103 = vsel %vm226, %v2041, 0
  %v2106 = vsel %vm226, %v2042, 0
  %v2109 = vsel %vm226, %v2043, 0
  %v2112 = vsel %vm226, %v2044, 0
  %v2115 = vsel %vm226, %v2045, 0
  %v2118 = vsel %vm226, %v2046, 0
  %v2121 = vsel %vm226, %v2047, 0
  %v2124 = vsel %vm226, %v2048, 0
  %v2127 = vsel %vm226, %v2049, 0
  %v2130 = vsel %vm226, %v2050, 0
  %v2133 = vsel %vm226, %v2051, 0
  %v2136 = vsel %vm226, %v2052, 0
  %v2139 = vsel %vm226, %v2053, 0
  %v2142 = vsel %vm226, %v2054, 0
  %v2145 = vsel %vm226, %v2055, 0
  %v2148 = vsel %vm226, %v2056, 0
  %v2151 = vsel %vm226, %v2057, 0
  %v2154 = vsel %vm226, %v2058, 0
  %v2157 = vsel %vm226, %v2059, 0
  %2159 = vmatprep.subr.bf16.mxu0 0
  %2160 = vmatpush1.bf16.msra.mxu0 0
  %2161 = vmatprep.subr.bf16.mxu0 0
  %2162 = vmatpush1.bf16.msra.mxu0 0
  %2163 = vmatprep.subr.bf16.mxu0 0
  %2164 = vmatpush1.bf16.msra.mxu0 0
  %2165 = vmatprep.subr.bf16.mxu0 0
  %2166 = vmatpush1.bf16.msra.mxu0 0
  %2167 = vmatprep.subr.bf16.mxu0 0
  %2168 = vmatpush1.bf16.msra.mxu0 %v2079
  %2169 = vmatprep.subr.bf16.mxu0 0
  %2170 = vmatpush1.bf16.msra.mxu0 %v2078
  %2171 = vmatprep.subr.bf16.mxu0 0
  %2172 = vmatpush1.bf16.msra.mxu0 %v2077
  %2173 = vmatprep.subr.bf16.mxu0 0
  %2174 = vmatpush1.bf16.msra.mxu0 %v2076
  %2175 = vmatprep.subr.bf16.mxu0 0
  %2176 = vmatpush2.bf16.msra.mxu0 0
  %2177 = vmatprep.subr.bf16.mxu0 0
  %2178 = vmatpush2.bf16.msra.mxu0 0
  %2179 = vmatprep.subr.bf16.mxu0 0
  %2180 = vmatpush2.bf16.msra.mxu0 0
  %2181 = vmatprep.subr.bf16.mxu0 0
  %2182 = vmatpush2.bf16.msra.mxu0 0
  %2183 = vmatprep.subr.bf16.mxu0 0
  %2184 = vmatpush2.bf16.msra.mxu0 0
  %2185 = vmatprep.subr.bf16.mxu0 0
  %2186 = vmatpush2.bf16.msra.mxu0 0
  %2187 = vmatprep.subr.bf16.mxu0 0
  %2188 = vmatpush2.bf16.msra.mxu0 0
  %2189 = vmatprep.subr.bf16.mxu0 0
  %2190 = vmatpush2.bf16.msra.mxu0 0
  %2191 = vmatprep.mubr.bf16.mxu0 0
  %2192 = vmatmul.mubr.bf16.gmra.mxu0 %v2085
  %v2193 = vpop.f32.mrf.mxu0
  %v2194 = vadd.f32 %v1935, %v2193
  %v2195 = vpop.f32.mrf.mxu0
  %v2196 = vpop.f32.mrf.mxu0
  %v2197 = vadd.f32 %v1935, %v2196
  %v2198 = vpop.f32.mrf.mxu0
  %2199 = vmatprep.mubr.bf16.mxu0 0
  %2200 = vmatmul.mubr.bf16.gmra.mxu0 %v2088
  %v2201 = vpop.f32.mrf.mxu0
  %v2202 = vadd.f32 %v1935, %v2201
  %v2203 = vpop.f32.mrf.mxu0
  %v2204 = vpop.f32.mrf.mxu0
  %v2205 = vadd.f32 %v1935, %v2204
  %v2206 = vpop.f32.mrf.mxu0
  %2207 = vmatprep.mubr.bf16.mxu0 0
  %2208 = vmatmul.mubr.bf16.gmra.mxu0 %v2091
  %v2209 = vpop.f32.mrf.mxu0
  %v2210 = vadd.f32 %v1935, %v2209
  %v2211 = vpop.f32.mrf.mxu0
  %v2212 = vpop.f32.mrf.mxu0
  %v2213 = vadd.f32 %v1935, %v2212
  %v2214 = vpop.f32.mrf.mxu0
  %2215 = vmatprep.mubr.bf16.mxu0 0
  %2216 = vmatmul.mubr.bf16.gmra.mxu0 %v2094
  %v2217 = vpop.f32.mrf.mxu0
  %v2218 = vadd.f32 %v1935, %v2217
  %v2219 = vpop.f32.mrf.mxu0
  %v2220 = vpop.f32.mrf.mxu0
  %v2221 = vadd.f32 %v1935, %v2220
  %v2222 = vpop.f32.mrf.mxu0
  %2223 = vmatprep.mubr.bf16.mxu0 0
  %2224 = vmatmul.mubr.bf16.gmra.mxu0 %v2097
  %v2225 = vpop.f32.mrf.mxu0
  %v2226 = vadd.f32 %v1935, %v2225
  %v2227 = vpop.f32.mrf.mxu0
  %v2228 = vpop.f32.mrf.mxu0
  %v2229 = vadd.f32 %v1935, %v2228
  %v2230 = vpop.f32.mrf.mxu0
  %2231 = vmatprep.mubr.bf16.mxu0 0
  %2232 = vmatmul.mubr.bf16.gmra.mxu0 %v2100
  %v2233 = vpop.f32.mrf.mxu0
  %v2234 = vadd.f32 %v1935, %v2233
  %v2235 = vpop.f32.mrf.mxu0
  %v2236 = vpop.f32.mrf.mxu0
  %v2237 = vadd.f32 %v1935, %v2236
  %v2238 = vpop.f32.mrf.mxu0
  %2239 = vmatprep.mubr.bf16.mxu0 0
  %2240 = vmatmul.mubr.bf16.gmra.mxu0 %v2103
  %v2241 = vpop.f32.mrf.mxu0
  %v2242 = vadd.f32 %v1935, %v2241
  %v2243 = vpop.f32.mrf.mxu0
  %v2244 = vpop.f32.mrf.mxu0
  %v2245 = vadd.f32 %v1935, %v2244
  %v2246 = vpop.f32.mrf.mxu0
  %2247 = vmatprep.mubr.bf16.mxu0 0
  %2248 = vmatmul.mubr.bf16.gmra.mxu0 %v2106
  %v2249 = vpop.f32.mrf.mxu0
  %v2250 = vadd.f32 %v1935, %v2249
  %v2251 = vpop.f32.mrf.mxu0
  %v2252 = vpop.f32.mrf.mxu0
  %v2253 = vadd.f32 %v1935, %v2252
  %v2254 = vpop.f32.mrf.mxu0
  %2255 = vmatprep.mubr.bf16.mxu0 0
  %2256 = vmatmul.mubr.bf16.gmra.mxu0 %v2109
  %v2257 = vpop.f32.mrf.mxu0
  %v2258 = vadd.f32 %v1935, %v2257
  %v2259 = vpop.f32.mrf.mxu0
  %v2260 = vpop.f32.mrf.mxu0
  %v2261 = vadd.f32 %v1935, %v2260
  %v2262 = vpop.f32.mrf.mxu0
  %2263 = vmatprep.mubr.bf16.mxu0 0
  %2264 = vmatmul.mubr.bf16.gmra.mxu0 %v2112
  %v2265 = vpop.f32.mrf.mxu0
  %v2266 = vadd.f32 %v1935, %v2265
  %v2267 = vpop.f32.mrf.mxu0
  %v2268 = vpop.f32.mrf.mxu0
  %v2269 = vadd.f32 %v1935, %v2268
  %v2270 = vpop.f32.mrf.mxu0
  %2271 = vmatprep.mubr.bf16.mxu0 0
  %2272 = vmatmul.mubr.bf16.gmra.mxu0 %v2115
  %v2273 = vpop.f32.mrf.mxu0
  %v2274 = vadd.f32 %v1935, %v2273
  %v2275 = vpop.f32.mrf.mxu0
  %v2276 = vpop.f32.mrf.mxu0
  %v2277 = vadd.f32 %v1935, %v2276
  %v2278 = vpop.f32.mrf.mxu0
  %2279 = vmatprep.mubr.bf16.mxu0 0
  %2280 = vmatmul.mubr.bf16.gmra.mxu0 %v2118
  %v2281 = vpop.f32.mrf.mxu0
  %v2282 = vadd.f32 %v1935, %v2281
  %v2283 = vpop.f32.mrf.mxu0
  %v2284 = vpop.f32.mrf.mxu0
  %v2285 = vadd.f32 %v1935, %v2284
  %v2286 = vpop.f32.mrf.mxu0
  %2287 = vmatprep.mubr.bf16.mxu0 0
  %2288 = vmatmul.mubr.bf16.gmra.mxu0 %v2121
  %v2289 = vpop.f32.mrf.mxu0
  %v2290 = vadd.f32 %v1935, %v2289
  %v2291 = vpop.f32.mrf.mxu0
  %v2292 = vpop.f32.mrf.mxu0
  %v2293 = vadd.f32 %v1935, %v2292
  %v2294 = vpop.f32.mrf.mxu0
  %2295 = vmatprep.mubr.bf16.mxu0 0
  %2296 = vmatmul.mubr.bf16.gmra.mxu0 %v2124
  %v2297 = vpop.f32.mrf.mxu0
  %v2298 = vadd.f32 %v1935, %v2297
  %v2299 = vpop.f32.mrf.mxu0
  %v2300 = vpop.f32.mrf.mxu0
  %v2301 = vadd.f32 %v1935, %v2300
  %v2302 = vpop.f32.mrf.mxu0
  %2303 = vmatprep.mubr.bf16.mxu0 0
  %2304 = vmatmul.mubr.bf16.gmra.mxu0 %v2127
  %v2305 = vpop.f32.mrf.mxu0
  %v2306 = vadd.f32 %v1935, %v2305
  %v2307 = vpop.f32.mrf.mxu0
  %v2308 = vpop.f32.mrf.mxu0
  %v2309 = vadd.f32 %v1935, %v2308
  %v2310 = vpop.f32.mrf.mxu0
  %2311 = vmatprep.mubr.bf16.mxu0 0
  %2312 = vmatmul.mubr.bf16.gmra.mxu0 %v2130
  %v2313 = vpop.f32.mrf.mxu0
  %v2314 = vadd.f32 %v1935, %v2313
  %v2315 = vpop.f32.mrf.mxu0
  %v2316 = vpop.f32.mrf.mxu0
  %v2317 = vadd.f32 %v1935, %v2316
  %v2318 = vpop.f32.mrf.mxu0
  %2319 = vmatprep.mubr.bf16.mxu0 0
  %2320 = vmatmul.mubr.bf16.gmra.mxu0 %v2133
  %v2321 = vpop.f32.mrf.mxu0
  %v2322 = vadd.f32 %v1935, %v2321
  %v2323 = vpop.f32.mrf.mxu0
  %v2324 = vpop.f32.mrf.mxu0
  %v2325 = vadd.f32 %v1935, %v2324
  %v2326 = vpop.f32.mrf.mxu0
  %2327 = vmatprep.mubr.bf16.mxu0 0
  %2328 = vmatmul.mubr.bf16.gmra.mxu0 %v2136
  %v2329 = vpop.f32.mrf.mxu0
  %v2330 = vadd.f32 %v1935, %v2329
  %v2331 = vpop.f32.mrf.mxu0
  %v2332 = vpop.f32.mrf.mxu0
  %v2333 = vadd.f32 %v1935, %v2332
  %v2334 = vpop.f32.mrf.mxu0
  %2335 = vmatprep.mubr.bf16.mxu0 0
  %2336 = vmatmul.mubr.bf16.gmra.mxu0 %v2139
  %v2337 = vpop.f32.mrf.mxu0
  %v2338 = vadd.f32 %v1935, %v2337
  %v2339 = vpop.f32.mrf.mxu0
  %v2340 = vpop.f32.mrf.mxu0
  %v2341 = vadd.f32 %v1935, %v2340
  %v2342 = vpop.f32.mrf.mxu0
  %2343 = vmatprep.mubr.bf16.mxu0 0
  %2344 = vmatmul.mubr.bf16.gmra.mxu0 %v2142
  %v2345 = vpop.f32.mrf.mxu0
  %v2346 = vadd.f32 %v1935, %v2345
  %v2347 = vpop.f32.mrf.mxu0
  %v2348 = vpop.f32.mrf.mxu0
  %v2349 = vadd.f32 %v1935, %v2348
  %v2350 = vpop.f32.mrf.mxu0
  %2351 = vmatprep.mubr.bf16.mxu0 0
  %2352 = vmatmul.mubr.bf16.gmra.mxu0 %v2145
  %v2353 = vpop.f32.mrf.mxu0
  %v2354 = vadd.f32 %v1935, %v2353
  %v2355 = vpop.f32.mrf.mxu0
  %v2356 = vpop.f32.mrf.mxu0
  %v2357 = vadd.f32 %v1935, %v2356
  %v2358 = vpop.f32.mrf.mxu0
  %2359 = vmatprep.mubr.bf16.mxu0 0
  %2360 = vmatmul.mubr.bf16.gmra.mxu0 %v2148
  %v2361 = vpop.f32.mrf.mxu0
  %v2362 = vadd.f32 %v1935, %v2361
  %v2363 = vpop.f32.mrf.mxu0
  %v2364 = vpop.f32.mrf.mxu0
  %v2365 = vadd.f32 %v1935, %v2364
  %v2366 = vpop.f32.mrf.mxu0
  %2367 = vmatprep.mubr.bf16.mxu0 0
  %2368 = vmatmul.mubr.bf16.gmra.mxu0 %v2151
  %v2369 = vpop.f32.mrf.mxu0
  %v2370 = vadd.f32 %v1935, %v2369
  %v2371 = vpop.f32.mrf.mxu0
  %v2372 = vpop.f32.mrf.mxu0
  %v2373 = vadd.f32 %v1935, %v2372
  %v2374 = vpop.f32.mrf.mxu0
  %2375 = vmatprep.mubr.bf16.mxu0 0
  %2376 = vmatmul.mubr.bf16.gmra.mxu0 %v2154
  %v2377 = vpop.f32.mrf.mxu0
  %v2378 = vadd.f32 %v1935, %v2377
  %v2379 = vpop.f32.mrf.mxu0
  %v2380 = vpop.f32.mrf.mxu0
  %v2381 = vadd.f32 %v1935, %v2380
  %v2382 = vpop.f32.mrf.mxu0
  %2383 = vmatprep.mubr.bf16.mxu0 0
  %2384 = vmatmul.mubr.bf16.gmra.mxu0 %v2157
  %v2385 = vpop.f32.mrf.mxu0
  %v2386 = vadd.f32 %v1935, %v2385
  %v2387 = vpop.f32.mrf.mxu0
  %v2388 = vpop.f32.mrf.mxu0
  %v2389 = vpop.f32.mrf.mxu0
  %2390 = vdwg.mxu0
  %v2391 = vtanh.pop %v2194
  %v2392 = vtanh.pop %v2197
  %v2393 = vtanh.pop %v2202
  %v2394 = vtanh.pop %v2205
  %v2395 = vtanh.pop %v2210
  %v2396 = vtanh.pop %v2213
  %v2397 = vtanh.pop %v2218
  %v2398 = vtanh.pop %v2221
  %v2399 = vtanh.pop %v2226
  %v2400 = vtanh.pop %v2229
  %v2401 = vtanh.pop %v2234
  %v2402 = vtanh.pop %v2237
  %v2403 = vtanh.pop %v2242
  %v2404 = vtanh.pop %v2245
  %v2405 = vtanh.pop %v2250
  %v2406 = vtanh.pop %v2253
  %v2407 = vtanh.pop %v2258
  %v2408 = vtanh.pop %v2261
  %v2409 = vtanh.pop %v2266
  %v2410 = vtanh.pop %v2269
  %v2411 = vtanh.pop %v2274
  %v2412 = vtanh.pop %v2277
  %v2413 = vtanh.pop %v2282
  %v2414 = vtanh.pop %v2285
  %v2415 = vtanh.pop %v2290
  %v2416 = vtanh.pop %v2293
  %v2417 = vtanh.pop %v2298
  %v2418 = vtanh.pop %v2301
  %v2419 = vtanh.pop %v2306
  %v2420 = vtanh.pop %v2309
  %v2421 = vtanh.pop %v2314
  %v2422 = vtanh.pop %v2317
  %v2423 = vtanh.pop %v2322
  %v2424 = vtanh.pop %v2325
  %v2425 = vtanh.pop %v2330
  %v2426 = vtanh.pop %v2333
  %v2427 = vtanh.pop %v2338
  %v2428 = vtanh.pop %v2341
  %v2429 = vtanh.pop %v2346
  %v2430 = vtanh.pop %v2349
  %v2431 = vtanh.pop %v2354
  %v2432 = vtanh.pop %v2357
  %v2433 = vtanh.pop %v2362
  %v2434 = vtanh.pop %v2365
  %v2435 = vtanh.pop %v2370
  %v2436 = vtanh.pop %v2373
  %v2437 = vtanh.pop %v2378
  %v2438 = vtanh.pop %v2381
  %v2439 = vtanh.pop %v2386
  %s2440 = scalar_lea.vmem %s3, 1176
  %2441 = vst.msk [vmem:[%s2440] sm:$0xff] %vm583, %v2391
  %2442 = vst.msk [vmem:[%s2440 + $0x8] sm:$0xff] %vm583, %v2392
  %2443 = vst.msk [vmem:[%s2440 + $0x10] sm:$0xff] %vm583, %v2393
  %2444 = vst.msk [vmem:[%s2440 + $0x18] sm:$0xff] %vm583, %v2394
  %2445 = vst.msk [vmem:[%s2440 + $0x20] sm:$0xff] %vm583, %v2395
  %2446 = vst.msk [vmem:[%s2440 + $0x28] sm:$0xff] %vm583, %v2396
  %2447 = vst.msk [vmem:[%s2440 + $0x30] sm:$0xff] %vm583, %v2397
  %2448 = vst.msk [vmem:[%s2440 + $0x38] sm:$0xff] %vm583, %v2398
  %2449 = vst.msk [vmem:[%s2440 + $0x40] sm:$0xff] %vm583, %v2399
  %2450 = vst.msk [vmem:[%s2440 + $0x48] sm:$0xff] %vm583, %v2400
  %2451 = vst.msk [vmem:[%s2440 + $0x50] sm:$0xff] %vm583, %v2401
  %2452 = vst.msk [vmem:[%s2440 + $0x58] sm:$0xff] %vm583, %v2402
  %2453 = vst.msk [vmem:[%s2440 + $0x60] sm:$0xff] %vm583, %v2403
  %2454 = vst.msk [vmem:[%s2440 + $0x68] sm:$0xff] %vm583, %v2404
  %2455 = vst.msk [vmem:[%s2440 + $0x70] sm:$0xff] %vm583, %v2405
  %2456 = vst.msk [vmem:[%s2440 + $0x78] sm:$0xff] %vm583, %v2406
  %2457 = vst.msk [vmem:[%s2440 + $0x80] sm:$0xff] %vm583, %v2407
  %2458 = vst.msk [vmem:[%s2440 + $0x88] sm:$0xff] %vm583, %v2408
  %2459 = vst.msk [vmem:[%s2440 + $0x90] sm:$0xff] %vm583, %v2409
  %2460 = vst.msk [vmem:[%s2440 + $0x98] sm:$0xff] %vm583, %v2410
  %2461 = vst.msk [vmem:[%s2440 + $0xa0] sm:$0xff] %vm583, %v2411
  %2462 = vst.msk [vmem:[%s2440 + $0xa8] sm:$0xff] %vm583, %v2412
  %2463 = vst.msk [vmem:[%s2440 + $0xb0] sm:$0xff] %vm583, %v2413
  %2464 = vst.msk [vmem:[%s2440 + $0xb8] sm:$0xff] %vm583, %v2414
  %2465 = vst.msk [vmem:[%s2440 + $0xc0] sm:$0xff] %vm583, %v2415
  %2466 = vst.msk [vmem:[%s2440 + $0xc8] sm:$0xff] %vm583, %v2416
  %2467 = vst.msk [vmem:[%s2440 + $0xd0] sm:$0xff] %vm583, %v2417
  %2468 = vst.msk [vmem:[%s2440 + $0xd8] sm:$0xff] %vm583, %v2418
  %2469 = vst.msk [vmem:[%s2440 + $0xe0] sm:$0xff] %vm583, %v2419
  %2470 = vst.msk [vmem:[%s2440 + $0xe8] sm:$0xff] %vm583, %v2420
  %2471 = vst.msk [vmem:[%s2440 + $0xf0] sm:$0xff] %vm583, %v2421
  %2472 = vst.msk [vmem:[%s2440 + $0xf8] sm:$0xff] %vm583, %v2422
  %2473 = vst.msk [vmem:[%s2440 + $0x100] sm:$0xff] %vm583, %v2423
  %2474 = vst.msk [vmem:[%s2440 + $0x108] sm:$0xff] %vm583, %v2424
  %2475 = vst.msk [vmem:[%s2440 + $0x110] sm:$0xff] %vm583, %v2425
  %2476 = vst.msk [vmem:[%s2440 + $0x118] sm:$0xff] %vm583, %v2426
  %2477 = vst.msk [vmem:[%s2440 + $0x120] sm:$0xff] %vm583, %v2427
  %2478 = vst.msk [vmem:[%s2440 + $0x128] sm:$0xff] %vm583, %v2428
  %2479 = vst.msk [vmem:[%s2440 + $0x130] sm:$0xff] %vm583, %v2429
  %2480 = vst.msk [vmem:[%s2440 + $0x138] sm:$0xff] %vm583, %v2430
  %2481 = vst.msk [vmem:[%s2440 + $0x140] sm:$0xff] %vm583, %v2431
  %2482 = vst.msk [vmem:[%s2440 + $0x148] sm:$0xff] %vm583, %v2432
  %2483 = vst.msk [vmem:[%s2440 + $0x150] sm:$0xff] %vm583, %v2433
  %2484 = vst.msk [vmem:[%s2440 + $0x158] sm:$0xff] %vm583, %v2434
  %2485 = vst.msk [vmem:[%s2440 + $0x160] sm:$0xff] %vm583, %v2435
  %2486 = vst.msk [vmem:[%s2440 + $0x168] sm:$0xff] %vm583, %v2436
  %2487 = vst.msk [vmem:[%s2440 + $0x170] sm:$0xff] %vm583, %v2437
  %2488 = vst.msk [vmem:[%s2440 + $0x178] sm:$0xff] %vm583, %v2438
  %2489 = vst.msk [vmem:[%s2440 + $0x180] sm:$0xff] %vm583, %v2439
  // Predicated region
  $region14: #{cond_conv_generator_forward.7} parent=0 // pred_check
    _
  $region15: #{cond_conv_generator_forward.7} parent=0 // pred_check_branch
    %2491 = sbr.rel (0) target = $region17
  $region16: #{cond_conv_generator_forward.7} parent=0 // pred_region
    _
  $region17: #{cond_conv_generator_forward.7} parent=0 // pred_fallthru
    _
  // Predicated region
  $region18: #{cond_conv_generator_forward.7} parent=0 // pred_check
    _
  $region19: #{cond_conv_generator_forward.7} parent=0 // pred_check_branch
    %2493 = sbr.rel (0) target = $region21
  $region20: #{cond_conv_generator_forward.7} parent=0 // pred_region
    _
  $region21: #{cond_conv_generator_forward.7} parent=0 // pred_fallthru
    _

</llo_original>
